<compile_context>
chip_gen: v7x
topology: tpu7x:2x2x1
jax: 0.10.0
libtpu: 0.0.40
codegen_flags: <defaults>
</compile_context>

<pallas_src>
import jax
import jax.numpy as jnp
from jax.experimental import pallas as pl
from jax.experimental.pallas import tpu as pltpu


# ---------------------------------------------------------------------------
# Helpers
# ---------------------------------------------------------------------------

def _round_up(x, m):
    return ((x + m - 1) // m) * m


def _pick_tile(dim, cap, align):
    """Largest multiple of `align` that divides `dim` and is <= cap; else full dim."""
    if dim <= cap:
        return dim
    t = (cap // align) * align
    while t >= align:
        if dim % t == 0:
            return t
        t -= align
    return dim


def _pad_axis(x, axis, new_size):
    pad = [(0, 0)] * x.ndim
    pad[axis] = (0, new_size - x.shape[axis])
    return jnp.pad(x, pad)


def _pad_gate_cols(w, H, HP):
    """Pad a PyTorch-packed (i|f|g|o) weight/bias along the gate axis:
    (..., 4*H) -> (..., 4*HP), padding each gate block separately so
    lane-aligned slices [k*HP:(k+1)*HP] stay correct."""
    lead = w.shape[:-1]
    w4 = w.reshape(lead + (4, H))
    w4 = jnp.pad(w4, [(0, 0)] * len(lead) + [(0, 0), (0, HP - H)])
    return w4.reshape(lead + (4 * HP,))


# ---------------------------------------------------------------------------
# Pallas kernels
# ---------------------------------------------------------------------------

def _make_linear_kernel(activation):
    """y = act(x @ w + b) on one (tn, tv) output tile."""
    def kernel(x_ref, w_ref, b_ref, o_ref):
        acc = (jnp.dot(x_ref[...], w_ref[...], preferred_element_type=jnp.float32)
               + b_ref[...])
        if activation == "tanh":
            acc = jnp.tanh(acc)
        o_ref[...] = acc
    return kernel


def linear_forward(x, w, b, activation=None, tile_n=256, tile_v=512):
    """Tiled y = act(x @ w + b).  Grid over (rows, out-cols), K kept full-extent.
    Used for the hoisted LSTM input projections and the vocab projection."""
    N, K = x.shape
    V = w.shape[1]
    tn = _pick_tile(N, tile_n, 8)
    tv = _pick_tile(V, tile_v, 128)
    grid = (N // tn, V // tv)
    return pl.pallas_call(
        _make_linear_kernel(activation),
        out_shape=jax.ShapeDtypeStruct((N, V), jnp.float32),
        grid_spec=pltpu.PrefetchScalarGridSpec(
            num_scalar_prefetch=0,
            grid=grid,
            in_specs=[
                pl.BlockSpec((tn, K), lambda i, j: (i, 0)),   # x rows
                pl.BlockSpec((K, tv), lambda i, j: (0, j)),   # weight cols
                pl.BlockSpec((1, tv), lambda i, j: (0, j)),   # bias cols
            ],
            out_specs=pl.BlockSpec((tn, tv), lambda i, j: (i, j)),
        ),
        compiler_params=pltpu.CompilerParams(
            dimension_semantics=("parallel", "parallel"),
            vmem_limit_bytes=64 * 1024 * 1024,   # stay under v7x's 64 MiB VMEM
        ),
    )(x, w, b)


def _lstm_step(h, c, xg_t, whh_ref, H):
    """One LSTM step.  xg_t already contains x_t @ W_ih + (b_ih + b_hh)."""
    gates = xg_t + jnp.dot(h, whh_ref[...], preferred_element_type=jnp.float32)
    # PyTorch gate order i, f, g, o; H is padded to a multiple of 128 so every
    # slice below is a full lane-aligned block (pure VPU/EUP, no lane shuffles).
    i_g = jax.nn.sigmoid(gates[:, 0 * H:1 * H])
    f_g = jax.nn.sigmoid(gates[:, 1 * H:2 * H])
    g_g = jnp.tanh(gates[:, 2 * H:3 * H])
    o_g = jax.nn.sigmoid(gates[:, 3 * H:4 * H])
    c_new = f_g * c + i_g * g_g
    h_new = o_g * jnp.tanh(c_new)
    return h_new, c_new


def _make_encoder_lstm_kernel(T, H):
    """Whole encoder recurrence in one kernel invocation, zero initial state,
    with Seq2Seq.map() (tanh(Linear(h_T))) fused into the epilogue.
    Only (mapped hT, cT) are emitted -- the per-step ctx was unused."""
    def kernel(xg_ref, whh_ref, mw_ref, mb_ref, h0dec_ref, cT_ref):
        B = xg_ref.shape[0]
        h = jnp.zeros((B, H), jnp.float32)
        c = jnp.zeros((B, H), jnp.float32)
        # Short, static T: fully unrolled (static slices of the VMEM-resident slab).
        # TODO(synk): for long sequences, switch to lax.fori_loop over time chunks.
        for t in range(T):
            h, c = _lstm_step(h, c, xg_ref[:, t, :], whh_ref, H)
        # Fused Seq2Seq.map(): tanh(Linear(dropout(h))); dropout is identity in eval.
        h0dec_ref[...] = jnp.tanh(
            jnp.dot(h, mw_ref[...], preferred_element_type=jnp.float32) + mb_ref[...])
        cT_ref[...] = c
    return kernel


def _make_decoder_lstm_kernel(T, H):
    """Whole decoder recurrence in one kernel invocation; emits per-step hidden
    states batch-major (B, T, H) so no transpose is needed before the vocab
    projection."""
    def kernel(xg_ref, h0_ref, c0_ref, whh_ref, ctx_ref):
        h = h0_ref[...]
        c = c0_ref[...]
        for t in range(T):
            h, c = _lstm_step(h, c, xg_ref[:, t, :], whh_ref, H)
            ctx_ref[:, t, :] = h
    return kernel


# ---------------------------------------------------------------------------
# Wrappers around pallas_call
# ---------------------------------------------------------------------------

def encoder_forward(xg, whh, map_w, map_b):
    """xg: (BP, T, 4*HP) precomputed input gates.  Returns (dec_h0, cT)."""
    BP, T, four_h = xg.shape
    H = four_h // 4
    H_dec = map_w.shape[1]
    return pl.pallas_call(
        _make_encoder_lstm_kernel(T, H),
        out_shape=(jax.ShapeDtypeStruct((BP, H_dec), jnp.float32),
                   jax.ShapeDtypeStruct((BP, H), jnp.float32)),
    )(xg, whh, map_w, map_b)


def decoder_forward(xg, h0, c0, whh):
    """xg: (BP, T, 4*HP) precomputed input gates.  Returns ctx (BP, T, HP)."""
    BP, T, four_h = xg.shape
    H = four_h // 4
    return pl.pallas_call(
        _make_decoder_lstm_kernel(T, H),
        out_shape=jax.ShapeDtypeStruct((BP, T, H), jnp.float32),
    )(xg, h0, c0, whh)


# ---------------------------------------------------------------------------
# Parameters (mirror the PyTorch module; combined LSTM bias = b_ih + b_hh)
# ---------------------------------------------------------------------------

def make_params(key, src_vocab, trg_vocab, emb_dim, h_enc, h_dec):
    ks = jax.random.split(key, 12)
    u = lambda k, shape: jax.random.uniform(k, shape, jnp.float32, -0.1, 0.1)
    return {
        # Encoder: embedding + LSTM
        "src_emb": u(ks[0], (src_vocab, emb_dim)),
        "enc_wih": u(ks[1], (emb_dim, 4 * h_enc)),
        "enc_whh": u(ks[2], (h_enc, 4 * h_enc)),
        "enc_b":   u(ks[3], (1, 4 * h_enc)),          # combined b_ih + b_hh
        # Mapper: Linear(encoder.size -> decoder.size), bias.fill_(0)
        "map_w": u(ks[4], (h_enc, h_dec)),
        "map_b": jnp.zeros((1, h_dec), jnp.float32),
        # Decoder: embedding + conditional LSTM + output projection
        "trg_emb": u(ks[5], (trg_vocab, emb_dim)),
        "dec_wih": u(ks[6], (emb_dim, 4 * h_dec)),
        "dec_whh": u(ks[7], (h_dec, 4 * h_dec)),
        "dec_b":   u(ks[8], (1, 4 * h_dec)),          # combined b_ih + b_hh
        "out_w":   u(ks[9], (h_dec, trg_vocab)),
        "out_b":   u(ks[10], (1, trg_vocab)),
    }


# ---------------------------------------------------------------------------
# Seq2Seq forward
# ---------------------------------------------------------------------------

def seq2seq_forward(params, data_src, data_trg):
    """data_src: (B, T_src) int32, data_trg: (B, T_trg) int32 -> logits (B, T_trg, V_trg)."""
    B, T_src = data_src.shape
    _, T_trg = data_trg.shape
    E = params["src_emb"].shape[1]
    H_enc = params["enc_whh"].shape[0]
    H_dec = params["dec_whh"].shape[0]
    V_trg = params["out_w"].shape[1]
    # Only the hidden state goes through the mapper; the cell state is passed
    # through unchanged (as in the PyTorch module), which requires equal sizes.
    assert H_enc == H_dec, "Seq2Seq passes the encoder cell state straight to the decoder."

    # Pad to TPU-friendly tiles: B -> mult of 8 (sublanes), H/V -> mult of 128 (lanes).
    # Zero padding keeps the padded hidden/cell entries exactly zero through the
    # recurrence (sigmoid(0)*0 terms), so results equal the unpadded computation.
    BP = _round_up(B, 8)
    HP = _round_up(H_enc, 128)
    VP = _round_up(V_trg, 128)

    enc_wih = _pad_gate_cols(params["enc_wih"], H_enc, HP)                    # (E, 4*HP)
    enc_whh = _pad_axis(_pad_gate_cols(params["enc_whh"], H_enc, HP), 0, HP)  # (HP, 4*HP)
    enc_b = _pad_gate_cols(params["enc_b"], H_enc, HP)                        # (1, 4*HP)
    dec_wih = _pad_gate_cols(params["dec_wih"], H_dec, HP)
    dec_whh = _pad_axis(_pad_gate_cols(params["dec_whh"], H_dec, HP), 0, HP)
    dec_b = _pad_gate_cols(params["dec_b"], H_dec, HP)
    map_w = _pad_axis(_pad_axis(params["map_w"], 0, HP), 1, HP)               # (HP, HP)
    map_b = _pad_axis(params["map_b"], 1, HP)                                 # (1, HP)
    out_w = _pad_axis(_pad_axis(params["out_w"], 0, HP), 1, VP)               # (HP, VP)
    out_b = _pad_axis(params["out_b"], 1, VP)                                 # (1, VP)

    # --- Encoder -------------------------------------------------------------
    src_e = jnp.take(params["src_emb"], data_src, axis=0)      # (B, T_src, E)
    src_e = _pad_axis(src_e, 0, BP)                            # (BP, T_src, E)
    # Hoisted input projection: one big matmul for all time steps (+ bias).
    enc_xg = linear_forward(src_e.reshape(BP * T_src, E), enc_wih, enc_b)
    enc_xg = enc_xg.reshape(BP, T_src, 4 * HP)
    # Recurrence + fused Seq2Seq.map() -> decoder initial state.
    dec_h0, dec_c0 = encoder_forward(enc_xg, enc_whh, map_w, map_b)

    # --- Conditional decoder -------------------------------------------------
    trg_e = jnp.take(params["trg_emb"], data_trg, axis=0)      # (B, T_trg, E)
    trg_e = _pad_axis(trg_e, 0, BP)
    dec_xg = linear_forward(trg_e.reshape(BP * T_trg, E), dec_wih, dec_b)
    dec_xg = dec_xg.reshape(BP, T_trg, 4 * HP)
    dec_ctx = decoder_forward(dec_xg, dec_h0, dec_c0, dec_whh)  # (BP, T_trg, HP)

    # --- Output vocab projection (tiled, lane-dense padded vocab) -------------
    logits = linear_forward(dec_ctx.reshape(BP * T_trg, HP), out_w, out_b)
    logits = logits.reshape(BP, T_trg, VP)
    return logits[:B, :, :V_trg]


# ---------------------------------------------------------------------------
# Main
# ---------------------------------------------------------------------------

if __name__ == "__main__":
    B = 2
    T_SRC = 8
    T_TRG = 8
    EMB = 32
    H_ENC = 32
    H_DEC = 32
    SRC_VOCAB = 32
    TRG_VOCAB = 40

    key = jax.random.PRNGKey(0)
    k_params, k_src, k_trg = jax.random.split(key, 3)

    params = make_params(k_params, SRC_VOCAB, TRG_VOCAB, EMB, H_ENC, H_DEC)
    data_src = jax.random.randint(k_src, (B, T_SRC), 0, SRC_VOCAB, dtype=jnp.int32)
    data_trg = jax.random.randint(k_trg, (B, T_TRG), 0, TRG_VOCAB, dtype=jnp.int32)

    logits = jax.jit(seq2seq_forward)(params, data_src, data_trg)
    jax.block_until_ready(logits)

    assert logits.shape == (B, T_TRG, TRG_VOCAB)
    assert logits.dtype == jnp.float32
    print("KERNEL_OK")
</pallas_src>

<mosaic_0001>
module attributes {stable_mosaic.version = 11 : i64} {
  func.func @kernel(%arg0: i32, %arg1: i32, %arg2: memref<64x32xf32, #tpu.memory_space<vmem>>, %arg3: memref<32x512xf32, #tpu.memory_space<vmem>>, %arg4: memref<1x512xf32, #tpu.memory_space<vmem>>, %arg5: memref<64x512xf32, #tpu.memory_space<vmem>>) attributes {dimension_semantics = [#tpu.dimension_semantics<parallel>, #tpu.dimension_semantics<parallel>], iteration_bounds = array<i64: 1, 1>, scalar_prefetch = 0 : i64, scratch_operands = 0 : i64, tpu.core_type = #tpu.core_type<tc>, window_params = [{transform_indices = @transform_0, window_bounds = array<i64: 64, 32>}, {transform_indices = @transform_1, window_bounds = array<i64: 32, 512>}, {transform_indices = @transform_2, window_bounds = array<i64: 1, 512>}, {transform_indices = @transform_3, window_bounds = array<i64: 64, 512>}]} {
    %c0 = arith.constant 0 : index
    %c0_0 = arith.constant 0 : index
    %0 = vector.load %arg2[%c0, %c0_0] : memref<64x32xf32, #tpu.memory_space<vmem>>, vector<64x32xf32>
    %c0_1 = arith.constant 0 : index
    %c0_2 = arith.constant 0 : index
    %1 = vector.load %arg3[%c0_1, %c0_2] : memref<32x512xf32, #tpu.memory_space<vmem>>, vector<32x512xf32>
    %cst = arith.constant dense<0.000000e+00> : vector<64x512xf32>
    %2 = tpu.matmul %0, %1, %cst {dimension_numbers = #tpu.dot_dimension_numbers<[1], [0], [0], [1], [0, 0, 1, 1], [], []>} : vector<64x32xf32>, vector<32x512xf32>, vector<64x512xf32> -> vector<64x512xf32>
    %c0_3 = arith.constant 0 : index
    %c0_4 = arith.constant 0 : index
    %3 = vector.load %arg4[%c0_3, %c0_4] : memref<1x512xf32, #tpu.memory_space<vmem>>, vector<1x512xf32>
    %4 = vector.broadcast %3 : vector<1x512xf32> to vector<64x512xf32>
    %5 = arith.addf %2, %4 : vector<64x512xf32>
    %c0_5 = arith.constant 0 : index
    %c0_6 = arith.constant 0 : index
    %6 = vector.load %arg5[%c0_5, %c0_6] : memref<64x512xf32, #tpu.memory_space<vmem>>, vector<64x512xf32>
    tpu.vector_store %arg5[%c0_5, %c0_6], %5 {strides = array<i32>} : memref<64x512xf32, #tpu.memory_space<vmem>>, vector<64x512xf32>,
    return
  }
  func.func @transform_0(%arg0: i32, %arg1: i32) -> (i32, i32) {
    %c0_i32 = arith.constant 0 : i32
    %c0_i32_0 = arith.constant 0 : i32
    return %arg0, %c0_i32 : i32, i32
  }
  func.func @transform_1(%arg0: i32, %arg1: i32) -> (i32, i32) {
    %c0_i32 = arith.constant 0 : i32
    %c0_i32_0 = arith.constant 0 : i32
    return %c0_i32, %arg1 : i32, i32
  }
  func.func @transform_2(%arg0: i32, %arg1: i32) -> (i32, i32) {
    %c0_i32 = arith.constant 0 : i32
    %c0_i32_0 = arith.constant 0 : i32
    return %c0_i32, %arg1 : i32, i32
  }
  func.func @transform_3(%arg0: i32, %arg1: i32) -> (i32, i32) {
    %c0_i32 = arith.constant 0 : i32
    return %arg0, %arg1 : i32, i32
  }
}

module attributes {stable_mosaic.version = 11 : i64} {
  func.func @kernel(%arg0: memref<8x8x512xf32, #tpu.memory_space<vmem>>, %arg1: memref<128x512xf32, #tpu.memory_space<vmem>>, %arg2: memref<128x128xf32, #tpu.memory_space<vmem>>, %arg3: memref<1x128xf32, #tpu.memory_space<vmem>>, %arg4: memref<8x128xf32, #tpu.memory_space<vmem>>, %arg5: memref<8x128xf32, #tpu.memory_space<vmem>>) attributes {dimension_semantics = [], scalar_prefetch = 0 : i64, scratch_operands = 0 : i64, tpu.core_type = #tpu.core_type<tc>} {
    %cst = arith.constant 0.000000e+00 : f32
    %0 = vector.broadcast %cst : f32 to vector<8x128xf32>
    %cst_0 = arith.constant 0.000000e+00 : f32
    %1 = vector.broadcast %cst_0 : f32 to vector<8x128xf32>
    %c0 = arith.constant 0 : index
    %c0_1 = arith.constant 0 : index
    %c0_2 = arith.constant 0 : index
    %2 = vector.load %arg0[%c0, %c0_1, %c0_2] : memref<8x8x512xf32, #tpu.memory_space<vmem>>, vector<8x1x512xf32>
    %3 = vector.shape_cast %2 : vector<8x1x512xf32> to vector<8x512xf32>
    %c0_3 = arith.constant 0 : index
    %c0_4 = arith.constant 0 : index
    %4 = vector.load %arg1[%c0_3, %c0_4] : memref<128x512xf32, #tpu.memory_space<vmem>>, vector<128x512xf32>
    %cst_5 = arith.constant dense<0.000000e+00> : vector<8x512xf32>
    %5 = tpu.matmul %0, %4, %cst_5 {dimension_numbers = #tpu.dot_dimension_numbers<[1], [0], [0], [1], [0, 0, 1, 1], [], []>} : vector<8x128xf32>, vector<128x512xf32>, vector<8x512xf32> -> vector<8x512xf32>
    %6 = arith.addf %3, %5 : vector<8x512xf32>
    %7 = vector.extract_strided_slice %6 {offsets = [0, 0], sizes = [8, 128], strides = [1, 1]} : vector<8x512xf32> to vector<8x128xf32>
    %8 = arith.negf %7 : vector<8x128xf32>
    %9 = math.exp %8 : vector<8x128xf32>
    %cst_6 = arith.constant 1.000000e+00 : f32
    %10 = vector.broadcast %cst_6 : f32 to vector<8x128xf32>
    %11 = arith.addf %10, %9 : vector<8x128xf32>
    %12 = arith.divf %10, %11 : vector<8x128xf32>
    %13 = vector.extract_strided_slice %6 {offsets = [0, 128], sizes = [8, 128], strides = [1, 1]} : vector<8x512xf32> to vector<8x128xf32>
    %14 = arith.negf %13 : vector<8x128xf32>
    %15 = math.exp %14 : vector<8x128xf32>
    %cst_7 = arith.constant 1.000000e+00 : f32
    %16 = vector.broadcast %cst_7 : f32 to vector<8x128xf32>
    %17 = arith.addf %16, %15 : vector<8x128xf32>
    %18 = arith.divf %16, %17 : vector<8x128xf32>
    %19 = vector.extract_strided_slice %6 {offsets = [0, 256], sizes = [8, 128], strides = [1, 1]} : vector<8x512xf32> to vector<8x128xf32>
    %20 = math.tanh %19 : vector<8x128xf32>
    %21 = vector.extract_strided_slice %6 {offsets = [0, 384], sizes = [8, 128], strides = [1, 1]} : vector<8x512xf32> to vector<8x128xf32>
    %22 = arith.negf %21 : vector<8x128xf32>
    %23 = math.exp %22 : vector<8x128xf32>
    %cst_8 = arith.constant 1.000000e+00 : f32
    %24 = vector.broadcast %cst_8 : f32 to vector<8x128xf32>
    %25 = arith.addf %24, %23 : vector<8x128xf32>
    %26 = arith.divf %24, %25 : vector<8x128xf32>
    %27 = arith.mulf %18, %1 : vector<8x128xf32>
    %28 = arith.mulf %12, %20 : vector<8x128xf32>
    %29 = arith.addf %27, %28 : vector<8x128xf32>
    %30 = math.tanh %29 : vector<8x128xf32>
    %31 = arith.mulf %26, %30 : vector<8x128xf32>
    %c0_9 = arith.constant 0 : index
    %c1 = arith.constant 1 : index
    %c0_10 = arith.constant 0 : index
    %32 = vector.load %arg0[%c0_9, %c1, %c0_10] : memref<8x8x512xf32, #tpu.memory_space<vmem>>, vector<8x1x512xf32>
    %33 = vector.shape_cast %32 : vector<8x1x512xf32> to vector<8x512xf32>
    %c0_11 = arith.constant 0 : index
    %c0_12 = arith.constant 0 : index
    %34 = vector.load %arg1[%c0_11, %c0_12] : memref<128x512xf32, #tpu.memory_space<vmem>>, vector<128x512xf32>
    %cst_13 = arith.constant dense<0.000000e+00> : vector<8x512xf32>
    %35 = tpu.matmul %31, %34, %cst_13 {dimension_numbers = #tpu.dot_dimension_numbers<[1], [0], [0], [1], [0, 0, 1, 1], [], []>} : vector<8x128xf32>, vector<128x512xf32>, vector<8x512xf32> -> vector<8x512xf32>
    %36 = arith.addf %33, %35 : vector<8x512xf32>
    %37 = vector.extract_strided_slice %36 {offsets = [0, 0], sizes = [8, 128], strides = [1, 1]} : vector<8x512xf32> to vector<8x128xf32>
    %38 = arith.negf %37 : vector<8x128xf32>
    %39 = math.exp %38 : vector<8x128xf32>
    %cst_14 = arith.constant 1.000000e+00 : f32
    %40 = vector.broadcast %cst_14 : f32 to vector<8x128xf32>
    %41 = arith.addf %40, %39 : vector<8x128xf32>
    %42 = arith.divf %40, %41 : vector<8x128xf32>
    %43 = vector.extract_strided_slice %36 {offsets = [0, 128], sizes = [8, 128], strides = [1, 1]} : vector<8x512xf32> to vector<8x128xf32>
    %44 = arith.negf %43 : vector<8x128xf32>
    %45 = math.exp %44 : vector<8x128xf32>
    %cst_15 = arith.constant 1.000000e+00 : f32
    %46 = vector.broadcast %cst_15 : f32 to vector<8x128xf32>
    %47 = arith.addf %46, %45 : vector<8x128xf32>
    %48 = arith.divf %46, %47 : vector<8x128xf32>
    %49 = vector.extract_strided_slice %36 {offsets = [0, 256], sizes = [8, 128], strides = [1, 1]} : vector<8x512xf32> to vector<8x128xf32>
    %50 = math.tanh %49 : vector<8x128xf32>
    %51 = vector.extract_strided_slice %36 {offsets = [0, 384], sizes = [8, 128], strides = [1, 1]} : vector<8x512xf32> to vector<8x128xf32>
    %52 = arith.negf %51 : vector<8x128xf32>
    %53 = math.exp %52 : vector<8x128xf32>
    %cst_16 = arith.constant 1.000000e+00 : f32
    %54 = vector.broadcast %cst_16 : f32 to vector<8x128xf32>
    %55 = arith.addf %54, %53 : vector<8x128xf32>
    %56 = arith.divf %54, %55 : vector<8x128xf32>
    %57 = arith.mulf %48, %29 : vector<8x128xf32>
    %58 = arith.mulf %42, %50 : vector<8x128xf32>
    %59 = arith.addf %57, %58 : vector<8x128xf32>
    %60 = math.tanh %59 : vector<8x128xf32>
    %61 = arith.mulf %56, %60 : vector<8x128xf32>
    %c0_17 = arith.constant 0 : index
    %c2 = arith.constant 2 : index
    %c0_18 = arith.constant 0 : index
    %62 = vector.load %arg0[%c0_17, %c2, %c0_18] : memref<8x8x512xf32, #tpu.memory_space<vmem>>, vector<8x1x512xf32>
    %63 = vector.shape_cast %62 : vector<8x1x512xf32> to vector<8x512xf32>
    %c0_19 = arith.constant 0 : index
    %c0_20 = arith.constant 0 : index
    %64 = vector.load %arg1[%c0_19, %c0_20] : memref<128x512xf32, #tpu.memory_space<vmem>>, vector<128x512xf32>
    %cst_21 = arith.constant dense<0.000000e+00> : vector<8x512xf32>
    %65 = tpu.matmul %61, %64, %cst_21 {dimension_numbers = #tpu.dot_dimension_numbers<[1], [0], [0], [1], [0, 0, 1, 1], [], []>} : vector<8x128xf32>, vector<128x512xf32>, vector<8x512xf32> -> vector<8x512xf32>
    %66 = arith.addf %63, %65 : vector<8x512xf32>
    %67 = vector.extract_strided_slice %66 {offsets = [0, 0], sizes = [8, 128], strides = [1, 1]} : vector<8x512xf32> to vector<8x128xf32>
    %68 = arith.negf %67 : vector<8x128xf32>
    %69 = math.exp %68 : vector<8x128xf32>
    %cst_22 = arith.constant 1.000000e+00 : f32
    %70 = vector.broadcast %cst_22 : f32 to vector<8x128xf32>
    %71 = arith.addf %70, %69 : vector<8x128xf32>
    %72 = arith.divf %70, %71 : vector<8x128xf32>
    %73 = vector.extract_strided_slice %66 {offsets = [0, 128], sizes = [8, 128], strides = [1, 1]} : vector<8x512xf32> to vector<8x128xf32>
    %74 = arith.negf %73 : vector<8x128xf32>
    %75 = math.exp %74 : vector<8x128xf32>
    %cst_23 = arith.constant 1.000000e+00 : f32
    %76 = vector.broadcast %cst_23 : f32 to vector<8x128xf32>
    %77 = arith.addf %76, %75 : vector<8x128xf32>
    %78 = arith.divf %76, %77 : vector<8x128xf32>
    %79 = vector.extract_strided_slice %66 {offsets = [0, 256], sizes = [8, 128], strides = [1, 1]} : vector<8x512xf32> to vector<8x128xf32>
    %80 = math.tanh %79 : vector<8x128xf32>
    %81 = vector.extract_strided_slice %66 {offsets = [0, 384], sizes = [8, 128], strides = [1, 1]} : vector<8x512xf32> to vector<8x128xf32>
    %82 = arith.negf %81 : vector<8x128xf32>
    %83 = math.exp %82 : vector<8x128xf32>
    %cst_24 = arith.constant 1.000000e+00 : f32
    %84 = vector.broadcast %cst_24 : f32 to vector<8x128xf32>
    %85 = arith.addf %84, %83 : vector<8x128xf32>
    %86 = arith.divf %84, %85 : vector<8x128xf32>
    %87 = arith.mulf %78, %59 : vector<8x128xf32>
    %88 = arith.mulf %72, %80 : vector<8x128xf32>
    %89 = arith.addf %87, %88 : vector<8x128xf32>
    %90 = math.tanh %89 : vector<8x128xf32>
    %91 = arith.mulf %86, %90 : vector<8x128xf32>
    %c0_25 = arith.constant 0 : index
    %c3 = arith.constant 3 : index
    %c0_26 = arith.constant 0 : index
    %92 = vector.load %arg0[%c0_25, %c3, %c0_26] : memref<8x8x512xf32, #tpu.memory_space<vmem>>, vector<8x1x512xf32>
    %93 = vector.shape_cast %92 : vector<8x1x512xf32> to vector<8x512xf32>
    %c0_27 = arith.constant 0 : index
    %c0_28 = arith.constant 0 : index
    %94 = vector.load %arg1[%c0_27, %c0_28] : memref<128x512xf32, #tpu.memory_space<vmem>>, vector<128x512xf32>
    %cst_29 = arith.constant dense<0.000000e+00> : vector<8x512xf32>
    %95 = tpu.matmul %91, %94, %cst_29 {dimension_numbers = #tpu.dot_dimension_numbers<[1], [0], [0], [1], [0, 0, 1, 1], [], []>} : vector<8x128xf32>, vector<128x512xf32>, vector<8x512xf32> -> vector<8x512xf32>
    %96 = arith.addf %93, %95 : vector<8x512xf32>
    %97 = vector.extract_strided_slice %96 {offsets = [0, 0], sizes = [8, 128], strides = [1, 1]} : vector<8x512xf32> to vector<8x128xf32>
    %98 = arith.negf %97 : vector<8x128xf32>
    %99 = math.exp %98 : vector<8x128xf32>
    %cst_30 = arith.constant 1.000000e+00 : f32
    %100 = vector.broadcast %cst_30 : f32 to vector<8x128xf32>
    %101 = arith.addf %100, %99 : vector<8x128xf32>
    %102 = arith.divf %100, %101 : vector<8x128xf32>
    %103 = vector.extract_strided_slice %96 {offsets = [0, 128], sizes = [8, 128], strides = [1, 1]} : vector<8x512xf32> to vector<8x128xf32>
    %104 = arith.negf %103 : vector<8x128xf32>
    %105 = math.exp %104 : vector<8x128xf32>
    %cst_31 = arith.constant 1.000000e+00 : f32
    %106 = vector.broadcast %cst_31 : f32 to vector<8x128xf32>
    %107 = arith.addf %106, %105 : vector<8x128xf32>
    %108 = arith.divf %106, %107 : vector<8x128xf32>
    %109 = vector.extract_strided_slice %96 {offsets = [0, 256], sizes = [8, 128], strides = [1, 1]} : vector<8x512xf32> to vector<8x128xf32>
    %110 = math.tanh %109 : vector<8x128xf32>
    %111 = vector.extract_strided_slice %96 {offsets = [0, 384], sizes = [8, 128], strides = [1, 1]} : vector<8x512xf32> to vector<8x128xf32>
    %112 = arith.negf %111 : vector<8x128xf32>
    %113 = math.exp %112 : vector<8x128xf32>
    %cst_32 = arith.constant 1.000000e+00 : f32
    %114 = vector.broadcast %cst_32 : f32 to vector<8x128xf32>
    %115 = arith.addf %114, %113 : vector<8x128xf32>
    %116 = arith.divf %114, %115 : vector<8x128xf32>
    %117 = arith.mulf %108, %89 : vector<8x128xf32>
    %118 = arith.mulf %102, %110 : vector<8x128xf32>
    %119 = arith.addf %117, %118 : vector<8x128xf32>
    %120 = math.tanh %119 : vector<8x128xf32>
    %121 = arith.mulf %116, %120 : vector<8x128xf32>
    %c0_33 = arith.constant 0 : index
    %c4 = arith.constant 4 : index
    %c0_34 = arith.constant 0 : index
    %122 = vector.load %arg0[%c0_33, %c4, %c0_34] : memref<8x8x512xf32, #tpu.memory_space<vmem>>, vector<8x1x512xf32>
    %123 = vector.shape_cast %122 : vector<8x1x512xf32> to vector<8x512xf32>
    %c0_35 = arith.constant 0 : index
    %c0_36 = arith.constant 0 : index
    %124 = vector.load %arg1[%c0_35, %c0_36] : memref<128x512xf32, #tpu.memory_space<vmem>>, vector<128x512xf32>
    %cst_37 = arith.constant dense<0.000000e+00> : vector<8x512xf32>
    %125 = tpu.matmul %121, %124, %cst_37 {dimension_numbers = #tpu.dot_dimension_numbers<[1], [0], [0], [1], [0, 0, 1, 1], [], []>} : vector<8x128xf32>, vector<128x512xf32>, vector<8x512xf32> -> vector<8x512xf32>
    %126 = arith.addf %123, %125 : vector<8x512xf32>
    %127 = vector.extract_strided_slice %126 {offsets = [0, 0], sizes = [8, 128], strides = [1, 1]} : vector<8x512xf32> to vector<8x128xf32>
    %128 = arith.negf %127 : vector<8x128xf32>
    %129 = math.exp %128 : vector<8x128xf32>
    %cst_38 = arith.constant 1.000000e+00 : f32
    %130 = vector.broadcast %cst_38 : f32 to vector<8x128xf32>
    %131 = arith.addf %130, %129 : vector<8x128xf32>
    %132 = arith.divf %130, %131 : vector<8x128xf32>
    %133 = vector.extract_strided_slice %126 {offsets = [0, 128], sizes = [8, 128], strides = [1, 1]} : vector<8x512xf32> to vector<8x128xf32>
    %134 = arith.negf %133 : vector<8x128xf32>
    %135 = math.exp %134 : vector<8x128xf32>
    %cst_39 = arith.constant 1.000000e+00 : f32
    %136 = vector.broadcast %cst_39 : f32 to vector<8x128xf32>
    %137 = arith.addf %136, %135 : vector<8x128xf32>
    %138 = arith.divf %136, %137 : vector<8x128xf32>
    %139 = vector.extract_strided_slice %126 {offsets = [0, 256], sizes = [8, 128], strides = [1, 1]} : vector<8x512xf32> to vector<8x128xf32>
    %140 = math.tanh %139 : vector<8x128xf32>
    %141 = vector.extract_strided_slice %126 {offsets = [0, 384], sizes = [8, 128], strides = [1, 1]} : vector<8x512xf32> to vector<8x128xf32>
    %142 = arith.negf %141 : vector<8x128xf32>
    %143 = math.exp %142 : vector<8x128xf32>
    %cst_40 = arith.constant 1.000000e+00 : f32
    %144 = vector.broadcast %cst_40 : f32 to vector<8x128xf32>
    %145 = arith.addf %144, %143 : vector<8x128xf32>
    %146 = arith.divf %144, %145 : vector<8x128xf32>
    %147 = arith.mulf %138, %119 : vector<8x128xf32>
    %148 = arith.mulf %132, %140 : vector<8x128xf32>
    %149 = arith.addf %147, %148 : vector<8x128xf32>
    %150 = math.tanh %149 : vector<8x128xf32>
    %151 = arith.mulf %146, %150 : vector<8x128xf32>
    %c0_41 = arith.constant 0 : index
    %c5 = arith.constant 5 : index
    %c0_42 = arith.constant 0 : index
    %152 = vector.load %arg0[%c0_41, %c5, %c0_42] : memref<8x8x512xf32, #tpu.memory_space<vmem>>, vector<8x1x512xf32>
    %153 = vector.shape_cast %152 : vector<8x1x512xf32> to vector<8x512xf32>
    %c0_43 = arith.constant 0 : index
    %c0_44 = arith.constant 0 : index
    %154 = vector.load %arg1[%c0_43, %c0_44] : memref<128x512xf32, #tpu.memory_space<vmem>>, vector<128x512xf32>
    %cst_45 = arith.constant dense<0.000000e+00> : vector<8x512xf32>
    %155 = tpu.matmul %151, %154, %cst_45 {dimension_numbers = #tpu.dot_dimension_numbers<[1], [0], [0], [1], [0, 0, 1, 1], [], []>} : vector<8x128xf32>, vector<128x512xf32>, vector<8x512xf32> -> vector<8x512xf32>
    %156 = arith.addf %153, %155 : vector<8x512xf32>
    %157 = vector.extract_strided_slice %156 {offsets = [0, 0], sizes = [8, 128], strides = [1, 1]} : vector<8x512xf32> to vector<8x128xf32>
    %158 = arith.negf %157 : vector<8x128xf32>
    %159 = math.exp %158 : vector<8x128xf32>
    %cst_46 = arith.constant 1.000000e+00 : f32
    %160 = vector.broadcast %cst_46 : f32 to vector<8x128xf32>
    %161 = arith.addf %160, %159 : vector<8x128xf32>
    %162 = arith.divf %160, %161 : vector<8x128xf32>
    %163 = vector.extract_strided_slice %156 {offsets = [0, 128], sizes = [8, 128], strides = [1, 1]} : vector<8x512xf32> to vector<8x128xf32>
    %164 = arith.negf %163 : vector<8x128xf32>
    %165 = math.exp %164 : vector<8x128xf32>
    %cst_47 = arith.constant 1.000000e+00 : f32
    %166 = vector.broadcast %cst_47 : f32 to vector<8x128xf32>
    %167 = arith.addf %166, %165 : vector<8x128xf32>
    %168 = arith.divf %166, %167 : vector<8x128xf32>
    %169 = vector.extract_strided_slice %156 {offsets = [0, 256], sizes = [8, 128], strides = [1, 1]} : vector<8x512xf32> to vector<8x128xf32>
    %170 = math.tanh %169 : vector<8x128xf32>
    %171 = vector.extract_strided_slice %156 {offsets = [0, 384], sizes = [8, 128], strides = [1, 1]} : vector<8x512xf32> to vector<8x128xf32>
    %172 = arith.negf %171 : vector<8x128xf32>
    %173 = math.exp %172 : vector<8x128xf32>
    %cst_48 = arith.constant 1.000000e+00 : f32
    %174 = vector.broadcast %cst_48 : f32 to vector<8x128xf32>
    %175 = arith.addf %174, %173 : vector<8x128xf32>
    %176 = arith.divf %174, %175 : vector<8x128xf32>
    %177 = arith.mulf %168, %149 : vector<8x128xf32>
    %178 = arith.mulf %162, %170 : vector<8x128xf32>
    %179 = arith.addf %177, %178 : vector<8x128xf32>
    %180 = math.tanh %179 : vector<8x128xf32>
    %181 = arith.mulf %176, %180 : vector<8x128xf32>
    %c0_49 = arith.constant 0 : index
    %c6 = arith.constant 6 : index
    %c0_50 = arith.constant 0 : index
    %182 = vector.load %arg0[%c0_49, %c6, %c0_50] : memref<8x8x512xf32, #tpu.memory_space<vmem>>, vector<8x1x512xf32>
    %183 = vector.shape_cast %182 : vector<8x1x512xf32> to vector<8x512xf32>
    %c0_51 = arith.constant 0 : index
    %c0_52 = arith.constant 0 : index
    %184 = vector.load %arg1[%c0_51, %c0_52] : memref<128x512xf32, #tpu.memory_space<vmem>>, vector<128x512xf32>
    %cst_53 = arith.constant dense<0.000000e+00> : vector<8x512xf32>
    %185 = tpu.matmul %181, %184, %cst_53 {dimension_numbers = #tpu.dot_dimension_numbers<[1], [0], [0], [1], [0, 0, 1, 1], [], []>} : vector<8x128xf32>, vector<128x512xf32>, vector<8x512xf32> -> vector<8x512xf32>
    %186 = arith.addf %183, %185 : vector<8x512xf32>
    %187 = vector.extract_strided_slice %186 {offsets = [0, 0], sizes = [8, 128], strides = [1, 1]} : vector<8x512xf32> to vector<8x128xf32>
    %188 = arith.negf %187 : vector<8x128xf32>
    %189 = math.exp %188 : vector<8x128xf32>
    %cst_54 = arith.constant 1.000000e+00 : f32
    %190 = vector.broadcast %cst_54 : f32 to vector<8x128xf32>
    %191 = arith.addf %190, %189 : vector<8x128xf32>
    %192 = arith.divf %190, %191 : vector<8x128xf32>
    %193 = vector.extract_strided_slice %186 {offsets = [0, 128], sizes = [8, 128], strides = [1, 1]} : vector<8x512xf32> to vector<8x128xf32>
    %194 = arith.negf %193 : vector<8x128xf32>
    %195 = math.exp %194 : vector<8x128xf32>
    %cst_55 = arith.constant 1.000000e+00 : f32
    %196 = vector.broadcast %cst_55 : f32 to vector<8x128xf32>
    %197 = arith.addf %196, %195 : vector<8x128xf32>
    %198 = arith.divf %196, %197 : vector<8x128xf32>
    %199 = vector.extract_strided_slice %186 {offsets = [0, 256], sizes = [8, 128], strides = [1, 1]} : vector<8x512xf32> to vector<8x128xf32>
    %200 = math.tanh %199 : vector<8x128xf32>
    %201 = vector.extract_strided_slice %186 {offsets = [0, 384], sizes = [8, 128], strides = [1, 1]} : vector<8x512xf32> to vector<8x128xf32>
    %202 = arith.negf %201 : vector<8x128xf32>
    %203 = math.exp %202 : vector<8x128xf32>
    %cst_56 = arith.constant 1.000000e+00 : f32
    %204 = vector.broadcast %cst_56 : f32 to vector<8x128xf32>
    %205 = arith.addf %204, %203 : vector<8x128xf32>
    %206 = arith.divf %204, %205 : vector<8x128xf32>
    %207 = arith.mulf %198, %179 : vector<8x128xf32>
    %208 = arith.mulf %192, %200 : vector<8x128xf32>
    %209 = arith.addf %207, %208 : vector<8x128xf32>
    %210 = math.tanh %209 : vector<8x128xf32>
    %211 = arith.mulf %206, %210 : vector<8x128xf32>
    %c0_57 = arith.constant 0 : index
    %c7 = arith.constant 7 : index
    %c0_58 = arith.constant 0 : index
    %212 = vector.load %arg0[%c0_57, %c7, %c0_58] : memref<8x8x512xf32, #tpu.memory_space<vmem>>, vector<8x1x512xf32>
    %213 = vector.shape_cast %212 : vector<8x1x512xf32> to vector<8x512xf32>
    %c0_59 = arith.constant 0 : index
    %c0_60 = arith.constant 0 : index
    %214 = vector.load %arg1[%c0_59, %c0_60] : memref<128x512xf32, #tpu.memory_space<vmem>>, vector<128x512xf32>
    %cst_61 = arith.constant dense<0.000000e+00> : vector<8x512xf32>
    %215 = tpu.matmul %211, %214, %cst_61 {dimension_numbers = #tpu.dot_dimension_numbers<[1], [0], [0], [1], [0, 0, 1, 1], [], []>} : vector<8x128xf32>, vector<128x512xf32>, vector<8x512xf32> -> vector<8x512xf32>
    %216 = arith.addf %213, %215 : vector<8x512xf32>
    %217 = vector.extract_strided_slice %216 {offsets = [0, 0], sizes = [8, 128], strides = [1, 1]} : vector<8x512xf32> to vector<8x128xf32>
    %218 = arith.negf %217 : vector<8x128xf32>
    %219 = math.exp %218 : vector<8x128xf32>
    %cst_62 = arith.constant 1.000000e+00 : f32
    %220 = vector.broadcast %cst_62 : f32 to vector<8x128xf32>
    %221 = arith.addf %220, %219 : vector<8x128xf32>
    %222 = arith.divf %220, %221 : vector<8x128xf32>
    %223 = vector.extract_strided_slice %216 {offsets = [0, 128], sizes = [8, 128], strides = [1, 1]} : vector<8x512xf32> to vector<8x128xf32>
    %224 = arith.negf %223 : vector<8x128xf32>
    %225 = math.exp %224 : vector<8x128xf32>
    %cst_63 = arith.constant 1.000000e+00 : f32
    %226 = vector.broadcast %cst_63 : f32 to vector<8x128xf32>
    %227 = arith.addf %226, %225 : vector<8x128xf32>
    %228 = arith.divf %226, %227 : vector<8x128xf32>
    %229 = vector.extract_strided_slice %216 {offsets = [0, 256], sizes = [8, 128], strides = [1, 1]} : vector<8x512xf32> to vector<8x128xf32>
    %230 = math.tanh %229 : vector<8x128xf32>
    %231 = vector.extract_strided_slice %216 {offsets = [0, 384], sizes = [8, 128], strides = [1, 1]} : vector<8x512xf32> to vector<8x128xf32>
    %232 = arith.negf %231 : vector<8x128xf32>
    %233 = math.exp %232 : vector<8x128xf32>
    %cst_64 = arith.constant 1.000000e+00 : f32
    %234 = vector.broadcast %cst_64 : f32 to vector<8x128xf32>
    %235 = arith.addf %234, %233 : vector<8x128xf32>
    %236 = arith.divf %234, %235 : vector<8x128xf32>
    %237 = arith.mulf %228, %209 : vector<8x128xf32>
    %238 = arith.mulf %222, %230 : vector<8x128xf32>
    %239 = arith.addf %237, %238 : vector<8x128xf32>
    %240 = math.tanh %239 : vector<8x128xf32>
    %241 = arith.mulf %236, %240 : vector<8x128xf32>
    %c0_65 = arith.constant 0 : index
    %c0_66 = arith.constant 0 : index
    %242 = vector.load %arg2[%c0_65, %c0_66] : memref<128x128xf32, #tpu.memory_space<vmem>>, vector<128x128xf32>
    %cst_67 = arith.constant dense<0.000000e+00> : vector<8x128xf32>
    %243 = tpu.matmul %241, %242, %cst_67 {dimension_numbers = #tpu.dot_dimension_numbers<[1], [0], [0], [1], [0, 0, 1, 1], [], []>} : vector<8x128xf32>, vector<128x128xf32>, vector<8x128xf32> -> vector<8x128xf32>
    %c0_68 = arith.constant 0 : index
    %c0_69 = arith.constant 0 : index
    %244 = vector.load %arg3[%c0_68, %c0_69] : memref<1x128xf32, #tpu.memory_space<vmem>>, vector<1x128xf32>
    %245 = vector.broadcast %244 : vector<1x128xf32> to vector<8x128xf32>
    %246 = arith.addf %243, %245 : vector<8x128xf32>
    %247 = math.tanh %246 : vector<8x128xf32>
    %c0_70 = arith.constant 0 : index
    %c0_71 = arith.constant 0 : index
    %248 = vector.load %arg4[%c0_70, %c0_71] : memref<8x128xf32, #tpu.memory_space<vmem>>, vector<8x128xf32>
    tpu.vector_store %arg4[%c0_70, %c0_71], %247 {strides = array<i32>} : memref<8x128xf32, #tpu.memory_space<vmem>>, vector<8x128xf32>,
    %c0_72 = arith.constant 0 : index
    %c0_73 = arith.constant 0 : index
    %249 = vector.load %arg5[%c0_72, %c0_73] : memref<8x128xf32, #tpu.memory_space<vmem>>, vector<8x128xf32>
    tpu.vector_store %arg5[%c0_72, %c0_73], %239 {strides = array<i32>} : memref<8x128xf32, #tpu.memory_space<vmem>>, vector<8x128xf32>,
    return
  }
}

module attributes {stable_mosaic.version = 11 : i64} {
  func.func @kernel(%arg0: memref<8x8x512xf32, #tpu.memory_space<vmem>>, %arg1: memref<8x128xf32, #tpu.memory_space<vmem>>, %arg2: memref<8x128xf32, #tpu.memory_space<vmem>>, %arg3: memref<128x512xf32, #tpu.memory_space<vmem>>, %arg4: memref<8x8x128xf32, #tpu.memory_space<vmem>>) attributes {dimension_semantics = [], scalar_prefetch = 0 : i64, scratch_operands = 0 : i64, tpu.core_type = #tpu.core_type<tc>} {
    %c0 = arith.constant 0 : index
    %c0_0 = arith.constant 0 : index
    %0 = vector.load %arg1[%c0, %c0_0] : memref<8x128xf32, #tpu.memory_space<vmem>>, vector<8x128xf32>
    %c0_1 = arith.constant 0 : index
    %c0_2 = arith.constant 0 : index
    %1 = vector.load %arg2[%c0_1, %c0_2] : memref<8x128xf32, #tpu.memory_space<vmem>>, vector<8x128xf32>
    %c0_3 = arith.constant 0 : index
    %c0_4 = arith.constant 0 : index
    %c0_5 = arith.constant 0 : index
    %2 = vector.load %arg0[%c0_3, %c0_4, %c0_5] : memref<8x8x512xf32, #tpu.memory_space<vmem>>, vector<8x1x512xf32>
    %3 = vector.shape_cast %2 : vector<8x1x512xf32> to vector<8x512xf32>
    %c0_6 = arith.constant 0 : index
    %c0_7 = arith.constant 0 : index
    %4 = vector.load %arg3[%c0_6, %c0_7] : memref<128x512xf32, #tpu.memory_space<vmem>>, vector<128x512xf32>
    %cst = arith.constant dense<0.000000e+00> : vector<8x512xf32>
    %5 = tpu.matmul %0, %4, %cst {dimension_numbers = #tpu.dot_dimension_numbers<[1], [0], [0], [1], [0, 0, 1, 1], [], []>} : vector<8x128xf32>, vector<128x512xf32>, vector<8x512xf32> -> vector<8x512xf32>
    %6 = arith.addf %3, %5 : vector<8x512xf32>
    %7 = vector.extract_strided_slice %6 {offsets = [0, 0], sizes = [8, 128], strides = [1, 1]} : vector<8x512xf32> to vector<8x128xf32>
    %8 = arith.negf %7 : vector<8x128xf32>
    %9 = math.exp %8 : vector<8x128xf32>
    %cst_8 = arith.constant 1.000000e+00 : f32
    %10 = vector.broadcast %cst_8 : f32 to vector<8x128xf32>
    %11 = arith.addf %10, %9 : vector<8x128xf32>
    %12 = arith.divf %10, %11 : vector<8x128xf32>
    %13 = vector.extract_strided_slice %6 {offsets = [0, 128], sizes = [8, 128], strides = [1, 1]} : vector<8x512xf32> to vector<8x128xf32>
    %14 = arith.negf %13 : vector<8x128xf32>
    %15 = math.exp %14 : vector<8x128xf32>
    %cst_9 = arith.constant 1.000000e+00 : f32
    %16 = vector.broadcast %cst_9 : f32 to vector<8x128xf32>
    %17 = arith.addf %16, %15 : vector<8x128xf32>
    %18 = arith.divf %16, %17 : vector<8x128xf32>
    %19 = vector.extract_strided_slice %6 {offsets = [0, 256], sizes = [8, 128], strides = [1, 1]} : vector<8x512xf32> to vector<8x128xf32>
    %20 = math.tanh %19 : vector<8x128xf32>
    %21 = vector.extract_strided_slice %6 {offsets = [0, 384], sizes = [8, 128], strides = [1, 1]} : vector<8x512xf32> to vector<8x128xf32>
    %22 = arith.negf %21 : vector<8x128xf32>
    %23 = math.exp %22 : vector<8x128xf32>
    %cst_10 = arith.constant 1.000000e+00 : f32
    %24 = vector.broadcast %cst_10 : f32 to vector<8x128xf32>
    %25 = arith.addf %24, %23 : vector<8x128xf32>
    %26 = arith.divf %24, %25 : vector<8x128xf32>
    %27 = arith.mulf %18, %1 : vector<8x128xf32>
    %28 = arith.mulf %12, %20 : vector<8x128xf32>
    %29 = arith.addf %27, %28 : vector<8x128xf32>
    %30 = math.tanh %29 : vector<8x128xf32>
    %31 = arith.mulf %26, %30 : vector<8x128xf32>
    %c0_11 = arith.constant 0 : index
    %c0_12 = arith.constant 0 : index
    %c0_13 = arith.constant 0 : index
    %32 = vector.load %arg4[%c0_11, %c0_12, %c0_13] : memref<8x8x128xf32, #tpu.memory_space<vmem>>, vector<8x1x128xf32>
    %33 = vector.shape_cast %32 : vector<8x1x128xf32> to vector<8x128xf32>
    %34 = vector.shape_cast %31 : vector<8x128xf32> to vector<8x1x128xf32>
    tpu.vector_store %arg4[%c0_11, %c0_12, %c0_13], %34 {strides = array<i32>} : memref<8x8x128xf32, #tpu.memory_space<vmem>>, vector<8x1x128xf32>,
    %c0_14 = arith.constant 0 : index
    %c1 = arith.constant 1 : index
    %c0_15 = arith.constant 0 : index
    %35 = vector.load %arg0[%c0_14, %c1, %c0_15] : memref<8x8x512xf32, #tpu.memory_space<vmem>>, vector<8x1x512xf32>
    %36 = vector.shape_cast %35 : vector<8x1x512xf32> to vector<8x512xf32>
    %c0_16 = arith.constant 0 : index
    %c0_17 = arith.constant 0 : index
    %37 = vector.load %arg3[%c0_16, %c0_17] : memref<128x512xf32, #tpu.memory_space<vmem>>, vector<128x512xf32>
    %cst_18 = arith.constant dense<0.000000e+00> : vector<8x512xf32>
    %38 = tpu.matmul %31, %37, %cst_18 {dimension_numbers = #tpu.dot_dimension_numbers<[1], [0], [0], [1], [0, 0, 1, 1], [], []>} : vector<8x128xf32>, vector<128x512xf32>, vector<8x512xf32> -> vector<8x512xf32>
    %39 = arith.addf %36, %38 : vector<8x512xf32>
    %40 = vector.extract_strided_slice %39 {offsets = [0, 0], sizes = [8, 128], strides = [1, 1]} : vector<8x512xf32> to vector<8x128xf32>
    %41 = arith.negf %40 : vector<8x128xf32>
    %42 = math.exp %41 : vector<8x128xf32>
    %cst_19 = arith.constant 1.000000e+00 : f32
    %43 = vector.broadcast %cst_19 : f32 to vector<8x128xf32>
    %44 = arith.addf %43, %42 : vector<8x128xf32>
    %45 = arith.divf %43, %44 : vector<8x128xf32>
    %46 = vector.extract_strided_slice %39 {offsets = [0, 128], sizes = [8, 128], strides = [1, 1]} : vector<8x512xf32> to vector<8x128xf32>
    %47 = arith.negf %46 : vector<8x128xf32>
    %48 = math.exp %47 : vector<8x128xf32>
    %cst_20 = arith.constant 1.000000e+00 : f32
    %49 = vector.broadcast %cst_20 : f32 to vector<8x128xf32>
    %50 = arith.addf %49, %48 : vector<8x128xf32>
    %51 = arith.divf %49, %50 : vector<8x128xf32>
    %52 = vector.extract_strided_slice %39 {offsets = [0, 256], sizes = [8, 128], strides = [1, 1]} : vector<8x512xf32> to vector<8x128xf32>
    %53 = math.tanh %52 : vector<8x128xf32>
    %54 = vector.extract_strided_slice %39 {offsets = [0, 384], sizes = [8, 128], strides = [1, 1]} : vector<8x512xf32> to vector<8x128xf32>
    %55 = arith.negf %54 : vector<8x128xf32>
    %56 = math.exp %55 : vector<8x128xf32>
    %cst_21 = arith.constant 1.000000e+00 : f32
    %57 = vector.broadcast %cst_21 : f32 to vector<8x128xf32>
    %58 = arith.addf %57, %56 : vector<8x128xf32>
    %59 = arith.divf %57, %58 : vector<8x128xf32>
    %60 = arith.mulf %51, %29 : vector<8x128xf32>
    %61 = arith.mulf %45, %53 : vector<8x128xf32>
    %62 = arith.addf %60, %61 : vector<8x128xf32>
    %63 = math.tanh %62 : vector<8x128xf32>
    %64 = arith.mulf %59, %63 : vector<8x128xf32>
    %c0_22 = arith.constant 0 : index
    %c1_23 = arith.constant 1 : index
    %c0_24 = arith.constant 0 : index
    %65 = vector.load %arg4[%c0_22, %c1_23, %c0_24] : memref<8x8x128xf32, #tpu.memory_space<vmem>>, vector<8x1x128xf32>
    %66 = vector.shape_cast %65 : vector<8x1x128xf32> to vector<8x128xf32>
    %67 = vector.shape_cast %64 : vector<8x128xf32> to vector<8x1x128xf32>
    tpu.vector_store %arg4[%c0_22, %c1_23, %c0_24], %67 {strides = array<i32>} : memref<8x8x128xf32, #tpu.memory_space<vmem>>, vector<8x1x128xf32>,
    %c0_25 = arith.constant 0 : index
    %c2 = arith.constant 2 : index
    %c0_26 = arith.constant 0 : index
    %68 = vector.load %arg0[%c0_25, %c2, %c0_26] : memref<8x8x512xf32, #tpu.memory_space<vmem>>, vector<8x1x512xf32>
    %69 = vector.shape_cast %68 : vector<8x1x512xf32> to vector<8x512xf32>
    %c0_27 = arith.constant 0 : index
    %c0_28 = arith.constant 0 : index
    %70 = vector.load %arg3[%c0_27, %c0_28] : memref<128x512xf32, #tpu.memory_space<vmem>>, vector<128x512xf32>
    %cst_29 = arith.constant dense<0.000000e+00> : vector<8x512xf32>
    %71 = tpu.matmul %64, %70, %cst_29 {dimension_numbers = #tpu.dot_dimension_numbers<[1], [0], [0], [1], [0, 0, 1, 1], [], []>} : vector<8x128xf32>, vector<128x512xf32>, vector<8x512xf32> -> vector<8x512xf32>
    %72 = arith.addf %69, %71 : vector<8x512xf32>
    %73 = vector.extract_strided_slice %72 {offsets = [0, 0], sizes = [8, 128], strides = [1, 1]} : vector<8x512xf32> to vector<8x128xf32>
    %74 = arith.negf %73 : vector<8x128xf32>
    %75 = math.exp %74 : vector<8x128xf32>
    %cst_30 = arith.constant 1.000000e+00 : f32
    %76 = vector.broadcast %cst_30 : f32 to vector<8x128xf32>
    %77 = arith.addf %76, %75 : vector<8x128xf32>
    %78 = arith.divf %76, %77 : vector<8x128xf32>
    %79 = vector.extract_strided_slice %72 {offsets = [0, 128], sizes = [8, 128], strides = [1, 1]} : vector<8x512xf32> to vector<8x128xf32>
    %80 = arith.negf %79 : vector<8x128xf32>
    %81 = math.exp %80 : vector<8x128xf32>
    %cst_31 = arith.constant 1.000000e+00 : f32
    %82 = vector.broadcast %cst_31 : f32 to vector<8x128xf32>
    %83 = arith.addf %82, %81 : vector<8x128xf32>
    %84 = arith.divf %82, %83 : vector<8x128xf32>
    %85 = vector.extract_strided_slice %72 {offsets = [0, 256], sizes = [8, 128], strides = [1, 1]} : vector<8x512xf32> to vector<8x128xf32>
    %86 = math.tanh %85 : vector<8x128xf32>
    %87 = vector.extract_strided_slice %72 {offsets = [0, 384], sizes = [8, 128], strides = [1, 1]} : vector<8x512xf32> to vector<8x128xf32>
    %88 = arith.negf %87 : vector<8x128xf32>
    %89 = math.exp %88 : vector<8x128xf32>
    %cst_32 = arith.constant 1.000000e+00 : f32
    %90 = vector.broadcast %cst_32 : f32 to vector<8x128xf32>
    %91 = arith.addf %90, %89 : vector<8x128xf32>
    %92 = arith.divf %90, %91 : vector<8x128xf32>
    %93 = arith.mulf %84, %62 : vector<8x128xf32>
    %94 = arith.mulf %78, %86 : vector<8x128xf32>
    %95 = arith.addf %93, %94 : vector<8x128xf32>
    %96 = math.tanh %95 : vector<8x128xf32>
    %97 = arith.mulf %92, %96 : vector<8x128xf32>
    %c0_33 = arith.constant 0 : index
    %c2_34 = arith.constant 2 : index
    %c0_35 = arith.constant 0 : index
    %98 = vector.load %arg4[%c0_33, %c2_34, %c0_35] : memref<8x8x128xf32, #tpu.memory_space<vmem>>, vector<8x1x128xf32>
    %99 = vector.shape_cast %98 : vector<8x1x128xf32> to vector<8x128xf32>
    %100 = vector.shape_cast %97 : vector<8x128xf32> to vector<8x1x128xf32>
    tpu.vector_store %arg4[%c0_33, %c2_34, %c0_35], %100 {strides = array<i32>} : memref<8x8x128xf32, #tpu.memory_space<vmem>>, vector<8x1x128xf32>,
    %c0_36 = arith.constant 0 : index
    %c3 = arith.constant 3 : index
    %c0_37 = arith.constant 0 : index
    %101 = vector.load %arg0[%c0_36, %c3, %c0_37] : memref<8x8x512xf32, #tpu.memory_space<vmem>>, vector<8x1x512xf32>
    %102 = vector.shape_cast %101 : vector<8x1x512xf32> to vector<8x512xf32>
    %c0_38 = arith.constant 0 : index
    %c0_39 = arith.constant 0 : index
    %103 = vector.load %arg3[%c0_38, %c0_39] : memref<128x512xf32, #tpu.memory_space<vmem>>, vector<128x512xf32>
    %cst_40 = arith.constant dense<0.000000e+00> : vector<8x512xf32>
    %104 = tpu.matmul %97, %103, %cst_40 {dimension_numbers = #tpu.dot_dimension_numbers<[1], [0], [0], [1], [0, 0, 1, 1], [], []>} : vector<8x128xf32>, vector<128x512xf32>, vector<8x512xf32> -> vector<8x512xf32>
    %105 = arith.addf %102, %104 : vector<8x512xf32>
    %106 = vector.extract_strided_slice %105 {offsets = [0, 0], sizes = [8, 128], strides = [1, 1]} : vector<8x512xf32> to vector<8x128xf32>
    %107 = arith.negf %106 : vector<8x128xf32>
    %108 = math.exp %107 : vector<8x128xf32>
    %cst_41 = arith.constant 1.000000e+00 : f32
    %109 = vector.broadcast %cst_41 : f32 to vector<8x128xf32>
    %110 = arith.addf %109, %108 : vector<8x128xf32>
    %111 = arith.divf %109, %110 : vector<8x128xf32>
    %112 = vector.extract_strided_slice %105 {offsets = [0, 128], sizes = [8, 128], strides = [1, 1]} : vector<8x512xf32> to vector<8x128xf32>
    %113 = arith.negf %112 : vector<8x128xf32>
    %114 = math.exp %113 : vector<8x128xf32>
    %cst_42 = arith.constant 1.000000e+00 : f32
    %115 = vector.broadcast %cst_42 : f32 to vector<8x128xf32>
    %116 = arith.addf %115, %114 : vector<8x128xf32>
    %117 = arith.divf %115, %116 : vector<8x128xf32>
    %118 = vector.extract_strided_slice %105 {offsets = [0, 256], sizes = [8, 128], strides = [1, 1]} : vector<8x512xf32> to vector<8x128xf32>
    %119 = math.tanh %118 : vector<8x128xf32>
    %120 = vector.extract_strided_slice %105 {offsets = [0, 384], sizes = [8, 128], strides = [1, 1]} : vector<8x512xf32> to vector<8x128xf32>
    %121 = arith.negf %120 : vector<8x128xf32>
    %122 = math.exp %121 : vector<8x128xf32>
    %cst_43 = arith.constant 1.000000e+00 : f32
    %123 = vector.broadcast %cst_43 : f32 to vector<8x128xf32>
    %124 = arith.addf %123, %122 : vector<8x128xf32>
    %125 = arith.divf %123, %124 : vector<8x128xf32>
    %126 = arith.mulf %117, %95 : vector<8x128xf32>
    %127 = arith.mulf %111, %119 : vector<8x128xf32>
    %128 = arith.addf %126, %127 : vector<8x128xf32>
    %129 = math.tanh %128 : vector<8x128xf32>
    %130 = arith.mulf %125, %129 : vector<8x128xf32>
    %c0_44 = arith.constant 0 : index
    %c3_45 = arith.constant 3 : index
    %c0_46 = arith.constant 0 : index
    %131 = vector.load %arg4[%c0_44, %c3_45, %c0_46] : memref<8x8x128xf32, #tpu.memory_space<vmem>>, vector<8x1x128xf32>
    %132 = vector.shape_cast %131 : vector<8x1x128xf32> to vector<8x128xf32>
    %133 = vector.shape_cast %130 : vector<8x128xf32> to vector<8x1x128xf32>
    tpu.vector_store %arg4[%c0_44, %c3_45, %c0_46], %133 {strides = array<i32>} : memref<8x8x128xf32, #tpu.memory_space<vmem>>, vector<8x1x128xf32>,
    %c0_47 = arith.constant 0 : index
    %c4 = arith.constant 4 : index
    %c0_48 = arith.constant 0 : index
    %134 = vector.load %arg0[%c0_47, %c4, %c0_48] : memref<8x8x512xf32, #tpu.memory_space<vmem>>, vector<8x1x512xf32>
    %135 = vector.shape_cast %134 : vector<8x1x512xf32> to vector<8x512xf32>
    %c0_49 = arith.constant 0 : index
    %c0_50 = arith.constant 0 : index
    %136 = vector.load %arg3[%c0_49, %c0_50] : memref<128x512xf32, #tpu.memory_space<vmem>>, vector<128x512xf32>
    %cst_51 = arith.constant dense<0.000000e+00> : vector<8x512xf32>
    %137 = tpu.matmul %130, %136, %cst_51 {dimension_numbers = #tpu.dot_dimension_numbers<[1], [0], [0], [1], [0, 0, 1, 1], [], []>} : vector<8x128xf32>, vector<128x512xf32>, vector<8x512xf32> -> vector<8x512xf32>
    %138 = arith.addf %135, %137 : vector<8x512xf32>
    %139 = vector.extract_strided_slice %138 {offsets = [0, 0], sizes = [8, 128], strides = [1, 1]} : vector<8x512xf32> to vector<8x128xf32>
    %140 = arith.negf %139 : vector<8x128xf32>
    %141 = math.exp %140 : vector<8x128xf32>
    %cst_52 = arith.constant 1.000000e+00 : f32
    %142 = vector.broadcast %cst_52 : f32 to vector<8x128xf32>
    %143 = arith.addf %142, %141 : vector<8x128xf32>
    %144 = arith.divf %142, %143 : vector<8x128xf32>
    %145 = vector.extract_strided_slice %138 {offsets = [0, 128], sizes = [8, 128], strides = [1, 1]} : vector<8x512xf32> to vector<8x128xf32>
    %146 = arith.negf %145 : vector<8x128xf32>
    %147 = math.exp %146 : vector<8x128xf32>
    %cst_53 = arith.constant 1.000000e+00 : f32
    %148 = vector.broadcast %cst_53 : f32 to vector<8x128xf32>
    %149 = arith.addf %148, %147 : vector<8x128xf32>
    %150 = arith.divf %148, %149 : vector<8x128xf32>
    %151 = vector.extract_strided_slice %138 {offsets = [0, 256], sizes = [8, 128], strides = [1, 1]} : vector<8x512xf32> to vector<8x128xf32>
    %152 = math.tanh %151 : vector<8x128xf32>
    %153 = vector.extract_strided_slice %138 {offsets = [0, 384], sizes = [8, 128], strides = [1, 1]} : vector<8x512xf32> to vector<8x128xf32>
    %154 = arith.negf %153 : vector<8x128xf32>
    %155 = math.exp %154 : vector<8x128xf32>
    %cst_54 = arith.constant 1.000000e+00 : f32
    %156 = vector.broadcast %cst_54 : f32 to vector<8x128xf32>
    %157 = arith.addf %156, %155 : vector<8x128xf32>
    %158 = arith.divf %156, %157 : vector<8x128xf32>
    %159 = arith.mulf %150, %128 : vector<8x128xf32>
    %160 = arith.mulf %144, %152 : vector<8x128xf32>
    %161 = arith.addf %159, %160 : vector<8x128xf32>
    %162 = math.tanh %161 : vector<8x128xf32>
    %163 = arith.mulf %158, %162 : vector<8x128xf32>
    %c0_55 = arith.constant 0 : index
    %c4_56 = arith.constant 4 : index
    %c0_57 = arith.constant 0 : index
    %164 = vector.load %arg4[%c0_55, %c4_56, %c0_57] : memref<8x8x128xf32, #tpu.memory_space<vmem>>, vector<8x1x128xf32>
    %165 = vector.shape_cast %164 : vector<8x1x128xf32> to vector<8x128xf32>
    %166 = vector.shape_cast %163 : vector<8x128xf32> to vector<8x1x128xf32>
    tpu.vector_store %arg4[%c0_55, %c4_56, %c0_57], %166 {strides = array<i32>} : memref<8x8x128xf32, #tpu.memory_space<vmem>>, vector<8x1x128xf32>,
    %c0_58 = arith.constant 0 : index
    %c5 = arith.constant 5 : index
    %c0_59 = arith.constant 0 : index
    %167 = vector.load %arg0[%c0_58, %c5, %c0_59] : memref<8x8x512xf32, #tpu.memory_space<vmem>>, vector<8x1x512xf32>
    %168 = vector.shape_cast %167 : vector<8x1x512xf32> to vector<8x512xf32>
    %c0_60 = arith.constant 0 : index
    %c0_61 = arith.constant 0 : index
    %169 = vector.load %arg3[%c0_60, %c0_61] : memref<128x512xf32, #tpu.memory_space<vmem>>, vector<128x512xf32>
    %cst_62 = arith.constant dense<0.000000e+00> : vector<8x512xf32>
    %170 = tpu.matmul %163, %169, %cst_62 {dimension_numbers = #tpu.dot_dimension_numbers<[1], [0], [0], [1], [0, 0, 1, 1], [], []>} : vector<8x128xf32>, vector<128x512xf32>, vector<8x512xf32> -> vector<8x512xf32>
    %171 = arith.addf %168, %170 : vector<8x512xf32>
    %172 = vector.extract_strided_slice %171 {offsets = [0, 0], sizes = [8, 128], strides = [1, 1]} : vector<8x512xf32> to vector<8x128xf32>
    %173 = arith.negf %172 : vector<8x128xf32>
    %174 = math.exp %173 : vector<8x128xf32>
    %cst_63 = arith.constant 1.000000e+00 : f32
    %175 = vector.broadcast %cst_63 : f32 to vector<8x128xf32>
    %176 = arith.addf %175, %174 : vector<8x128xf32>
    %177 = arith.divf %175, %176 : vector<8x128xf32>
    %178 = vector.extract_strided_slice %171 {offsets = [0, 128], sizes = [8, 128], strides = [1, 1]} : vector<8x512xf32> to vector<8x128xf32>
    %179 = arith.negf %178 : vector<8x128xf32>
    %180 = math.exp %179 : vector<8x128xf32>
    %cst_64 = arith.constant 1.000000e+00 : f32
    %181 = vector.broadcast %cst_64 : f32 to vector<8x128xf32>
    %182 = arith.addf %181, %180 : vector<8x128xf32>
    %183 = arith.divf %181, %182 : vector<8x128xf32>
    %184 = vector.extract_strided_slice %171 {offsets = [0, 256], sizes = [8, 128], strides = [1, 1]} : vector<8x512xf32> to vector<8x128xf32>
    %185 = math.tanh %184 : vector<8x128xf32>
    %186 = vector.extract_strided_slice %171 {offsets = [0, 384], sizes = [8, 128], strides = [1, 1]} : vector<8x512xf32> to vector<8x128xf32>
    %187 = arith.negf %186 : vector<8x128xf32>
    %188 = math.exp %187 : vector<8x128xf32>
    %cst_65 = arith.constant 1.000000e+00 : f32
    %189 = vector.broadcast %cst_65 : f32 to vector<8x128xf32>
    %190 = arith.addf %189, %188 : vector<8x128xf32>
    %191 = arith.divf %189, %190 : vector<8x128xf32>
    %192 = arith.mulf %183, %161 : vector<8x128xf32>
    %193 = arith.mulf %177, %185 : vector<8x128xf32>
    %194 = arith.addf %192, %193 : vector<8x128xf32>
    %195 = math.tanh %194 : vector<8x128xf32>
    %196 = arith.mulf %191, %195 : vector<8x128xf32>
    %c0_66 = arith.constant 0 : index
    %c5_67 = arith.constant 5 : index
    %c0_68 = arith.constant 0 : index
    %197 = vector.load %arg4[%c0_66, %c5_67, %c0_68] : memref<8x8x128xf32, #tpu.memory_space<vmem>>, vector<8x1x128xf32>
    %198 = vector.shape_cast %197 : vector<8x1x128xf32> to vector<8x128xf32>
    %199 = vector.shape_cast %196 : vector<8x128xf32> to vector<8x1x128xf32>
    tpu.vector_store %arg4[%c0_66, %c5_67, %c0_68], %199 {strides = array<i32>} : memref<8x8x128xf32, #tpu.memory_space<vmem>>, vector<8x1x128xf32>,
    %c0_69 = arith.constant 0 : index
    %c6 = arith.constant 6 : index
    %c0_70 = arith.constant 0 : index
    %200 = vector.load %arg0[%c0_69, %c6, %c0_70] : memref<8x8x512xf32, #tpu.memory_space<vmem>>, vector<8x1x512xf32>
    %201 = vector.shape_cast %200 : vector<8x1x512xf32> to vector<8x512xf32>
    %c0_71 = arith.constant 0 : index
    %c0_72 = arith.constant 0 : index
    %202 = vector.load %arg3[%c0_71, %c0_72] : memref<128x512xf32, #tpu.memory_space<vmem>>, vector<128x512xf32>
    %cst_73 = arith.constant dense<0.000000e+00> : vector<8x512xf32>
    %203 = tpu.matmul %196, %202, %cst_73 {dimension_numbers = #tpu.dot_dimension_numbers<[1], [0], [0], [1], [0, 0, 1, 1], [], []>} : vector<8x128xf32>, vector<128x512xf32>, vector<8x512xf32> -> vector<8x512xf32>
    %204 = arith.addf %201, %203 : vector<8x512xf32>
    %205 = vector.extract_strided_slice %204 {offsets = [0, 0], sizes = [8, 128], strides = [1, 1]} : vector<8x512xf32> to vector<8x128xf32>
    %206 = arith.negf %205 : vector<8x128xf32>
    %207 = math.exp %206 : vector<8x128xf32>
    %cst_74 = arith.constant 1.000000e+00 : f32
    %208 = vector.broadcast %cst_74 : f32 to vector<8x128xf32>
    %209 = arith.addf %208, %207 : vector<8x128xf32>
    %210 = arith.divf %208, %209 : vector<8x128xf32>
    %211 = vector.extract_strided_slice %204 {offsets = [0, 128], sizes = [8, 128], strides = [1, 1]} : vector<8x512xf32> to vector<8x128xf32>
    %212 = arith.negf %211 : vector<8x128xf32>
    %213 = math.exp %212 : vector<8x128xf32>
    %cst_75 = arith.constant 1.000000e+00 : f32
    %214 = vector.broadcast %cst_75 : f32 to vector<8x128xf32>
    %215 = arith.addf %214, %213 : vector<8x128xf32>
    %216 = arith.divf %214, %215 : vector<8x128xf32>
    %217 = vector.extract_strided_slice %204 {offsets = [0, 256], sizes = [8, 128], strides = [1, 1]} : vector<8x512xf32> to vector<8x128xf32>
    %218 = math.tanh %217 : vector<8x128xf32>
    %219 = vector.extract_strided_slice %204 {offsets = [0, 384], sizes = [8, 128], strides = [1, 1]} : vector<8x512xf32> to vector<8x128xf32>
    %220 = arith.negf %219 : vector<8x128xf32>
    %221 = math.exp %220 : vector<8x128xf32>
    %cst_76 = arith.constant 1.000000e+00 : f32
    %222 = vector.broadcast %cst_76 : f32 to vector<8x128xf32>
    %223 = arith.addf %222, %221 : vector<8x128xf32>
    %224 = arith.divf %222, %223 : vector<8x128xf32>
    %225 = arith.mulf %216, %194 : vector<8x128xf32>
    %226 = arith.mulf %210, %218 : vector<8x128xf32>
    %227 = arith.addf %225, %226 : vector<8x128xf32>
    %228 = math.tanh %227 : vector<8x128xf32>
    %229 = arith.mulf %224, %228 : vector<8x128xf32>
    %c0_77 = arith.constant 0 : index
    %c6_78 = arith.constant 6 : index
    %c0_79 = arith.constant 0 : index
    %230 = vector.load %arg4[%c0_77, %c6_78, %c0_79] : memref<8x8x128xf32, #tpu.memory_space<vmem>>, vector<8x1x128xf32>
    %231 = vector.shape_cast %230 : vector<8x1x128xf32> to vector<8x128xf32>
    %232 = vector.shape_cast %229 : vector<8x128xf32> to vector<8x1x128xf32>
    tpu.vector_store %arg4[%c0_77, %c6_78, %c0_79], %232 {strides = array<i32>} : memref<8x8x128xf32, #tpu.memory_space<vmem>>, vector<8x1x128xf32>,
    %c0_80 = arith.constant 0 : index
    %c7 = arith.constant 7 : index
    %c0_81 = arith.constant 0 : index
    %233 = vector.load %arg0[%c0_80, %c7, %c0_81] : memref<8x8x512xf32, #tpu.memory_space<vmem>>, vector<8x1x512xf32>
    %234 = vector.shape_cast %233 : vector<8x1x512xf32> to vector<8x512xf32>
    %c0_82 = arith.constant 0 : index
    %c0_83 = arith.constant 0 : index
    %235 = vector.load %arg3[%c0_82, %c0_83] : memref<128x512xf32, #tpu.memory_space<vmem>>, vector<128x512xf32>
    %cst_84 = arith.constant dense<0.000000e+00> : vector<8x512xf32>
    %236 = tpu.matmul %229, %235, %cst_84 {dimension_numbers = #tpu.dot_dimension_numbers<[1], [0], [0], [1], [0, 0, 1, 1], [], []>} : vector<8x128xf32>, vector<128x512xf32>, vector<8x512xf32> -> vector<8x512xf32>
    %237 = arith.addf %234, %236 : vector<8x512xf32>
    %238 = vector.extract_strided_slice %237 {offsets = [0, 0], sizes = [8, 128], strides = [1, 1]} : vector<8x512xf32> to vector<8x128xf32>
    %239 = arith.negf %238 : vector<8x128xf32>
    %240 = math.exp %239 : vector<8x128xf32>
    %cst_85 = arith.constant 1.000000e+00 : f32
    %241 = vector.broadcast %cst_85 : f32 to vector<8x128xf32>
    %242 = arith.addf %241, %240 : vector<8x128xf32>
    %243 = arith.divf %241, %242 : vector<8x128xf32>
    %244 = vector.extract_strided_slice %237 {offsets = [0, 128], sizes = [8, 128], strides = [1, 1]} : vector<8x512xf32> to vector<8x128xf32>
    %245 = arith.negf %244 : vector<8x128xf32>
    %246 = math.exp %245 : vector<8x128xf32>
    %cst_86 = arith.constant 1.000000e+00 : f32
    %247 = vector.broadcast %cst_86 : f32 to vector<8x128xf32>
    %248 = arith.addf %247, %246 : vector<8x128xf32>
    %249 = arith.divf %247, %248 : vector<8x128xf32>
    %250 = vector.extract_strided_slice %237 {offsets = [0, 256], sizes = [8, 128], strides = [1, 1]} : vector<8x512xf32> to vector<8x128xf32>
    %251 = math.tanh %250 : vector<8x128xf32>
    %252 = vector.extract_strided_slice %237 {offsets = [0, 384], sizes = [8, 128], strides = [1, 1]} : vector<8x512xf32> to vector<8x128xf32>
    %253 = arith.negf %252 : vector<8x128xf32>
    %254 = math.exp %253 : vector<8x128xf32>
    %cst_87 = arith.constant 1.000000e+00 : f32
    %255 = vector.broadcast %cst_87 : f32 to vector<8x128xf32>
    %256 = arith.addf %255, %254 : vector<8x128xf32>
    %257 = arith.divf %255, %256 : vector<8x128xf32>
    %258 = arith.mulf %249, %227 : vector<8x128xf32>
    %259 = arith.mulf %243, %251 : vector<8x128xf32>
    %260 = arith.addf %258, %259 : vector<8x128xf32>
    %261 = math.tanh %260 : vector<8x128xf32>
    %262 = arith.mulf %257, %261 : vector<8x128xf32>
    %c0_88 = arith.constant 0 : index
    %c7_89 = arith.constant 7 : index
    %c0_90 = arith.constant 0 : index
    %263 = vector.load %arg4[%c0_88, %c7_89, %c0_90] : memref<8x8x128xf32, #tpu.memory_space<vmem>>, vector<8x1x128xf32>
    %264 = vector.shape_cast %263 : vector<8x1x128xf32> to vector<8x128xf32>
    %265 = vector.shape_cast %262 : vector<8x128xf32> to vector<8x1x128xf32>
    tpu.vector_store %arg4[%c0_88, %c7_89, %c0_90], %265 {strides = array<i32>} : memref<8x8x128xf32, #tpu.memory_space<vmem>>, vector<8x1x128xf32>,
    return
  }
}

module attributes {stable_mosaic.version = 11 : i64} {
  func.func @kernel(%arg0: i32, %arg1: i32, %arg2: memref<64x128xf32, #tpu.memory_space<vmem>>, %arg3: memref<128x128xf32, #tpu.memory_space<vmem>>, %arg4: memref<1x128xf32, #tpu.memory_space<vmem>>, %arg5: memref<64x128xf32, #tpu.memory_space<vmem>>) attributes {dimension_semantics = [#tpu.dimension_semantics<parallel>, #tpu.dimension_semantics<parallel>], iteration_bounds = array<i64: 1, 1>, scalar_prefetch = 0 : i64, scratch_operands = 0 : i64, tpu.core_type = #tpu.core_type<tc>, window_params = [{transform_indices = @transform_0, window_bounds = array<i64: 64, 128>}, {transform_indices = @transform_1, window_bounds = array<i64: 128, 128>}, {transform_indices = @transform_2, window_bounds = array<i64: 1, 128>}, {transform_indices = @transform_3, window_bounds = array<i64: 64, 128>}]} {
    %c0 = arith.constant 0 : index
    %c0_0 = arith.constant 0 : index
    %0 = vector.load %arg2[%c0, %c0_0] : memref<64x128xf32, #tpu.memory_space<vmem>>, vector<64x128xf32>
    %c0_1 = arith.constant 0 : index
    %c0_2 = arith.constant 0 : index
    %1 = vector.load %arg3[%c0_1, %c0_2] : memref<128x128xf32, #tpu.memory_space<vmem>>, vector<128x128xf32>
    %cst = arith.constant dense<0.000000e+00> : vector<64x128xf32>
    %2 = tpu.matmul %0, %1, %cst {dimension_numbers = #tpu.dot_dimension_numbers<[1], [0], [0], [1], [0, 0, 1, 1], [], []>} : vector<64x128xf32>, vector<128x128xf32>, vector<64x128xf32> -> vector<64x128xf32>
    %c0_3 = arith.constant 0 : index
    %c0_4 = arith.constant 0 : index
    %3 = vector.load %arg4[%c0_3, %c0_4] : memref<1x128xf32, #tpu.memory_space<vmem>>, vector<1x128xf32>
    %4 = vector.broadcast %3 : vector<1x128xf32> to vector<64x128xf32>
    %5 = arith.addf %2, %4 : vector<64x128xf32>
    %c0_5 = arith.constant 0 : index
    %c0_6 = arith.constant 0 : index
    %6 = vector.load %arg5[%c0_5, %c0_6] : memref<64x128xf32, #tpu.memory_space<vmem>>, vector<64x128xf32>
    tpu.vector_store %arg5[%c0_5, %c0_6], %5 {strides = array<i32>} : memref<64x128xf32, #tpu.memory_space<vmem>>, vector<64x128xf32>,
    return
  }
  func.func @transform_0(%arg0: i32, %arg1: i32) -> (i32, i32) {
    %c0_i32 = arith.constant 0 : i32
    %c0_i32_0 = arith.constant 0 : i32
    return %arg0, %c0_i32 : i32, i32
  }
  func.func @transform_1(%arg0: i32, %arg1: i32) -> (i32, i32) {
    %c0_i32 = arith.constant 0 : i32
    %c0_i32_0 = arith.constant 0 : i32
    return %c0_i32, %arg1 : i32, i32
  }
  func.func @transform_2(%arg0: i32, %arg1: i32) -> (i32, i32) {
    %c0_i32 = arith.constant 0 : i32
    %c0_i32_0 = arith.constant 0 : i32
    return %c0_i32, %arg1 : i32, i32
  }
  func.func @transform_3(%arg0: i32, %arg1: i32) -> (i32, i32) {
    %c0_i32 = arith.constant 0 : i32
    return %arg0, %arg1 : i32, i32
  }
}

</mosaic_0001>

<llo_original>
// kernel: seq2seq_forward.5
$region0: #{seq2seq_forward.5}
  #allocation0 [shape = 'u32[]', space=smem, size = 0x4, offset = 0x4, fixed_abs, tag = 'smem constant byte address 0x4 - core index']
  #allocation1 [shape = 'u32[144,128]{1,0:T(1,128)}', space=vmem, size = 0x12000, scoped, tag = 'internal scratch']
  %s0 = inlined_call_operand.hbm [shape: f32[64,32], index: 0, kind: input, shape index: {}]
  %s1 = inlined_call_operand.hbm [shape: f32[32,512], index: 1, kind: input, shape index: {}]
  %s2 = inlined_call_operand.hbm [shape: f32[1,512], index: 2, kind: input, shape index: {}]
  %s3 = inlined_call_operand.hbm [shape: f32[64,512], index: 3, kind: output, shape index: {}]
  %s4 = sld [smem:[#allocation0]]
  $region34: #{seq2seq_forward.5} parent=0
    _
  %s6 = ssub.s32 1, %s4
  %s7 = scalar_select 0, %s6, %s4
  $region1: #{seq2seq_forward.5} parent=0
    #allocation2 [shape = 'u8[32768]{0}', space=vmem, size = 0x8000, scoped, tag = 'input window, operand 0, single buffered']
    #allocation3 [shape = 's32[1]{0}', space=sflag, size = 0x4, scoped, tag = 'scoped memory for seq2seq_forward.5']
    #allocation4 [shape = 's32[1]{0}', space=sflag, size = 0x4, scoped, tag = 'scoped memory for seq2seq_forward.5']
    #allocation5 [shape = 'u8[65536]{0}', space=vmem, size = 0x10000, scoped, tag = 'input window, operand 1, single buffered']
    #allocation6 [shape = 's32[1]{0}', space=sflag, size = 0x4, scoped, tag = 'scoped memory for seq2seq_forward.5']
    #allocation7 [shape = 'u8[2048]{0}', space=vmem, size = 0x800, scoped, tag = 'input window, operand 2, single buffered']
    #allocation8 [shape = 'u8[131072]{0}', space=vmem, size = 0x20000, scoped, tag = 'output window, operand 0, single buffered']
    %8 = vsyncpa [#allocation3], 0
    %9 = vsyncpa [#allocation6], 0
    %10 = vsyncpa [#allocation4], 0
    // Predicated region
    $region2: #{seq2seq_forward.5} parent=1 // pred_check
      _
    $region3: #{seq2seq_forward.5} parent=1 // pred_check_branch
      %12 = sbr.rel (0) target = $region5
    $region4: #{seq2seq_forward.5} parent=1 // pred_region
      %s14 = ssub.s32 1024, 1024
      %15 = vsyncadd [#allocation3], %s14
      %s16 = sshll.u32 [#allocation2], 4
      %s17 = int_to_ptr.vmem [resolvable:$true] %s16
      %22 = dma.hbm_to_vmem [thread:$0]  %s0, 1024, %s17, [#allocation3], 128, 128, 8
    $region5: #{seq2seq_forward.5} parent=1 // pred_fallthru
      _
    // Predicated region
    $region6: #{seq2seq_forward.5} parent=1 // pred_check
      _
    $region7: #{seq2seq_forward.5} parent=1 // pred_check_branch
      %24 = sbr.rel (0) target = $region9
    $region8: #{seq2seq_forward.5} parent=1 // pred_region
      %s26 = ssub.s32 2048, 2048
      %27 = vsyncadd [#allocation6], %s26
      %s28 = sshll.u32 [#allocation5], 4
      %s29 = int_to_ptr.vmem [resolvable:$true] %s28
      %34 = dma.hbm_to_vmem [thread:$0]  %s1, 2048, %s29, [#allocation6], 512, 512, 32
    $region9: #{seq2seq_forward.5} parent=1 // pred_fallthru
      _
    // Predicated region
    $region10: #{seq2seq_forward.5} parent=1 // pred_check
      _
    $region11: #{seq2seq_forward.5} parent=1 // pred_check_branch
      %36 = sbr.rel (0) target = $region13
    $region12: #{seq2seq_forward.5} parent=1 // pred_region
      %s38 = ssub.s32 64, 64
      %39 = vsyncadd [#allocation6], %s38
      %s41 = sshll.u32 [#allocation7], 4
      %s42 = int_to_ptr.vmem [resolvable:$true] %s41
      %44 = dma.hbm_to_vmem [thread:$0]  %s2, 64, %s42, [#allocation6]
    $region13: #{seq2seq_forward.5} parent=1 // pred_fallthru
      _
    // Predicated region
    $region14: #{seq2seq_forward.5} parent=1 // pred_check
      _
    $region15: #{seq2seq_forward.5} parent=1 // pred_check_branch
      %46 = sbr.rel (0) target = $region17
    $region16: #{seq2seq_forward.5} parent=1 // pred_region
      %47 = dma.done [#allocation3], 1024
    $region17: #{seq2seq_forward.5} parent=1 // pred_fallthru
      _
    // Predicated region
    $region18: #{seq2seq_forward.5} parent=1 // pred_check
      _
    $region19: #{seq2seq_forward.5} parent=1 // pred_check_branch
      %49 = sbr.rel (0) target = $region21
    $region20: #{seq2seq_forward.5} parent=1 // pred_region
      %50 = dma.done [#allocation6], 2048
    $region21: #{seq2seq_forward.5} parent=1 // pred_fallthru
      _
    // Predicated region
    $region22: #{seq2seq_forward.5} parent=1 // pred_check
      _
    $region23: #{seq2seq_forward.5} parent=1 // pred_check_branch
      %52 = sbr.rel (0) target = $region25
    $region24: #{seq2seq_forward.5} parent=1 // pred_region
      %53 = dma.done [#allocation6], 64
    $region25: #{seq2seq_forward.5} parent=1 // pred_fallthru
      _
    %v54 = vld [vmem:[#allocation2] sm:$0xff]
    %v55 = vld [vmem:[#allocation2 + $0x8] sm:$0xff]
    %v56 = vld [vmem:[#allocation2 + $0x10] sm:$0xff]
    %v57 = vld [vmem:[#allocation2 + $0x18] sm:$0xff]
    %v58 = vld [vmem:[#allocation2 + $0x20] sm:$0xff]
    %v59 = vld [vmem:[#allocation2 + $0x28] sm:$0xff]
    %v60 = vld [vmem:[#allocation2 + $0x30] sm:$0xff]
    %v61 = vld [vmem:[#allocation2 + $0x38] sm:$0xff]
    %v62 = vld [vmem:[#allocation5] sm:$0xff]
    %v63 = vld [vmem:[#allocation5 + $0x8] sm:$0xff]
    %v64 = vld [vmem:[#allocation5 + $0x10] sm:$0xff]
    %v65 = vld [vmem:[#allocation5 + $0x18] sm:$0xff]
    %v66 = vld [vmem:[#allocation5 + $0x20] sm:$0xff]
    %v67 = vld [vmem:[#allocation5 + $0x28] sm:$0xff]
    %v68 = vld [vmem:[#allocation5 + $0x30] sm:$0xff]
    %v69 = vld [vmem:[#allocation5 + $0x38] sm:$0xff]
    %v70 = vld [vmem:[#allocation5 + $0x40] sm:$0xff]
    %v71 = vld [vmem:[#allocation5 + $0x48] sm:$0xff]
    %v72 = vld [vmem:[#allocation5 + $0x50] sm:$0xff]
    %v73 = vld [vmem:[#allocation5 + $0x58] sm:$0xff]
    %v74 = vld [vmem:[#allocation5 + $0x60] sm:$0xff]
    %v75 = vld [vmem:[#allocation5 + $0x68] sm:$0xff]
    %v76 = vld [vmem:[#allocation5 + $0x70] sm:$0xff]
    %v77 = vld [vmem:[#allocation5 + $0x78] sm:$0xff]
    %v78 = vld [vmem:[#allocation7] sm:$0xf]
    %v80 = vlaneseq
    %v81 = vshrl.u32 %v80, 7
    %v82 = vsub.s32 0, %v81
    %v83 = vrot.slane %v78, %v82
    %v84 = vlaneseq
    %v85 = vshrl.u32 %v84, 7
    %v86 = vsub.s32 1, %v85
    %v87 = vrot.slane %v78, %v86
    %v88 = vlaneseq
    %v89 = vshrl.u32 %v88, 7
    %v90 = vsub.s32 2, %v89
    %v91 = vrot.slane %v78, %v90
    %v92 = vlaneseq
    %v93 = vshrl.u32 %v92, 7
    %v94 = vsub.s32 3, %v93
    %v95 = vrot.slane %v78, %v94
    %vm100 = vcmask 261120
    %v102 = vsel %vm100, %v54, 0
    %v105 = vsel %vm100, %v55, 0
    %v108 = vsel %vm100, %v56, 0
    %v111 = vsel %vm100, %v57, 0
    %v114 = vsel %vm100, %v58, 0
    %v117 = vsel %vm100, %v59, 0
    %v120 = vsel %vm100, %v60, 0
    %v123 = vsel %vm100, %v61, 0
    %125 = vmatprep.subr.mxu0 %v63
    %126 = vmatpush1.msra.mxu0 %v62
    %127 = vmatprep.subr.mxu0 %v67
    %128 = vmatpush1.msra.mxu0 %v66
    %129 = vmatprep.subr.mxu0 %v71
    %130 = vmatpush1.msra.mxu0 %v70
    %131 = vmatprep.subr.mxu0 %v75
    %132 = vmatpush1.msra.mxu0 %v74
    %133 = vmatprep.subr.mxu0 0.0
    %134 = vmatpush1.msra.mxu0 0.0
    %135 = vmatprep.subr.mxu0 0.0
    %136 = vmatpush1.msra.mxu0 0.0
    %137 = vmatprep.subr.mxu0 0.0
    %138 = vmatpush1.msra.mxu0 0.0
    %139 = vmatprep.subr.mxu0 0.0
    %140 = vmatpush1.msra.mxu0 0.0
    %141 = vmatprep.subr.mxu0 0.0
    %142 = vmatpush1.msra.mxu0 0.0
    %143 = vmatprep.subr.mxu0 0.0
    %144 = vmatpush1.msra.mxu0 0.0
    %145 = vmatprep.subr.mxu0 0.0
    %146 = vmatpush1.msra.mxu0 0.0
    %147 = vmatprep.subr.mxu0 0.0
    %148 = vmatpush1.msra.mxu0 0.0
    %149 = vmatprep.subr.mxu0 0.0
    %150 = vmatpush1.msra.mxu0 0.0
    %151 = vmatprep.subr.mxu0 0.0
    %152 = vmatpush1.msra.mxu0 0.0
    %153 = vmatprep.subr.mxu0 0.0
    %154 = vmatpush1.msra.mxu0 0.0
    %155 = vmatprep.subr.mxu0 0.0
    %156 = vmatpush1.msra.mxu0 0.0
    %157 = vmatprep.subr.mxu0 0.0
    %158 = vmatpush1.msra.mxu0 0.0
    %159 = vmatprep.subr.mxu0 0.0
    %160 = vmatpush1.msra.mxu0 0.0
    %161 = vmatprep.subr.mxu0 0.0
    %162 = vmatpush1.msra.mxu0 0.0
    %163 = vmatprep.subr.mxu0 0.0
    %164 = vmatpush1.msra.mxu0 0.0
    %165 = vmatprep.subr.mxu0 0.0
    %166 = vmatpush1.msra.mxu0 0.0
    %167 = vmatprep.subr.mxu0 0.0
    %168 = vmatpush1.msra.mxu0 0.0
    %169 = vmatprep.subr.mxu0 0.0
    %170 = vmatpush1.msra.mxu0 0.0
    %171 = vmatprep.subr.mxu0 0.0
    %172 = vmatpush1.msra.mxu0 0.0
    %173 = vmatprep.subr.mxu0 0.0
    %174 = vmatpush1.msra.mxu0 0.0
    %175 = vmatprep.subr.mxu0 0.0
    %176 = vmatpush1.msra.mxu0 0.0
    %177 = vmatprep.subr.mxu0 0.0
    %178 = vmatpush1.msra.mxu0 0.0
    %179 = vmatprep.subr.mxu0 0.0
    %180 = vmatpush1.msra.mxu0 0.0
    %181 = vmatprep.subr.mxu0 0.0
    %182 = vmatpush1.msra.mxu0 0.0
    %183 = vmatprep.subr.mxu0 0.0
    %184 = vmatpush1.msra.mxu0 0.0
    %185 = vmatprep.subr.mxu0 0.0
    %186 = vmatpush1.msra.mxu0 0.0
    %187 = vmatprep.subr.mxu0 0.0
    %188 = vmatpush1.msra.mxu0 0.0
    %189 = vmatprep.mubr.f32.mxu0 0.0
    %190 = vmatmul.mubr.f32.gmra.mrb[0].mxu0 %v102
    %v191 = vpop.f32.mrb[0].mxu0
    %v192 = vadd.f32 %v83, %v191
    %v193 = vpop.f32.mrb[0].mxu0
    %v194 = vadd.f32 %v87, %v193
    %195 = vmatprep.mubr.f32.mxu0 0.0
    %196 = vmatmul.mubr.f32.gmra.mrb[0].mxu0 %v105
    %v197 = vpop.f32.mrb[0].mxu0
    %v198 = vadd.f32 %v83, %v197
    %v199 = vpop.f32.mrb[0].mxu0
    %v200 = vadd.f32 %v87, %v199
    %201 = vmatprep.mubr.f32.mxu0 0.0
    %202 = vmatmul.mubr.f32.gmra.mrb[0].mxu0 %v108
    %v203 = vpop.f32.mrb[0].mxu0
    %v204 = vadd.f32 %v83, %v203
    %v205 = vpop.f32.mrb[0].mxu0
    %v206 = vadd.f32 %v87, %v205
    %207 = vmatprep.mubr.f32.mxu0 0.0
    %208 = vmatmul.mubr.f32.gmra.mrb[0].mxu0 %v111
    %v209 = vpop.f32.mrb[0].mxu0
    %v210 = vadd.f32 %v83, %v209
    %v211 = vpop.f32.mrb[0].mxu0
    %v212 = vadd.f32 %v87, %v211
    %213 = vmatprep.mubr.f32.mxu0 0.0
    %214 = vmatmul.mubr.f32.gmra.mrb[0].mxu0 %v114
    %v215 = vpop.f32.mrb[0].mxu0
    %v216 = vadd.f32 %v83, %v215
    %v217 = vpop.f32.mrb[0].mxu0
    %v218 = vadd.f32 %v87, %v217
    %219 = vmatprep.mubr.f32.mxu0 0.0
    %220 = vmatmul.mubr.f32.gmra.mrb[0].mxu0 %v117
    %v221 = vpop.f32.mrb[0].mxu0
    %v222 = vadd.f32 %v83, %v221
    %v223 = vpop.f32.mrb[0].mxu0
    %v224 = vadd.f32 %v87, %v223
    %225 = vmatprep.mubr.f32.mxu0 0.0
    %226 = vmatmul.mubr.f32.gmra.mrb[0].mxu0 %v120
    %v227 = vpop.f32.mrb[0].mxu0
    %v228 = vadd.f32 %v83, %v227
    %v229 = vpop.f32.mrb[0].mxu0
    %v230 = vadd.f32 %v87, %v229
    %231 = vmatprep.mubr.f32.mxu0 0.0
    %232 = vmatmul.mubr.f32.gmra.mrb[0].mxu0 %v123
    %v233 = vpop.f32.mrb[0].mxu0
    %v234 = vadd.f32 %v83, %v233
    %v235 = vpop.f32.mrb[0].mxu0
    %v236 = vadd.f32 %v87, %v235
    %237 = vdwg.mxu0
    %238 = vmatprep.subr.mxu0 %v65
    %239 = vmatpush1.msra.mxu0 %v64
    %240 = vmatprep.subr.mxu0 %v69
    %241 = vmatpush1.msra.mxu0 %v68
    %242 = vmatprep.subr.mxu0 %v73
    %243 = vmatpush1.msra.mxu0 %v72
    %244 = vmatprep.subr.mxu0 %v77
    %245 = vmatpush1.msra.mxu0 %v76
    %246 = vmatprep.subr.mxu0 0.0
    %247 = vmatpush1.msra.mxu0 0.0
    %248 = vmatprep.subr.mxu0 0.0
    %249 = vmatpush1.msra.mxu0 0.0
    %250 = vmatprep.subr.mxu0 0.0
    %251 = vmatpush1.msra.mxu0 0.0
    %252 = vmatprep.subr.mxu0 0.0
    %253 = vmatpush1.msra.mxu0 0.0
    %254 = vmatprep.subr.mxu0 0.0
    %255 = vmatpush1.msra.mxu0 0.0
    %256 = vmatprep.subr.mxu0 0.0
    %257 = vmatpush1.msra.mxu0 0.0
    %258 = vmatprep.subr.mxu0 0.0
    %259 = vmatpush1.msra.mxu0 0.0
    %260 = vmatprep.subr.mxu0 0.0
    %261 = vmatpush1.msra.mxu0 0.0
    %262 = vmatprep.subr.mxu0 0.0
    %263 = vmatpush1.msra.mxu0 0.0
    %264 = vmatprep.subr.mxu0 0.0
    %265 = vmatpush1.msra.mxu0 0.0
    %266 = vmatprep.subr.mxu0 0.0
    %267 = vmatpush1.msra.mxu0 0.0
    %268 = vmatprep.subr.mxu0 0.0
    %269 = vmatpush1.msra.mxu0 0.0
    %270 = vmatprep.subr.mxu0 0.0
    %271 = vmatpush1.msra.mxu0 0.0
    %272 = vmatprep.subr.mxu0 0.0
    %273 = vmatpush1.msra.mxu0 0.0
    %274 = vmatprep.subr.mxu0 0.0
    %275 = vmatpush1.msra.mxu0 0.0
    %276 = vmatprep.subr.mxu0 0.0
    %277 = vmatpush1.msra.mxu0 0.0
    %278 = vmatprep.subr.mxu0 0.0
    %279 = vmatpush1.msra.mxu0 0.0
    %280 = vmatprep.subr.mxu0 0.0
    %281 = vmatpush1.msra.mxu0 0.0
    %282 = vmatprep.subr.mxu0 0.0
    %283 = vmatpush1.msra.mxu0 0.0
    %284 = vmatprep.subr.mxu0 0.0
    %285 = vmatpush1.msra.mxu0 0.0
    %286 = vmatprep.subr.mxu0 0.0
    %287 = vmatpush1.msra.mxu0 0.0
    %288 = vmatprep.subr.mxu0 0.0
    %289 = vmatpush1.msra.mxu0 0.0
    %290 = vmatprep.subr.mxu0 0.0
    %291 = vmatpush1.msra.mxu0 0.0
    %292 = vmatprep.subr.mxu0 0.0
    %293 = vmatpush1.msra.mxu0 0.0
    %294 = vmatprep.subr.mxu0 0.0
    %295 = vmatpush1.msra.mxu0 0.0
    %296 = vmatprep.subr.mxu0 0.0
    %297 = vmatpush1.msra.mxu0 0.0
    %298 = vmatprep.subr.mxu0 0.0
    %299 = vmatpush1.msra.mxu0 0.0
    %300 = vmatprep.subr.mxu0 0.0
    %301 = vmatpush1.msra.mxu0 0.0
    %302 = vmatprep.mubr.f32.mxu0 0.0
    %303 = vmatmul.mubr.f32.gmra.mrb[0].mxu0 %v102
    %v304 = vpop.f32.mrb[0].mxu0
    %v305 = vadd.f32 %v91, %v304
    %v306 = vpop.f32.mrb[0].mxu0
    %v307 = vadd.f32 %v95, %v306
    %308 = vmatprep.mubr.f32.mxu0 0.0
    %309 = vmatmul.mubr.f32.gmra.mrb[0].mxu0 %v105
    %v310 = vpop.f32.mrb[0].mxu0
    %v311 = vadd.f32 %v91, %v310
    %v312 = vpop.f32.mrb[0].mxu0
    %v313 = vadd.f32 %v95, %v312
    %314 = vmatprep.mubr.f32.mxu0 0.0
    %315 = vmatmul.mubr.f32.gmra.mrb[0].mxu0 %v108
    %v316 = vpop.f32.mrb[0].mxu0
    %v317 = vadd.f32 %v91, %v316
    %v318 = vpop.f32.mrb[0].mxu0
    %v319 = vadd.f32 %v95, %v318
    %320 = vmatprep.mubr.f32.mxu0 0.0
    %321 = vmatmul.mubr.f32.gmra.mrb[0].mxu0 %v111
    %v322 = vpop.f32.mrb[0].mxu0
    %v323 = vadd.f32 %v91, %v322
    %v324 = vpop.f32.mrb[0].mxu0
    %v325 = vadd.f32 %v95, %v324
    %326 = vmatprep.mubr.f32.mxu0 0.0
    %327 = vmatmul.mubr.f32.gmra.mrb[0].mxu0 %v114
    %v328 = vpop.f32.mrb[0].mxu0
    %v329 = vadd.f32 %v91, %v328
    %v330 = vpop.f32.mrb[0].mxu0
    %v331 = vadd.f32 %v95, %v330
    %332 = vmatprep.mubr.f32.mxu0 0.0
    %333 = vmatmul.mubr.f32.gmra.mrb[0].mxu0 %v117
    %v334 = vpop.f32.mrb[0].mxu0
    %v335 = vadd.f32 %v91, %v334
    %v336 = vpop.f32.mrb[0].mxu0
    %v337 = vadd.f32 %v95, %v336
    %338 = vmatprep.mubr.f32.mxu0 0.0
    %339 = vmatmul.mubr.f32.gmra.mrb[0].mxu0 %v120
    %v340 = vpop.f32.mrb[0].mxu0
    %v341 = vadd.f32 %v91, %v340
    %v342 = vpop.f32.mrb[0].mxu0
    %v343 = vadd.f32 %v95, %v342
    %344 = vmatprep.mubr.f32.mxu0 0.0
    %345 = vmatmul.mubr.f32.gmra.mrb[0].mxu0 %v123
    %v346 = vpop.f32.mrb[0].mxu0
    %v347 = vadd.f32 %v91, %v346
    %v348 = vpop.f32.mrb[0].mxu0
    %v349 = vadd.f32 %v95, %v348
    %350 = vdwg.mxu0
    %351 = vst [vmem:[#allocation8] sm:$0xff] %v192
    %352 = vst [vmem:[#allocation8 + $0x8] sm:$0xff] %v194
    %353 = vst [vmem:[#allocation8 + $0x10] sm:$0xff] %v305
    %354 = vst [vmem:[#allocation8 + $0x18] sm:$0xff] %v307
    %355 = vst [vmem:[#allocation8 + $0x20] sm:$0xff] %v198
    %356 = vst [vmem:[#allocation8 + $0x28] sm:$0xff] %v200
    %357 = vst [vmem:[#allocation8 + $0x30] sm:$0xff] %v311
    %358 = vst [vmem:[#allocation8 + $0x38] sm:$0xff] %v313
    %359 = vst [vmem:[#allocation8 + $0x40] sm:$0xff] %v204
    %360 = vst [vmem:[#allocation8 + $0x48] sm:$0xff] %v206
    %361 = vst [vmem:[#allocation8 + $0x50] sm:$0xff] %v317
    %362 = vst [vmem:[#allocation8 + $0x58] sm:$0xff] %v319
    %363 = vst [vmem:[#allocation8 + $0x60] sm:$0xff] %v210
    %364 = vst [vmem:[#allocation8 + $0x68] sm:$0xff] %v212
    %365 = vst [vmem:[#allocation8 + $0x70] sm:$0xff] %v323
    %366 = vst [vmem:[#allocation8 + $0x78] sm:$0xff] %v325
    %367 = vst [vmem:[#allocation8 + $0x80] sm:$0xff] %v216
    %368 = vst [vmem:[#allocation8 + $0x88] sm:$0xff] %v218
    %369 = vst [vmem:[#allocation8 + $0x90] sm:$0xff] %v329
    %370 = vst [vmem:[#allocation8 + $0x98] sm:$0xff] %v331
    %371 = vst [vmem:[#allocation8 + $0xa0] sm:$0xff] %v222
    %372 = vst [vmem:[#allocation8 + $0xa8] sm:$0xff] %v224
    %373 = vst [vmem:[#allocation8 + $0xb0] sm:$0xff] %v335
    %374 = vst [vmem:[#allocation8 + $0xb8] sm:$0xff] %v337
    %375 = vst [vmem:[#allocation8 + $0xc0] sm:$0xff] %v228
    %376 = vst [vmem:[#allocation8 + $0xc8] sm:$0xff] %v230
    %377 = vst [vmem:[#allocation8 + $0xd0] sm:$0xff] %v341
    %378 = vst [vmem:[#allocation8 + $0xd8] sm:$0xff] %v343
    %379 = vst [vmem:[#allocation8 + $0xe0] sm:$0xff] %v234
    %380 = vst [vmem:[#allocation8 + $0xe8] sm:$0xff] %v236
    %381 = vst [vmem:[#allocation8 + $0xf0] sm:$0xff] %v347
    %382 = vst [vmem:[#allocation8 + $0xf8] sm:$0xff] %v349
    // Predicated region
    $region26: #{seq2seq_forward.5} parent=1 // pred_check
      _
    $region27: #{seq2seq_forward.5} parent=1 // pred_check_branch
      %384 = sbr.rel (0) target = $region29
    $region28: #{seq2seq_forward.5} parent=1 // pred_region
      %s386 = ssub.s32 4096, 4096
      %387 = vsyncadd [#allocation4], %s386
      %s388 = sshll.u32 [#allocation8], 4
      %s389 = int_to_ptr.vmem [resolvable:$true] %s388
      %394 = dma.vmem_to_hbm [thread:$0]  %s389, 4096, %s3, [#allocation4], 512, 512, 32
    $region29: #{seq2seq_forward.5} parent=1 // pred_fallthru
      _
    // Predicated region
    $region30: #{seq2seq_forward.5} parent=1 // pred_check
      _
    $region31: #{seq2seq_forward.5} parent=1 // pred_check_branch
      %396 = sbr.rel (0) target = $region33
    $region32: #{seq2seq_forward.5} parent=1 // pred_region
      %397 = dma.done [#allocation4], 4096
    $region33: #{seq2seq_forward.5} parent=1 // pred_fallthru
      _
    %398 = vsyncpa [#allocation3], 1
    %399 = vsyncpa [#allocation6], 1
    %400 = vsyncpa [#allocation4], 1

// kernel: seq2seq_forward.9
$region0: #{seq2seq_forward.9}
  #allocation0 [shape = 'u32[]', space=smem, size = 0x4, offset = 0x4, fixed_abs, tag = 'smem constant byte address 0x4 - core index']
  #allocation1 [shape = 'u32[144,128]{1,0:T(1,128)}', space=vmem, size = 0x12000, scoped, tag = 'internal scratch']
  %s0 = inlined_call_operand.hbm [shape: f32[64,128], index: 0, kind: input, shape index: {}]
  %s1 = inlined_call_operand.hbm [shape: f32[128,128], index: 1, kind: input, shape index: {}]
  %s2 = inlined_call_operand.hbm [shape: f32[1,128], index: 2, kind: input, shape index: {}]
  %s3 = inlined_call_operand.hbm [shape: f32[64,128], index: 3, kind: output, shape index: {}]
  %s4 = sld [smem:[#allocation0]]
  $region34: #{seq2seq_forward.9} parent=0
    _
  %s6 = ssub.s32 1, %s4
  %s7 = scalar_select 0, %s6, %s4
  $region1: #{seq2seq_forward.9} parent=0
    #allocation2 [shape = 'u8[32768]{0}', space=vmem, size = 0x8000, scoped, tag = 'input window, operand 0, single buffered']
    #allocation3 [shape = 's32[1]{0}', space=sflag, size = 0x4, scoped, tag = 'scoped memory for seq2seq_forward.9']
    #allocation4 [shape = 's32[1]{0}', space=sflag, size = 0x4, scoped, tag = 'scoped memory for seq2seq_forward.9']
    #allocation5 [shape = 'u8[65536]{0}', space=vmem, size = 0x10000, scoped, tag = 'input window, operand 1, single buffered']
    #allocation6 [shape = 's32[1]{0}', space=sflag, size = 0x4, scoped, tag = 'scoped memory for seq2seq_forward.9']
    #allocation7 [shape = 'u8[512]{0}', space=vmem, size = 0x400, scoped, tag = 'input window, operand 2, single buffered']
    #allocation8 [shape = 'u8[32768]{0}', space=vmem, size = 0x8000, scoped, tag = 'output window, operand 0, single buffered']
    %8 = vsyncpa [#allocation3], 0
    %9 = vsyncpa [#allocation6], 0
    %10 = vsyncpa [#allocation4], 0
    // Predicated region
    $region2: #{seq2seq_forward.9} parent=1 // pred_check
      _
    $region3: #{seq2seq_forward.9} parent=1 // pred_check_branch
      %12 = sbr.rel (0) target = $region5
    $region4: #{seq2seq_forward.9} parent=1 // pred_region
      %s14 = ssub.s32 1024, 1024
      %15 = vsyncadd [#allocation3], %s14
      %s16 = sshll.u32 [#allocation2], 4
      %s17 = int_to_ptr.vmem [resolvable:$true] %s16
      %22 = dma.hbm_to_vmem [thread:$0]  %s0, 1024, %s17, [#allocation3], 128, 128, 8
    $region5: #{seq2seq_forward.9} parent=1 // pred_fallthru
      _
    // Predicated region
    $region6: #{seq2seq_forward.9} parent=1 // pred_check
      _
    $region7: #{seq2seq_forward.9} parent=1 // pred_check_branch
      %24 = sbr.rel (0) target = $region9
    $region8: #{seq2seq_forward.9} parent=1 // pred_region
      %s26 = ssub.s32 2048, 2048
      %27 = vsyncadd [#allocation6], %s26
      %s28 = sshll.u32 [#allocation5], 4
      %s29 = int_to_ptr.vmem [resolvable:$true] %s28
      %34 = dma.hbm_to_vmem [thread:$0]  %s1, 2048, %s29, [#allocation6], 128, 128, 8
    $region9: #{seq2seq_forward.9} parent=1 // pred_fallthru
      _
    // Predicated region
    $region10: #{seq2seq_forward.9} parent=1 // pred_check
      _
    $region11: #{seq2seq_forward.9} parent=1 // pred_check_branch
      %36 = sbr.rel (0) target = $region13
    $region12: #{seq2seq_forward.9} parent=1 // pred_region
      %s38 = ssub.s32 16, 16
      %39 = vsyncadd [#allocation6], %s38
      %s41 = sshll.u32 [#allocation7], 4
      %s42 = int_to_ptr.vmem [resolvable:$true] %s41
      %44 = dma.hbm_to_vmem [thread:$0]  %s2, 16, %s42, [#allocation6]
    $region13: #{seq2seq_forward.9} parent=1 // pred_fallthru
      _
    // Predicated region
    $region14: #{seq2seq_forward.9} parent=1 // pred_check
      _
    $region15: #{seq2seq_forward.9} parent=1 // pred_check_branch
      %46 = sbr.rel (0) target = $region17
    $region16: #{seq2seq_forward.9} parent=1 // pred_region
      %47 = dma.done [#allocation3], 1024
    $region17: #{seq2seq_forward.9} parent=1 // pred_fallthru
      _
    // Predicated region
    $region18: #{seq2seq_forward.9} parent=1 // pred_check
      _
    $region19: #{seq2seq_forward.9} parent=1 // pred_check_branch
      %49 = sbr.rel (0) target = $region21
    $region20: #{seq2seq_forward.9} parent=1 // pred_region
      %50 = dma.done [#allocation6], 2048
    $region21: #{seq2seq_forward.9} parent=1 // pred_fallthru
      _
    // Predicated region
    $region22: #{seq2seq_forward.9} parent=1 // pred_check
      _
    $region23: #{seq2seq_forward.9} parent=1 // pred_check_branch
      %52 = sbr.rel (0) target = $region25
    $region24: #{seq2seq_forward.9} parent=1 // pred_region
      %53 = dma.done [#allocation6], 16
    $region25: #{seq2seq_forward.9} parent=1 // pred_fallthru
      _
    %v54 = vld [vmem:[#allocation2] sm:$0xff]
    %v55 = vld [vmem:[#allocation2 + $0x8] sm:$0xff]
    %v56 = vld [vmem:[#allocation2 + $0x10] sm:$0xff]
    %v57 = vld [vmem:[#allocation2 + $0x18] sm:$0xff]
    %v58 = vld [vmem:[#allocation2 + $0x20] sm:$0xff]
    %v59 = vld [vmem:[#allocation2 + $0x28] sm:$0xff]
    %v60 = vld [vmem:[#allocation2 + $0x30] sm:$0xff]
    %v61 = vld [vmem:[#allocation2 + $0x38] sm:$0xff]
    %v62 = vld [vmem:[#allocation5] sm:$0xff]
    %v63 = vld [vmem:[#allocation5 + $0x8] sm:$0xff]
    %v64 = vld [vmem:[#allocation5 + $0x10] sm:$0xff]
    %v65 = vld [vmem:[#allocation5 + $0x18] sm:$0xff]
    %v66 = vld [vmem:[#allocation5 + $0x20] sm:$0xff]
    %v67 = vld [vmem:[#allocation5 + $0x28] sm:$0xff]
    %v68 = vld [vmem:[#allocation5 + $0x30] sm:$0xff]
    %v69 = vld [vmem:[#allocation5 + $0x38] sm:$0xff]
    %v70 = vld [vmem:[#allocation5 + $0x40] sm:$0xff]
    %v71 = vld [vmem:[#allocation5 + $0x48] sm:$0xff]
    %v72 = vld [vmem:[#allocation5 + $0x50] sm:$0xff]
    %v73 = vld [vmem:[#allocation5 + $0x58] sm:$0xff]
    %v74 = vld [vmem:[#allocation5 + $0x60] sm:$0xff]
    %v75 = vld [vmem:[#allocation5 + $0x68] sm:$0xff]
    %v76 = vld [vmem:[#allocation5 + $0x70] sm:$0xff]
    %v77 = vld [vmem:[#allocation5 + $0x78] sm:$0xff]
    %v78 = vld [vmem:[#allocation7] sm:$0x1]
    %v80 = vlaneseq
    %v81 = vshrl.u32 %v80, 7
    %v82 = vsub.s32 0, %v81
    %v83 = vrot.slane %v78, %v82
    %85 = vmatprep.subr.mxu0 0.0
    %86 = vmatpush1.msra.mxu0 %v62
    %87 = vmatprep.subr.mxu0 0.0
    %88 = vmatpush1.msra.mxu0 %v63
    %89 = vmatprep.subr.mxu0 0.0
    %90 = vmatpush1.msra.mxu0 %v64
    %91 = vmatprep.subr.mxu0 0.0
    %92 = vmatpush1.msra.mxu0 %v65
    %93 = vmatprep.subr.mxu0 0.0
    %94 = vmatpush1.msra.mxu0 %v66
    %95 = vmatprep.subr.mxu0 0.0
    %96 = vmatpush1.msra.mxu0 %v67
    %97 = vmatprep.subr.mxu0 0.0
    %98 = vmatpush1.msra.mxu0 %v68
    %99 = vmatprep.subr.mxu0 0.0
    %100 = vmatpush1.msra.mxu0 %v69
    %101 = vmatprep.subr.mxu0 0.0
    %102 = vmatpush1.msra.mxu0 %v70
    %103 = vmatprep.subr.mxu0 0.0
    %104 = vmatpush1.msra.mxu0 %v71
    %105 = vmatprep.subr.mxu0 0.0
    %106 = vmatpush1.msra.mxu0 %v72
    %107 = vmatprep.subr.mxu0 0.0
    %108 = vmatpush1.msra.mxu0 %v73
    %109 = vmatprep.subr.mxu0 0.0
    %110 = vmatpush1.msra.mxu0 %v74
    %111 = vmatprep.subr.mxu0 0.0
    %112 = vmatpush1.msra.mxu0 %v75
    %113 = vmatprep.subr.mxu0 0.0
    %114 = vmatpush1.msra.mxu0 %v76
    %115 = vmatprep.subr.mxu0 0.0
    %116 = vmatpush1.msra.mxu0 %v77
    %117 = vmatprep.subr.mxu0 0.0
    %118 = vmatpush1.msra.mxu0 0.0
    %119 = vmatprep.subr.mxu0 0.0
    %120 = vmatpush1.msra.mxu0 0.0
    %121 = vmatprep.subr.mxu0 0.0
    %122 = vmatpush1.msra.mxu0 0.0
    %123 = vmatprep.subr.mxu0 0.0
    %124 = vmatpush1.msra.mxu0 0.0
    %125 = vmatprep.subr.mxu0 0.0
    %126 = vmatpush1.msra.mxu0 0.0
    %127 = vmatprep.subr.mxu0 0.0
    %128 = vmatpush1.msra.mxu0 0.0
    %129 = vmatprep.subr.mxu0 0.0
    %130 = vmatpush1.msra.mxu0 0.0
    %131 = vmatprep.subr.mxu0 0.0
    %132 = vmatpush1.msra.mxu0 0.0
    %133 = vmatprep.subr.mxu0 0.0
    %134 = vmatpush1.msra.mxu0 0.0
    %135 = vmatprep.subr.mxu0 0.0
    %136 = vmatpush1.msra.mxu0 0.0
    %137 = vmatprep.subr.mxu0 0.0
    %138 = vmatpush1.msra.mxu0 0.0
    %139 = vmatprep.subr.mxu0 0.0
    %140 = vmatpush1.msra.mxu0 0.0
    %141 = vmatprep.subr.mxu0 0.0
    %142 = vmatpush1.msra.mxu0 0.0
    %143 = vmatprep.subr.mxu0 0.0
    %144 = vmatpush1.msra.mxu0 0.0
    %145 = vmatprep.subr.mxu0 0.0
    %146 = vmatpush1.msra.mxu0 0.0
    %147 = vmatprep.subr.mxu0 0.0
    %148 = vmatpush1.msra.mxu0 0.0
    %149 = vmatprep.mubr.f32.mxu0 0.0
    %150 = vmatmul.mubr.f32.gmra.mrb[0].mxu0 %v54
    %v151 = vpop.f32.mrb[0].mxu0
    %v152 = vadd.f32 %v83, %v151
    %v153 = vpop.f32.mrb[0].mxu0
    %154 = vmatprep.mubr.f32.mxu0 0.0
    %155 = vmatmul.mubr.f32.gmra.mrb[0].mxu0 %v55
    %v156 = vpop.f32.mrb[0].mxu0
    %v157 = vadd.f32 %v83, %v156
    %v158 = vpop.f32.mrb[0].mxu0
    %159 = vmatprep.mubr.f32.mxu0 0.0
    %160 = vmatmul.mubr.f32.gmra.mrb[0].mxu0 %v56
    %v161 = vpop.f32.mrb[0].mxu0
    %v162 = vadd.f32 %v83, %v161
    %v163 = vpop.f32.mrb[0].mxu0
    %164 = vmatprep.mubr.f32.mxu0 0.0
    %165 = vmatmul.mubr.f32.gmra.mrb[0].mxu0 %v57
    %v166 = vpop.f32.mrb[0].mxu0
    %v167 = vadd.f32 %v83, %v166
    %v168 = vpop.f32.mrb[0].mxu0
    %169 = vmatprep.mubr.f32.mxu0 0.0
    %170 = vmatmul.mubr.f32.gmra.mrb[0].mxu0 %v58
    %v171 = vpop.f32.mrb[0].mxu0
    %v172 = vadd.f32 %v83, %v171
    %v173 = vpop.f32.mrb[0].mxu0
    %174 = vmatprep.mubr.f32.mxu0 0.0
    %175 = vmatmul.mubr.f32.gmra.mrb[0].mxu0 %v59
    %v176 = vpop.f32.mrb[0].mxu0
    %v177 = vadd.f32 %v83, %v176
    %v178 = vpop.f32.mrb[0].mxu0
    %179 = vmatprep.mubr.f32.mxu0 0.0
    %180 = vmatmul.mubr.f32.gmra.mrb[0].mxu0 %v60
    %v181 = vpop.f32.mrb[0].mxu0
    %v182 = vadd.f32 %v83, %v181
    %v183 = vpop.f32.mrb[0].mxu0
    %184 = vmatprep.mubr.f32.mxu0 0.0
    %185 = vmatmul.mubr.f32.gmra.mrb[0].mxu0 %v61
    %v186 = vpop.f32.mrb[0].mxu0
    %v187 = vadd.f32 %v83, %v186
    %v188 = vpop.f32.mrb[0].mxu0
    %189 = vdwg.mxu0
    %190 = vst [vmem:[#allocation8] sm:$0xff] %v152
    %191 = vst [vmem:[#allocation8 + $0x8] sm:$0xff] %v157
    %192 = vst [vmem:[#allocation8 + $0x10] sm:$0xff] %v162
    %193 = vst [vmem:[#allocation8 + $0x18] sm:$0xff] %v167
    %194 = vst [vmem:[#allocation8 + $0x20] sm:$0xff] %v172
    %195 = vst [vmem:[#allocation8 + $0x28] sm:$0xff] %v177
    %196 = vst [vmem:[#allocation8 + $0x30] sm:$0xff] %v182
    %197 = vst [vmem:[#allocation8 + $0x38] sm:$0xff] %v187
    // Predicated region
    $region26: #{seq2seq_forward.9} parent=1 // pred_check
      _
    $region27: #{seq2seq_forward.9} parent=1 // pred_check_branch
      %199 = sbr.rel (0) target = $region29
    $region28: #{seq2seq_forward.9} parent=1 // pred_region
      %s201 = ssub.s32 1024, 1024
      %202 = vsyncadd [#allocation4], %s201
      %s203 = sshll.u32 [#allocation8], 4
      %s204 = int_to_ptr.vmem [resolvable:$true] %s203
      %209 = dma.vmem_to_hbm [thread:$0]  %s204, 1024, %s3, [#allocation4], 128, 128, 8
    $region29: #{seq2seq_forward.9} parent=1 // pred_fallthru
      _
    // Predicated region
    $region30: #{seq2seq_forward.9} parent=1 // pred_check
      _
    $region31: #{seq2seq_forward.9} parent=1 // pred_check_branch
      %211 = sbr.rel (0) target = $region33
    $region32: #{seq2seq_forward.9} parent=1 // pred_region
      %212 = dma.done [#allocation4], 1024
    $region33: #{seq2seq_forward.9} parent=1 // pred_fallthru
      _
    %213 = vsyncpa [#allocation3], 1
    %214 = vsyncpa [#allocation6], 1
    %215 = vsyncpa [#allocation4], 1

// kernel: seq2seq_forward.6
$region0: #{seq2seq_forward.6}
  #allocation0 [shape = 'u32[]', space=smem, size = 0x4, offset = 0x4, fixed_abs, tag = 'smem constant byte address 0x4 - core index']
  #allocation1 [shape = 'u32[144,128]{1,0:T(1,128)}', space=vmem, size = 0x12000, scoped, tag = 'internal scratch']
  %s0 = inlined_call_operand.vmem [shape: f32[8,8,512], index: 0, kind: input, shape index: {}]
  %s1 = inlined_call_operand.vmem [shape: f32[128,512], index: 1, kind: input, shape index: {}]
  %s2 = inlined_call_operand.vmem [shape: f32[128,128], index: 2, kind: input, shape index: {}]
  %s3 = inlined_call_operand.vmem [shape: f32[1,128], index: 3, kind: input, shape index: {}]
  %s4 = inlined_call_operand.hbm [shape: f32[8,128], index: 4, kind: output, shape index: {0}]
  %s5 = inlined_call_operand.hbm [shape: f32[8,128], index: 5, kind: output, shape index: {1}]
  %6 = xla_tuple %s4, %s5
  %s7 = sld [smem:[#allocation0]]
  $region34: #{seq2seq_forward.6} parent=0
    _
  %s9 = ssub.s32 1, %s7
  %s10 = scalar_select 0, %s9, %s7
  $region1: #{seq2seq_forward.6} parent=0
    #allocation2 [shape = 'u8[4096]{0}', space=vmem, size = 0x1000, scoped, tag = 'output window, operand 0, single buffered']
    #allocation3 [shape = 's32[1]{0}', space=sflag, size = 0x4, scoped, tag = 'scoped memory for seq2seq_forward.6']
    #allocation4 [shape = 'u8[4096]{0}', space=vmem, size = 0x1000, scoped, tag = 'output window, operand 1, single buffered']
    #allocation5 [shape = 's32[1]{0}', space=sflag, size = 0x4, scoped, tag = 'scoped memory for seq2seq_forward.6']
    %11 = vsyncpa [#allocation3], 0
    %12 = vsyncpa [#allocation5], 0
    // Predicated region
    $region2: #{seq2seq_forward.6} parent=1 // pred_check
      _
    $region3: #{seq2seq_forward.6} parent=1 // pred_check_branch
      %14 = sbr.rel (0) target = $region5
    $region4: #{seq2seq_forward.6} parent=1 // pred_region
      _
    $region5: #{seq2seq_forward.6} parent=1 // pred_fallthru
      _
    // Predicated region
    $region6: #{seq2seq_forward.6} parent=1 // pred_check
      _
    $region7: #{seq2seq_forward.6} parent=1 // pred_check_branch
      %16 = sbr.rel (0) target = $region9
    $region8: #{seq2seq_forward.6} parent=1 // pred_region
      _
    $region9: #{seq2seq_forward.6} parent=1 // pred_fallthru
      _
    // Predicated region
    $region10: #{seq2seq_forward.6} parent=1 // pred_check
      _
    $region11: #{seq2seq_forward.6} parent=1 // pred_check_branch
      %18 = sbr.rel (0) target = $region13
    $region12: #{seq2seq_forward.6} parent=1 // pred_region
      _
    $region13: #{seq2seq_forward.6} parent=1 // pred_fallthru
      _
    // Predicated region
    $region14: #{seq2seq_forward.6} parent=1 // pred_check
      _
    $region15: #{seq2seq_forward.6} parent=1 // pred_check_branch
      %20 = sbr.rel (0) target = $region17
    $region16: #{seq2seq_forward.6} parent=1 // pred_region
      _
    $region17: #{seq2seq_forward.6} parent=1 // pred_fallthru
      _
    %v21 = vld [vmem:[%s0] ss:$8 sm:$0xf]
    %s22 = scalar_lea.vmem %s0, 32
    %v23 = vld [vmem:[%s22] ss:$8 sm:$0xf]
    %s24 = scalar_lea.vmem %s0, 64
    %v25 = vld [vmem:[%s24] ss:$8 sm:$0xf]
    %s26 = scalar_lea.vmem %s0, 96
    %v27 = vld [vmem:[%s26] ss:$8 sm:$0xf]
    %s28 = scalar_lea.vmem %s0, 128
    %v29 = vld [vmem:[%s28] ss:$8 sm:$0xf]
    %s30 = scalar_lea.vmem %s0, 160
    %v31 = vld [vmem:[%s30] ss:$8 sm:$0xf]
    %s32 = scalar_lea.vmem %s0, 192
    %v33 = vld [vmem:[%s32] ss:$8 sm:$0xf]
    %s34 = scalar_lea.vmem %s0, 224
    %v35 = vld [vmem:[%s34] ss:$8 sm:$0xf]
    %v36 = vld [vmem:[%s1] sm:$0xff]
    %v37 = vld [vmem:[%s1 + $0x8] sm:$0xff]
    %v38 = vld [vmem:[%s1 + $0x10] sm:$0xff]
    %v39 = vld [vmem:[%s1 + $0x18] sm:$0xff]
    %v40 = vld [vmem:[%s1 + $0x20] sm:$0xff]
    %v41 = vld [vmem:[%s1 + $0x28] sm:$0xff]
    %v42 = vld [vmem:[%s1 + $0x30] sm:$0xff]
    %v43 = vld [vmem:[%s1 + $0x38] sm:$0xff]
    %v44 = vld [vmem:[%s1 + $0x40] sm:$0xff]
    %v45 = vld [vmem:[%s1 + $0x48] sm:$0xff]
    %v46 = vld [vmem:[%s1 + $0x50] sm:$0xff]
    %v47 = vld [vmem:[%s1 + $0x58] sm:$0xff]
    %v48 = vld [vmem:[%s1 + $0x60] sm:$0xff]
    %v49 = vld [vmem:[%s1 + $0x68] sm:$0xff]
    %v50 = vld [vmem:[%s1 + $0x70] sm:$0xff]
    %v51 = vld [vmem:[%s1 + $0x78] sm:$0xff]
    %v52 = vld [vmem:[%s1 + $0x80] sm:$0xff]
    %v53 = vld [vmem:[%s1 + $0x88] sm:$0xff]
    %v54 = vld [vmem:[%s1 + $0x90] sm:$0xff]
    %v55 = vld [vmem:[%s1 + $0x98] sm:$0xff]
    %v56 = vld [vmem:[%s1 + $0xa0] sm:$0xff]
    %v57 = vld [vmem:[%s1 + $0xa8] sm:$0xff]
    %v58 = vld [vmem:[%s1 + $0xb0] sm:$0xff]
    %v59 = vld [vmem:[%s1 + $0xb8] sm:$0xff]
    %v60 = vld [vmem:[%s1 + $0xc0] sm:$0xff]
    %v61 = vld [vmem:[%s1 + $0xc8] sm:$0xff]
    %v62 = vld [vmem:[%s1 + $0xd0] sm:$0xff]
    %v63 = vld [vmem:[%s1 + $0xd8] sm:$0xff]
    %v64 = vld [vmem:[%s1 + $0xe0] sm:$0xff]
    %v65 = vld [vmem:[%s1 + $0xe8] sm:$0xff]
    %v66 = vld [vmem:[%s1 + $0xf0] sm:$0xff]
    %v67 = vld [vmem:[%s1 + $0xf8] sm:$0xff]
    %v68 = vld [vmem:[%s1 + $0x100] sm:$0xff]
    %v69 = vld [vmem:[%s1 + $0x108] sm:$0xff]
    %v70 = vld [vmem:[%s1 + $0x110] sm:$0xff]
    %v71 = vld [vmem:[%s1 + $0x118] sm:$0xff]
    %v72 = vld [vmem:[%s1 + $0x120] sm:$0xff]
    %v73 = vld [vmem:[%s1 + $0x128] sm:$0xff]
    %v74 = vld [vmem:[%s1 + $0x130] sm:$0xff]
    %v75 = vld [vmem:[%s1 + $0x138] sm:$0xff]
    %v76 = vld [vmem:[%s1 + $0x140] sm:$0xff]
    %v77 = vld [vmem:[%s1 + $0x148] sm:$0xff]
    %v78 = vld [vmem:[%s1 + $0x150] sm:$0xff]
    %v79 = vld [vmem:[%s1 + $0x158] sm:$0xff]
    %v80 = vld [vmem:[%s1 + $0x160] sm:$0xff]
    %v81 = vld [vmem:[%s1 + $0x168] sm:$0xff]
    %v82 = vld [vmem:[%s1 + $0x170] sm:$0xff]
    %v83 = vld [vmem:[%s1 + $0x178] sm:$0xff]
    %v84 = vld [vmem:[%s1 + $0x180] sm:$0xff]
    %v85 = vld [vmem:[%s1 + $0x188] sm:$0xff]
    %v86 = vld [vmem:[%s1 + $0x190] sm:$0xff]
    %v87 = vld [vmem:[%s1 + $0x198] sm:$0xff]
    %v88 = vld [vmem:[%s1 + $0x1a0] sm:$0xff]
    %v89 = vld [vmem:[%s1 + $0x1a8] sm:$0xff]
    %v90 = vld [vmem:[%s1 + $0x1b0] sm:$0xff]
    %v91 = vld [vmem:[%s1 + $0x1b8] sm:$0xff]
    %v92 = vld [vmem:[%s1 + $0x1c0] sm:$0xff]
    %v93 = vld [vmem:[%s1 + $0x1c8] sm:$0xff]
    %v94 = vld [vmem:[%s1 + $0x1d0] sm:$0xff]
    %v95 = vld [vmem:[%s1 + $0x1d8] sm:$0xff]
    %v96 = vld [vmem:[%s1 + $0x1e0] sm:$0xff]
    %v97 = vld [vmem:[%s1 + $0x1e8] sm:$0xff]
    %v98 = vld [vmem:[%s1 + $0x1f0] sm:$0xff]
    %v99 = vld [vmem:[%s1 + $0x1f8] sm:$0xff]
    %100 = vmatprep.subr.mxu0 %v37
    %101 = vmatpush1.msra.mxu0 %v36
    %102 = vmatprep.subr.mxu0 %v41
    %103 = vmatpush1.msra.mxu0 %v40
    %104 = vmatprep.subr.mxu0 %v45
    %105 = vmatpush1.msra.mxu0 %v44
    %106 = vmatprep.subr.mxu0 %v49
    %107 = vmatpush1.msra.mxu0 %v48
    %108 = vmatprep.subr.mxu0 %v53
    %109 = vmatpush1.msra.mxu0 %v52
    %110 = vmatprep.subr.mxu0 %v57
    %111 = vmatpush1.msra.mxu0 %v56
    %112 = vmatprep.subr.mxu0 %v61
    %113 = vmatpush1.msra.mxu0 %v60
    %114 = vmatprep.subr.mxu0 %v65
    %115 = vmatpush1.msra.mxu0 %v64
    %116 = vmatprep.subr.mxu0 %v69
    %117 = vmatpush1.msra.mxu0 %v68
    %118 = vmatprep.subr.mxu0 %v73
    %119 = vmatpush1.msra.mxu0 %v72
    %120 = vmatprep.subr.mxu0 %v77
    %121 = vmatpush1.msra.mxu0 %v76
    %122 = vmatprep.subr.mxu0 %v81
    %123 = vmatpush1.msra.mxu0 %v80
    %124 = vmatprep.subr.mxu0 %v85
    %125 = vmatpush1.msra.mxu0 %v84
    %126 = vmatprep.subr.mxu0 %v89
    %127 = vmatpush1.msra.mxu0 %v88
    %128 = vmatprep.subr.mxu0 %v93
    %129 = vmatpush1.msra.mxu0 %v92
    %130 = vmatprep.subr.mxu0 %v97
    %131 = vmatpush1.msra.mxu0 %v96
    %132 = vmatprep.subr.mxu0 0.0
    %133 = vmatpush1.msra.mxu0 0.0
    %134 = vmatprep.subr.mxu0 0.0
    %135 = vmatpush1.msra.mxu0 0.0
    %136 = vmatprep.subr.mxu0 0.0
    %137 = vmatpush1.msra.mxu0 0.0
    %138 = vmatprep.subr.mxu0 0.0
    %139 = vmatpush1.msra.mxu0 0.0
    %140 = vmatprep.subr.mxu0 0.0
    %141 = vmatpush1.msra.mxu0 0.0
    %142 = vmatprep.subr.mxu0 0.0
    %143 = vmatpush1.msra.mxu0 0.0
    %144 = vmatprep.subr.mxu0 0.0
    %145 = vmatpush1.msra.mxu0 0.0
    %146 = vmatprep.subr.mxu0 0.0
    %147 = vmatpush1.msra.mxu0 0.0
    %148 = vmatprep.subr.mxu0 0.0
    %149 = vmatpush1.msra.mxu0 0.0
    %150 = vmatprep.subr.mxu0 0.0
    %151 = vmatpush1.msra.mxu0 0.0
    %152 = vmatprep.subr.mxu0 0.0
    %153 = vmatpush1.msra.mxu0 0.0
    %154 = vmatprep.subr.mxu0 0.0
    %155 = vmatpush1.msra.mxu0 0.0
    %156 = vmatprep.subr.mxu0 0.0
    %157 = vmatpush1.msra.mxu0 0.0
    %158 = vmatprep.subr.mxu0 0.0
    %159 = vmatpush1.msra.mxu0 0.0
    %160 = vmatprep.subr.mxu0 0.0
    %161 = vmatpush1.msra.mxu0 0.0
    %162 = vmatprep.subr.mxu0 0.0
    %163 = vmatpush1.msra.mxu0 0.0
    %164 = vmatprep.mubr.f32.mxu0 0.0
    %165 = vmatmul.mubr.f32.gmra.mrb[0].mxu0 0.0
    %v166 = vpop.f32.mrb[0].mxu0
    %v167 = vadd.f32 0.0, %v166
    %v168 = vpop.f32.mrb[0].mxu0
    %v169 = vadd.f32 0.0, %v168
    %170 = vdwg.mxu0
    %171 = vmatprep.subr.mxu0 %v39
    %172 = vmatpush1.msra.mxu0 %v38
    %173 = vmatprep.subr.mxu0 %v43
    %174 = vmatpush1.msra.mxu0 %v42
    %175 = vmatprep.subr.mxu0 %v47
    %176 = vmatpush1.msra.mxu0 %v46
    %177 = vmatprep.subr.mxu0 %v51
    %178 = vmatpush1.msra.mxu0 %v50
    %179 = vmatprep.subr.mxu0 %v55
    %180 = vmatpush1.msra.mxu0 %v54
    %181 = vmatprep.subr.mxu0 %v59
    %182 = vmatpush1.msra.mxu0 %v58
    %183 = vmatprep.subr.mxu0 %v63
    %184 = vmatpush1.msra.mxu0 %v62
    %185 = vmatprep.subr.mxu0 %v67
    %186 = vmatpush1.msra.mxu0 %v66
    %187 = vmatprep.subr.mxu0 %v71
    %188 = vmatpush1.msra.mxu0 %v70
    %189 = vmatprep.subr.mxu0 %v75
    %190 = vmatpush1.msra.mxu0 %v74
    %191 = vmatprep.subr.mxu0 %v79
    %192 = vmatpush1.msra.mxu0 %v78
    %193 = vmatprep.subr.mxu0 %v83
    %194 = vmatpush1.msra.mxu0 %v82
    %195 = vmatprep.subr.mxu0 %v87
    %196 = vmatpush1.msra.mxu0 %v86
    %197 = vmatprep.subr.mxu0 %v91
    %198 = vmatpush1.msra.mxu0 %v90
    %199 = vmatprep.subr.mxu0 %v95
    %200 = vmatpush1.msra.mxu0 %v94
    %201 = vmatprep.subr.mxu0 %v99
    %202 = vmatpush1.msra.mxu0 %v98
    %203 = vmatprep.subr.mxu0 0.0
    %204 = vmatpush1.msra.mxu0 0.0
    %205 = vmatprep.subr.mxu0 0.0
    %206 = vmatpush1.msra.mxu0 0.0
    %207 = vmatprep.subr.mxu0 0.0
    %208 = vmatpush1.msra.mxu0 0.0
    %209 = vmatprep.subr.mxu0 0.0
    %210 = vmatpush1.msra.mxu0 0.0
    %211 = vmatprep.subr.mxu0 0.0
    %212 = vmatpush1.msra.mxu0 0.0
    %213 = vmatprep.subr.mxu0 0.0
    %214 = vmatpush1.msra.mxu0 0.0
    %215 = vmatprep.subr.mxu0 0.0
    %216 = vmatpush1.msra.mxu0 0.0
    %217 = vmatprep.subr.mxu0 0.0
    %218 = vmatpush1.msra.mxu0 0.0
    %219 = vmatprep.subr.mxu0 0.0
    %220 = vmatpush1.msra.mxu0 0.0
    %221 = vmatprep.subr.mxu0 0.0
    %222 = vmatpush1.msra.mxu0 0.0
    %223 = vmatprep.subr.mxu0 0.0
    %224 = vmatpush1.msra.mxu0 0.0
    %225 = vmatprep.subr.mxu0 0.0
    %226 = vmatpush1.msra.mxu0 0.0
    %227 = vmatprep.subr.mxu0 0.0
    %228 = vmatpush1.msra.mxu0 0.0
    %229 = vmatprep.subr.mxu0 0.0
    %230 = vmatpush1.msra.mxu0 0.0
    %231 = vmatprep.subr.mxu0 0.0
    %232 = vmatpush1.msra.mxu0 0.0
    %233 = vmatprep.subr.mxu0 0.0
    %234 = vmatpush1.msra.mxu0 0.0
    %235 = vmatprep.mubr.f32.mxu0 0.0
    %236 = vmatmul.mubr.f32.gmra.mrb[0].mxu0 0.0
    %v237 = vpop.f32.mrb[0].mxu0
    %v238 = vadd.f32 0.0, %v237
    %v239 = vpop.f32.mrb[0].mxu0
    %v240 = vadd.f32 0.0, %v239
    %241 = vdwg.mxu0
    %v246 = vcombine.low %v167, %v169
    %v247 = vcombine.high %v167, %v169
    %v248 = vcombine.low %v238, %v240
    %v249 = vcombine.high %v238, %v240
    %v251 = vunpack.c.l.s4 1966171168
    %v252 = vunpack.c.0.s8 %v251
    %v253 = vlaneseq
    %v254 = vshrl.u32 %v253, 7
    %v255 = vsub.s32 %v252, %v254
    %v256 = vrot.slane %v246, %v255
    %v258 = vunpack.c.l.s4 1966171168
    %v259 = vunpack.c.0.s8 %v258
    %v260 = vlaneseq
    %v261 = vshrl.u32 %v260, 7
    %v262 = vsub.s32 %v259, %v261
    %v263 = vrot.slane %v247, %v262
    %v265 = vunpack.c.l.s4 1966171168
    %v266 = vunpack.c.0.s8 %v265
    %v267 = vlaneseq
    %v268 = vshrl.u32 %v267, 7
    %v269 = vsub.s32 %v266, %v268
    %v270 = vrot.slane %v248, %v269
    %v272 = vunpack.c.l.s4 1966171168
    %v273 = vunpack.c.0.s8 %v272
    %v274 = vlaneseq
    %v275 = vshrl.u32 %v274, 7
    %v276 = vsub.s32 %v273, %v275
    %v277 = vrot.slane %v249, %v276
    %v278 = vcombine.low %v256, %v270
    %v279 = vcombine.high %v256, %v270
    %v280 = vcombine.low %v263, %v277
    %v281 = vcombine.high %v263, %v277
    %v283 = vunpack.c.l.s4 1966171168
    %v284 = vunpack.c.0.s8 %v283
    %v285 = vlaneseq
    %v286 = vshrl.u32 %v285, 7
    %v287 = vsub.s32 %v284, %v286
    %v288 = vrot.slane %v278, %v287
    %v290 = vunpack.c.l.s4 1966171168
    %v291 = vunpack.c.0.s8 %v290
    %v292 = vlaneseq
    %v293 = vshrl.u32 %v292, 7
    %v294 = vsub.s32 %v291, %v293
    %v295 = vrot.slane %v280, %v294
    %v297 = vunpack.c.l.s4 1966171168
    %v298 = vunpack.c.0.s8 %v297
    %v299 = vlaneseq
    %v300 = vshrl.u32 %v299, 7
    %v301 = vsub.s32 %v298, %v300
    %v302 = vrot.slane %v279, %v301
    %v304 = vunpack.c.l.s4 1966171168
    %v305 = vunpack.c.0.s8 %v304
    %v306 = vlaneseq
    %v307 = vshrl.u32 %v306, 7
    %v308 = vsub.s32 %v305, %v307
    %v309 = vrot.slane %v281, %v308
    %v310 = vcombine.high %v288, %v288
    %v311 = vcombine.high %v295, %v295
    %v312 = vcombine.high %v302, %v302
    %v313 = vcombine.high %v309, %v309
    %v322 = vadd.f32 %v21, %v288
    %v323 = vadd.f32 %v23, %v302
    %v324 = vadd.f32 %v25, %v310
    %v325 = vadd.f32 %v27, %v312
    %v326 = vadd.f32 %v29, %v295
    %v327 = vadd.f32 %v31, %v309
    %v328 = vadd.f32 %v33, %v311
    %v329 = vadd.f32 %v35, %v313
    %v330 = vxor.u32 %v322, 2147483648
    %v331 = vxor.u32 %v323, 2147483648
    %v332 = vxor.u32 %v324, 2147483648
    %v333 = vxor.u32 %v325, 2147483648
    %v334 = vxor.u32 %v326, 2147483648
    %v335 = vxor.u32 %v327, 2147483648
    %v336 = vxor.u32 %v328, 2147483648
    %v337 = vxor.u32 %v329, 2147483648
    %v338 = vmul.f32 %v330, 1.442695
    %v339 = vpow.pop %v338
    %v340 = vmul.f32 %v331, 1.442695
    %v341 = vpow.pop %v340
    %v342 = vmul.f32 %v332, 1.442695
    %v343 = vpow.pop %v342
    %v344 = vmul.f32 %v333, 1.442695
    %v345 = vpow.pop %v344
    %v346 = vmul.f32 %v334, 1.442695
    %v347 = vpow.pop %v346
    %v348 = vmul.f32 %v335, 1.442695
    %v349 = vpow.pop %v348
    %v350 = vmul.f32 %v336, 1.442695
    %v351 = vpow.pop %v350
    %v352 = vmul.f32 %v337, 1.442695
    %v353 = vpow.pop %v352
    %v354 = vadd.f32 %v339, 1.0
    %v355 = vadd.f32 %v341, 1.0
    %v356 = vadd.f32 %v343, 1.0
    %v357 = vadd.f32 %v345, 1.0
    %v358 = vadd.f32 %v347, 1.0
    %v359 = vadd.f32 %v349, 1.0
    %v360 = vadd.f32 %v351, 1.0
    %v361 = vadd.f32 %v353, 1.0
    %v362 = vrcp.pop %v354
    %v363 = vmul.f32 1.0, %v362
    %v364 = vrcp.pop %v355
    %v365 = vmul.f32 1.0, %v364
    %v366 = vrcp.pop %v356
    %v367 = vmul.f32 1.0, %v366
    %v368 = vrcp.pop %v357
    %v369 = vmul.f32 1.0, %v368
    %v370 = vrcp.pop %v358
    %v371 = vmul.f32 1.0, %v370
    %v372 = vrcp.pop %v359
    %v373 = vmul.f32 1.0, %v372
    %v374 = vrcp.pop %v360
    %v375 = vmul.f32 1.0, %v374
    %v376 = vrcp.pop %v361
    %v377 = vmul.f32 1.0, %v376
    %v386 = vrot.slane %v322, 1
    %v387 = vrot.slane %v323, 1
    %v388 = vrot.slane %v324, 1
    %v389 = vrot.slane %v325, 1
    %v390 = vrot.slane %v326, 1
    %v391 = vrot.slane %v327, 1
    %v392 = vrot.slane %v328, 1
    %v393 = vrot.slane %v329, 1
    %v402 = vxor.u32 %v386, 2147483648
    %v403 = vxor.u32 %v387, 2147483648
    %v404 = vxor.u32 %v388, 2147483648
    %v405 = vxor.u32 %v389, 2147483648
    %v406 = vxor.u32 %v390, 2147483648
    %v407 = vxor.u32 %v391, 2147483648
    %v408 = vxor.u32 %v392, 2147483648
    %v409 = vxor.u32 %v393, 2147483648
    %v410 = vmul.f32 %v402, 1.442695
    %v411 = vpow.pop %v410
    %v412 = vmul.f32 %v403, 1.442695
    %v413 = vpow.pop %v412
    %v414 = vmul.f32 %v404, 1.442695
    %v415 = vpow.pop %v414
    %v416 = vmul.f32 %v405, 1.442695
    %v417 = vpow.pop %v416
    %v418 = vmul.f32 %v406, 1.442695
    %v419 = vpow.pop %v418
    %v420 = vmul.f32 %v407, 1.442695
    %v421 = vpow.pop %v420
    %v422 = vmul.f32 %v408, 1.442695
    %v423 = vpow.pop %v422
    %v424 = vmul.f32 %v409, 1.442695
    %v425 = vpow.pop %v424
    %v426 = vadd.f32 %v411, 1.0
    %v427 = vadd.f32 %v413, 1.0
    %v428 = vadd.f32 %v415, 1.0
    %v429 = vadd.f32 %v417, 1.0
    %v430 = vadd.f32 %v419, 1.0
    %v431 = vadd.f32 %v421, 1.0
    %v432 = vadd.f32 %v423, 1.0
    %v433 = vadd.f32 %v425, 1.0
    %v434 = vrcp.pop %v426
    %v435 = vmul.f32 1.0, %v434
    %v436 = vrcp.pop %v427
    %v437 = vmul.f32 1.0, %v436
    %v438 = vrcp.pop %v428
    %v439 = vmul.f32 1.0, %v438
    %v440 = vrcp.pop %v429
    %v441 = vmul.f32 1.0, %v440
    %v442 = vrcp.pop %v430
    %v443 = vmul.f32 1.0, %v442
    %v444 = vrcp.pop %v431
    %v445 = vmul.f32 1.0, %v444
    %v446 = vrcp.pop %v432
    %v447 = vmul.f32 1.0, %v446
    %v448 = vrcp.pop %v433
    %v449 = vmul.f32 1.0, %v448
    %v450 = vrot.slane %v322, 2
    %v451 = vrot.slane %v323, 2
    %v452 = vrot.slane %v324, 2
    %v453 = vrot.slane %v325, 2
    %v454 = vrot.slane %v326, 2
    %v455 = vrot.slane %v327, 2
    %v456 = vrot.slane %v328, 2
    %v457 = vrot.slane %v329, 2
    %v466 = vtanh.pop %v450
    %v467 = vtanh.pop %v451
    %v468 = vtanh.pop %v452
    %v469 = vtanh.pop %v453
    %v470 = vtanh.pop %v454
    %v471 = vtanh.pop %v455
    %v472 = vtanh.pop %v456
    %v473 = vtanh.pop %v457
    %v474 = vrot.slane %v322, 3
    %v475 = vrot.slane %v323, 3
    %v476 = vrot.slane %v324, 3
    %v477 = vrot.slane %v325, 3
    %v478 = vrot.slane %v326, 3
    %v479 = vrot.slane %v327, 3
    %v480 = vrot.slane %v328, 3
    %v481 = vrot.slane %v329, 3
    %v490 = vxor.u32 %v474, 2147483648
    %v491 = vxor.u32 %v475, 2147483648
    %v492 = vxor.u32 %v476, 2147483648
    %v493 = vxor.u32 %v477, 2147483648
    %v494 = vxor.u32 %v478, 2147483648
    %v495 = vxor.u32 %v479, 2147483648
    %v496 = vxor.u32 %v480, 2147483648
    %v497 = vxor.u32 %v481, 2147483648
    %v498 = vmul.f32 %v490, 1.442695
    %v499 = vpow.pop %v498
    %v500 = vmul.f32 %v491, 1.442695
    %v501 = vpow.pop %v500
    %v502 = vmul.f32 %v492, 1.442695
    %v503 = vpow.pop %v502
    %v504 = vmul.f32 %v493, 1.442695
    %v505 = vpow.pop %v504
    %v506 = vmul.f32 %v494, 1.442695
    %v507 = vpow.pop %v506
    %v508 = vmul.f32 %v495, 1.442695
    %v509 = vpow.pop %v508
    %v510 = vmul.f32 %v496, 1.442695
    %v511 = vpow.pop %v510
    %v512 = vmul.f32 %v497, 1.442695
    %v513 = vpow.pop %v512
    %v514 = vadd.f32 %v499, 1.0
    %v515 = vadd.f32 %v501, 1.0
    %v516 = vadd.f32 %v503, 1.0
    %v517 = vadd.f32 %v505, 1.0
    %v518 = vadd.f32 %v507, 1.0
    %v519 = vadd.f32 %v509, 1.0
    %v520 = vadd.f32 %v511, 1.0
    %v521 = vadd.f32 %v513, 1.0
    %v522 = vrcp.pop %v514
    %v523 = vmul.f32 1.0, %v522
    %v524 = vrcp.pop %v515
    %v525 = vmul.f32 1.0, %v524
    %v526 = vrcp.pop %v516
    %v527 = vmul.f32 1.0, %v526
    %v528 = vrcp.pop %v517
    %v529 = vmul.f32 1.0, %v528
    %v530 = vrcp.pop %v518
    %v531 = vmul.f32 1.0, %v530
    %v532 = vrcp.pop %v519
    %v533 = vmul.f32 1.0, %v532
    %v534 = vrcp.pop %v520
    %v535 = vmul.f32 1.0, %v534
    %v536 = vrcp.pop %v521
    %v537 = vmul.f32 1.0, %v536
    %v538 = vmul.f32 %v435, 0.0
    %v539 = vmul.f32 %v437, 0.0
    %v540 = vmul.f32 %v439, 0.0
    %v541 = vmul.f32 %v441, 0.0
    %v542 = vmul.f32 %v443, 0.0
    %v543 = vmul.f32 %v445, 0.0
    %v544 = vmul.f32 %v447, 0.0
    %v545 = vmul.f32 %v449, 0.0
    %v546 = vmul.f32 %v363, %v466
    %v547 = vmul.f32 %v365, %v467
    %v548 = vmul.f32 %v367, %v468
    %v549 = vmul.f32 %v369, %v469
    %v550 = vmul.f32 %v371, %v470
    %v551 = vmul.f32 %v373, %v471
    %v552 = vmul.f32 %v375, %v472
    %v553 = vmul.f32 %v377, %v473
    %v554 = vadd.f32 %v538, %v546
    %v555 = vadd.f32 %v539, %v547
    %v556 = vadd.f32 %v540, %v548
    %v557 = vadd.f32 %v541, %v549
    %v558 = vadd.f32 %v542, %v550
    %v559 = vadd.f32 %v543, %v551
    %v560 = vadd.f32 %v544, %v552
    %v561 = vadd.f32 %v545, %v553
    %v562 = vtanh.pop %v554
    %v563 = vtanh.pop %v555
    %v564 = vtanh.pop %v556
    %v565 = vtanh.pop %v557
    %v566 = vtanh.pop %v558
    %v567 = vtanh.pop %v559
    %v568 = vtanh.pop %v560
    %v569 = vtanh.pop %v561
    %v570 = vmul.f32 %v523, %v562
    %v571 = vmul.f32 %v525, %v563
    %v572 = vmul.f32 %v527, %v564
    %v573 = vmul.f32 %v529, %v565
    %v574 = vmul.f32 %v531, %v566
    %v575 = vmul.f32 %v533, %v567
    %v576 = vmul.f32 %v535, %v568
    %v577 = vmul.f32 %v537, %v569
    %s578 = scalar_lea.vmem %s0, 1
    %v579 = vld [vmem:[%s578] ss:$8 sm:$0xf]
    %s580 = scalar_lea.vmem %s0, 33
    %v581 = vld [vmem:[%s580] ss:$8 sm:$0xf]
    %s582 = scalar_lea.vmem %s0, 65
    %v583 = vld [vmem:[%s582] ss:$8 sm:$0xf]
    %s584 = scalar_lea.vmem %s0, 97
    %v585 = vld [vmem:[%s584] ss:$8 sm:$0xf]
    %s586 = scalar_lea.vmem %s0, 129
    %v587 = vld [vmem:[%s586] ss:$8 sm:$0xf]
    %s588 = scalar_lea.vmem %s0, 161
    %v589 = vld [vmem:[%s588] ss:$8 sm:$0xf]
    %s590 = scalar_lea.vmem %s0, 193
    %v591 = vld [vmem:[%s590] ss:$8 sm:$0xf]
    %s592 = scalar_lea.vmem %s0, 225
    %v593 = vld [vmem:[%s592] ss:$8 sm:$0xf]
    %v602 = vcombine.low %v570, %v571
    %v603 = vcombine.low %v572, %v573
    %v604 = vcombine.low %v574, %v575
    %v605 = vcombine.low %v576, %v577
    %v607 = vunpack.c.l.s4 1966171168
    %v608 = vunpack.c.0.s8 %v607
    %v609 = vlaneseq
    %v610 = vshrl.u32 %v609, 7
    %v611 = vsub.s32 %v608, %v610
    %v612 = vrot.slane %v602, %v611
    %v614 = vunpack.c.l.s4 1966171168
    %v615 = vunpack.c.0.s8 %v614
    %v616 = vlaneseq
    %v617 = vshrl.u32 %v616, 7
    %v618 = vsub.s32 %v615, %v617
    %v619 = vrot.slane %v603, %v618
    %v621 = vunpack.c.l.s4 1966171168
    %v622 = vunpack.c.0.s8 %v621
    %v623 = vlaneseq
    %v624 = vshrl.u32 %v623, 7
    %v625 = vsub.s32 %v622, %v624
    %v626 = vrot.slane %v604, %v625
    %v628 = vunpack.c.l.s4 1966171168
    %v629 = vunpack.c.0.s8 %v628
    %v630 = vlaneseq
    %v631 = vshrl.u32 %v630, 7
    %v632 = vsub.s32 %v629, %v631
    %v633 = vrot.slane %v605, %v632
    %v634 = vcombine.low %v612, %v619
    %v635 = vcombine.low %v626, %v633
    %v637 = vunpack.c.l.s4 1966171168
    %v638 = vunpack.c.0.s8 %v637
    %v639 = vlaneseq
    %v640 = vshrl.u32 %v639, 7
    %v641 = vsub.s32 %v638, %v640
    %v642 = vrot.slane %v634, %v641
    %v644 = vunpack.c.l.s4 1966171168
    %v645 = vunpack.c.0.s8 %v644
    %v646 = vlaneseq
    %v647 = vshrl.u32 %v646, 7
    %v648 = vsub.s32 %v645, %v647
    %v649 = vrot.slane %v635, %v648
    %v650 = vcombine.low %v642, %v649
    %652 = vmatprep.subr.mxu0 %v37
    %653 = vmatpush1.msra.mxu0 %v36
    %654 = vmatprep.subr.mxu0 %v41
    %655 = vmatpush1.msra.mxu0 %v40
    %656 = vmatprep.subr.mxu0 %v45
    %657 = vmatpush1.msra.mxu0 %v44
    %658 = vmatprep.subr.mxu0 %v49
    %659 = vmatpush1.msra.mxu0 %v48
    %660 = vmatprep.subr.mxu0 %v53
    %661 = vmatpush1.msra.mxu0 %v52
    %662 = vmatprep.subr.mxu0 %v57
    %663 = vmatpush1.msra.mxu0 %v56
    %664 = vmatprep.subr.mxu0 %v61
    %665 = vmatpush1.msra.mxu0 %v60
    %666 = vmatprep.subr.mxu0 %v65
    %667 = vmatpush1.msra.mxu0 %v64
    %668 = vmatprep.subr.mxu0 %v69
    %669 = vmatpush1.msra.mxu0 %v68
    %670 = vmatprep.subr.mxu0 %v73
    %671 = vmatpush1.msra.mxu0 %v72
    %672 = vmatprep.subr.mxu0 %v77
    %673 = vmatpush1.msra.mxu0 %v76
    %674 = vmatprep.subr.mxu0 %v81
    %675 = vmatpush1.msra.mxu0 %v80
    %676 = vmatprep.subr.mxu0 %v85
    %677 = vmatpush1.msra.mxu0 %v84
    %678 = vmatprep.subr.mxu0 %v89
    %679 = vmatpush1.msra.mxu0 %v88
    %680 = vmatprep.subr.mxu0 %v93
    %681 = vmatpush1.msra.mxu0 %v92
    %682 = vmatprep.subr.mxu0 %v97
    %683 = vmatpush1.msra.mxu0 %v96
    %684 = vmatprep.subr.mxu0 0.0
    %685 = vmatpush1.msra.mxu0 0.0
    %686 = vmatprep.subr.mxu0 0.0
    %687 = vmatpush1.msra.mxu0 0.0
    %688 = vmatprep.subr.mxu0 0.0
    %689 = vmatpush1.msra.mxu0 0.0
    %690 = vmatprep.subr.mxu0 0.0
    %691 = vmatpush1.msra.mxu0 0.0
    %692 = vmatprep.subr.mxu0 0.0
    %693 = vmatpush1.msra.mxu0 0.0
    %694 = vmatprep.subr.mxu0 0.0
    %695 = vmatpush1.msra.mxu0 0.0
    %696 = vmatprep.subr.mxu0 0.0
    %697 = vmatpush1.msra.mxu0 0.0
    %698 = vmatprep.subr.mxu0 0.0
    %699 = vmatpush1.msra.mxu0 0.0
    %700 = vmatprep.subr.mxu0 0.0
    %701 = vmatpush1.msra.mxu0 0.0
    %702 = vmatprep.subr.mxu0 0.0
    %703 = vmatpush1.msra.mxu0 0.0
    %704 = vmatprep.subr.mxu0 0.0
    %705 = vmatpush1.msra.mxu0 0.0
    %706 = vmatprep.subr.mxu0 0.0
    %707 = vmatpush1.msra.mxu0 0.0
    %708 = vmatprep.subr.mxu0 0.0
    %709 = vmatpush1.msra.mxu0 0.0
    %710 = vmatprep.subr.mxu0 0.0
    %711 = vmatpush1.msra.mxu0 0.0
    %712 = vmatprep.subr.mxu0 0.0
    %713 = vmatpush1.msra.mxu0 0.0
    %714 = vmatprep.subr.mxu0 0.0
    %715 = vmatpush1.msra.mxu0 0.0
    %716 = vmatprep.mubr.f32.mxu0 0.0
    %717 = vmatmul.mubr.f32.gmra.mrb[0].mxu0 %v650
    %v718 = vpop.f32.mrb[0].mxu0
    %v719 = vadd.f32 0.0, %v718
    %v720 = vpop.f32.mrb[0].mxu0
    %v721 = vadd.f32 0.0, %v720
    %722 = vdwg.mxu0
    %723 = vmatprep.subr.mxu0 %v39
    %724 = vmatpush1.msra.mxu0 %v38
    %725 = vmatprep.subr.mxu0 %v43
    %726 = vmatpush1.msra.mxu0 %v42
    %727 = vmatprep.subr.mxu0 %v47
    %728 = vmatpush1.msra.mxu0 %v46
    %729 = vmatprep.subr.mxu0 %v51
    %730 = vmatpush1.msra.mxu0 %v50
    %731 = vmatprep.subr.mxu0 %v55
    %732 = vmatpush1.msra.mxu0 %v54
    %733 = vmatprep.subr.mxu0 %v59
    %734 = vmatpush1.msra.mxu0 %v58
    %735 = vmatprep.subr.mxu0 %v63
    %736 = vmatpush1.msra.mxu0 %v62
    %737 = vmatprep.subr.mxu0 %v67
    %738 = vmatpush1.msra.mxu0 %v66
    %739 = vmatprep.subr.mxu0 %v71
    %740 = vmatpush1.msra.mxu0 %v70
    %741 = vmatprep.subr.mxu0 %v75
    %742 = vmatpush1.msra.mxu0 %v74
    %743 = vmatprep.subr.mxu0 %v79
    %744 = vmatpush1.msra.mxu0 %v78
    %745 = vmatprep.subr.mxu0 %v83
    %746 = vmatpush1.msra.mxu0 %v82
    %747 = vmatprep.subr.mxu0 %v87
    %748 = vmatpush1.msra.mxu0 %v86
    %749 = vmatprep.subr.mxu0 %v91
    %750 = vmatpush1.msra.mxu0 %v90
    %751 = vmatprep.subr.mxu0 %v95
    %752 = vmatpush1.msra.mxu0 %v94
    %753 = vmatprep.subr.mxu0 %v99
    %754 = vmatpush1.msra.mxu0 %v98
    %755 = vmatprep.subr.mxu0 0.0
    %756 = vmatpush1.msra.mxu0 0.0
    %757 = vmatprep.subr.mxu0 0.0
    %758 = vmatpush1.msra.mxu0 0.0
    %759 = vmatprep.subr.mxu0 0.0
    %760 = vmatpush1.msra.mxu0 0.0
    %761 = vmatprep.subr.mxu0 0.0
    %762 = vmatpush1.msra.mxu0 0.0
    %763 = vmatprep.subr.mxu0 0.0
    %764 = vmatpush1.msra.mxu0 0.0
    %765 = vmatprep.subr.mxu0 0.0
    %766 = vmatpush1.msra.mxu0 0.0
    %767 = vmatprep.subr.mxu0 0.0
    %768 = vmatpush1.msra.mxu0 0.0
    %769 = vmatprep.subr.mxu0 0.0
    %770 = vmatpush1.msra.mxu0 0.0
    %771 = vmatprep.subr.mxu0 0.0
    %772 = vmatpush1.msra.mxu0 0.0
    %773 = vmatprep.subr.mxu0 0.0
    %774 = vmatpush1.msra.mxu0 0.0
    %775 = vmatprep.subr.mxu0 0.0
    %776 = vmatpush1.msra.mxu0 0.0
    %777 = vmatprep.subr.mxu0 0.0
    %778 = vmatpush1.msra.mxu0 0.0
    %779 = vmatprep.subr.mxu0 0.0
    %780 = vmatpush1.msra.mxu0 0.0
    %781 = vmatprep.subr.mxu0 0.0
    %782 = vmatpush1.msra.mxu0 0.0
    %783 = vmatprep.subr.mxu0 0.0
    %784 = vmatpush1.msra.mxu0 0.0
    %785 = vmatprep.subr.mxu0 0.0
    %786 = vmatpush1.msra.mxu0 0.0
    %787 = vmatprep.mubr.f32.mxu0 0.0
    %788 = vmatmul.mubr.f32.gmra.mrb[0].mxu0 %v650
    %v789 = vpop.f32.mrb[0].mxu0
    %v790 = vadd.f32 0.0, %v789
    %v791 = vpop.f32.mrb[0].mxu0
    %v792 = vadd.f32 0.0, %v791
    %793 = vdwg.mxu0
    %v798 = vcombine.low %v719, %v721
    %v799 = vcombine.high %v719, %v721
    %v800 = vcombine.low %v790, %v792
    %v801 = vcombine.high %v790, %v792
    %v803 = vunpack.c.l.s4 1966171168
    %v804 = vunpack.c.0.s8 %v803
    %v805 = vlaneseq
    %v806 = vshrl.u32 %v805, 7
    %v807 = vsub.s32 %v804, %v806
    %v808 = vrot.slane %v798, %v807
    %v810 = vunpack.c.l.s4 1966171168
    %v811 = vunpack.c.0.s8 %v810
    %v812 = vlaneseq
    %v813 = vshrl.u32 %v812, 7
    %v814 = vsub.s32 %v811, %v813
    %v815 = vrot.slane %v799, %v814
    %v817 = vunpack.c.l.s4 1966171168
    %v818 = vunpack.c.0.s8 %v817
    %v819 = vlaneseq
    %v820 = vshrl.u32 %v819, 7
    %v821 = vsub.s32 %v818, %v820
    %v822 = vrot.slane %v800, %v821
    %v824 = vunpack.c.l.s4 1966171168
    %v825 = vunpack.c.0.s8 %v824
    %v826 = vlaneseq
    %v827 = vshrl.u32 %v826, 7
    %v828 = vsub.s32 %v825, %v827
    %v829 = vrot.slane %v801, %v828
    %v830 = vcombine.low %v808, %v822
    %v831 = vcombine.high %v808, %v822
    %v832 = vcombine.low %v815, %v829
    %v833 = vcombine.high %v815, %v829
    %v835 = vunpack.c.l.s4 1966171168
    %v836 = vunpack.c.0.s8 %v835
    %v837 = vlaneseq
    %v838 = vshrl.u32 %v837, 7
    %v839 = vsub.s32 %v836, %v838
    %v840 = vrot.slane %v830, %v839
    %v842 = vunpack.c.l.s4 1966171168
    %v843 = vunpack.c.0.s8 %v842
    %v844 = vlaneseq
    %v845 = vshrl.u32 %v844, 7
    %v846 = vsub.s32 %v843, %v845
    %v847 = vrot.slane %v832, %v846
    %v849 = vunpack.c.l.s4 1966171168
    %v850 = vunpack.c.0.s8 %v849
    %v851 = vlaneseq
    %v852 = vshrl.u32 %v851, 7
    %v853 = vsub.s32 %v850, %v852
    %v854 = vrot.slane %v831, %v853
    %v856 = vunpack.c.l.s4 1966171168
    %v857 = vunpack.c.0.s8 %v856
    %v858 = vlaneseq
    %v859 = vshrl.u32 %v858, 7
    %v860 = vsub.s32 %v857, %v859
    %v861 = vrot.slane %v833, %v860
    %v862 = vcombine.high %v840, %v840
    %v863 = vcombine.high %v847, %v847
    %v864 = vcombine.high %v854, %v854
    %v865 = vcombine.high %v861, %v861
    %v874 = vadd.f32 %v579, %v840
    %v875 = vadd.f32 %v581, %v854
    %v876 = vadd.f32 %v583, %v862
    %v877 = vadd.f32 %v585, %v864
    %v878 = vadd.f32 %v587, %v847
    %v879 = vadd.f32 %v589, %v861
    %v880 = vadd.f32 %v591, %v863
    %v881 = vadd.f32 %v593, %v865
    %v882 = vxor.u32 %v874, 2147483648
    %v883 = vxor.u32 %v875, 2147483648
    %v884 = vxor.u32 %v876, 2147483648
    %v885 = vxor.u32 %v877, 2147483648
    %v886 = vxor.u32 %v878, 2147483648
    %v887 = vxor.u32 %v879, 2147483648
    %v888 = vxor.u32 %v880, 2147483648
    %v889 = vxor.u32 %v881, 2147483648
    %v890 = vmul.f32 %v882, 1.442695
    %v891 = vpow.pop %v890
    %v892 = vmul.f32 %v883, 1.442695
    %v893 = vpow.pop %v892
    %v894 = vmul.f32 %v884, 1.442695
    %v895 = vpow.pop %v894
    %v896 = vmul.f32 %v885, 1.442695
    %v897 = vpow.pop %v896
    %v898 = vmul.f32 %v886, 1.442695
    %v899 = vpow.pop %v898
    %v900 = vmul.f32 %v887, 1.442695
    %v901 = vpow.pop %v900
    %v902 = vmul.f32 %v888, 1.442695
    %v903 = vpow.pop %v902
    %v904 = vmul.f32 %v889, 1.442695
    %v905 = vpow.pop %v904
    %v906 = vadd.f32 %v891, 1.0
    %v907 = vadd.f32 %v893, 1.0
    %v908 = vadd.f32 %v895, 1.0
    %v909 = vadd.f32 %v897, 1.0
    %v910 = vadd.f32 %v899, 1.0
    %v911 = vadd.f32 %v901, 1.0
    %v912 = vadd.f32 %v903, 1.0
    %v913 = vadd.f32 %v905, 1.0
    %v914 = vrcp.pop %v906
    %v915 = vmul.f32 1.0, %v914
    %v916 = vrcp.pop %v907
    %v917 = vmul.f32 1.0, %v916
    %v918 = vrcp.pop %v908
    %v919 = vmul.f32 1.0, %v918
    %v920 = vrcp.pop %v909
    %v921 = vmul.f32 1.0, %v920
    %v922 = vrcp.pop %v910
    %v923 = vmul.f32 1.0, %v922
    %v924 = vrcp.pop %v911
    %v925 = vmul.f32 1.0, %v924
    %v926 = vrcp.pop %v912
    %v927 = vmul.f32 1.0, %v926
    %v928 = vrcp.pop %v913
    %v929 = vmul.f32 1.0, %v928
    %v938 = vrot.slane %v874, 1
    %v939 = vrot.slane %v875, 1
    %v940 = vrot.slane %v876, 1
    %v941 = vrot.slane %v877, 1
    %v942 = vrot.slane %v878, 1
    %v943 = vrot.slane %v879, 1
    %v944 = vrot.slane %v880, 1
    %v945 = vrot.slane %v881, 1
    %v954 = vxor.u32 %v938, 2147483648
    %v955 = vxor.u32 %v939, 2147483648
    %v956 = vxor.u32 %v940, 2147483648
    %v957 = vxor.u32 %v941, 2147483648
    %v958 = vxor.u32 %v942, 2147483648
    %v959 = vxor.u32 %v943, 2147483648
    %v960 = vxor.u32 %v944, 2147483648
    %v961 = vxor.u32 %v945, 2147483648
    %v962 = vmul.f32 %v954, 1.442695
    %v963 = vpow.pop %v962
    %v964 = vmul.f32 %v955, 1.442695
    %v965 = vpow.pop %v964
    %v966 = vmul.f32 %v956, 1.442695
    %v967 = vpow.pop %v966
    %v968 = vmul.f32 %v957, 1.442695
    %v969 = vpow.pop %v968
    %v970 = vmul.f32 %v958, 1.442695
    %v971 = vpow.pop %v970
    %v972 = vmul.f32 %v959, 1.442695
    %v973 = vpow.pop %v972
    %v974 = vmul.f32 %v960, 1.442695
    %v975 = vpow.pop %v974
    %v976 = vmul.f32 %v961, 1.442695
    %v977 = vpow.pop %v976
    %v978 = vadd.f32 %v963, 1.0
    %v979 = vadd.f32 %v965, 1.0
    %v980 = vadd.f32 %v967, 1.0
    %v981 = vadd.f32 %v969, 1.0
    %v982 = vadd.f32 %v971, 1.0
    %v983 = vadd.f32 %v973, 1.0
    %v984 = vadd.f32 %v975, 1.0
    %v985 = vadd.f32 %v977, 1.0
    %v986 = vrcp.pop %v978
    %v987 = vmul.f32 1.0, %v986
    %v988 = vrcp.pop %v979
    %v989 = vmul.f32 1.0, %v988
    %v990 = vrcp.pop %v980
    %v991 = vmul.f32 1.0, %v990
    %v992 = vrcp.pop %v981
    %v993 = vmul.f32 1.0, %v992
    %v994 = vrcp.pop %v982
    %v995 = vmul.f32 1.0, %v994
    %v996 = vrcp.pop %v983
    %v997 = vmul.f32 1.0, %v996
    %v998 = vrcp.pop %v984
    %v999 = vmul.f32 1.0, %v998
    %v1000 = vrcp.pop %v985
    %v1001 = vmul.f32 1.0, %v1000
    %v1002 = vrot.slane %v874, 2
    %v1003 = vrot.slane %v875, 2
    %v1004 = vrot.slane %v876, 2
    %v1005 = vrot.slane %v877, 2
    %v1006 = vrot.slane %v878, 2
    %v1007 = vrot.slane %v879, 2
    %v1008 = vrot.slane %v880, 2
    %v1009 = vrot.slane %v881, 2
    %v1018 = vtanh.pop %v1002
    %v1019 = vtanh.pop %v1003
    %v1020 = vtanh.pop %v1004
    %v1021 = vtanh.pop %v1005
    %v1022 = vtanh.pop %v1006
    %v1023 = vtanh.pop %v1007
    %v1024 = vtanh.pop %v1008
    %v1025 = vtanh.pop %v1009
    %v1026 = vrot.slane %v874, 3
    %v1027 = vrot.slane %v875, 3
    %v1028 = vrot.slane %v876, 3
    %v1029 = vrot.slane %v877, 3
    %v1030 = vrot.slane %v878, 3
    %v1031 = vrot.slane %v879, 3
    %v1032 = vrot.slane %v880, 3
    %v1033 = vrot.slane %v881, 3
    %v1042 = vxor.u32 %v1026, 2147483648
    %v1043 = vxor.u32 %v1027, 2147483648
    %v1044 = vxor.u32 %v1028, 2147483648
    %v1045 = vxor.u32 %v1029, 2147483648
    %v1046 = vxor.u32 %v1030, 2147483648
    %v1047 = vxor.u32 %v1031, 2147483648
    %v1048 = vxor.u32 %v1032, 2147483648
    %v1049 = vxor.u32 %v1033, 2147483648
    %v1050 = vmul.f32 %v1042, 1.442695
    %v1051 = vpow.pop %v1050
    %v1052 = vmul.f32 %v1043, 1.442695
    %v1053 = vpow.pop %v1052
    %v1054 = vmul.f32 %v1044, 1.442695
    %v1055 = vpow.pop %v1054
    %v1056 = vmul.f32 %v1045, 1.442695
    %v1057 = vpow.pop %v1056
    %v1058 = vmul.f32 %v1046, 1.442695
    %v1059 = vpow.pop %v1058
    %v1060 = vmul.f32 %v1047, 1.442695
    %v1061 = vpow.pop %v1060
    %v1062 = vmul.f32 %v1048, 1.442695
    %v1063 = vpow.pop %v1062
    %v1064 = vmul.f32 %v1049, 1.442695
    %v1065 = vpow.pop %v1064
    %v1066 = vadd.f32 %v1051, 1.0
    %v1067 = vadd.f32 %v1053, 1.0
    %v1068 = vadd.f32 %v1055, 1.0
    %v1069 = vadd.f32 %v1057, 1.0
    %v1070 = vadd.f32 %v1059, 1.0
    %v1071 = vadd.f32 %v1061, 1.0
    %v1072 = vadd.f32 %v1063, 1.0
    %v1073 = vadd.f32 %v1065, 1.0
    %v1074 = vrcp.pop %v1066
    %v1075 = vmul.f32 1.0, %v1074
    %v1076 = vrcp.pop %v1067
    %v1077 = vmul.f32 1.0, %v1076
    %v1078 = vrcp.pop %v1068
    %v1079 = vmul.f32 1.0, %v1078
    %v1080 = vrcp.pop %v1069
    %v1081 = vmul.f32 1.0, %v1080
    %v1082 = vrcp.pop %v1070
    %v1083 = vmul.f32 1.0, %v1082
    %v1084 = vrcp.pop %v1071
    %v1085 = vmul.f32 1.0, %v1084
    %v1086 = vrcp.pop %v1072
    %v1087 = vmul.f32 1.0, %v1086
    %v1088 = vrcp.pop %v1073
    %v1089 = vmul.f32 1.0, %v1088
    %v1090 = vmul.f32 %v987, %v554
    %v1091 = vmul.f32 %v989, %v555
    %v1092 = vmul.f32 %v991, %v556
    %v1093 = vmul.f32 %v993, %v557
    %v1094 = vmul.f32 %v995, %v558
    %v1095 = vmul.f32 %v997, %v559
    %v1096 = vmul.f32 %v999, %v560
    %v1097 = vmul.f32 %v1001, %v561
    %v1098 = vmul.f32 %v915, %v1018
    %v1099 = vmul.f32 %v917, %v1019
    %v1100 = vmul.f32 %v919, %v1020
    %v1101 = vmul.f32 %v921, %v1021
    %v1102 = vmul.f32 %v923, %v1022
    %v1103 = vmul.f32 %v925, %v1023
    %v1104 = vmul.f32 %v927, %v1024
    %v1105 = vmul.f32 %v929, %v1025
    %v1106 = vadd.f32 %v1090, %v1098
    %v1107 = vadd.f32 %v1091, %v1099
    %v1108 = vadd.f32 %v1092, %v1100
    %v1109 = vadd.f32 %v1093, %v1101
    %v1110 = vadd.f32 %v1094, %v1102
    %v1111 = vadd.f32 %v1095, %v1103
    %v1112 = vadd.f32 %v1096, %v1104
    %v1113 = vadd.f32 %v1097, %v1105
    %v1114 = vtanh.pop %v1106
    %v1115 = vtanh.pop %v1107
    %v1116 = vtanh.pop %v1108
    %v1117 = vtanh.pop %v1109
    %v1118 = vtanh.pop %v1110
    %v1119 = vtanh.pop %v1111
    %v1120 = vtanh.pop %v1112
    %v1121 = vtanh.pop %v1113
    %v1122 = vmul.f32 %v1075, %v1114
    %v1123 = vmul.f32 %v1077, %v1115
    %v1124 = vmul.f32 %v1079, %v1116
    %v1125 = vmul.f32 %v1081, %v1117
    %v1126 = vmul.f32 %v1083, %v1118
    %v1127 = vmul.f32 %v1085, %v1119
    %v1128 = vmul.f32 %v1087, %v1120
    %v1129 = vmul.f32 %v1089, %v1121
    %s1130 = scalar_lea.vmem %s0, 2
    %v1131 = vld [vmem:[%s1130] ss:$8 sm:$0xf]
    %s1132 = scalar_lea.vmem %s0, 34
    %v1133 = vld [vmem:[%s1132] ss:$8 sm:$0xf]
    %s1134 = scalar_lea.vmem %s0, 66
    %v1135 = vld [vmem:[%s1134] ss:$8 sm:$0xf]
    %s1136 = scalar_lea.vmem %s0, 98
    %v1137 = vld [vmem:[%s1136] ss:$8 sm:$0xf]
    %s1138 = scalar_lea.vmem %s0, 130
    %v1139 = vld [vmem:[%s1138] ss:$8 sm:$0xf]
    %s1140 = scalar_lea.vmem %s0, 162
    %v1141 = vld [vmem:[%s1140] ss:$8 sm:$0xf]
    %s1142 = scalar_lea.vmem %s0, 194
    %v1143 = vld [vmem:[%s1142] ss:$8 sm:$0xf]
    %s1144 = scalar_lea.vmem %s0, 226
    %v1145 = vld [vmem:[%s1144] ss:$8 sm:$0xf]
    %v1154 = vcombine.low %v1122, %v1123
    %v1155 = vcombine.low %v1124, %v1125
    %v1156 = vcombine.low %v1126, %v1127
    %v1157 = vcombine.low %v1128, %v1129
    %v1159 = vunpack.c.l.s4 1966171168
    %v1160 = vunpack.c.0.s8 %v1159
    %v1161 = vlaneseq
    %v1162 = vshrl.u32 %v1161, 7
    %v1163 = vsub.s32 %v1160, %v1162
    %v1164 = vrot.slane %v1154, %v1163
    %v1166 = vunpack.c.l.s4 1966171168
    %v1167 = vunpack.c.0.s8 %v1166
    %v1168 = vlaneseq
    %v1169 = vshrl.u32 %v1168, 7
    %v1170 = vsub.s32 %v1167, %v1169
    %v1171 = vrot.slane %v1155, %v1170
    %v1173 = vunpack.c.l.s4 1966171168
    %v1174 = vunpack.c.0.s8 %v1173
    %v1175 = vlaneseq
    %v1176 = vshrl.u32 %v1175, 7
    %v1177 = vsub.s32 %v1174, %v1176
    %v1178 = vrot.slane %v1156, %v1177
    %v1180 = vunpack.c.l.s4 1966171168
    %v1181 = vunpack.c.0.s8 %v1180
    %v1182 = vlaneseq
    %v1183 = vshrl.u32 %v1182, 7
    %v1184 = vsub.s32 %v1181, %v1183
    %v1185 = vrot.slane %v1157, %v1184
    %v1186 = vcombine.low %v1164, %v1171
    %v1187 = vcombine.low %v1178, %v1185
    %v1189 = vunpack.c.l.s4 1966171168
    %v1190 = vunpack.c.0.s8 %v1189
    %v1191 = vlaneseq
    %v1192 = vshrl.u32 %v1191, 7
    %v1193 = vsub.s32 %v1190, %v1192
    %v1194 = vrot.slane %v1186, %v1193
    %v1196 = vunpack.c.l.s4 1966171168
    %v1197 = vunpack.c.0.s8 %v1196
    %v1198 = vlaneseq
    %v1199 = vshrl.u32 %v1198, 7
    %v1200 = vsub.s32 %v1197, %v1199
    %v1201 = vrot.slane %v1187, %v1200
    %v1202 = vcombine.low %v1194, %v1201
    %1204 = vmatprep.subr.mxu0 %v37
    %1205 = vmatpush1.msra.mxu0 %v36
    %1206 = vmatprep.subr.mxu0 %v41
    %1207 = vmatpush1.msra.mxu0 %v40
    %1208 = vmatprep.subr.mxu0 %v45
    %1209 = vmatpush1.msra.mxu0 %v44
    %1210 = vmatprep.subr.mxu0 %v49
    %1211 = vmatpush1.msra.mxu0 %v48
    %1212 = vmatprep.subr.mxu0 %v53
    %1213 = vmatpush1.msra.mxu0 %v52
    %1214 = vmatprep.subr.mxu0 %v57
    %1215 = vmatpush1.msra.mxu0 %v56
    %1216 = vmatprep.subr.mxu0 %v61
    %1217 = vmatpush1.msra.mxu0 %v60
    %1218 = vmatprep.subr.mxu0 %v65
    %1219 = vmatpush1.msra.mxu0 %v64
    %1220 = vmatprep.subr.mxu0 %v69
    %1221 = vmatpush1.msra.mxu0 %v68
    %1222 = vmatprep.subr.mxu0 %v73
    %1223 = vmatpush1.msra.mxu0 %v72
    %1224 = vmatprep.subr.mxu0 %v77
    %1225 = vmatpush1.msra.mxu0 %v76
    %1226 = vmatprep.subr.mxu0 %v81
    %1227 = vmatpush1.msra.mxu0 %v80
    %1228 = vmatprep.subr.mxu0 %v85
    %1229 = vmatpush1.msra.mxu0 %v84
    %1230 = vmatprep.subr.mxu0 %v89
    %1231 = vmatpush1.msra.mxu0 %v88
    %1232 = vmatprep.subr.mxu0 %v93
    %1233 = vmatpush1.msra.mxu0 %v92
    %1234 = vmatprep.subr.mxu0 %v97
    %1235 = vmatpush1.msra.mxu0 %v96
    %1236 = vmatprep.subr.mxu0 0.0
    %1237 = vmatpush1.msra.mxu0 0.0
    %1238 = vmatprep.subr.mxu0 0.0
    %1239 = vmatpush1.msra.mxu0 0.0
    %1240 = vmatprep.subr.mxu0 0.0
    %1241 = vmatpush1.msra.mxu0 0.0
    %1242 = vmatprep.subr.mxu0 0.0
    %1243 = vmatpush1.msra.mxu0 0.0
    %1244 = vmatprep.subr.mxu0 0.0
    %1245 = vmatpush1.msra.mxu0 0.0
    %1246 = vmatprep.subr.mxu0 0.0
    %1247 = vmatpush1.msra.mxu0 0.0
    %1248 = vmatprep.subr.mxu0 0.0
    %1249 = vmatpush1.msra.mxu0 0.0
    %1250 = vmatprep.subr.mxu0 0.0
    %1251 = vmatpush1.msra.mxu0 0.0
    %1252 = vmatprep.subr.mxu0 0.0
    %1253 = vmatpush1.msra.mxu0 0.0
    %1254 = vmatprep.subr.mxu0 0.0
    %1255 = vmatpush1.msra.mxu0 0.0
    %1256 = vmatprep.subr.mxu0 0.0
    %1257 = vmatpush1.msra.mxu0 0.0
    %1258 = vmatprep.subr.mxu0 0.0
    %1259 = vmatpush1.msra.mxu0 0.0
    %1260 = vmatprep.subr.mxu0 0.0
    %1261 = vmatpush1.msra.mxu0 0.0
    %1262 = vmatprep.subr.mxu0 0.0
    %1263 = vmatpush1.msra.mxu0 0.0
    %1264 = vmatprep.subr.mxu0 0.0
    %1265 = vmatpush1.msra.mxu0 0.0
    %1266 = vmatprep.subr.mxu0 0.0
    %1267 = vmatpush1.msra.mxu0 0.0
    %1268 = vmatprep.mubr.f32.mxu0 0.0
    %1269 = vmatmul.mubr.f32.gmra.mrb[0].mxu0 %v1202
    %v1270 = vpop.f32.mrb[0].mxu0
    %v1271 = vadd.f32 0.0, %v1270
    %v1272 = vpop.f32.mrb[0].mxu0
    %v1273 = vadd.f32 0.0, %v1272
    %1274 = vdwg.mxu0
    %1275 = vmatprep.subr.mxu0 %v39
    %1276 = vmatpush1.msra.mxu0 %v38
    %1277 = vmatprep.subr.mxu0 %v43
    %1278 = vmatpush1.msra.mxu0 %v42
    %1279 = vmatprep.subr.mxu0 %v47
    %1280 = vmatpush1.msra.mxu0 %v46
    %1281 = vmatprep.subr.mxu0 %v51
    %1282 = vmatpush1.msra.mxu0 %v50
    %1283 = vmatprep.subr.mxu0 %v55
    %1284 = vmatpush1.msra.mxu0 %v54
    %1285 = vmatprep.subr.mxu0 %v59
    %1286 = vmatpush1.msra.mxu0 %v58
    %1287 = vmatprep.subr.mxu0 %v63
    %1288 = vmatpush1.msra.mxu0 %v62
    %1289 = vmatprep.subr.mxu0 %v67
    %1290 = vmatpush1.msra.mxu0 %v66
    %1291 = vmatprep.subr.mxu0 %v71
    %1292 = vmatpush1.msra.mxu0 %v70
    %1293 = vmatprep.subr.mxu0 %v75
    %1294 = vmatpush1.msra.mxu0 %v74
    %1295 = vmatprep.subr.mxu0 %v79
    %1296 = vmatpush1.msra.mxu0 %v78
    %1297 = vmatprep.subr.mxu0 %v83
    %1298 = vmatpush1.msra.mxu0 %v82
    %1299 = vmatprep.subr.mxu0 %v87
    %1300 = vmatpush1.msra.mxu0 %v86
    %1301 = vmatprep.subr.mxu0 %v91
    %1302 = vmatpush1.msra.mxu0 %v90
    %1303 = vmatprep.subr.mxu0 %v95
    %1304 = vmatpush1.msra.mxu0 %v94
    %1305 = vmatprep.subr.mxu0 %v99
    %1306 = vmatpush1.msra.mxu0 %v98
    %1307 = vmatprep.subr.mxu0 0.0
    %1308 = vmatpush1.msra.mxu0 0.0
    %1309 = vmatprep.subr.mxu0 0.0
    %1310 = vmatpush1.msra.mxu0 0.0
    %1311 = vmatprep.subr.mxu0 0.0
    %1312 = vmatpush1.msra.mxu0 0.0
    %1313 = vmatprep.subr.mxu0 0.0
    %1314 = vmatpush1.msra.mxu0 0.0
    %1315 = vmatprep.subr.mxu0 0.0
    %1316 = vmatpush1.msra.mxu0 0.0
    %1317 = vmatprep.subr.mxu0 0.0
    %1318 = vmatpush1.msra.mxu0 0.0
    %1319 = vmatprep.subr.mxu0 0.0
    %1320 = vmatpush1.msra.mxu0 0.0
    %1321 = vmatprep.subr.mxu0 0.0
    %1322 = vmatpush1.msra.mxu0 0.0
    %1323 = vmatprep.subr.mxu0 0.0
    %1324 = vmatpush1.msra.mxu0 0.0
    %1325 = vmatprep.subr.mxu0 0.0
    %1326 = vmatpush1.msra.mxu0 0.0
    %1327 = vmatprep.subr.mxu0 0.0
    %1328 = vmatpush1.msra.mxu0 0.0
    %1329 = vmatprep.subr.mxu0 0.0
    %1330 = vmatpush1.msra.mxu0 0.0
    %1331 = vmatprep.subr.mxu0 0.0
    %1332 = vmatpush1.msra.mxu0 0.0
    %1333 = vmatprep.subr.mxu0 0.0
    %1334 = vmatpush1.msra.mxu0 0.0
    %1335 = vmatprep.subr.mxu0 0.0
    %1336 = vmatpush1.msra.mxu0 0.0
    %1337 = vmatprep.subr.mxu0 0.0
    %1338 = vmatpush1.msra.mxu0 0.0
    %1339 = vmatprep.mubr.f32.mxu0 0.0
    %1340 = vmatmul.mubr.f32.gmra.mrb[0].mxu0 %v1202
    %v1341 = vpop.f32.mrb[0].mxu0
    %v1342 = vadd.f32 0.0, %v1341
    %v1343 = vpop.f32.mrb[0].mxu0
    %v1344 = vadd.f32 0.0, %v1343
    %1345 = vdwg.mxu0
    %v1350 = vcombine.low %v1271, %v1273
    %v1351 = vcombine.high %v1271, %v1273
    %v1352 = vcombine.low %v1342, %v1344
    %v1353 = vcombine.high %v1342, %v1344
    %v1355 = vunpack.c.l.s4 1966171168
    %v1356 = vunpack.c.0.s8 %v1355
    %v1357 = vlaneseq
    %v1358 = vshrl.u32 %v1357, 7
    %v1359 = vsub.s32 %v1356, %v1358
    %v1360 = vrot.slane %v1350, %v1359
    %v1362 = vunpack.c.l.s4 1966171168
    %v1363 = vunpack.c.0.s8 %v1362
    %v1364 = vlaneseq
    %v1365 = vshrl.u32 %v1364, 7
    %v1366 = vsub.s32 %v1363, %v1365
    %v1367 = vrot.slane %v1351, %v1366
    %v1369 = vunpack.c.l.s4 1966171168
    %v1370 = vunpack.c.0.s8 %v1369
    %v1371 = vlaneseq
    %v1372 = vshrl.u32 %v1371, 7
    %v1373 = vsub.s32 %v1370, %v1372
    %v1374 = vrot.slane %v1352, %v1373
    %v1376 = vunpack.c.l.s4 1966171168
    %v1377 = vunpack.c.0.s8 %v1376
    %v1378 = vlaneseq
    %v1379 = vshrl.u32 %v1378, 7
    %v1380 = vsub.s32 %v1377, %v1379
    %v1381 = vrot.slane %v1353, %v1380
    %v1382 = vcombine.low %v1360, %v1374
    %v1383 = vcombine.high %v1360, %v1374
    %v1384 = vcombine.low %v1367, %v1381
    %v1385 = vcombine.high %v1367, %v1381
    %v1387 = vunpack.c.l.s4 1966171168
    %v1388 = vunpack.c.0.s8 %v1387
    %v1389 = vlaneseq
    %v1390 = vshrl.u32 %v1389, 7
    %v1391 = vsub.s32 %v1388, %v1390
    %v1392 = vrot.slane %v1382, %v1391
    %v1394 = vunpack.c.l.s4 1966171168
    %v1395 = vunpack.c.0.s8 %v1394
    %v1396 = vlaneseq
    %v1397 = vshrl.u32 %v1396, 7
    %v1398 = vsub.s32 %v1395, %v1397
    %v1399 = vrot.slane %v1384, %v1398
    %v1401 = vunpack.c.l.s4 1966171168
    %v1402 = vunpack.c.0.s8 %v1401
    %v1403 = vlaneseq
    %v1404 = vshrl.u32 %v1403, 7
    %v1405 = vsub.s32 %v1402, %v1404
    %v1406 = vrot.slane %v1383, %v1405
    %v1408 = vunpack.c.l.s4 1966171168
    %v1409 = vunpack.c.0.s8 %v1408
    %v1410 = vlaneseq
    %v1411 = vshrl.u32 %v1410, 7
    %v1412 = vsub.s32 %v1409, %v1411
    %v1413 = vrot.slane %v1385, %v1412
    %v1414 = vcombine.high %v1392, %v1392
    %v1415 = vcombine.high %v1399, %v1399
    %v1416 = vcombine.high %v1406, %v1406
    %v1417 = vcombine.high %v1413, %v1413
    %v1426 = vadd.f32 %v1131, %v1392
    %v1427 = vadd.f32 %v1133, %v1406
    %v1428 = vadd.f32 %v1135, %v1414
    %v1429 = vadd.f32 %v1137, %v1416
    %v1430 = vadd.f32 %v1139, %v1399
    %v1431 = vadd.f32 %v1141, %v1413
    %v1432 = vadd.f32 %v1143, %v1415
    %v1433 = vadd.f32 %v1145, %v1417
    %v1434 = vxor.u32 %v1426, 2147483648
    %v1435 = vxor.u32 %v1427, 2147483648
    %v1436 = vxor.u32 %v1428, 2147483648
    %v1437 = vxor.u32 %v1429, 2147483648
    %v1438 = vxor.u32 %v1430, 2147483648
    %v1439 = vxor.u32 %v1431, 2147483648
    %v1440 = vxor.u32 %v1432, 2147483648
    %v1441 = vxor.u32 %v1433, 2147483648
    %v1442 = vmul.f32 %v1434, 1.442695
    %v1443 = vpow.pop %v1442
    %v1444 = vmul.f32 %v1435, 1.442695
    %v1445 = vpow.pop %v1444
    %v1446 = vmul.f32 %v1436, 1.442695
    %v1447 = vpow.pop %v1446
    %v1448 = vmul.f32 %v1437, 1.442695
    %v1449 = vpow.pop %v1448
    %v1450 = vmul.f32 %v1438, 1.442695
    %v1451 = vpow.pop %v1450
    %v1452 = vmul.f32 %v1439, 1.442695
    %v1453 = vpow.pop %v1452
    %v1454 = vmul.f32 %v1440, 1.442695
    %v1455 = vpow.pop %v1454
    %v1456 = vmul.f32 %v1441, 1.442695
    %v1457 = vpow.pop %v1456
    %v1458 = vadd.f32 %v1443, 1.0
    %v1459 = vadd.f32 %v1445, 1.0
    %v1460 = vadd.f32 %v1447, 1.0
    %v1461 = vadd.f32 %v1449, 1.0
    %v1462 = vadd.f32 %v1451, 1.0
    %v1463 = vadd.f32 %v1453, 1.0
    %v1464 = vadd.f32 %v1455, 1.0
    %v1465 = vadd.f32 %v1457, 1.0
    %v1466 = vrcp.pop %v1458
    %v1467 = vmul.f32 1.0, %v1466
    %v1468 = vrcp.pop %v1459
    %v1469 = vmul.f32 1.0, %v1468
    %v1470 = vrcp.pop %v1460
    %v1471 = vmul.f32 1.0, %v1470
    %v1472 = vrcp.pop %v1461
    %v1473 = vmul.f32 1.0, %v1472
    %v1474 = vrcp.pop %v1462
    %v1475 = vmul.f32 1.0, %v1474
    %v1476 = vrcp.pop %v1463
    %v1477 = vmul.f32 1.0, %v1476
    %v1478 = vrcp.pop %v1464
    %v1479 = vmul.f32 1.0, %v1478
    %v1480 = vrcp.pop %v1465
    %v1481 = vmul.f32 1.0, %v1480
    %v1490 = vrot.slane %v1426, 1
    %v1491 = vrot.slane %v1427, 1
    %v1492 = vrot.slane %v1428, 1
    %v1493 = vrot.slane %v1429, 1
    %v1494 = vrot.slane %v1430, 1
    %v1495 = vrot.slane %v1431, 1
    %v1496 = vrot.slane %v1432, 1
    %v1497 = vrot.slane %v1433, 1
    %v1506 = vxor.u32 %v1490, 2147483648
    %v1507 = vxor.u32 %v1491, 2147483648
    %v1508 = vxor.u32 %v1492, 2147483648
    %v1509 = vxor.u32 %v1493, 2147483648
    %v1510 = vxor.u32 %v1494, 2147483648
    %v1511 = vxor.u32 %v1495, 2147483648
    %v1512 = vxor.u32 %v1496, 2147483648
    %v1513 = vxor.u32 %v1497, 2147483648
    %v1514 = vmul.f32 %v1506, 1.442695
    %v1515 = vpow.pop %v1514
    %v1516 = vmul.f32 %v1507, 1.442695
    %v1517 = vpow.pop %v1516
    %v1518 = vmul.f32 %v1508, 1.442695
    %v1519 = vpow.pop %v1518
    %v1520 = vmul.f32 %v1509, 1.442695
    %v1521 = vpow.pop %v1520
    %v1522 = vmul.f32 %v1510, 1.442695
    %v1523 = vpow.pop %v1522
    %v1524 = vmul.f32 %v1511, 1.442695
    %v1525 = vpow.pop %v1524
    %v1526 = vmul.f32 %v1512, 1.442695
    %v1527 = vpow.pop %v1526
    %v1528 = vmul.f32 %v1513, 1.442695
    %v1529 = vpow.pop %v1528
    %v1530 = vadd.f32 %v1515, 1.0
    %v1531 = vadd.f32 %v1517, 1.0
    %v1532 = vadd.f32 %v1519, 1.0
    %v1533 = vadd.f32 %v1521, 1.0
    %v1534 = vadd.f32 %v1523, 1.0
    %v1535 = vadd.f32 %v1525, 1.0
    %v1536 = vadd.f32 %v1527, 1.0
    %v1537 = vadd.f32 %v1529, 1.0
    %v1538 = vrcp.pop %v1530
    %v1539 = vmul.f32 1.0, %v1538
    %v1540 = vrcp.pop %v1531
    %v1541 = vmul.f32 1.0, %v1540
    %v1542 = vrcp.pop %v1532
    %v1543 = vmul.f32 1.0, %v1542
    %v1544 = vrcp.pop %v1533
    %v1545 = vmul.f32 1.0, %v1544
    %v1546 = vrcp.pop %v1534
    %v1547 = vmul.f32 1.0, %v1546
    %v1548 = vrcp.pop %v1535
    %v1549 = vmul.f32 1.0, %v1548
    %v1550 = vrcp.pop %v1536
    %v1551 = vmul.f32 1.0, %v1550
    %v1552 = vrcp.pop %v1537
    %v1553 = vmul.f32 1.0, %v1552
    %v1554 = vrot.slane %v1426, 2
    %v1555 = vrot.slane %v1427, 2
    %v1556 = vrot.slane %v1428, 2
    %v1557 = vrot.slane %v1429, 2
    %v1558 = vrot.slane %v1430, 2
    %v1559 = vrot.slane %v1431, 2
    %v1560 = vrot.slane %v1432, 2
    %v1561 = vrot.slane %v1433, 2
    %v1570 = vtanh.pop %v1554
    %v1571 = vtanh.pop %v1555
    %v1572 = vtanh.pop %v1556
    %v1573 = vtanh.pop %v1557
    %v1574 = vtanh.pop %v1558
    %v1575 = vtanh.pop %v1559
    %v1576 = vtanh.pop %v1560
    %v1577 = vtanh.pop %v1561
    %v1578 = vrot.slane %v1426, 3
    %v1579 = vrot.slane %v1427, 3
    %v1580 = vrot.slane %v1428, 3
    %v1581 = vrot.slane %v1429, 3
    %v1582 = vrot.slane %v1430, 3
    %v1583 = vrot.slane %v1431, 3
    %v1584 = vrot.slane %v1432, 3
    %v1585 = vrot.slane %v1433, 3
    %v1594 = vxor.u32 %v1578, 2147483648
    %v1595 = vxor.u32 %v1579, 2147483648
    %v1596 = vxor.u32 %v1580, 2147483648
    %v1597 = vxor.u32 %v1581, 2147483648
    %v1598 = vxor.u32 %v1582, 2147483648
    %v1599 = vxor.u32 %v1583, 2147483648
    %v1600 = vxor.u32 %v1584, 2147483648
    %v1601 = vxor.u32 %v1585, 2147483648
    %v1602 = vmul.f32 %v1594, 1.442695
    %v1603 = vpow.pop %v1602
    %v1604 = vmul.f32 %v1595, 1.442695
    %v1605 = vpow.pop %v1604
    %v1606 = vmul.f32 %v1596, 1.442695
    %v1607 = vpow.pop %v1606
    %v1608 = vmul.f32 %v1597, 1.442695
    %v1609 = vpow.pop %v1608
    %v1610 = vmul.f32 %v1598, 1.442695
    %v1611 = vpow.pop %v1610
    %v1612 = vmul.f32 %v1599, 1.442695
    %v1613 = vpow.pop %v1612
    %v1614 = vmul.f32 %v1600, 1.442695
    %v1615 = vpow.pop %v1614
    %v1616 = vmul.f32 %v1601, 1.442695
    %v1617 = vpow.pop %v1616
    %v1618 = vadd.f32 %v1603, 1.0
    %v1619 = vadd.f32 %v1605, 1.0
    %v1620 = vadd.f32 %v1607, 1.0
    %v1621 = vadd.f32 %v1609, 1.0
    %v1622 = vadd.f32 %v1611, 1.0
    %v1623 = vadd.f32 %v1613, 1.0
    %v1624 = vadd.f32 %v1615, 1.0
    %v1625 = vadd.f32 %v1617, 1.0
    %v1626 = vrcp.pop %v1618
    %v1627 = vmul.f32 1.0, %v1626
    %v1628 = vrcp.pop %v1619
    %v1629 = vmul.f32 1.0, %v1628
    %v1630 = vrcp.pop %v1620
    %v1631 = vmul.f32 1.0, %v1630
    %v1632 = vrcp.pop %v1621
    %v1633 = vmul.f32 1.0, %v1632
    %v1634 = vrcp.pop %v1622
    %v1635 = vmul.f32 1.0, %v1634
    %v1636 = vrcp.pop %v1623
    %v1637 = vmul.f32 1.0, %v1636
    %v1638 = vrcp.pop %v1624
    %v1639 = vmul.f32 1.0, %v1638
    %v1640 = vrcp.pop %v1625
    %v1641 = vmul.f32 1.0, %v1640
    %v1642 = vmul.f32 %v1539, %v1106
    %v1643 = vmul.f32 %v1541, %v1107
    %v1644 = vmul.f32 %v1543, %v1108
    %v1645 = vmul.f32 %v1545, %v1109
    %v1646 = vmul.f32 %v1547, %v1110
    %v1647 = vmul.f32 %v1549, %v1111
    %v1648 = vmul.f32 %v1551, %v1112
    %v1649 = vmul.f32 %v1553, %v1113
    %v1650 = vmul.f32 %v1467, %v1570
    %v1651 = vmul.f32 %v1469, %v1571
    %v1652 = vmul.f32 %v1471, %v1572
    %v1653 = vmul.f32 %v1473, %v1573
    %v1654 = vmul.f32 %v1475, %v1574
    %v1655 = vmul.f32 %v1477, %v1575
    %v1656 = vmul.f32 %v1479, %v1576
    %v1657 = vmul.f32 %v1481, %v1577
    %v1658 = vadd.f32 %v1642, %v1650
    %v1659 = vadd.f32 %v1643, %v1651
    %v1660 = vadd.f32 %v1644, %v1652
    %v1661 = vadd.f32 %v1645, %v1653
    %v1662 = vadd.f32 %v1646, %v1654
    %v1663 = vadd.f32 %v1647, %v1655
    %v1664 = vadd.f32 %v1648, %v1656
    %v1665 = vadd.f32 %v1649, %v1657
    %v1666 = vtanh.pop %v1658
    %v1667 = vtanh.pop %v1659
    %v1668 = vtanh.pop %v1660
    %v1669 = vtanh.pop %v1661
    %v1670 = vtanh.pop %v1662
    %v1671 = vtanh.pop %v1663
    %v1672 = vtanh.pop %v1664
    %v1673 = vtanh.pop %v1665
    %v1674 = vmul.f32 %v1627, %v1666
    %v1675 = vmul.f32 %v1629, %v1667
    %v1676 = vmul.f32 %v1631, %v1668
    %v1677 = vmul.f32 %v1633, %v1669
    %v1678 = vmul.f32 %v1635, %v1670
    %v1679 = vmul.f32 %v1637, %v1671
    %v1680 = vmul.f32 %v1639, %v1672
    %v1681 = vmul.f32 %v1641, %v1673
    %s1682 = scalar_lea.vmem %s0, 3
    %v1683 = vld [vmem:[%s1682] ss:$8 sm:$0xf]
    %s1684 = scalar_lea.vmem %s0, 35
    %v1685 = vld [vmem:[%s1684] ss:$8 sm:$0xf]
    %s1686 = scalar_lea.vmem %s0, 67
    %v1687 = vld [vmem:[%s1686] ss:$8 sm:$0xf]
    %s1688 = scalar_lea.vmem %s0, 99
    %v1689 = vld [vmem:[%s1688] ss:$8 sm:$0xf]
    %s1690 = scalar_lea.vmem %s0, 131
    %v1691 = vld [vmem:[%s1690] ss:$8 sm:$0xf]
    %s1692 = scalar_lea.vmem %s0, 163
    %v1693 = vld [vmem:[%s1692] ss:$8 sm:$0xf]
    %s1694 = scalar_lea.vmem %s0, 195
    %v1695 = vld [vmem:[%s1694] ss:$8 sm:$0xf]
    %s1696 = scalar_lea.vmem %s0, 227
    %v1697 = vld [vmem:[%s1696] ss:$8 sm:$0xf]
    %v1706 = vcombine.low %v1674, %v1675
    %v1707 = vcombine.low %v1676, %v1677
    %v1708 = vcombine.low %v1678, %v1679
    %v1709 = vcombine.low %v1680, %v1681
    %v1711 = vunpack.c.l.s4 1966171168
    %v1712 = vunpack.c.0.s8 %v1711
    %v1713 = vlaneseq
    %v1714 = vshrl.u32 %v1713, 7
    %v1715 = vsub.s32 %v1712, %v1714
    %v1716 = vrot.slane %v1706, %v1715
    %v1718 = vunpack.c.l.s4 1966171168
    %v1719 = vunpack.c.0.s8 %v1718
    %v1720 = vlaneseq
    %v1721 = vshrl.u32 %v1720, 7
    %v1722 = vsub.s32 %v1719, %v1721
    %v1723 = vrot.slane %v1707, %v1722
    %v1725 = vunpack.c.l.s4 1966171168
    %v1726 = vunpack.c.0.s8 %v1725
    %v1727 = vlaneseq
    %v1728 = vshrl.u32 %v1727, 7
    %v1729 = vsub.s32 %v1726, %v1728
    %v1730 = vrot.slane %v1708, %v1729
    %v1732 = vunpack.c.l.s4 1966171168
    %v1733 = vunpack.c.0.s8 %v1732
    %v1734 = vlaneseq
    %v1735 = vshrl.u32 %v1734, 7
    %v1736 = vsub.s32 %v1733, %v1735
    %v1737 = vrot.slane %v1709, %v1736
    %v1738 = vcombine.low %v1716, %v1723
    %v1739 = vcombine.low %v1730, %v1737
    %v1741 = vunpack.c.l.s4 1966171168
    %v1742 = vunpack.c.0.s8 %v1741
    %v1743 = vlaneseq
    %v1744 = vshrl.u32 %v1743, 7
    %v1745 = vsub.s32 %v1742, %v1744
    %v1746 = vrot.slane %v1738, %v1745
    %v1748 = vunpack.c.l.s4 1966171168
    %v1749 = vunpack.c.0.s8 %v1748
    %v1750 = vlaneseq
    %v1751 = vshrl.u32 %v1750, 7
    %v1752 = vsub.s32 %v1749, %v1751
    %v1753 = vrot.slane %v1739, %v1752
    %v1754 = vcombine.low %v1746, %v1753
    %1756 = vmatprep.subr.mxu0 %v37
    %1757 = vmatpush1.msra.mxu0 %v36
    %1758 = vmatprep.subr.mxu0 %v41
    %1759 = vmatpush1.msra.mxu0 %v40
    %1760 = vmatprep.subr.mxu0 %v45
    %1761 = vmatpush1.msra.mxu0 %v44
    %1762 = vmatprep.subr.mxu0 %v49
    %1763 = vmatpush1.msra.mxu0 %v48
    %1764 = vmatprep.subr.mxu0 %v53
    %1765 = vmatpush1.msra.mxu0 %v52
    %1766 = vmatprep.subr.mxu0 %v57
    %1767 = vmatpush1.msra.mxu0 %v56
    %1768 = vmatprep.subr.mxu0 %v61
    %1769 = vmatpush1.msra.mxu0 %v60
    %1770 = vmatprep.subr.mxu0 %v65
    %1771 = vmatpush1.msra.mxu0 %v64
    %1772 = vmatprep.subr.mxu0 %v69
    %1773 = vmatpush1.msra.mxu0 %v68
    %1774 = vmatprep.subr.mxu0 %v73
    %1775 = vmatpush1.msra.mxu0 %v72
    %1776 = vmatprep.subr.mxu0 %v77
    %1777 = vmatpush1.msra.mxu0 %v76
    %1778 = vmatprep.subr.mxu0 %v81
    %1779 = vmatpush1.msra.mxu0 %v80
    %1780 = vmatprep.subr.mxu0 %v85
    %1781 = vmatpush1.msra.mxu0 %v84
    %1782 = vmatprep.subr.mxu0 %v89
    %1783 = vmatpush1.msra.mxu0 %v88
    %1784 = vmatprep.subr.mxu0 %v93
    %1785 = vmatpush1.msra.mxu0 %v92
    %1786 = vmatprep.subr.mxu0 %v97
    %1787 = vmatpush1.msra.mxu0 %v96
    %1788 = vmatprep.subr.mxu0 0.0
    %1789 = vmatpush1.msra.mxu0 0.0
    %1790 = vmatprep.subr.mxu0 0.0
    %1791 = vmatpush1.msra.mxu0 0.0
    %1792 = vmatprep.subr.mxu0 0.0
    %1793 = vmatpush1.msra.mxu0 0.0
    %1794 = vmatprep.subr.mxu0 0.0
    %1795 = vmatpush1.msra.mxu0 0.0
    %1796 = vmatprep.subr.mxu0 0.0
    %1797 = vmatpush1.msra.mxu0 0.0
    %1798 = vmatprep.subr.mxu0 0.0
    %1799 = vmatpush1.msra.mxu0 0.0
    %1800 = vmatprep.subr.mxu0 0.0
    %1801 = vmatpush1.msra.mxu0 0.0
    %1802 = vmatprep.subr.mxu0 0.0
    %1803 = vmatpush1.msra.mxu0 0.0
    %1804 = vmatprep.subr.mxu0 0.0
    %1805 = vmatpush1.msra.mxu0 0.0
    %1806 = vmatprep.subr.mxu0 0.0
    %1807 = vmatpush1.msra.mxu0 0.0
    %1808 = vmatprep.subr.mxu0 0.0
    %1809 = vmatpush1.msra.mxu0 0.0
    %1810 = vmatprep.subr.mxu0 0.0
    %1811 = vmatpush1.msra.mxu0 0.0
    %1812 = vmatprep.subr.mxu0 0.0
    %1813 = vmatpush1.msra.mxu0 0.0
    %1814 = vmatprep.subr.mxu0 0.0
    %1815 = vmatpush1.msra.mxu0 0.0
    %1816 = vmatprep.subr.mxu0 0.0
    %1817 = vmatpush1.msra.mxu0 0.0
    %1818 = vmatprep.subr.mxu0 0.0
    %1819 = vmatpush1.msra.mxu0 0.0
    %1820 = vmatprep.mubr.f32.mxu0 0.0
    %1821 = vmatmul.mubr.f32.gmra.mrb[0].mxu0 %v1754
    %v1822 = vpop.f32.mrb[0].mxu0
    %v1823 = vadd.f32 0.0, %v1822
    %v1824 = vpop.f32.mrb[0].mxu0
    %v1825 = vadd.f32 0.0, %v1824
    %1826 = vdwg.mxu0
    %1827 = vmatprep.subr.mxu0 %v39
    %1828 = vmatpush1.msra.mxu0 %v38
    %1829 = vmatprep.subr.mxu0 %v43
    %1830 = vmatpush1.msra.mxu0 %v42
    %1831 = vmatprep.subr.mxu0 %v47
    %1832 = vmatpush1.msra.mxu0 %v46
    %1833 = vmatprep.subr.mxu0 %v51
    %1834 = vmatpush1.msra.mxu0 %v50
    %1835 = vmatprep.subr.mxu0 %v55
    %1836 = vmatpush1.msra.mxu0 %v54
    %1837 = vmatprep.subr.mxu0 %v59
    %1838 = vmatpush1.msra.mxu0 %v58
    %1839 = vmatprep.subr.mxu0 %v63
    %1840 = vmatpush1.msra.mxu0 %v62
    %1841 = vmatprep.subr.mxu0 %v67
    %1842 = vmatpush1.msra.mxu0 %v66
    %1843 = vmatprep.subr.mxu0 %v71
    %1844 = vmatpush1.msra.mxu0 %v70
    %1845 = vmatprep.subr.mxu0 %v75
    %1846 = vmatpush1.msra.mxu0 %v74
    %1847 = vmatprep.subr.mxu0 %v79
    %1848 = vmatpush1.msra.mxu0 %v78
    %1849 = vmatprep.subr.mxu0 %v83
    %1850 = vmatpush1.msra.mxu0 %v82
    %1851 = vmatprep.subr.mxu0 %v87
    %1852 = vmatpush1.msra.mxu0 %v86
    %1853 = vmatprep.subr.mxu0 %v91
    %1854 = vmatpush1.msra.mxu0 %v90
    %1855 = vmatprep.subr.mxu0 %v95
    %1856 = vmatpush1.msra.mxu0 %v94
    %1857 = vmatprep.subr.mxu0 %v99
    %1858 = vmatpush1.msra.mxu0 %v98
    %1859 = vmatprep.subr.mxu0 0.0
    %1860 = vmatpush1.msra.mxu0 0.0
    %1861 = vmatprep.subr.mxu0 0.0
    %1862 = vmatpush1.msra.mxu0 0.0
    %1863 = vmatprep.subr.mxu0 0.0
    %1864 = vmatpush1.msra.mxu0 0.0
    %1865 = vmatprep.subr.mxu0 0.0
    %1866 = vmatpush1.msra.mxu0 0.0
    %1867 = vmatprep.subr.mxu0 0.0
    %1868 = vmatpush1.msra.mxu0 0.0
    %1869 = vmatprep.subr.mxu0 0.0
    %1870 = vmatpush1.msra.mxu0 0.0
    %1871 = vmatprep.subr.mxu0 0.0
    %1872 = vmatpush1.msra.mxu0 0.0
    %1873 = vmatprep.subr.mxu0 0.0
    %1874 = vmatpush1.msra.mxu0 0.0
    %1875 = vmatprep.subr.mxu0 0.0
    %1876 = vmatpush1.msra.mxu0 0.0
    %1877 = vmatprep.subr.mxu0 0.0
    %1878 = vmatpush1.msra.mxu0 0.0
    %1879 = vmatprep.subr.mxu0 0.0
    %1880 = vmatpush1.msra.mxu0 0.0
    %1881 = vmatprep.subr.mxu0 0.0
    %1882 = vmatpush1.msra.mxu0 0.0
    %1883 = vmatprep.subr.mxu0 0.0
    %1884 = vmatpush1.msra.mxu0 0.0
    %1885 = vmatprep.subr.mxu0 0.0
    %1886 = vmatpush1.msra.mxu0 0.0
    %1887 = vmatprep.subr.mxu0 0.0
    %1888 = vmatpush1.msra.mxu0 0.0
    %1889 = vmatprep.subr.mxu0 0.0
    %1890 = vmatpush1.msra.mxu0 0.0
    %1891 = vmatprep.mubr.f32.mxu0 0.0
    %1892 = vmatmul.mubr.f32.gmra.mrb[0].mxu0 %v1754
    %v1893 = vpop.f32.mrb[0].mxu0
    %v1894 = vadd.f32 0.0, %v1893
    %v1895 = vpop.f32.mrb[0].mxu0
    %v1896 = vadd.f32 0.0, %v1895
    %1897 = vdwg.mxu0
    %v1902 = vcombine.low %v1823, %v1825
    %v1903 = vcombine.high %v1823, %v1825
    %v1904 = vcombine.low %v1894, %v1896
    %v1905 = vcombine.high %v1894, %v1896
    %v1907 = vunpack.c.l.s4 1966171168
    %v1908 = vunpack.c.0.s8 %v1907
    %v1909 = vlaneseq
    %v1910 = vshrl.u32 %v1909, 7
    %v1911 = vsub.s32 %v1908, %v1910
    %v1912 = vrot.slane %v1902, %v1911
    %v1914 = vunpack.c.l.s4 1966171168
    %v1915 = vunpack.c.0.s8 %v1914
    %v1916 = vlaneseq
    %v1917 = vshrl.u32 %v1916, 7
    %v1918 = vsub.s32 %v1915, %v1917
    %v1919 = vrot.slane %v1903, %v1918
    %v1921 = vunpack.c.l.s4 1966171168
    %v1922 = vunpack.c.0.s8 %v1921
    %v1923 = vlaneseq
    %v1924 = vshrl.u32 %v1923, 7
    %v1925 = vsub.s32 %v1922, %v1924
    %v1926 = vrot.slane %v1904, %v1925
    %v1928 = vunpack.c.l.s4 1966171168
    %v1929 = vunpack.c.0.s8 %v1928
    %v1930 = vlaneseq
    %v1931 = vshrl.u32 %v1930, 7
    %v1932 = vsub.s32 %v1929, %v1931
    %v1933 = vrot.slane %v1905, %v1932
    %v1934 = vcombine.low %v1912, %v1926
    %v1935 = vcombine.high %v1912, %v1926
    %v1936 = vcombine.low %v1919, %v1933
    %v1937 = vcombine.high %v1919, %v1933
    %v1939 = vunpack.c.l.s4 1966171168
    %v1940 = vunpack.c.0.s8 %v1939
    %v1941 = vlaneseq
    %v1942 = vshrl.u32 %v1941, 7
    %v1943 = vsub.s32 %v1940, %v1942
    %v1944 = vrot.slane %v1934, %v1943
    %v1946 = vunpack.c.l.s4 1966171168
    %v1947 = vunpack.c.0.s8 %v1946
    %v1948 = vlaneseq
    %v1949 = vshrl.u32 %v1948, 7
    %v1950 = vsub.s32 %v1947, %v1949
    %v1951 = vrot.slane %v1936, %v1950
    %v1953 = vunpack.c.l.s4 1966171168
    %v1954 = vunpack.c.0.s8 %v1953
    %v1955 = vlaneseq
    %v1956 = vshrl.u32 %v1955, 7
    %v1957 = vsub.s32 %v1954, %v1956
    %v1958 = vrot.slane %v1935, %v1957
    %v1960 = vunpack.c.l.s4 1966171168
    %v1961 = vunpack.c.0.s8 %v1960
    %v1962 = vlaneseq
    %v1963 = vshrl.u32 %v1962, 7
    %v1964 = vsub.s32 %v1961, %v1963
    %v1965 = vrot.slane %v1937, %v1964
    %v1966 = vcombine.high %v1944, %v1944
    %v1967 = vcombine.high %v1951, %v1951
    %v1968 = vcombine.high %v1958, %v1958
    %v1969 = vcombine.high %v1965, %v1965
    %v1978 = vadd.f32 %v1683, %v1944
    %v1979 = vadd.f32 %v1685, %v1958
    %v1980 = vadd.f32 %v1687, %v1966
    %v1981 = vadd.f32 %v1689, %v1968
    %v1982 = vadd.f32 %v1691, %v1951
    %v1983 = vadd.f32 %v1693, %v1965
    %v1984 = vadd.f32 %v1695, %v1967
    %v1985 = vadd.f32 %v1697, %v1969
    %v1986 = vxor.u32 %v1978, 2147483648
    %v1987 = vxor.u32 %v1979, 2147483648
    %v1988 = vxor.u32 %v1980, 2147483648
    %v1989 = vxor.u32 %v1981, 2147483648
    %v1990 = vxor.u32 %v1982, 2147483648
    %v1991 = vxor.u32 %v1983, 2147483648
    %v1992 = vxor.u32 %v1984, 2147483648
    %v1993 = vxor.u32 %v1985, 2147483648
    %v1994 = vmul.f32 %v1986, 1.442695
    %v1995 = vpow.pop %v1994
    %v1996 = vmul.f32 %v1987, 1.442695
    %v1997 = vpow.pop %v1996
    %v1998 = vmul.f32 %v1988, 1.442695
    %v1999 = vpow.pop %v1998
    %v2000 = vmul.f32 %v1989, 1.442695
    %v2001 = vpow.pop %v2000
    %v2002 = vmul.f32 %v1990, 1.442695
    %v2003 = vpow.pop %v2002
    %v2004 = vmul.f32 %v1991, 1.442695
    %v2005 = vpow.pop %v2004
    %v2006 = vmul.f32 %v1992, 1.442695
    %v2007 = vpow.pop %v2006
    %v2008 = vmul.f32 %v1993, 1.442695
    %v2009 = vpow.pop %v2008
    %v2010 = vadd.f32 %v1995, 1.0
    %v2011 = vadd.f32 %v1997, 1.0
    %v2012 = vadd.f32 %v1999, 1.0
    %v2013 = vadd.f32 %v2001, 1.0
    %v2014 = vadd.f32 %v2003, 1.0
    %v2015 = vadd.f32 %v2005, 1.0
    %v2016 = vadd.f32 %v2007, 1.0
    %v2017 = vadd.f32 %v2009, 1.0
    %v2018 = vrcp.pop %v2010
    %v2019 = vmul.f32 1.0, %v2018
    %v2020 = vrcp.pop %v2011
    %v2021 = vmul.f32 1.0, %v2020
    %v2022 = vrcp.pop %v2012
    %v2023 = vmul.f32 1.0, %v2022
    %v2024 = vrcp.pop %v2013
    %v2025 = vmul.f32 1.0, %v2024
    %v2026 = vrcp.pop %v2014
    %v2027 = vmul.f32 1.0, %v2026
    %v2028 = vrcp.pop %v2015
    %v2029 = vmul.f32 1.0, %v2028
    %v2030 = vrcp.pop %v2016
    %v2031 = vmul.f32 1.0, %v2030
    %v2032 = vrcp.pop %v2017
    %v2033 = vmul.f32 1.0, %v2032
    %v2042 = vrot.slane %v1978, 1
    %v2043 = vrot.slane %v1979, 1
    %v2044 = vrot.slane %v1980, 1
    %v2045 = vrot.slane %v1981, 1
    %v2046 = vrot.slane %v1982, 1
    %v2047 = vrot.slane %v1983, 1
    %v2048 = vrot.slane %v1984, 1
    %v2049 = vrot.slane %v1985, 1
    %v2058 = vxor.u32 %v2042, 2147483648
    %v2059 = vxor.u32 %v2043, 2147483648
    %v2060 = vxor.u32 %v2044, 2147483648
    %v2061 = vxor.u32 %v2045, 2147483648
    %v2062 = vxor.u32 %v2046, 2147483648
    %v2063 = vxor.u32 %v2047, 2147483648
    %v2064 = vxor.u32 %v2048, 2147483648
    %v2065 = vxor.u32 %v2049, 2147483648
    %v2066 = vmul.f32 %v2058, 1.442695
    %v2067 = vpow.pop %v2066
    %v2068 = vmul.f32 %v2059, 1.442695
    %v2069 = vpow.pop %v2068
    %v2070 = vmul.f32 %v2060, 1.442695
    %v2071 = vpow.pop %v2070
    %v2072 = vmul.f32 %v2061, 1.442695
    %v2073 = vpow.pop %v2072
    %v2074 = vmul.f32 %v2062, 1.442695
    %v2075 = vpow.pop %v2074
    %v2076 = vmul.f32 %v2063, 1.442695
    %v2077 = vpow.pop %v2076
    %v2078 = vmul.f32 %v2064, 1.442695
    %v2079 = vpow.pop %v2078
    %v2080 = vmul.f32 %v2065, 1.442695
    %v2081 = vpow.pop %v2080
    %v2082 = vadd.f32 %v2067, 1.0
    %v2083 = vadd.f32 %v2069, 1.0
    %v2084 = vadd.f32 %v2071, 1.0
    %v2085 = vadd.f32 %v2073, 1.0
    %v2086 = vadd.f32 %v2075, 1.0
    %v2087 = vadd.f32 %v2077, 1.0
    %v2088 = vadd.f32 %v2079, 1.0
    %v2089 = vadd.f32 %v2081, 1.0
    %v2090 = vrcp.pop %v2082
    %v2091 = vmul.f32 1.0, %v2090
    %v2092 = vrcp.pop %v2083
    %v2093 = vmul.f32 1.0, %v2092
    %v2094 = vrcp.pop %v2084
    %v2095 = vmul.f32 1.0, %v2094
    %v2096 = vrcp.pop %v2085
    %v2097 = vmul.f32 1.0, %v2096
    %v2098 = vrcp.pop %v2086
    %v2099 = vmul.f32 1.0, %v2098
    %v2100 = vrcp.pop %v2087
    %v2101 = vmul.f32 1.0, %v2100
    %v2102 = vrcp.pop %v2088
    %v2103 = vmul.f32 1.0, %v2102
    %v2104 = vrcp.pop %v2089
    %v2105 = vmul.f32 1.0, %v2104
    %v2106 = vrot.slane %v1978, 2
    %v2107 = vrot.slane %v1979, 2
    %v2108 = vrot.slane %v1980, 2
    %v2109 = vrot.slane %v1981, 2
    %v2110 = vrot.slane %v1982, 2
    %v2111 = vrot.slane %v1983, 2
    %v2112 = vrot.slane %v1984, 2
    %v2113 = vrot.slane %v1985, 2
    %v2122 = vtanh.pop %v2106
    %v2123 = vtanh.pop %v2107
    %v2124 = vtanh.pop %v2108
    %v2125 = vtanh.pop %v2109
    %v2126 = vtanh.pop %v2110
    %v2127 = vtanh.pop %v2111
    %v2128 = vtanh.pop %v2112
    %v2129 = vtanh.pop %v2113
    %v2130 = vrot.slane %v1978, 3
    %v2131 = vrot.slane %v1979, 3
    %v2132 = vrot.slane %v1980, 3
    %v2133 = vrot.slane %v1981, 3
    %v2134 = vrot.slane %v1982, 3
    %v2135 = vrot.slane %v1983, 3
    %v2136 = vrot.slane %v1984, 3
    %v2137 = vrot.slane %v1985, 3
    %v2146 = vxor.u32 %v2130, 2147483648
    %v2147 = vxor.u32 %v2131, 2147483648
    %v2148 = vxor.u32 %v2132, 2147483648
    %v2149 = vxor.u32 %v2133, 2147483648
    %v2150 = vxor.u32 %v2134, 2147483648
    %v2151 = vxor.u32 %v2135, 2147483648
    %v2152 = vxor.u32 %v2136, 2147483648
    %v2153 = vxor.u32 %v2137, 2147483648
    %v2154 = vmul.f32 %v2146, 1.442695
    %v2155 = vpow.pop %v2154
    %v2156 = vmul.f32 %v2147, 1.442695
    %v2157 = vpow.pop %v2156
    %v2158 = vmul.f32 %v2148, 1.442695
    %v2159 = vpow.pop %v2158
    %v2160 = vmul.f32 %v2149, 1.442695
    %v2161 = vpow.pop %v2160
    %v2162 = vmul.f32 %v2150, 1.442695
    %v2163 = vpow.pop %v2162
    %v2164 = vmul.f32 %v2151, 1.442695
    %v2165 = vpow.pop %v2164
    %v2166 = vmul.f32 %v2152, 1.442695
    %v2167 = vpow.pop %v2166
    %v2168 = vmul.f32 %v2153, 1.442695
    %v2169 = vpow.pop %v2168
    %v2170 = vadd.f32 %v2155, 1.0
    %v2171 = vadd.f32 %v2157, 1.0
    %v2172 = vadd.f32 %v2159, 1.0
    %v2173 = vadd.f32 %v2161, 1.0
    %v2174 = vadd.f32 %v2163, 1.0
    %v2175 = vadd.f32 %v2165, 1.0
    %v2176 = vadd.f32 %v2167, 1.0
    %v2177 = vadd.f32 %v2169, 1.0
    %v2178 = vrcp.pop %v2170
    %v2179 = vmul.f32 1.0, %v2178
    %v2180 = vrcp.pop %v2171
    %v2181 = vmul.f32 1.0, %v2180
    %v2182 = vrcp.pop %v2172
    %v2183 = vmul.f32 1.0, %v2182
    %v2184 = vrcp.pop %v2173
    %v2185 = vmul.f32 1.0, %v2184
    %v2186 = vrcp.pop %v2174
    %v2187 = vmul.f32 1.0, %v2186
    %v2188 = vrcp.pop %v2175
    %v2189 = vmul.f32 1.0, %v2188
    %v2190 = vrcp.pop %v2176
    %v2191 = vmul.f32 1.0, %v2190
    %v2192 = vrcp.pop %v2177
    %v2193 = vmul.f32 1.0, %v2192
    %v2194 = vmul.f32 %v2091, %v1658
    %v2195 = vmul.f32 %v2093, %v1659
    %v2196 = vmul.f32 %v2095, %v1660
    %v2197 = vmul.f32 %v2097, %v1661
    %v2198 = vmul.f32 %v2099, %v1662
    %v2199 = vmul.f32 %v2101, %v1663
    %v2200 = vmul.f32 %v2103, %v1664
    %v2201 = vmul.f32 %v2105, %v1665
    %v2202 = vmul.f32 %v2019, %v2122
    %v2203 = vmul.f32 %v2021, %v2123
    %v2204 = vmul.f32 %v2023, %v2124
    %v2205 = vmul.f32 %v2025, %v2125
    %v2206 = vmul.f32 %v2027, %v2126
    %v2207 = vmul.f32 %v2029, %v2127
    %v2208 = vmul.f32 %v2031, %v2128
    %v2209 = vmul.f32 %v2033, %v2129
    %v2210 = vadd.f32 %v2194, %v2202
    %v2211 = vadd.f32 %v2195, %v2203
    %v2212 = vadd.f32 %v2196, %v2204
    %v2213 = vadd.f32 %v2197, %v2205
    %v2214 = vadd.f32 %v2198, %v2206
    %v2215 = vadd.f32 %v2199, %v2207
    %v2216 = vadd.f32 %v2200, %v2208
    %v2217 = vadd.f32 %v2201, %v2209
    %v2218 = vtanh.pop %v2210
    %v2219 = vtanh.pop %v2211
    %v2220 = vtanh.pop %v2212
    %v2221 = vtanh.pop %v2213
    %v2222 = vtanh.pop %v2214
    %v2223 = vtanh.pop %v2215
    %v2224 = vtanh.pop %v2216
    %v2225 = vtanh.pop %v2217
    %v2226 = vmul.f32 %v2179, %v2218
    %v2227 = vmul.f32 %v2181, %v2219
    %v2228 = vmul.f32 %v2183, %v2220
    %v2229 = vmul.f32 %v2185, %v2221
    %v2230 = vmul.f32 %v2187, %v2222
    %v2231 = vmul.f32 %v2189, %v2223
    %v2232 = vmul.f32 %v2191, %v2224
    %v2233 = vmul.f32 %v2193, %v2225
    %s2234 = scalar_lea.vmem %s0, 4
    %v2235 = vld [vmem:[%s2234] ss:$8 sm:$0xf]
    %s2236 = scalar_lea.vmem %s0, 36
    %v2237 = vld [vmem:[%s2236] ss:$8 sm:$0xf]
    %s2238 = scalar_lea.vmem %s0, 68
    %v2239 = vld [vmem:[%s2238] ss:$8 sm:$0xf]
    %s2240 = scalar_lea.vmem %s0, 100
    %v2241 = vld [vmem:[%s2240] ss:$8 sm:$0xf]
    %s2242 = scalar_lea.vmem %s0, 132
    %v2243 = vld [vmem:[%s2242] ss:$8 sm:$0xf]
    %s2244 = scalar_lea.vmem %s0, 164
    %v2245 = vld [vmem:[%s2244] ss:$8 sm:$0xf]
    %s2246 = scalar_lea.vmem %s0, 196
    %v2247 = vld [vmem:[%s2246] ss:$8 sm:$0xf]
    %s2248 = scalar_lea.vmem %s0, 228
    %v2249 = vld [vmem:[%s2248] ss:$8 sm:$0xf]
    %v2258 = vcombine.low %v2226, %v2227
    %v2259 = vcombine.low %v2228, %v2229
    %v2260 = vcombine.low %v2230, %v2231
    %v2261 = vcombine.low %v2232, %v2233
    %v2263 = vunpack.c.l.s4 1966171168
    %v2264 = vunpack.c.0.s8 %v2263
    %v2265 = vlaneseq
    %v2266 = vshrl.u32 %v2265, 7
    %v2267 = vsub.s32 %v2264, %v2266
    %v2268 = vrot.slane %v2258, %v2267
    %v2270 = vunpack.c.l.s4 1966171168
    %v2271 = vunpack.c.0.s8 %v2270
    %v2272 = vlaneseq
    %v2273 = vshrl.u32 %v2272, 7
    %v2274 = vsub.s32 %v2271, %v2273
    %v2275 = vrot.slane %v2259, %v2274
    %v2277 = vunpack.c.l.s4 1966171168
    %v2278 = vunpack.c.0.s8 %v2277
    %v2279 = vlaneseq
    %v2280 = vshrl.u32 %v2279, 7
    %v2281 = vsub.s32 %v2278, %v2280
    %v2282 = vrot.slane %v2260, %v2281
    %v2284 = vunpack.c.l.s4 1966171168
    %v2285 = vunpack.c.0.s8 %v2284
    %v2286 = vlaneseq
    %v2287 = vshrl.u32 %v2286, 7
    %v2288 = vsub.s32 %v2285, %v2287
    %v2289 = vrot.slane %v2261, %v2288
    %v2290 = vcombine.low %v2268, %v2275
    %v2291 = vcombine.low %v2282, %v2289
    %v2293 = vunpack.c.l.s4 1966171168
    %v2294 = vunpack.c.0.s8 %v2293
    %v2295 = vlaneseq
    %v2296 = vshrl.u32 %v2295, 7
    %v2297 = vsub.s32 %v2294, %v2296
    %v2298 = vrot.slane %v2290, %v2297
    %v2300 = vunpack.c.l.s4 1966171168
    %v2301 = vunpack.c.0.s8 %v2300
    %v2302 = vlaneseq
    %v2303 = vshrl.u32 %v2302, 7
    %v2304 = vsub.s32 %v2301, %v2303
    %v2305 = vrot.slane %v2291, %v2304
    %v2306 = vcombine.low %v2298, %v2305
    %2308 = vmatprep.subr.mxu0 %v37
    %2309 = vmatpush1.msra.mxu0 %v36
    %2310 = vmatprep.subr.mxu0 %v41
    %2311 = vmatpush1.msra.mxu0 %v40
    %2312 = vmatprep.subr.mxu0 %v45
    %2313 = vmatpush1.msra.mxu0 %v44
    %2314 = vmatprep.subr.mxu0 %v49
    %2315 = vmatpush1.msra.mxu0 %v48
    %2316 = vmatprep.subr.mxu0 %v53
    %2317 = vmatpush1.msra.mxu0 %v52
    %2318 = vmatprep.subr.mxu0 %v57
    %2319 = vmatpush1.msra.mxu0 %v56
    %2320 = vmatprep.subr.mxu0 %v61
    %2321 = vmatpush1.msra.mxu0 %v60
    %2322 = vmatprep.subr.mxu0 %v65
    %2323 = vmatpush1.msra.mxu0 %v64
    %2324 = vmatprep.subr.mxu0 %v69
    %2325 = vmatpush1.msra.mxu0 %v68
    %2326 = vmatprep.subr.mxu0 %v73
    %2327 = vmatpush1.msra.mxu0 %v72
    %2328 = vmatprep.subr.mxu0 %v77
    %2329 = vmatpush1.msra.mxu0 %v76
    %2330 = vmatprep.subr.mxu0 %v81
    %2331 = vmatpush1.msra.mxu0 %v80
    %2332 = vmatprep.subr.mxu0 %v85
    %2333 = vmatpush1.msra.mxu0 %v84
    %2334 = vmatprep.subr.mxu0 %v89
    %2335 = vmatpush1.msra.mxu0 %v88
    %2336 = vmatprep.subr.mxu0 %v93
    %2337 = vmatpush1.msra.mxu0 %v92
    %2338 = vmatprep.subr.mxu0 %v97
    %2339 = vmatpush1.msra.mxu0 %v96
    %2340 = vmatprep.subr.mxu0 0.0
    %2341 = vmatpush1.msra.mxu0 0.0
    %2342 = vmatprep.subr.mxu0 0.0
    %2343 = vmatpush1.msra.mxu0 0.0
    %2344 = vmatprep.subr.mxu0 0.0
    %2345 = vmatpush1.msra.mxu0 0.0
    %2346 = vmatprep.subr.mxu0 0.0
    %2347 = vmatpush1.msra.mxu0 0.0
    %2348 = vmatprep.subr.mxu0 0.0
    %2349 = vmatpush1.msra.mxu0 0.0
    %2350 = vmatprep.subr.mxu0 0.0
    %2351 = vmatpush1.msra.mxu0 0.0
    %2352 = vmatprep.subr.mxu0 0.0
    %2353 = vmatpush1.msra.mxu0 0.0
    %2354 = vmatprep.subr.mxu0 0.0
    %2355 = vmatpush1.msra.mxu0 0.0
    %2356 = vmatprep.subr.mxu0 0.0
    %2357 = vmatpush1.msra.mxu0 0.0
    %2358 = vmatprep.subr.mxu0 0.0
    %2359 = vmatpush1.msra.mxu0 0.0
    %2360 = vmatprep.subr.mxu0 0.0
    %2361 = vmatpush1.msra.mxu0 0.0
    %2362 = vmatprep.subr.mxu0 0.0
    %2363 = vmatpush1.msra.mxu0 0.0
    %2364 = vmatprep.subr.mxu0 0.0
    %2365 = vmatpush1.msra.mxu0 0.0
    %2366 = vmatprep.subr.mxu0 0.0
    %2367 = vmatpush1.msra.mxu0 0.0
    %2368 = vmatprep.subr.mxu0 0.0
    %2369 = vmatpush1.msra.mxu0 0.0
    %2370 = vmatprep.subr.mxu0 0.0
    %2371 = vmatpush1.msra.mxu0 0.0
    %2372 = vmatprep.mubr.f32.mxu0 0.0
    %2373 = vmatmul.mubr.f32.gmra.mrb[0].mxu0 %v2306
    %v2374 = vpop.f32.mrb[0].mxu0
    %v2375 = vadd.f32 0.0, %v2374
    %v2376 = vpop.f32.mrb[0].mxu0
    %v2377 = vadd.f32 0.0, %v2376
    %2378 = vdwg.mxu0
    %2379 = vmatprep.subr.mxu0 %v39
    %2380 = vmatpush1.msra.mxu0 %v38
    %2381 = vmatprep.subr.mxu0 %v43
    %2382 = vmatpush1.msra.mxu0 %v42
    %2383 = vmatprep.subr.mxu0 %v47
    %2384 = vmatpush1.msra.mxu0 %v46
    %2385 = vmatprep.subr.mxu0 %v51
    %2386 = vmatpush1.msra.mxu0 %v50
    %2387 = vmatprep.subr.mxu0 %v55
    %2388 = vmatpush1.msra.mxu0 %v54
    %2389 = vmatprep.subr.mxu0 %v59
    %2390 = vmatpush1.msra.mxu0 %v58
    %2391 = vmatprep.subr.mxu0 %v63
    %2392 = vmatpush1.msra.mxu0 %v62
    %2393 = vmatprep.subr.mxu0 %v67
    %2394 = vmatpush1.msra.mxu0 %v66
    %2395 = vmatprep.subr.mxu0 %v71
    %2396 = vmatpush1.msra.mxu0 %v70
    %2397 = vmatprep.subr.mxu0 %v75
    %2398 = vmatpush1.msra.mxu0 %v74
    %2399 = vmatprep.subr.mxu0 %v79
    %2400 = vmatpush1.msra.mxu0 %v78
    %2401 = vmatprep.subr.mxu0 %v83
    %2402 = vmatpush1.msra.mxu0 %v82
    %2403 = vmatprep.subr.mxu0 %v87
    %2404 = vmatpush1.msra.mxu0 %v86
    %2405 = vmatprep.subr.mxu0 %v91
    %2406 = vmatpush1.msra.mxu0 %v90
    %2407 = vmatprep.subr.mxu0 %v95
    %2408 = vmatpush1.msra.mxu0 %v94
    %2409 = vmatprep.subr.mxu0 %v99
    %2410 = vmatpush1.msra.mxu0 %v98
    %2411 = vmatprep.subr.mxu0 0.0
    %2412 = vmatpush1.msra.mxu0 0.0
    %2413 = vmatprep.subr.mxu0 0.0
    %2414 = vmatpush1.msra.mxu0 0.0
    %2415 = vmatprep.subr.mxu0 0.0
    %2416 = vmatpush1.msra.mxu0 0.0
    %2417 = vmatprep.subr.mxu0 0.0
    %2418 = vmatpush1.msra.mxu0 0.0
    %2419 = vmatprep.subr.mxu0 0.0
    %2420 = vmatpush1.msra.mxu0 0.0
    %2421 = vmatprep.subr.mxu0 0.0
    %2422 = vmatpush1.msra.mxu0 0.0
    %2423 = vmatprep.subr.mxu0 0.0
    %2424 = vmatpush1.msra.mxu0 0.0
    %2425 = vmatprep.subr.mxu0 0.0
    %2426 = vmatpush1.msra.mxu0 0.0
    %2427 = vmatprep.subr.mxu0 0.0
    %2428 = vmatpush1.msra.mxu0 0.0
    %2429 = vmatprep.subr.mxu0 0.0
    %2430 = vmatpush1.msra.mxu0 0.0
    %2431 = vmatprep.subr.mxu0 0.0
    %2432 = vmatpush1.msra.mxu0 0.0
    %2433 = vmatprep.subr.mxu0 0.0
    %2434 = vmatpush1.msra.mxu0 0.0
    %2435 = vmatprep.subr.mxu0 0.0
    %2436 = vmatpush1.msra.mxu0 0.0
    %2437 = vmatprep.subr.mxu0 0.0
    %2438 = vmatpush1.msra.mxu0 0.0
    %2439 = vmatprep.subr.mxu0 0.0
    %2440 = vmatpush1.msra.mxu0 0.0
    %2441 = vmatprep.subr.mxu0 0.0
    %2442 = vmatpush1.msra.mxu0 0.0
    %2443 = vmatprep.mubr.f32.mxu0 0.0
    %2444 = vmatmul.mubr.f32.gmra.mrb[0].mxu0 %v2306
    %v2445 = vpop.f32.mrb[0].mxu0
    %v2446 = vadd.f32 0.0, %v2445
    %v2447 = vpop.f32.mrb[0].mxu0
    %v2448 = vadd.f32 0.0, %v2447
    %2449 = vdwg.mxu0
    %v2454 = vcombine.low %v2375, %v2377
    %v2455 = vcombine.high %v2375, %v2377
    %v2456 = vcombine.low %v2446, %v2448
    %v2457 = vcombine.high %v2446, %v2448
    %v2459 = vunpack.c.l.s4 1966171168
    %v2460 = vunpack.c.0.s8 %v2459
    %v2461 = vlaneseq
    %v2462 = vshrl.u32 %v2461, 7
    %v2463 = vsub.s32 %v2460, %v2462
    %v2464 = vrot.slane %v2454, %v2463
    %v2466 = vunpack.c.l.s4 1966171168
    %v2467 = vunpack.c.0.s8 %v2466
    %v2468 = vlaneseq
    %v2469 = vshrl.u32 %v2468, 7
    %v2470 = vsub.s32 %v2467, %v2469
    %v2471 = vrot.slane %v2455, %v2470
    %v2473 = vunpack.c.l.s4 1966171168
    %v2474 = vunpack.c.0.s8 %v2473
    %v2475 = vlaneseq
    %v2476 = vshrl.u32 %v2475, 7
    %v2477 = vsub.s32 %v2474, %v2476
    %v2478 = vrot.slane %v2456, %v2477
    %v2480 = vunpack.c.l.s4 1966171168
    %v2481 = vunpack.c.0.s8 %v2480
    %v2482 = vlaneseq
    %v2483 = vshrl.u32 %v2482, 7
    %v2484 = vsub.s32 %v2481, %v2483
    %v2485 = vrot.slane %v2457, %v2484
    %v2486 = vcombine.low %v2464, %v2478
    %v2487 = vcombine.high %v2464, %v2478
    %v2488 = vcombine.low %v2471, %v2485
    %v2489 = vcombine.high %v2471, %v2485
    %v2491 = vunpack.c.l.s4 1966171168
    %v2492 = vunpack.c.0.s8 %v2491
    %v2493 = vlaneseq
    %v2494 = vshrl.u32 %v2493, 7
    %v2495 = vsub.s32 %v2492, %v2494
    %v2496 = vrot.slane %v2486, %v2495
    %v2498 = vunpack.c.l.s4 1966171168
    %v2499 = vunpack.c.0.s8 %v2498
    %v2500 = vlaneseq
    %v2501 = vshrl.u32 %v2500, 7
    %v2502 = vsub.s32 %v2499, %v2501
    %v2503 = vrot.slane %v2488, %v2502
    %v2505 = vunpack.c.l.s4 1966171168
    %v2506 = vunpack.c.0.s8 %v2505
    %v2507 = vlaneseq
    %v2508 = vshrl.u32 %v2507, 7
    %v2509 = vsub.s32 %v2506, %v2508
    %v2510 = vrot.slane %v2487, %v2509
    %v2512 = vunpack.c.l.s4 1966171168
    %v2513 = vunpack.c.0.s8 %v2512
    %v2514 = vlaneseq
    %v2515 = vshrl.u32 %v2514, 7
    %v2516 = vsub.s32 %v2513, %v2515
    %v2517 = vrot.slane %v2489, %v2516
    %v2518 = vcombine.high %v2496, %v2496
    %v2519 = vcombine.high %v2503, %v2503
    %v2520 = vcombine.high %v2510, %v2510
    %v2521 = vcombine.high %v2517, %v2517
    %v2530 = vadd.f32 %v2235, %v2496
    %v2531 = vadd.f32 %v2237, %v2510
    %v2532 = vadd.f32 %v2239, %v2518
    %v2533 = vadd.f32 %v2241, %v2520
    %v2534 = vadd.f32 %v2243, %v2503
    %v2535 = vadd.f32 %v2245, %v2517
    %v2536 = vadd.f32 %v2247, %v2519
    %v2537 = vadd.f32 %v2249, %v2521
    %v2538 = vxor.u32 %v2530, 2147483648
    %v2539 = vxor.u32 %v2531, 2147483648
    %v2540 = vxor.u32 %v2532, 2147483648
    %v2541 = vxor.u32 %v2533, 2147483648
    %v2542 = vxor.u32 %v2534, 2147483648
    %v2543 = vxor.u32 %v2535, 2147483648
    %v2544 = vxor.u32 %v2536, 2147483648
    %v2545 = vxor.u32 %v2537, 2147483648
    %v2546 = vmul.f32 %v2538, 1.442695
    %v2547 = vpow.pop %v2546
    %v2548 = vmul.f32 %v2539, 1.442695
    %v2549 = vpow.pop %v2548
    %v2550 = vmul.f32 %v2540, 1.442695
    %v2551 = vpow.pop %v2550
    %v2552 = vmul.f32 %v2541, 1.442695
    %v2553 = vpow.pop %v2552
    %v2554 = vmul.f32 %v2542, 1.442695
    %v2555 = vpow.pop %v2554
    %v2556 = vmul.f32 %v2543, 1.442695
    %v2557 = vpow.pop %v2556
    %v2558 = vmul.f32 %v2544, 1.442695
    %v2559 = vpow.pop %v2558
    %v2560 = vmul.f32 %v2545, 1.442695
    %v2561 = vpow.pop %v2560
    %v2562 = vadd.f32 %v2547, 1.0
    %v2563 = vadd.f32 %v2549, 1.0
    %v2564 = vadd.f32 %v2551, 1.0
    %v2565 = vadd.f32 %v2553, 1.0
    %v2566 = vadd.f32 %v2555, 1.0
    %v2567 = vadd.f32 %v2557, 1.0
    %v2568 = vadd.f32 %v2559, 1.0
    %v2569 = vadd.f32 %v2561, 1.0
    %v2570 = vrcp.pop %v2562
    %v2571 = vmul.f32 1.0, %v2570
    %v2572 = vrcp.pop %v2563
    %v2573 = vmul.f32 1.0, %v2572
    %v2574 = vrcp.pop %v2564
    %v2575 = vmul.f32 1.0, %v2574
    %v2576 = vrcp.pop %v2565
    %v2577 = vmul.f32 1.0, %v2576
    %v2578 = vrcp.pop %v2566
    %v2579 = vmul.f32 1.0, %v2578
    %v2580 = vrcp.pop %v2567
    %v2581 = vmul.f32 1.0, %v2580
    %v2582 = vrcp.pop %v2568
    %v2583 = vmul.f32 1.0, %v2582
    %v2584 = vrcp.pop %v2569
    %v2585 = vmul.f32 1.0, %v2584
    %v2594 = vrot.slane %v2530, 1
    %v2595 = vrot.slane %v2531, 1
    %v2596 = vrot.slane %v2532, 1
    %v2597 = vrot.slane %v2533, 1
    %v2598 = vrot.slane %v2534, 1
    %v2599 = vrot.slane %v2535, 1
    %v2600 = vrot.slane %v2536, 1
    %v2601 = vrot.slane %v2537, 1
    %v2610 = vxor.u32 %v2594, 2147483648
    %v2611 = vxor.u32 %v2595, 2147483648
    %v2612 = vxor.u32 %v2596, 2147483648
    %v2613 = vxor.u32 %v2597, 2147483648
    %v2614 = vxor.u32 %v2598, 2147483648
    %v2615 = vxor.u32 %v2599, 2147483648
    %v2616 = vxor.u32 %v2600, 2147483648
    %v2617 = vxor.u32 %v2601, 2147483648
    %v2618 = vmul.f32 %v2610, 1.442695
    %v2619 = vpow.pop %v2618
    %v2620 = vmul.f32 %v2611, 1.442695
    %v2621 = vpow.pop %v2620
    %v2622 = vmul.f32 %v2612, 1.442695
    %v2623 = vpow.pop %v2622
    %v2624 = vmul.f32 %v2613, 1.442695
    %v2625 = vpow.pop %v2624
    %v2626 = vmul.f32 %v2614, 1.442695
    %v2627 = vpow.pop %v2626
    %v2628 = vmul.f32 %v2615, 1.442695
    %v2629 = vpow.pop %v2628
    %v2630 = vmul.f32 %v2616, 1.442695
    %v2631 = vpow.pop %v2630
    %v2632 = vmul.f32 %v2617, 1.442695
    %v2633 = vpow.pop %v2632
    %v2634 = vadd.f32 %v2619, 1.0
    %v2635 = vadd.f32 %v2621, 1.0
    %v2636 = vadd.f32 %v2623, 1.0
    %v2637 = vadd.f32 %v2625, 1.0
    %v2638 = vadd.f32 %v2627, 1.0
    %v2639 = vadd.f32 %v2629, 1.0
    %v2640 = vadd.f32 %v2631, 1.0
    %v2641 = vadd.f32 %v2633, 1.0
    %v2642 = vrcp.pop %v2634
    %v2643 = vmul.f32 1.0, %v2642
    %v2644 = vrcp.pop %v2635
    %v2645 = vmul.f32 1.0, %v2644
    %v2646 = vrcp.pop %v2636
    %v2647 = vmul.f32 1.0, %v2646
    %v2648 = vrcp.pop %v2637
    %v2649 = vmul.f32 1.0, %v2648
    %v2650 = vrcp.pop %v2638
    %v2651 = vmul.f32 1.0, %v2650
    %v2652 = vrcp.pop %v2639
    %v2653 = vmul.f32 1.0, %v2652
    %v2654 = vrcp.pop %v2640
    %v2655 = vmul.f32 1.0, %v2654
    %v2656 = vrcp.pop %v2641
    %v2657 = vmul.f32 1.0, %v2656
    %v2658 = vrot.slane %v2530, 2
    %v2659 = vrot.slane %v2531, 2
    %v2660 = vrot.slane %v2532, 2
    %v2661 = vrot.slane %v2533, 2
    %v2662 = vrot.slane %v2534, 2
    %v2663 = vrot.slane %v2535, 2
    %v2664 = vrot.slane %v2536, 2
    %v2665 = vrot.slane %v2537, 2
    %v2674 = vtanh.pop %v2658
    %v2675 = vtanh.pop %v2659
    %v2676 = vtanh.pop %v2660
    %v2677 = vtanh.pop %v2661
    %v2678 = vtanh.pop %v2662
    %v2679 = vtanh.pop %v2663
    %v2680 = vtanh.pop %v2664
    %v2681 = vtanh.pop %v2665
    %v2682 = vrot.slane %v2530, 3
    %v2683 = vrot.slane %v2531, 3
    %v2684 = vrot.slane %v2532, 3
    %v2685 = vrot.slane %v2533, 3
    %v2686 = vrot.slane %v2534, 3
    %v2687 = vrot.slane %v2535, 3
    %v2688 = vrot.slane %v2536, 3
    %v2689 = vrot.slane %v2537, 3
    %v2698 = vxor.u32 %v2682, 2147483648
    %v2699 = vxor.u32 %v2683, 2147483648
    %v2700 = vxor.u32 %v2684, 2147483648
    %v2701 = vxor.u32 %v2685, 2147483648
    %v2702 = vxor.u32 %v2686, 2147483648
    %v2703 = vxor.u32 %v2687, 2147483648
    %v2704 = vxor.u32 %v2688, 2147483648
    %v2705 = vxor.u32 %v2689, 2147483648
    %v2706 = vmul.f32 %v2698, 1.442695
    %v2707 = vpow.pop %v2706
    %v2708 = vmul.f32 %v2699, 1.442695
    %v2709 = vpow.pop %v2708
    %v2710 = vmul.f32 %v2700, 1.442695
    %v2711 = vpow.pop %v2710
    %v2712 = vmul.f32 %v2701, 1.442695
    %v2713 = vpow.pop %v2712
    %v2714 = vmul.f32 %v2702, 1.442695
    %v2715 = vpow.pop %v2714
    %v2716 = vmul.f32 %v2703, 1.442695
    %v2717 = vpow.pop %v2716
    %v2718 = vmul.f32 %v2704, 1.442695
    %v2719 = vpow.pop %v2718
    %v2720 = vmul.f32 %v2705, 1.442695
    %v2721 = vpow.pop %v2720
    %v2722 = vadd.f32 %v2707, 1.0
    %v2723 = vadd.f32 %v2709, 1.0
    %v2724 = vadd.f32 %v2711, 1.0
    %v2725 = vadd.f32 %v2713, 1.0
    %v2726 = vadd.f32 %v2715, 1.0
    %v2727 = vadd.f32 %v2717, 1.0
    %v2728 = vadd.f32 %v2719, 1.0
    %v2729 = vadd.f32 %v2721, 1.0
    %v2730 = vrcp.pop %v2722
    %v2731 = vmul.f32 1.0, %v2730
    %v2732 = vrcp.pop %v2723
    %v2733 = vmul.f32 1.0, %v2732
    %v2734 = vrcp.pop %v2724
    %v2735 = vmul.f32 1.0, %v2734
    %v2736 = vrcp.pop %v2725
    %v2737 = vmul.f32 1.0, %v2736
    %v2738 = vrcp.pop %v2726
    %v2739 = vmul.f32 1.0, %v2738
    %v2740 = vrcp.pop %v2727
    %v2741 = vmul.f32 1.0, %v2740
    %v2742 = vrcp.pop %v2728
    %v2743 = vmul.f32 1.0, %v2742
    %v2744 = vrcp.pop %v2729
    %v2745 = vmul.f32 1.0, %v2744
    %v2746 = vmul.f32 %v2643, %v2210
    %v2747 = vmul.f32 %v2645, %v2211
    %v2748 = vmul.f32 %v2647, %v2212
    %v2749 = vmul.f32 %v2649, %v2213
    %v2750 = vmul.f32 %v2651, %v2214
    %v2751 = vmul.f32 %v2653, %v2215
    %v2752 = vmul.f32 %v2655, %v2216
    %v2753 = vmul.f32 %v2657, %v2217
    %v2754 = vmul.f32 %v2571, %v2674
    %v2755 = vmul.f32 %v2573, %v2675
    %v2756 = vmul.f32 %v2575, %v2676
    %v2757 = vmul.f32 %v2577, %v2677
    %v2758 = vmul.f32 %v2579, %v2678
    %v2759 = vmul.f32 %v2581, %v2679
    %v2760 = vmul.f32 %v2583, %v2680
    %v2761 = vmul.f32 %v2585, %v2681
    %v2762 = vadd.f32 %v2746, %v2754
    %v2763 = vadd.f32 %v2747, %v2755
    %v2764 = vadd.f32 %v2748, %v2756
    %v2765 = vadd.f32 %v2749, %v2757
    %v2766 = vadd.f32 %v2750, %v2758
    %v2767 = vadd.f32 %v2751, %v2759
    %v2768 = vadd.f32 %v2752, %v2760
    %v2769 = vadd.f32 %v2753, %v2761
    %v2770 = vtanh.pop %v2762
    %v2771 = vtanh.pop %v2763
    %v2772 = vtanh.pop %v2764
    %v2773 = vtanh.pop %v2765
    %v2774 = vtanh.pop %v2766
    %v2775 = vtanh.pop %v2767
    %v2776 = vtanh.pop %v2768
    %v2777 = vtanh.pop %v2769
    %v2778 = vmul.f32 %v2731, %v2770
    %v2779 = vmul.f32 %v2733, %v2771
    %v2780 = vmul.f32 %v2735, %v2772
    %v2781 = vmul.f32 %v2737, %v2773
    %v2782 = vmul.f32 %v2739, %v2774
    %v2783 = vmul.f32 %v2741, %v2775
    %v2784 = vmul.f32 %v2743, %v2776
    %v2785 = vmul.f32 %v2745, %v2777
    %s2786 = scalar_lea.vmem %s0, 5
    %v2787 = vld [vmem:[%s2786] ss:$8 sm:$0xf]
    %s2788 = scalar_lea.vmem %s0, 37
    %v2789 = vld [vmem:[%s2788] ss:$8 sm:$0xf]
    %s2790 = scalar_lea.vmem %s0, 69
    %v2791 = vld [vmem:[%s2790] ss:$8 sm:$0xf]
    %s2792 = scalar_lea.vmem %s0, 101
    %v2793 = vld [vmem:[%s2792] ss:$8 sm:$0xf]
    %s2794 = scalar_lea.vmem %s0, 133
    %v2795 = vld [vmem:[%s2794] ss:$8 sm:$0xf]
    %s2796 = scalar_lea.vmem %s0, 165
    %v2797 = vld [vmem:[%s2796] ss:$8 sm:$0xf]
    %s2798 = scalar_lea.vmem %s0, 197
    %v2799 = vld [vmem:[%s2798] ss:$8 sm:$0xf]
    %s2800 = scalar_lea.vmem %s0, 229
    %v2801 = vld [vmem:[%s2800] ss:$8 sm:$0xf]
    %v2810 = vcombine.low %v2778, %v2779
    %v2811 = vcombine.low %v2780, %v2781
    %v2812 = vcombine.low %v2782, %v2783
    %v2813 = vcombine.low %v2784, %v2785
    %v2815 = vunpack.c.l.s4 1966171168
    %v2816 = vunpack.c.0.s8 %v2815
    %v2817 = vlaneseq
    %v2818 = vshrl.u32 %v2817, 7
    %v2819 = vsub.s32 %v2816, %v2818
    %v2820 = vrot.slane %v2810, %v2819
    %v2822 = vunpack.c.l.s4 1966171168
    %v2823 = vunpack.c.0.s8 %v2822
    %v2824 = vlaneseq
    %v2825 = vshrl.u32 %v2824, 7
    %v2826 = vsub.s32 %v2823, %v2825
    %v2827 = vrot.slane %v2811, %v2826
    %v2829 = vunpack.c.l.s4 1966171168
    %v2830 = vunpack.c.0.s8 %v2829
    %v2831 = vlaneseq
    %v2832 = vshrl.u32 %v2831, 7
    %v2833 = vsub.s32 %v2830, %v2832
    %v2834 = vrot.slane %v2812, %v2833
    %v2836 = vunpack.c.l.s4 1966171168
    %v2837 = vunpack.c.0.s8 %v2836
    %v2838 = vlaneseq
    %v2839 = vshrl.u32 %v2838, 7
    %v2840 = vsub.s32 %v2837, %v2839
    %v2841 = vrot.slane %v2813, %v2840
    %v2842 = vcombine.low %v2820, %v2827
    %v2843 = vcombine.low %v2834, %v2841
    %v2845 = vunpack.c.l.s4 1966171168
    %v2846 = vunpack.c.0.s8 %v2845
    %v2847 = vlaneseq
    %v2848 = vshrl.u32 %v2847, 7
    %v2849 = vsub.s32 %v2846, %v2848
    %v2850 = vrot.slane %v2842, %v2849
    %v2852 = vunpack.c.l.s4 1966171168
    %v2853 = vunpack.c.0.s8 %v2852
    %v2854 = vlaneseq
    %v2855 = vshrl.u32 %v2854, 7
    %v2856 = vsub.s32 %v2853, %v2855
    %v2857 = vrot.slane %v2843, %v2856
    %v2858 = vcombine.low %v2850, %v2857
    %2860 = vmatprep.subr.mxu0 %v37
    %2861 = vmatpush1.msra.mxu0 %v36
    %2862 = vmatprep.subr.mxu0 %v41
    %2863 = vmatpush1.msra.mxu0 %v40
    %2864 = vmatprep.subr.mxu0 %v45
    %2865 = vmatpush1.msra.mxu0 %v44
    %2866 = vmatprep.subr.mxu0 %v49
    %2867 = vmatpush1.msra.mxu0 %v48
    %2868 = vmatprep.subr.mxu0 %v53
    %2869 = vmatpush1.msra.mxu0 %v52
    %2870 = vmatprep.subr.mxu0 %v57
    %2871 = vmatpush1.msra.mxu0 %v56
    %2872 = vmatprep.subr.mxu0 %v61
    %2873 = vmatpush1.msra.mxu0 %v60
    %2874 = vmatprep.subr.mxu0 %v65
    %2875 = vmatpush1.msra.mxu0 %v64
    %2876 = vmatprep.subr.mxu0 %v69
    %2877 = vmatpush1.msra.mxu0 %v68
    %2878 = vmatprep.subr.mxu0 %v73
    %2879 = vmatpush1.msra.mxu0 %v72
    %2880 = vmatprep.subr.mxu0 %v77
    %2881 = vmatpush1.msra.mxu0 %v76
    %2882 = vmatprep.subr.mxu0 %v81
    %2883 = vmatpush1.msra.mxu0 %v80
    %2884 = vmatprep.subr.mxu0 %v85
    %2885 = vmatpush1.msra.mxu0 %v84
    %2886 = vmatprep.subr.mxu0 %v89
    %2887 = vmatpush1.msra.mxu0 %v88
    %2888 = vmatprep.subr.mxu0 %v93
    %2889 = vmatpush1.msra.mxu0 %v92
    %2890 = vmatprep.subr.mxu0 %v97
    %2891 = vmatpush1.msra.mxu0 %v96
    %2892 = vmatprep.subr.mxu0 0.0
    %2893 = vmatpush1.msra.mxu0 0.0
    %2894 = vmatprep.subr.mxu0 0.0
    %2895 = vmatpush1.msra.mxu0 0.0
    %2896 = vmatprep.subr.mxu0 0.0
    %2897 = vmatpush1.msra.mxu0 0.0
    %2898 = vmatprep.subr.mxu0 0.0
    %2899 = vmatpush1.msra.mxu0 0.0
    %2900 = vmatprep.subr.mxu0 0.0
    %2901 = vmatpush1.msra.mxu0 0.0
    %2902 = vmatprep.subr.mxu0 0.0
    %2903 = vmatpush1.msra.mxu0 0.0
    %2904 = vmatprep.subr.mxu0 0.0
    %2905 = vmatpush1.msra.mxu0 0.0
    %2906 = vmatprep.subr.mxu0 0.0
    %2907 = vmatpush1.msra.mxu0 0.0
    %2908 = vmatprep.subr.mxu0 0.0
    %2909 = vmatpush1.msra.mxu0 0.0
    %2910 = vmatprep.subr.mxu0 0.0
    %2911 = vmatpush1.msra.mxu0 0.0
    %2912 = vmatprep.subr.mxu0 0.0
    %2913 = vmatpush1.msra.mxu0 0.0
    %2914 = vmatprep.subr.mxu0 0.0
    %2915 = vmatpush1.msra.mxu0 0.0
    %2916 = vmatprep.subr.mxu0 0.0
    %2917 = vmatpush1.msra.mxu0 0.0
    %2918 = vmatprep.subr.mxu0 0.0
    %2919 = vmatpush1.msra.mxu0 0.0
    %2920 = vmatprep.subr.mxu0 0.0
    %2921 = vmatpush1.msra.mxu0 0.0
    %2922 = vmatprep.subr.mxu0 0.0
    %2923 = vmatpush1.msra.mxu0 0.0
    %2924 = vmatprep.mubr.f32.mxu0 0.0
    %2925 = vmatmul.mubr.f32.gmra.mrb[0].mxu0 %v2858
    %v2926 = vpop.f32.mrb[0].mxu0
    %v2927 = vadd.f32 0.0, %v2926
    %v2928 = vpop.f32.mrb[0].mxu0
    %v2929 = vadd.f32 0.0, %v2928
    %2930 = vdwg.mxu0
    %2931 = vmatprep.subr.mxu0 %v39
    %2932 = vmatpush1.msra.mxu0 %v38
    %2933 = vmatprep.subr.mxu0 %v43
    %2934 = vmatpush1.msra.mxu0 %v42
    %2935 = vmatprep.subr.mxu0 %v47
    %2936 = vmatpush1.msra.mxu0 %v46
    %2937 = vmatprep.subr.mxu0 %v51
    %2938 = vmatpush1.msra.mxu0 %v50
    %2939 = vmatprep.subr.mxu0 %v55
    %2940 = vmatpush1.msra.mxu0 %v54
    %2941 = vmatprep.subr.mxu0 %v59
    %2942 = vmatpush1.msra.mxu0 %v58
    %2943 = vmatprep.subr.mxu0 %v63
    %2944 = vmatpush1.msra.mxu0 %v62
    %2945 = vmatprep.subr.mxu0 %v67
    %2946 = vmatpush1.msra.mxu0 %v66
    %2947 = vmatprep.subr.mxu0 %v71
    %2948 = vmatpush1.msra.mxu0 %v70
    %2949 = vmatprep.subr.mxu0 %v75
    %2950 = vmatpush1.msra.mxu0 %v74
    %2951 = vmatprep.subr.mxu0 %v79
    %2952 = vmatpush1.msra.mxu0 %v78
    %2953 = vmatprep.subr.mxu0 %v83
    %2954 = vmatpush1.msra.mxu0 %v82
    %2955 = vmatprep.subr.mxu0 %v87
    %2956 = vmatpush1.msra.mxu0 %v86
    %2957 = vmatprep.subr.mxu0 %v91
    %2958 = vmatpush1.msra.mxu0 %v90
    %2959 = vmatprep.subr.mxu0 %v95
    %2960 = vmatpush1.msra.mxu0 %v94
    %2961 = vmatprep.subr.mxu0 %v99
    %2962 = vmatpush1.msra.mxu0 %v98
    %2963 = vmatprep.subr.mxu0 0.0
    %2964 = vmatpush1.msra.mxu0 0.0
    %2965 = vmatprep.subr.mxu0 0.0
    %2966 = vmatpush1.msra.mxu0 0.0
    %2967 = vmatprep.subr.mxu0 0.0
    %2968 = vmatpush1.msra.mxu0 0.0
    %2969 = vmatprep.subr.mxu0 0.0
    %2970 = vmatpush1.msra.mxu0 0.0
    %2971 = vmatprep.subr.mxu0 0.0
    %2972 = vmatpush1.msra.mxu0 0.0
    %2973 = vmatprep.subr.mxu0 0.0
    %2974 = vmatpush1.msra.mxu0 0.0
    %2975 = vmatprep.subr.mxu0 0.0
    %2976 = vmatpush1.msra.mxu0 0.0
    %2977 = vmatprep.subr.mxu0 0.0
    %2978 = vmatpush1.msra.mxu0 0.0
    %2979 = vmatprep.subr.mxu0 0.0
    %2980 = vmatpush1.msra.mxu0 0.0
    %2981 = vmatprep.subr.mxu0 0.0
    %2982 = vmatpush1.msra.mxu0 0.0
    %2983 = vmatprep.subr.mxu0 0.0
    %2984 = vmatpush1.msra.mxu0 0.0
    %2985 = vmatprep.subr.mxu0 0.0
    %2986 = vmatpush1.msra.mxu0 0.0
    %2987 = vmatprep.subr.mxu0 0.0
    %2988 = vmatpush1.msra.mxu0 0.0
    %2989 = vmatprep.subr.mxu0 0.0
    %2990 = vmatpush1.msra.mxu0 0.0
    %2991 = vmatprep.subr.mxu0 0.0
    %2992 = vmatpush1.msra.mxu0 0.0
    %2993 = vmatprep.subr.mxu0 0.0
    %2994 = vmatpush1.msra.mxu0 0.0
    %2995 = vmatprep.mubr.f32.mxu0 0.0
    %2996 = vmatmul.mubr.f32.gmra.mrb[0].mxu0 %v2858
    %v2997 = vpop.f32.mrb[0].mxu0
    %v2998 = vadd.f32 0.0, %v2997
    %v2999 = vpop.f32.mrb[0].mxu0
    %v3000 = vadd.f32 0.0, %v2999
    %3001 = vdwg.mxu0
    %v3006 = vcombine.low %v2927, %v2929
    %v3007 = vcombine.high %v2927, %v2929
    %v3008 = vcombine.low %v2998, %v3000
    %v3009 = vcombine.high %v2998, %v3000
    %v3011 = vunpack.c.l.s4 1966171168
    %v3012 = vunpack.c.0.s8 %v3011
    %v3013 = vlaneseq
    %v3014 = vshrl.u32 %v3013, 7
    %v3015 = vsub.s32 %v3012, %v3014
    %v3016 = vrot.slane %v3006, %v3015
    %v3018 = vunpack.c.l.s4 1966171168
    %v3019 = vunpack.c.0.s8 %v3018
    %v3020 = vlaneseq
    %v3021 = vshrl.u32 %v3020, 7
    %v3022 = vsub.s32 %v3019, %v3021
    %v3023 = vrot.slane %v3007, %v3022
    %v3025 = vunpack.c.l.s4 1966171168
    %v3026 = vunpack.c.0.s8 %v3025
    %v3027 = vlaneseq
    %v3028 = vshrl.u32 %v3027, 7
    %v3029 = vsub.s32 %v3026, %v3028
    %v3030 = vrot.slane %v3008, %v3029
    %v3032 = vunpack.c.l.s4 1966171168
    %v3033 = vunpack.c.0.s8 %v3032
    %v3034 = vlaneseq
    %v3035 = vshrl.u32 %v3034, 7
    %v3036 = vsub.s32 %v3033, %v3035
    %v3037 = vrot.slane %v3009, %v3036
    %v3038 = vcombine.low %v3016, %v3030
    %v3039 = vcombine.high %v3016, %v3030
    %v3040 = vcombine.low %v3023, %v3037
    %v3041 = vcombine.high %v3023, %v3037
    %v3043 = vunpack.c.l.s4 1966171168
    %v3044 = vunpack.c.0.s8 %v3043
    %v3045 = vlaneseq
    %v3046 = vshrl.u32 %v3045, 7
    %v3047 = vsub.s32 %v3044, %v3046
    %v3048 = vrot.slane %v3038, %v3047
    %v3050 = vunpack.c.l.s4 1966171168
    %v3051 = vunpack.c.0.s8 %v3050
    %v3052 = vlaneseq
    %v3053 = vshrl.u32 %v3052, 7
    %v3054 = vsub.s32 %v3051, %v3053
    %v3055 = vrot.slane %v3040, %v3054
    %v3057 = vunpack.c.l.s4 1966171168
    %v3058 = vunpack.c.0.s8 %v3057
    %v3059 = vlaneseq
    %v3060 = vshrl.u32 %v3059, 7
    %v3061 = vsub.s32 %v3058, %v3060
    %v3062 = vrot.slane %v3039, %v3061
    %v3064 = vunpack.c.l.s4 1966171168
    %v3065 = vunpack.c.0.s8 %v3064
    %v3066 = vlaneseq
    %v3067 = vshrl.u32 %v3066, 7
    %v3068 = vsub.s32 %v3065, %v3067
    %v3069 = vrot.slane %v3041, %v3068
    %v3070 = vcombine.high %v3048, %v3048
    %v3071 = vcombine.high %v3055, %v3055
    %v3072 = vcombine.high %v3062, %v3062
    %v3073 = vcombine.high %v3069, %v3069
    %v3082 = vadd.f32 %v2787, %v3048
    %v3083 = vadd.f32 %v2789, %v3062
    %v3084 = vadd.f32 %v2791, %v3070
    %v3085 = vadd.f32 %v2793, %v3072
    %v3086 = vadd.f32 %v2795, %v3055
    %v3087 = vadd.f32 %v2797, %v3069
    %v3088 = vadd.f32 %v2799, %v3071
    %v3089 = vadd.f32 %v2801, %v3073
    %v3090 = vxor.u32 %v3082, 2147483648
    %v3091 = vxor.u32 %v3083, 2147483648
    %v3092 = vxor.u32 %v3084, 2147483648
    %v3093 = vxor.u32 %v3085, 2147483648
    %v3094 = vxor.u32 %v3086, 2147483648
    %v3095 = vxor.u32 %v3087, 2147483648
    %v3096 = vxor.u32 %v3088, 2147483648
    %v3097 = vxor.u32 %v3089, 2147483648
    %v3098 = vmul.f32 %v3090, 1.442695
    %v3099 = vpow.pop %v3098
    %v3100 = vmul.f32 %v3091, 1.442695
    %v3101 = vpow.pop %v3100
    %v3102 = vmul.f32 %v3092, 1.442695
    %v3103 = vpow.pop %v3102
    %v3104 = vmul.f32 %v3093, 1.442695
    %v3105 = vpow.pop %v3104
    %v3106 = vmul.f32 %v3094, 1.442695
    %v3107 = vpow.pop %v3106
    %v3108 = vmul.f32 %v3095, 1.442695
    %v3109 = vpow.pop %v3108
    %v3110 = vmul.f32 %v3096, 1.442695
    %v3111 = vpow.pop %v3110
    %v3112 = vmul.f32 %v3097, 1.442695
    %v3113 = vpow.pop %v3112
    %v3114 = vadd.f32 %v3099, 1.0
    %v3115 = vadd.f32 %v3101, 1.0
    %v3116 = vadd.f32 %v3103, 1.0
    %v3117 = vadd.f32 %v3105, 1.0
    %v3118 = vadd.f32 %v3107, 1.0
    %v3119 = vadd.f32 %v3109, 1.0
    %v3120 = vadd.f32 %v3111, 1.0
    %v3121 = vadd.f32 %v3113, 1.0
    %v3122 = vrcp.pop %v3114
    %v3123 = vmul.f32 1.0, %v3122
    %v3124 = vrcp.pop %v3115
    %v3125 = vmul.f32 1.0, %v3124
    %v3126 = vrcp.pop %v3116
    %v3127 = vmul.f32 1.0, %v3126
    %v3128 = vrcp.pop %v3117
    %v3129 = vmul.f32 1.0, %v3128
    %v3130 = vrcp.pop %v3118
    %v3131 = vmul.f32 1.0, %v3130
    %v3132 = vrcp.pop %v3119
    %v3133 = vmul.f32 1.0, %v3132
    %v3134 = vrcp.pop %v3120
    %v3135 = vmul.f32 1.0, %v3134
    %v3136 = vrcp.pop %v3121
    %v3137 = vmul.f32 1.0, %v3136
    %v3146 = vrot.slane %v3082, 1
    %v3147 = vrot.slane %v3083, 1
    %v3148 = vrot.slane %v3084, 1
    %v3149 = vrot.slane %v3085, 1
    %v3150 = vrot.slane %v3086, 1
    %v3151 = vrot.slane %v3087, 1
    %v3152 = vrot.slane %v3088, 1
    %v3153 = vrot.slane %v3089, 1
    %v3162 = vxor.u32 %v3146, 2147483648
    %v3163 = vxor.u32 %v3147, 2147483648
    %v3164 = vxor.u32 %v3148, 2147483648
    %v3165 = vxor.u32 %v3149, 2147483648
    %v3166 = vxor.u32 %v3150, 2147483648
    %v3167 = vxor.u32 %v3151, 2147483648
    %v3168 = vxor.u32 %v3152, 2147483648
    %v3169 = vxor.u32 %v3153, 2147483648
    %v3170 = vmul.f32 %v3162, 1.442695
    %v3171 = vpow.pop %v3170
    %v3172 = vmul.f32 %v3163, 1.442695
    %v3173 = vpow.pop %v3172
    %v3174 = vmul.f32 %v3164, 1.442695
    %v3175 = vpow.pop %v3174
    %v3176 = vmul.f32 %v3165, 1.442695
    %v3177 = vpow.pop %v3176
    %v3178 = vmul.f32 %v3166, 1.442695
    %v3179 = vpow.pop %v3178
    %v3180 = vmul.f32 %v3167, 1.442695
    %v3181 = vpow.pop %v3180
    %v3182 = vmul.f32 %v3168, 1.442695
    %v3183 = vpow.pop %v3182
    %v3184 = vmul.f32 %v3169, 1.442695
    %v3185 = vpow.pop %v3184
    %v3186 = vadd.f32 %v3171, 1.0
    %v3187 = vadd.f32 %v3173, 1.0
    %v3188 = vadd.f32 %v3175, 1.0
    %v3189 = vadd.f32 %v3177, 1.0
    %v3190 = vadd.f32 %v3179, 1.0
    %v3191 = vadd.f32 %v3181, 1.0
    %v3192 = vadd.f32 %v3183, 1.0
    %v3193 = vadd.f32 %v3185, 1.0
    %v3194 = vrcp.pop %v3186
    %v3195 = vmul.f32 1.0, %v3194
    %v3196 = vrcp.pop %v3187
    %v3197 = vmul.f32 1.0, %v3196
    %v3198 = vrcp.pop %v3188
    %v3199 = vmul.f32 1.0, %v3198
    %v3200 = vrcp.pop %v3189
    %v3201 = vmul.f32 1.0, %v3200
    %v3202 = vrcp.pop %v3190
    %v3203 = vmul.f32 1.0, %v3202
    %v3204 = vrcp.pop %v3191
    %v3205 = vmul.f32 1.0, %v3204
    %v3206 = vrcp.pop %v3192
    %v3207 = vmul.f32 1.0, %v3206
    %v3208 = vrcp.pop %v3193
    %v3209 = vmul.f32 1.0, %v3208
    %v3210 = vrot.slane %v3082, 2
    %v3211 = vrot.slane %v3083, 2
    %v3212 = vrot.slane %v3084, 2
    %v3213 = vrot.slane %v3085, 2
    %v3214 = vrot.slane %v3086, 2
    %v3215 = vrot.slane %v3087, 2
    %v3216 = vrot.slane %v3088, 2
    %v3217 = vrot.slane %v3089, 2
    %v3226 = vtanh.pop %v3210
    %v3227 = vtanh.pop %v3211
    %v3228 = vtanh.pop %v3212
    %v3229 = vtanh.pop %v3213
    %v3230 = vtanh.pop %v3214
    %v3231 = vtanh.pop %v3215
    %v3232 = vtanh.pop %v3216
    %v3233 = vtanh.pop %v3217
    %v3234 = vrot.slane %v3082, 3
    %v3235 = vrot.slane %v3083, 3
    %v3236 = vrot.slane %v3084, 3
    %v3237 = vrot.slane %v3085, 3
    %v3238 = vrot.slane %v3086, 3
    %v3239 = vrot.slane %v3087, 3
    %v3240 = vrot.slane %v3088, 3
    %v3241 = vrot.slane %v3089, 3
    %v3250 = vxor.u32 %v3234, 2147483648
    %v3251 = vxor.u32 %v3235, 2147483648
    %v3252 = vxor.u32 %v3236, 2147483648
    %v3253 = vxor.u32 %v3237, 2147483648
    %v3254 = vxor.u32 %v3238, 2147483648
    %v3255 = vxor.u32 %v3239, 2147483648
    %v3256 = vxor.u32 %v3240, 2147483648
    %v3257 = vxor.u32 %v3241, 2147483648
    %v3258 = vmul.f32 %v3250, 1.442695
    %v3259 = vpow.pop %v3258
    %v3260 = vmul.f32 %v3251, 1.442695
    %v3261 = vpow.pop %v3260
    %v3262 = vmul.f32 %v3252, 1.442695
    %v3263 = vpow.pop %v3262
    %v3264 = vmul.f32 %v3253, 1.442695
    %v3265 = vpow.pop %v3264
    %v3266 = vmul.f32 %v3254, 1.442695
    %v3267 = vpow.pop %v3266
    %v3268 = vmul.f32 %v3255, 1.442695
    %v3269 = vpow.pop %v3268
    %v3270 = vmul.f32 %v3256, 1.442695
    %v3271 = vpow.pop %v3270
    %v3272 = vmul.f32 %v3257, 1.442695
    %v3273 = vpow.pop %v3272
    %v3274 = vadd.f32 %v3259, 1.0
    %v3275 = vadd.f32 %v3261, 1.0
    %v3276 = vadd.f32 %v3263, 1.0
    %v3277 = vadd.f32 %v3265, 1.0
    %v3278 = vadd.f32 %v3267, 1.0
    %v3279 = vadd.f32 %v3269, 1.0
    %v3280 = vadd.f32 %v3271, 1.0
    %v3281 = vadd.f32 %v3273, 1.0
    %v3282 = vrcp.pop %v3274
    %v3283 = vmul.f32 1.0, %v3282
    %v3284 = vrcp.pop %v3275
    %v3285 = vmul.f32 1.0, %v3284
    %v3286 = vrcp.pop %v3276
    %v3287 = vmul.f32 1.0, %v3286
    %v3288 = vrcp.pop %v3277
    %v3289 = vmul.f32 1.0, %v3288
    %v3290 = vrcp.pop %v3278
    %v3291 = vmul.f32 1.0, %v3290
    %v3292 = vrcp.pop %v3279
    %v3293 = vmul.f32 1.0, %v3292
    %v3294 = vrcp.pop %v3280
    %v3295 = vmul.f32 1.0, %v3294
    %v3296 = vrcp.pop %v3281
    %v3297 = vmul.f32 1.0, %v3296
    %v3298 = vmul.f32 %v3195, %v2762
    %v3299 = vmul.f32 %v3197, %v2763
    %v3300 = vmul.f32 %v3199, %v2764
    %v3301 = vmul.f32 %v3201, %v2765
    %v3302 = vmul.f32 %v3203, %v2766
    %v3303 = vmul.f32 %v3205, %v2767
    %v3304 = vmul.f32 %v3207, %v2768
    %v3305 = vmul.f32 %v3209, %v2769
    %v3306 = vmul.f32 %v3123, %v3226
    %v3307 = vmul.f32 %v3125, %v3227
    %v3308 = vmul.f32 %v3127, %v3228
    %v3309 = vmul.f32 %v3129, %v3229
    %v3310 = vmul.f32 %v3131, %v3230
    %v3311 = vmul.f32 %v3133, %v3231
    %v3312 = vmul.f32 %v3135, %v3232
    %v3313 = vmul.f32 %v3137, %v3233
    %v3314 = vadd.f32 %v3298, %v3306
    %v3315 = vadd.f32 %v3299, %v3307
    %v3316 = vadd.f32 %v3300, %v3308
    %v3317 = vadd.f32 %v3301, %v3309
    %v3318 = vadd.f32 %v3302, %v3310
    %v3319 = vadd.f32 %v3303, %v3311
    %v3320 = vadd.f32 %v3304, %v3312
    %v3321 = vadd.f32 %v3305, %v3313
    %v3322 = vtanh.pop %v3314
    %v3323 = vtanh.pop %v3315
    %v3324 = vtanh.pop %v3316
    %v3325 = vtanh.pop %v3317
    %v3326 = vtanh.pop %v3318
    %v3327 = vtanh.pop %v3319
    %v3328 = vtanh.pop %v3320
    %v3329 = vtanh.pop %v3321
    %v3330 = vmul.f32 %v3283, %v3322
    %v3331 = vmul.f32 %v3285, %v3323
    %v3332 = vmul.f32 %v3287, %v3324
    %v3333 = vmul.f32 %v3289, %v3325
    %v3334 = vmul.f32 %v3291, %v3326
    %v3335 = vmul.f32 %v3293, %v3327
    %v3336 = vmul.f32 %v3295, %v3328
    %v3337 = vmul.f32 %v3297, %v3329
    %s3338 = scalar_lea.vmem %s0, 6
    %v3339 = vld [vmem:[%s3338] ss:$8 sm:$0xf]
    %s3340 = scalar_lea.vmem %s0, 38
    %v3341 = vld [vmem:[%s3340] ss:$8 sm:$0xf]
    %s3342 = scalar_lea.vmem %s0, 70
    %v3343 = vld [vmem:[%s3342] ss:$8 sm:$0xf]
    %s3344 = scalar_lea.vmem %s0, 102
    %v3345 = vld [vmem:[%s3344] ss:$8 sm:$0xf]
    %s3346 = scalar_lea.vmem %s0, 134
    %v3347 = vld [vmem:[%s3346] ss:$8 sm:$0xf]
    %s3348 = scalar_lea.vmem %s0, 166
    %v3349 = vld [vmem:[%s3348] ss:$8 sm:$0xf]
    %s3350 = scalar_lea.vmem %s0, 198
    %v3351 = vld [vmem:[%s3350] ss:$8 sm:$0xf]
    %s3352 = scalar_lea.vmem %s0, 230
    %v3353 = vld [vmem:[%s3352] ss:$8 sm:$0xf]
    %v3362 = vcombine.low %v3330, %v3331
    %v3363 = vcombine.low %v3332, %v3333
    %v3364 = vcombine.low %v3334, %v3335
    %v3365 = vcombine.low %v3336, %v3337
    %v3367 = vunpack.c.l.s4 1966171168
    %v3368 = vunpack.c.0.s8 %v3367
    %v3369 = vlaneseq
    %v3370 = vshrl.u32 %v3369, 7
    %v3371 = vsub.s32 %v3368, %v3370
    %v3372 = vrot.slane %v3362, %v3371
    %v3374 = vunpack.c.l.s4 1966171168
    %v3375 = vunpack.c.0.s8 %v3374
    %v3376 = vlaneseq
    %v3377 = vshrl.u32 %v3376, 7
    %v3378 = vsub.s32 %v3375, %v3377
    %v3379 = vrot.slane %v3363, %v3378
    %v3381 = vunpack.c.l.s4 1966171168
    %v3382 = vunpack.c.0.s8 %v3381
    %v3383 = vlaneseq
    %v3384 = vshrl.u32 %v3383, 7
    %v3385 = vsub.s32 %v3382, %v3384
    %v3386 = vrot.slane %v3364, %v3385
    %v3388 = vunpack.c.l.s4 1966171168
    %v3389 = vunpack.c.0.s8 %v3388
    %v3390 = vlaneseq
    %v3391 = vshrl.u32 %v3390, 7
    %v3392 = vsub.s32 %v3389, %v3391
    %v3393 = vrot.slane %v3365, %v3392
    %v3394 = vcombine.low %v3372, %v3379
    %v3395 = vcombine.low %v3386, %v3393
    %v3397 = vunpack.c.l.s4 1966171168
    %v3398 = vunpack.c.0.s8 %v3397
    %v3399 = vlaneseq
    %v3400 = vshrl.u32 %v3399, 7
    %v3401 = vsub.s32 %v3398, %v3400
    %v3402 = vrot.slane %v3394, %v3401
    %v3404 = vunpack.c.l.s4 1966171168
    %v3405 = vunpack.c.0.s8 %v3404
    %v3406 = vlaneseq
    %v3407 = vshrl.u32 %v3406, 7
    %v3408 = vsub.s32 %v3405, %v3407
    %v3409 = vrot.slane %v3395, %v3408
    %v3410 = vcombine.low %v3402, %v3409
    %3412 = vmatprep.subr.mxu0 %v37
    %3413 = vmatpush1.msra.mxu0 %v36
    %3414 = vmatprep.subr.mxu0 %v41
    %3415 = vmatpush1.msra.mxu0 %v40
    %3416 = vmatprep.subr.mxu0 %v45
    %3417 = vmatpush1.msra.mxu0 %v44
    %3418 = vmatprep.subr.mxu0 %v49
    %3419 = vmatpush1.msra.mxu0 %v48
    %3420 = vmatprep.subr.mxu0 %v53
    %3421 = vmatpush1.msra.mxu0 %v52
    %3422 = vmatprep.subr.mxu0 %v57
    %3423 = vmatpush1.msra.mxu0 %v56
    %3424 = vmatprep.subr.mxu0 %v61
    %3425 = vmatpush1.msra.mxu0 %v60
    %3426 = vmatprep.subr.mxu0 %v65
    %3427 = vmatpush1.msra.mxu0 %v64
    %3428 = vmatprep.subr.mxu0 %v69
    %3429 = vmatpush1.msra.mxu0 %v68
    %3430 = vmatprep.subr.mxu0 %v73
    %3431 = vmatpush1.msra.mxu0 %v72
    %3432 = vmatprep.subr.mxu0 %v77
    %3433 = vmatpush1.msra.mxu0 %v76
    %3434 = vmatprep.subr.mxu0 %v81
    %3435 = vmatpush1.msra.mxu0 %v80
    %3436 = vmatprep.subr.mxu0 %v85
    %3437 = vmatpush1.msra.mxu0 %v84
    %3438 = vmatprep.subr.mxu0 %v89
    %3439 = vmatpush1.msra.mxu0 %v88
    %3440 = vmatprep.subr.mxu0 %v93
    %3441 = vmatpush1.msra.mxu0 %v92
    %3442 = vmatprep.subr.mxu0 %v97
    %3443 = vmatpush1.msra.mxu0 %v96
    %3444 = vmatprep.subr.mxu0 0.0
    %3445 = vmatpush1.msra.mxu0 0.0
    %3446 = vmatprep.subr.mxu0 0.0
    %3447 = vmatpush1.msra.mxu0 0.0
    %3448 = vmatprep.subr.mxu0 0.0
    %3449 = vmatpush1.msra.mxu0 0.0
    %3450 = vmatprep.subr.mxu0 0.0
    %3451 = vmatpush1.msra.mxu0 0.0
    %3452 = vmatprep.subr.mxu0 0.0
    %3453 = vmatpush1.msra.mxu0 0.0
    %3454 = vmatprep.subr.mxu0 0.0
    %3455 = vmatpush1.msra.mxu0 0.0
    %3456 = vmatprep.subr.mxu0 0.0
    %3457 = vmatpush1.msra.mxu0 0.0
    %3458 = vmatprep.subr.mxu0 0.0
    %3459 = vmatpush1.msra.mxu0 0.0
    %3460 = vmatprep.subr.mxu0 0.0
    %3461 = vmatpush1.msra.mxu0 0.0
    %3462 = vmatprep.subr.mxu0 0.0
    %3463 = vmatpush1.msra.mxu0 0.0
    %3464 = vmatprep.subr.mxu0 0.0
    %3465 = vmatpush1.msra.mxu0 0.0
    %3466 = vmatprep.subr.mxu0 0.0
    %3467 = vmatpush1.msra.mxu0 0.0
    %3468 = vmatprep.subr.mxu0 0.0
    %3469 = vmatpush1.msra.mxu0 0.0
    %3470 = vmatprep.subr.mxu0 0.0
    %3471 = vmatpush1.msra.mxu0 0.0
    %3472 = vmatprep.subr.mxu0 0.0
    %3473 = vmatpush1.msra.mxu0 0.0
    %3474 = vmatprep.subr.mxu0 0.0
    %3475 = vmatpush1.msra.mxu0 0.0
    %3476 = vmatprep.mubr.f32.mxu0 0.0
    %3477 = vmatmul.mubr.f32.gmra.mrb[0].mxu0 %v3410
    %v3478 = vpop.f32.mrb[0].mxu0
    %v3479 = vadd.f32 0.0, %v3478
    %v3480 = vpop.f32.mrb[0].mxu0
    %v3481 = vadd.f32 0.0, %v3480
    %3482 = vdwg.mxu0
    %3483 = vmatprep.subr.mxu0 %v39
    %3484 = vmatpush1.msra.mxu0 %v38
    %3485 = vmatprep.subr.mxu0 %v43
    %3486 = vmatpush1.msra.mxu0 %v42
    %3487 = vmatprep.subr.mxu0 %v47
    %3488 = vmatpush1.msra.mxu0 %v46
    %3489 = vmatprep.subr.mxu0 %v51
    %3490 = vmatpush1.msra.mxu0 %v50
    %3491 = vmatprep.subr.mxu0 %v55
    %3492 = vmatpush1.msra.mxu0 %v54
    %3493 = vmatprep.subr.mxu0 %v59
    %3494 = vmatpush1.msra.mxu0 %v58
    %3495 = vmatprep.subr.mxu0 %v63
    %3496 = vmatpush1.msra.mxu0 %v62
    %3497 = vmatprep.subr.mxu0 %v67
    %3498 = vmatpush1.msra.mxu0 %v66
    %3499 = vmatprep.subr.mxu0 %v71
    %3500 = vmatpush1.msra.mxu0 %v70
    %3501 = vmatprep.subr.mxu0 %v75
    %3502 = vmatpush1.msra.mxu0 %v74
    %3503 = vmatprep.subr.mxu0 %v79
    %3504 = vmatpush1.msra.mxu0 %v78
    %3505 = vmatprep.subr.mxu0 %v83
    %3506 = vmatpush1.msra.mxu0 %v82
    %3507 = vmatprep.subr.mxu0 %v87
    %3508 = vmatpush1.msra.mxu0 %v86
    %3509 = vmatprep.subr.mxu0 %v91
    %3510 = vmatpush1.msra.mxu0 %v90
    %3511 = vmatprep.subr.mxu0 %v95
    %3512 = vmatpush1.msra.mxu0 %v94
    %3513 = vmatprep.subr.mxu0 %v99
    %3514 = vmatpush1.msra.mxu0 %v98
    %3515 = vmatprep.subr.mxu0 0.0
    %3516 = vmatpush1.msra.mxu0 0.0
    %3517 = vmatprep.subr.mxu0 0.0
    %3518 = vmatpush1.msra.mxu0 0.0
    %3519 = vmatprep.subr.mxu0 0.0
    %3520 = vmatpush1.msra.mxu0 0.0
    %3521 = vmatprep.subr.mxu0 0.0
    %3522 = vmatpush1.msra.mxu0 0.0
    %3523 = vmatprep.subr.mxu0 0.0
    %3524 = vmatpush1.msra.mxu0 0.0
    %3525 = vmatprep.subr.mxu0 0.0
    %3526 = vmatpush1.msra.mxu0 0.0
    %3527 = vmatprep.subr.mxu0 0.0
    %3528 = vmatpush1.msra.mxu0 0.0
    %3529 = vmatprep.subr.mxu0 0.0
    %3530 = vmatpush1.msra.mxu0 0.0
    %3531 = vmatprep.subr.mxu0 0.0
    %3532 = vmatpush1.msra.mxu0 0.0
    %3533 = vmatprep.subr.mxu0 0.0
    %3534 = vmatpush1.msra.mxu0 0.0
    %3535 = vmatprep.subr.mxu0 0.0
    %3536 = vmatpush1.msra.mxu0 0.0
    %3537 = vmatprep.subr.mxu0 0.0
    %3538 = vmatpush1.msra.mxu0 0.0
    %3539 = vmatprep.subr.mxu0 0.0
    %3540 = vmatpush1.msra.mxu0 0.0
    %3541 = vmatprep.subr.mxu0 0.0
    %3542 = vmatpush1.msra.mxu0 0.0
    %3543 = vmatprep.subr.mxu0 0.0
    %3544 = vmatpush1.msra.mxu0 0.0
    %3545 = vmatprep.subr.mxu0 0.0
    %3546 = vmatpush1.msra.mxu0 0.0
    %3547 = vmatprep.mubr.f32.mxu0 0.0
    %3548 = vmatmul.mubr.f32.gmra.mrb[0].mxu0 %v3410
    %v3549 = vpop.f32.mrb[0].mxu0
    %v3550 = vadd.f32 0.0, %v3549
    %v3551 = vpop.f32.mrb[0].mxu0
    %v3552 = vadd.f32 0.0, %v3551
    %3553 = vdwg.mxu0
    %v3558 = vcombine.low %v3479, %v3481
    %v3559 = vcombine.high %v3479, %v3481
    %v3560 = vcombine.low %v3550, %v3552
    %v3561 = vcombine.high %v3550, %v3552
    %v3563 = vunpack.c.l.s4 1966171168
    %v3564 = vunpack.c.0.s8 %v3563
    %v3565 = vlaneseq
    %v3566 = vshrl.u32 %v3565, 7
    %v3567 = vsub.s32 %v3564, %v3566
    %v3568 = vrot.slane %v3558, %v3567
    %v3570 = vunpack.c.l.s4 1966171168
    %v3571 = vunpack.c.0.s8 %v3570
    %v3572 = vlaneseq
    %v3573 = vshrl.u32 %v3572, 7
    %v3574 = vsub.s32 %v3571, %v3573
    %v3575 = vrot.slane %v3559, %v3574
    %v3577 = vunpack.c.l.s4 1966171168
    %v3578 = vunpack.c.0.s8 %v3577
    %v3579 = vlaneseq
    %v3580 = vshrl.u32 %v3579, 7
    %v3581 = vsub.s32 %v3578, %v3580
    %v3582 = vrot.slane %v3560, %v3581
    %v3584 = vunpack.c.l.s4 1966171168
    %v3585 = vunpack.c.0.s8 %v3584
    %v3586 = vlaneseq
    %v3587 = vshrl.u32 %v3586, 7
    %v3588 = vsub.s32 %v3585, %v3587
    %v3589 = vrot.slane %v3561, %v3588
    %v3590 = vcombine.low %v3568, %v3582
    %v3591 = vcombine.high %v3568, %v3582
    %v3592 = vcombine.low %v3575, %v3589
    %v3593 = vcombine.high %v3575, %v3589
    %v3595 = vunpack.c.l.s4 1966171168
    %v3596 = vunpack.c.0.s8 %v3595
    %v3597 = vlaneseq
    %v3598 = vshrl.u32 %v3597, 7
    %v3599 = vsub.s32 %v3596, %v3598
    %v3600 = vrot.slane %v3590, %v3599
    %v3602 = vunpack.c.l.s4 1966171168
    %v3603 = vunpack.c.0.s8 %v3602
    %v3604 = vlaneseq
    %v3605 = vshrl.u32 %v3604, 7
    %v3606 = vsub.s32 %v3603, %v3605
    %v3607 = vrot.slane %v3592, %v3606
    %v3609 = vunpack.c.l.s4 1966171168
    %v3610 = vunpack.c.0.s8 %v3609
    %v3611 = vlaneseq
    %v3612 = vshrl.u32 %v3611, 7
    %v3613 = vsub.s32 %v3610, %v3612
    %v3614 = vrot.slane %v3591, %v3613
    %v3616 = vunpack.c.l.s4 1966171168
    %v3617 = vunpack.c.0.s8 %v3616
    %v3618 = vlaneseq
    %v3619 = vshrl.u32 %v3618, 7
    %v3620 = vsub.s32 %v3617, %v3619
    %v3621 = vrot.slane %v3593, %v3620
    %v3622 = vcombine.high %v3600, %v3600
    %v3623 = vcombine.high %v3607, %v3607
    %v3624 = vcombine.high %v3614, %v3614
    %v3625 = vcombine.high %v3621, %v3621
    %v3634 = vadd.f32 %v3339, %v3600
    %v3635 = vadd.f32 %v3341, %v3614
    %v3636 = vadd.f32 %v3343, %v3622
    %v3637 = vadd.f32 %v3345, %v3624
    %v3638 = vadd.f32 %v3347, %v3607
    %v3639 = vadd.f32 %v3349, %v3621
    %v3640 = vadd.f32 %v3351, %v3623
    %v3641 = vadd.f32 %v3353, %v3625
    %v3642 = vxor.u32 %v3634, 2147483648
    %v3643 = vxor.u32 %v3635, 2147483648
    %v3644 = vxor.u32 %v3636, 2147483648
    %v3645 = vxor.u32 %v3637, 2147483648
    %v3646 = vxor.u32 %v3638, 2147483648
    %v3647 = vxor.u32 %v3639, 2147483648
    %v3648 = vxor.u32 %v3640, 2147483648
    %v3649 = vxor.u32 %v3641, 2147483648
    %v3650 = vmul.f32 %v3642, 1.442695
    %v3651 = vpow.pop %v3650
    %v3652 = vmul.f32 %v3643, 1.442695
    %v3653 = vpow.pop %v3652
    %v3654 = vmul.f32 %v3644, 1.442695
    %v3655 = vpow.pop %v3654
    %v3656 = vmul.f32 %v3645, 1.442695
    %v3657 = vpow.pop %v3656
    %v3658 = vmul.f32 %v3646, 1.442695
    %v3659 = vpow.pop %v3658
    %v3660 = vmul.f32 %v3647, 1.442695
    %v3661 = vpow.pop %v3660
    %v3662 = vmul.f32 %v3648, 1.442695
    %v3663 = vpow.pop %v3662
    %v3664 = vmul.f32 %v3649, 1.442695
    %v3665 = vpow.pop %v3664
    %v3666 = vadd.f32 %v3651, 1.0
    %v3667 = vadd.f32 %v3653, 1.0
    %v3668 = vadd.f32 %v3655, 1.0
    %v3669 = vadd.f32 %v3657, 1.0
    %v3670 = vadd.f32 %v3659, 1.0
    %v3671 = vadd.f32 %v3661, 1.0
    %v3672 = vadd.f32 %v3663, 1.0
    %v3673 = vadd.f32 %v3665, 1.0
    %v3674 = vrcp.pop %v3666
    %v3675 = vmul.f32 1.0, %v3674
    %v3676 = vrcp.pop %v3667
    %v3677 = vmul.f32 1.0, %v3676
    %v3678 = vrcp.pop %v3668
    %v3679 = vmul.f32 1.0, %v3678
    %v3680 = vrcp.pop %v3669
    %v3681 = vmul.f32 1.0, %v3680
    %v3682 = vrcp.pop %v3670
    %v3683 = vmul.f32 1.0, %v3682
    %v3684 = vrcp.pop %v3671
    %v3685 = vmul.f32 1.0, %v3684
    %v3686 = vrcp.pop %v3672
    %v3687 = vmul.f32 1.0, %v3686
    %v3688 = vrcp.pop %v3673
    %v3689 = vmul.f32 1.0, %v3688
    %v3698 = vrot.slane %v3634, 1
    %v3699 = vrot.slane %v3635, 1
    %v3700 = vrot.slane %v3636, 1
    %v3701 = vrot.slane %v3637, 1
    %v3702 = vrot.slane %v3638, 1
    %v3703 = vrot.slane %v3639, 1
    %v3704 = vrot.slane %v3640, 1
    %v3705 = vrot.slane %v3641, 1
    %v3714 = vxor.u32 %v3698, 2147483648
    %v3715 = vxor.u32 %v3699, 2147483648
    %v3716 = vxor.u32 %v3700, 2147483648
    %v3717 = vxor.u32 %v3701, 2147483648
    %v3718 = vxor.u32 %v3702, 2147483648
    %v3719 = vxor.u32 %v3703, 2147483648
    %v3720 = vxor.u32 %v3704, 2147483648
    %v3721 = vxor.u32 %v3705, 2147483648
    %v3722 = vmul.f32 %v3714, 1.442695
    %v3723 = vpow.pop %v3722
    %v3724 = vmul.f32 %v3715, 1.442695
    %v3725 = vpow.pop %v3724
    %v3726 = vmul.f32 %v3716, 1.442695
    %v3727 = vpow.pop %v3726
    %v3728 = vmul.f32 %v3717, 1.442695
    %v3729 = vpow.pop %v3728
    %v3730 = vmul.f32 %v3718, 1.442695
    %v3731 = vpow.pop %v3730
    %v3732 = vmul.f32 %v3719, 1.442695
    %v3733 = vpow.pop %v3732
    %v3734 = vmul.f32 %v3720, 1.442695
    %v3735 = vpow.pop %v3734
    %v3736 = vmul.f32 %v3721, 1.442695
    %v3737 = vpow.pop %v3736
    %v3738 = vadd.f32 %v3723, 1.0
    %v3739 = vadd.f32 %v3725, 1.0
    %v3740 = vadd.f32 %v3727, 1.0
    %v3741 = vadd.f32 %v3729, 1.0
    %v3742 = vadd.f32 %v3731, 1.0
    %v3743 = vadd.f32 %v3733, 1.0
    %v3744 = vadd.f32 %v3735, 1.0
    %v3745 = vadd.f32 %v3737, 1.0
    %v3746 = vrcp.pop %v3738
    %v3747 = vmul.f32 1.0, %v3746
    %v3748 = vrcp.pop %v3739
    %v3749 = vmul.f32 1.0, %v3748
    %v3750 = vrcp.pop %v3740
    %v3751 = vmul.f32 1.0, %v3750
    %v3752 = vrcp.pop %v3741
    %v3753 = vmul.f32 1.0, %v3752
    %v3754 = vrcp.pop %v3742
    %v3755 = vmul.f32 1.0, %v3754
    %v3756 = vrcp.pop %v3743
    %v3757 = vmul.f32 1.0, %v3756
    %v3758 = vrcp.pop %v3744
    %v3759 = vmul.f32 1.0, %v3758
    %v3760 = vrcp.pop %v3745
    %v3761 = vmul.f32 1.0, %v3760
    %v3762 = vrot.slane %v3634, 2
    %v3763 = vrot.slane %v3635, 2
    %v3764 = vrot.slane %v3636, 2
    %v3765 = vrot.slane %v3637, 2
    %v3766 = vrot.slane %v3638, 2
    %v3767 = vrot.slane %v3639, 2
    %v3768 = vrot.slane %v3640, 2
    %v3769 = vrot.slane %v3641, 2
    %v3778 = vtanh.pop %v3762
    %v3779 = vtanh.pop %v3763
    %v3780 = vtanh.pop %v3764
    %v3781 = vtanh.pop %v3765
    %v3782 = vtanh.pop %v3766
    %v3783 = vtanh.pop %v3767
    %v3784 = vtanh.pop %v3768
    %v3785 = vtanh.pop %v3769
    %v3786 = vrot.slane %v3634, 3
    %v3787 = vrot.slane %v3635, 3
    %v3788 = vrot.slane %v3636, 3
    %v3789 = vrot.slane %v3637, 3
    %v3790 = vrot.slane %v3638, 3
    %v3791 = vrot.slane %v3639, 3
    %v3792 = vrot.slane %v3640, 3
    %v3793 = vrot.slane %v3641, 3
    %v3802 = vxor.u32 %v3786, 2147483648
    %v3803 = vxor.u32 %v3787, 2147483648
    %v3804 = vxor.u32 %v3788, 2147483648
    %v3805 = vxor.u32 %v3789, 2147483648
    %v3806 = vxor.u32 %v3790, 2147483648
    %v3807 = vxor.u32 %v3791, 2147483648
    %v3808 = vxor.u32 %v3792, 2147483648
    %v3809 = vxor.u32 %v3793, 2147483648
    %v3810 = vmul.f32 %v3802, 1.442695
    %v3811 = vpow.pop %v3810
    %v3812 = vmul.f32 %v3803, 1.442695
    %v3813 = vpow.pop %v3812
    %v3814 = vmul.f32 %v3804, 1.442695
    %v3815 = vpow.pop %v3814
    %v3816 = vmul.f32 %v3805, 1.442695
    %v3817 = vpow.pop %v3816
    %v3818 = vmul.f32 %v3806, 1.442695
    %v3819 = vpow.pop %v3818
    %v3820 = vmul.f32 %v3807, 1.442695
    %v3821 = vpow.pop %v3820
    %v3822 = vmul.f32 %v3808, 1.442695
    %v3823 = vpow.pop %v3822
    %v3824 = vmul.f32 %v3809, 1.442695
    %v3825 = vpow.pop %v3824
    %v3826 = vadd.f32 %v3811, 1.0
    %v3827 = vadd.f32 %v3813, 1.0
    %v3828 = vadd.f32 %v3815, 1.0
    %v3829 = vadd.f32 %v3817, 1.0
    %v3830 = vadd.f32 %v3819, 1.0
    %v3831 = vadd.f32 %v3821, 1.0
    %v3832 = vadd.f32 %v3823, 1.0
    %v3833 = vadd.f32 %v3825, 1.0
    %v3834 = vrcp.pop %v3826
    %v3835 = vmul.f32 1.0, %v3834
    %v3836 = vrcp.pop %v3827
    %v3837 = vmul.f32 1.0, %v3836
    %v3838 = vrcp.pop %v3828
    %v3839 = vmul.f32 1.0, %v3838
    %v3840 = vrcp.pop %v3829
    %v3841 = vmul.f32 1.0, %v3840
    %v3842 = vrcp.pop %v3830
    %v3843 = vmul.f32 1.0, %v3842
    %v3844 = vrcp.pop %v3831
    %v3845 = vmul.f32 1.0, %v3844
    %v3846 = vrcp.pop %v3832
    %v3847 = vmul.f32 1.0, %v3846
    %v3848 = vrcp.pop %v3833
    %v3849 = vmul.f32 1.0, %v3848
    %v3850 = vmul.f32 %v3747, %v3314
    %v3851 = vmul.f32 %v3749, %v3315
    %v3852 = vmul.f32 %v3751, %v3316
    %v3853 = vmul.f32 %v3753, %v3317
    %v3854 = vmul.f32 %v3755, %v3318
    %v3855 = vmul.f32 %v3757, %v3319
    %v3856 = vmul.f32 %v3759, %v3320
    %v3857 = vmul.f32 %v3761, %v3321
    %v3858 = vmul.f32 %v3675, %v3778
    %v3859 = vmul.f32 %v3677, %v3779
    %v3860 = vmul.f32 %v3679, %v3780
    %v3861 = vmul.f32 %v3681, %v3781
    %v3862 = vmul.f32 %v3683, %v3782
    %v3863 = vmul.f32 %v3685, %v3783
    %v3864 = vmul.f32 %v3687, %v3784
    %v3865 = vmul.f32 %v3689, %v3785
    %v3866 = vadd.f32 %v3850, %v3858
    %v3867 = vadd.f32 %v3851, %v3859
    %v3868 = vadd.f32 %v3852, %v3860
    %v3869 = vadd.f32 %v3853, %v3861
    %v3870 = vadd.f32 %v3854, %v3862
    %v3871 = vadd.f32 %v3855, %v3863
    %v3872 = vadd.f32 %v3856, %v3864
    %v3873 = vadd.f32 %v3857, %v3865
    %v3874 = vtanh.pop %v3866
    %v3875 = vtanh.pop %v3867
    %v3876 = vtanh.pop %v3868
    %v3877 = vtanh.pop %v3869
    %v3878 = vtanh.pop %v3870
    %v3879 = vtanh.pop %v3871
    %v3880 = vtanh.pop %v3872
    %v3881 = vtanh.pop %v3873
    %v3882 = vmul.f32 %v3835, %v3874
    %v3883 = vmul.f32 %v3837, %v3875
    %v3884 = vmul.f32 %v3839, %v3876
    %v3885 = vmul.f32 %v3841, %v3877
    %v3886 = vmul.f32 %v3843, %v3878
    %v3887 = vmul.f32 %v3845, %v3879
    %v3888 = vmul.f32 %v3847, %v3880
    %v3889 = vmul.f32 %v3849, %v3881
    %s3890 = scalar_lea.vmem %s0, 7
    %v3891 = vld [vmem:[%s3890] ss:$8 sm:$0xf]
    %s3892 = scalar_lea.vmem %s0, 39
    %v3893 = vld [vmem:[%s3892] ss:$8 sm:$0xf]
    %s3894 = scalar_lea.vmem %s0, 71
    %v3895 = vld [vmem:[%s3894] ss:$8 sm:$0xf]
    %s3896 = scalar_lea.vmem %s0, 103
    %v3897 = vld [vmem:[%s3896] ss:$8 sm:$0xf]
    %s3898 = scalar_lea.vmem %s0, 135
    %v3899 = vld [vmem:[%s3898] ss:$8 sm:$0xf]
    %s3900 = scalar_lea.vmem %s0, 167
    %v3901 = vld [vmem:[%s3900] ss:$8 sm:$0xf]
    %s3902 = scalar_lea.vmem %s0, 199
    %v3903 = vld [vmem:[%s3902] ss:$8 sm:$0xf]
    %s3904 = scalar_lea.vmem %s0, 231
    %v3905 = vld [vmem:[%s3904] ss:$8 sm:$0xf]
    %v3914 = vcombine.low %v3882, %v3883
    %v3915 = vcombine.low %v3884, %v3885
    %v3916 = vcombine.low %v3886, %v3887
    %v3917 = vcombine.low %v3888, %v3889
    %v3919 = vunpack.c.l.s4 1966171168
    %v3920 = vunpack.c.0.s8 %v3919
    %v3921 = vlaneseq
    %v3922 = vshrl.u32 %v3921, 7
    %v3923 = vsub.s32 %v3920, %v3922
    %v3924 = vrot.slane %v3914, %v3923
    %v3926 = vunpack.c.l.s4 1966171168
    %v3927 = vunpack.c.0.s8 %v3926
    %v3928 = vlaneseq
    %v3929 = vshrl.u32 %v3928, 7
    %v3930 = vsub.s32 %v3927, %v3929
    %v3931 = vrot.slane %v3915, %v3930
    %v3933 = vunpack.c.l.s4 1966171168
    %v3934 = vunpack.c.0.s8 %v3933
    %v3935 = vlaneseq
    %v3936 = vshrl.u32 %v3935, 7
    %v3937 = vsub.s32 %v3934, %v3936
    %v3938 = vrot.slane %v3916, %v3937
    %v3940 = vunpack.c.l.s4 1966171168
    %v3941 = vunpack.c.0.s8 %v3940
    %v3942 = vlaneseq
    %v3943 = vshrl.u32 %v3942, 7
    %v3944 = vsub.s32 %v3941, %v3943
    %v3945 = vrot.slane %v3917, %v3944
    %v3946 = vcombine.low %v3924, %v3931
    %v3947 = vcombine.low %v3938, %v3945
    %v3949 = vunpack.c.l.s4 1966171168
    %v3950 = vunpack.c.0.s8 %v3949
    %v3951 = vlaneseq
    %v3952 = vshrl.u32 %v3951, 7
    %v3953 = vsub.s32 %v3950, %v3952
    %v3954 = vrot.slane %v3946, %v3953
    %v3956 = vunpack.c.l.s4 1966171168
    %v3957 = vunpack.c.0.s8 %v3956
    %v3958 = vlaneseq
    %v3959 = vshrl.u32 %v3958, 7
    %v3960 = vsub.s32 %v3957, %v3959
    %v3961 = vrot.slane %v3947, %v3960
    %v3962 = vcombine.low %v3954, %v3961
    %3964 = vmatprep.subr.mxu0 %v37
    %3965 = vmatpush1.msra.mxu0 %v36
    %3966 = vmatprep.subr.mxu0 %v41
    %3967 = vmatpush1.msra.mxu0 %v40
    %3968 = vmatprep.subr.mxu0 %v45
    %3969 = vmatpush1.msra.mxu0 %v44
    %3970 = vmatprep.subr.mxu0 %v49
    %3971 = vmatpush1.msra.mxu0 %v48
    %3972 = vmatprep.subr.mxu0 %v53
    %3973 = vmatpush1.msra.mxu0 %v52
    %3974 = vmatprep.subr.mxu0 %v57
    %3975 = vmatpush1.msra.mxu0 %v56
    %3976 = vmatprep.subr.mxu0 %v61
    %3977 = vmatpush1.msra.mxu0 %v60
    %3978 = vmatprep.subr.mxu0 %v65
    %3979 = vmatpush1.msra.mxu0 %v64
    %3980 = vmatprep.subr.mxu0 %v69
    %3981 = vmatpush1.msra.mxu0 %v68
    %3982 = vmatprep.subr.mxu0 %v73
    %3983 = vmatpush1.msra.mxu0 %v72
    %3984 = vmatprep.subr.mxu0 %v77
    %3985 = vmatpush1.msra.mxu0 %v76
    %3986 = vmatprep.subr.mxu0 %v81
    %3987 = vmatpush1.msra.mxu0 %v80
    %3988 = vmatprep.subr.mxu0 %v85
    %3989 = vmatpush1.msra.mxu0 %v84
    %3990 = vmatprep.subr.mxu0 %v89
    %3991 = vmatpush1.msra.mxu0 %v88
    %3992 = vmatprep.subr.mxu0 %v93
    %3993 = vmatpush1.msra.mxu0 %v92
    %3994 = vmatprep.subr.mxu0 %v97
    %3995 = vmatpush1.msra.mxu0 %v96
    %3996 = vmatprep.subr.mxu0 0.0
    %3997 = vmatpush1.msra.mxu0 0.0
    %3998 = vmatprep.subr.mxu0 0.0
    %3999 = vmatpush1.msra.mxu0 0.0
    %4000 = vmatprep.subr.mxu0 0.0
    %4001 = vmatpush1.msra.mxu0 0.0
    %4002 = vmatprep.subr.mxu0 0.0
    %4003 = vmatpush1.msra.mxu0 0.0
    %4004 = vmatprep.subr.mxu0 0.0
    %4005 = vmatpush1.msra.mxu0 0.0
    %4006 = vmatprep.subr.mxu0 0.0
    %4007 = vmatpush1.msra.mxu0 0.0
    %4008 = vmatprep.subr.mxu0 0.0
    %4009 = vmatpush1.msra.mxu0 0.0
    %4010 = vmatprep.subr.mxu0 0.0
    %4011 = vmatpush1.msra.mxu0 0.0
    %4012 = vmatprep.subr.mxu0 0.0
    %4013 = vmatpush1.msra.mxu0 0.0
    %4014 = vmatprep.subr.mxu0 0.0
    %4015 = vmatpush1.msra.mxu0 0.0
    %4016 = vmatprep.subr.mxu0 0.0
    %4017 = vmatpush1.msra.mxu0 0.0
    %4018 = vmatprep.subr.mxu0 0.0
    %4019 = vmatpush1.msra.mxu0 0.0
    %4020 = vmatprep.subr.mxu0 0.0
    %4021 = vmatpush1.msra.mxu0 0.0
    %4022 = vmatprep.subr.mxu0 0.0
    %4023 = vmatpush1.msra.mxu0 0.0
    %4024 = vmatprep.subr.mxu0 0.0
    %4025 = vmatpush1.msra.mxu0 0.0
    %4026 = vmatprep.subr.mxu0 0.0
    %4027 = vmatpush1.msra.mxu0 0.0
    %4028 = vmatprep.mubr.f32.mxu0 0.0
    %4029 = vmatmul.mubr.f32.gmra.mrb[0].mxu0 %v3962
    %v4030 = vpop.f32.mrb[0].mxu0
    %v4031 = vadd.f32 0.0, %v4030
    %v4032 = vpop.f32.mrb[0].mxu0
    %v4033 = vadd.f32 0.0, %v4032
    %4034 = vdwg.mxu0
    %4035 = vmatprep.subr.mxu0 %v39
    %4036 = vmatpush1.msra.mxu0 %v38
    %4037 = vmatprep.subr.mxu0 %v43
    %4038 = vmatpush1.msra.mxu0 %v42
    %4039 = vmatprep.subr.mxu0 %v47
    %4040 = vmatpush1.msra.mxu0 %v46
    %4041 = vmatprep.subr.mxu0 %v51
    %4042 = vmatpush1.msra.mxu0 %v50
    %4043 = vmatprep.subr.mxu0 %v55
    %4044 = vmatpush1.msra.mxu0 %v54
    %4045 = vmatprep.subr.mxu0 %v59
    %4046 = vmatpush1.msra.mxu0 %v58
    %4047 = vmatprep.subr.mxu0 %v63
    %4048 = vmatpush1.msra.mxu0 %v62
    %4049 = vmatprep.subr.mxu0 %v67
    %4050 = vmatpush1.msra.mxu0 %v66
    %4051 = vmatprep.subr.mxu0 %v71
    %4052 = vmatpush1.msra.mxu0 %v70
    %4053 = vmatprep.subr.mxu0 %v75
    %4054 = vmatpush1.msra.mxu0 %v74
    %4055 = vmatprep.subr.mxu0 %v79
    %4056 = vmatpush1.msra.mxu0 %v78
    %4057 = vmatprep.subr.mxu0 %v83
    %4058 = vmatpush1.msra.mxu0 %v82
    %4059 = vmatprep.subr.mxu0 %v87
    %4060 = vmatpush1.msra.mxu0 %v86
    %4061 = vmatprep.subr.mxu0 %v91
    %4062 = vmatpush1.msra.mxu0 %v90
    %4063 = vmatprep.subr.mxu0 %v95
    %4064 = vmatpush1.msra.mxu0 %v94
    %4065 = vmatprep.subr.mxu0 %v99
    %4066 = vmatpush1.msra.mxu0 %v98
    %4067 = vmatprep.subr.mxu0 0.0
    %4068 = vmatpush1.msra.mxu0 0.0
    %4069 = vmatprep.subr.mxu0 0.0
    %4070 = vmatpush1.msra.mxu0 0.0
    %4071 = vmatprep.subr.mxu0 0.0
    %4072 = vmatpush1.msra.mxu0 0.0
    %4073 = vmatprep.subr.mxu0 0.0
    %4074 = vmatpush1.msra.mxu0 0.0
    %4075 = vmatprep.subr.mxu0 0.0
    %4076 = vmatpush1.msra.mxu0 0.0
    %4077 = vmatprep.subr.mxu0 0.0
    %4078 = vmatpush1.msra.mxu0 0.0
    %4079 = vmatprep.subr.mxu0 0.0
    %4080 = vmatpush1.msra.mxu0 0.0
    %4081 = vmatprep.subr.mxu0 0.0
    %4082 = vmatpush1.msra.mxu0 0.0
    %4083 = vmatprep.subr.mxu0 0.0
    %4084 = vmatpush1.msra.mxu0 0.0
    %4085 = vmatprep.subr.mxu0 0.0
    %4086 = vmatpush1.msra.mxu0 0.0
    %4087 = vmatprep.subr.mxu0 0.0
    %4088 = vmatpush1.msra.mxu0 0.0
    %4089 = vmatprep.subr.mxu0 0.0
    %4090 = vmatpush1.msra.mxu0 0.0
    %4091 = vmatprep.subr.mxu0 0.0
    %4092 = vmatpush1.msra.mxu0 0.0
    %4093 = vmatprep.subr.mxu0 0.0
    %4094 = vmatpush1.msra.mxu0 0.0
    %4095 = vmatprep.subr.mxu0 0.0
    %4096 = vmatpush1.msra.mxu0 0.0
    %4097 = vmatprep.subr.mxu0 0.0
    %4098 = vmatpush1.msra.mxu0 0.0
    %4099 = vmatprep.mubr.f32.mxu0 0.0
    %4100 = vmatmul.mubr.f32.gmra.mrb[0].mxu0 %v3962
    %v4101 = vpop.f32.mrb[0].mxu0
    %v4102 = vadd.f32 0.0, %v4101
    %v4103 = vpop.f32.mrb[0].mxu0
    %v4104 = vadd.f32 0.0, %v4103
    %4105 = vdwg.mxu0
    %v4110 = vcombine.low %v4031, %v4033
    %v4111 = vcombine.high %v4031, %v4033
    %v4112 = vcombine.low %v4102, %v4104
    %v4113 = vcombine.high %v4102, %v4104
    %v4115 = vunpack.c.l.s4 1966171168
    %v4116 = vunpack.c.0.s8 %v4115
    %v4117 = vlaneseq
    %v4118 = vshrl.u32 %v4117, 7
    %v4119 = vsub.s32 %v4116, %v4118
    %v4120 = vrot.slane %v4110, %v4119
    %v4122 = vunpack.c.l.s4 1966171168
    %v4123 = vunpack.c.0.s8 %v4122
    %v4124 = vlaneseq
    %v4125 = vshrl.u32 %v4124, 7
    %v4126 = vsub.s32 %v4123, %v4125
    %v4127 = vrot.slane %v4111, %v4126
    %v4129 = vunpack.c.l.s4 1966171168
    %v4130 = vunpack.c.0.s8 %v4129
    %v4131 = vlaneseq
    %v4132 = vshrl.u32 %v4131, 7
    %v4133 = vsub.s32 %v4130, %v4132
    %v4134 = vrot.slane %v4112, %v4133
    %v4136 = vunpack.c.l.s4 1966171168
    %v4137 = vunpack.c.0.s8 %v4136
    %v4138 = vlaneseq
    %v4139 = vshrl.u32 %v4138, 7
    %v4140 = vsub.s32 %v4137, %v4139
    %v4141 = vrot.slane %v4113, %v4140
    %v4142 = vcombine.low %v4120, %v4134
    %v4143 = vcombine.high %v4120, %v4134
    %v4144 = vcombine.low %v4127, %v4141
    %v4145 = vcombine.high %v4127, %v4141
    %v4147 = vunpack.c.l.s4 1966171168
    %v4148 = vunpack.c.0.s8 %v4147
    %v4149 = vlaneseq
    %v4150 = vshrl.u32 %v4149, 7
    %v4151 = vsub.s32 %v4148, %v4150
    %v4152 = vrot.slane %v4142, %v4151
    %v4154 = vunpack.c.l.s4 1966171168
    %v4155 = vunpack.c.0.s8 %v4154
    %v4156 = vlaneseq
    %v4157 = vshrl.u32 %v4156, 7
    %v4158 = vsub.s32 %v4155, %v4157
    %v4159 = vrot.slane %v4144, %v4158
    %v4161 = vunpack.c.l.s4 1966171168
    %v4162 = vunpack.c.0.s8 %v4161
    %v4163 = vlaneseq
    %v4164 = vshrl.u32 %v4163, 7
    %v4165 = vsub.s32 %v4162, %v4164
    %v4166 = vrot.slane %v4143, %v4165
    %v4168 = vunpack.c.l.s4 1966171168
    %v4169 = vunpack.c.0.s8 %v4168
    %v4170 = vlaneseq
    %v4171 = vshrl.u32 %v4170, 7
    %v4172 = vsub.s32 %v4169, %v4171
    %v4173 = vrot.slane %v4145, %v4172
    %v4174 = vcombine.high %v4152, %v4152
    %v4175 = vcombine.high %v4159, %v4159
    %v4176 = vcombine.high %v4166, %v4166
    %v4177 = vcombine.high %v4173, %v4173
    %v4186 = vadd.f32 %v3891, %v4152
    %v4187 = vadd.f32 %v3893, %v4166
    %v4188 = vadd.f32 %v3895, %v4174
    %v4189 = vadd.f32 %v3897, %v4176
    %v4190 = vadd.f32 %v3899, %v4159
    %v4191 = vadd.f32 %v3901, %v4173
    %v4192 = vadd.f32 %v3903, %v4175
    %v4193 = vadd.f32 %v3905, %v4177
    %v4194 = vxor.u32 %v4186, 2147483648
    %v4195 = vxor.u32 %v4187, 2147483648
    %v4196 = vxor.u32 %v4188, 2147483648
    %v4197 = vxor.u32 %v4189, 2147483648
    %v4198 = vxor.u32 %v4190, 2147483648
    %v4199 = vxor.u32 %v4191, 2147483648
    %v4200 = vxor.u32 %v4192, 2147483648
    %v4201 = vxor.u32 %v4193, 2147483648
    %v4202 = vmul.f32 %v4194, 1.442695
    %v4203 = vpow.pop %v4202
    %v4204 = vmul.f32 %v4195, 1.442695
    %v4205 = vpow.pop %v4204
    %v4206 = vmul.f32 %v4196, 1.442695
    %v4207 = vpow.pop %v4206
    %v4208 = vmul.f32 %v4197, 1.442695
    %v4209 = vpow.pop %v4208
    %v4210 = vmul.f32 %v4198, 1.442695
    %v4211 = vpow.pop %v4210
    %v4212 = vmul.f32 %v4199, 1.442695
    %v4213 = vpow.pop %v4212
    %v4214 = vmul.f32 %v4200, 1.442695
    %v4215 = vpow.pop %v4214
    %v4216 = vmul.f32 %v4201, 1.442695
    %v4217 = vpow.pop %v4216
    %v4218 = vadd.f32 %v4203, 1.0
    %v4219 = vadd.f32 %v4205, 1.0
    %v4220 = vadd.f32 %v4207, 1.0
    %v4221 = vadd.f32 %v4209, 1.0
    %v4222 = vadd.f32 %v4211, 1.0
    %v4223 = vadd.f32 %v4213, 1.0
    %v4224 = vadd.f32 %v4215, 1.0
    %v4225 = vadd.f32 %v4217, 1.0
    %v4226 = vrcp.pop %v4218
    %v4227 = vmul.f32 1.0, %v4226
    %v4228 = vrcp.pop %v4219
    %v4229 = vmul.f32 1.0, %v4228
    %v4230 = vrcp.pop %v4220
    %v4231 = vmul.f32 1.0, %v4230
    %v4232 = vrcp.pop %v4221
    %v4233 = vmul.f32 1.0, %v4232
    %v4234 = vrcp.pop %v4222
    %v4235 = vmul.f32 1.0, %v4234
    %v4236 = vrcp.pop %v4223
    %v4237 = vmul.f32 1.0, %v4236
    %v4238 = vrcp.pop %v4224
    %v4239 = vmul.f32 1.0, %v4238
    %v4240 = vrcp.pop %v4225
    %v4241 = vmul.f32 1.0, %v4240
    %v4250 = vrot.slane %v4186, 1
    %v4251 = vrot.slane %v4187, 1
    %v4252 = vrot.slane %v4188, 1
    %v4253 = vrot.slane %v4189, 1
    %v4254 = vrot.slane %v4190, 1
    %v4255 = vrot.slane %v4191, 1
    %v4256 = vrot.slane %v4192, 1
    %v4257 = vrot.slane %v4193, 1
    %v4266 = vxor.u32 %v4250, 2147483648
    %v4267 = vxor.u32 %v4251, 2147483648
    %v4268 = vxor.u32 %v4252, 2147483648
    %v4269 = vxor.u32 %v4253, 2147483648
    %v4270 = vxor.u32 %v4254, 2147483648
    %v4271 = vxor.u32 %v4255, 2147483648
    %v4272 = vxor.u32 %v4256, 2147483648
    %v4273 = vxor.u32 %v4257, 2147483648
    %v4274 = vmul.f32 %v4266, 1.442695
    %v4275 = vpow.pop %v4274
    %v4276 = vmul.f32 %v4267, 1.442695
    %v4277 = vpow.pop %v4276
    %v4278 = vmul.f32 %v4268, 1.442695
    %v4279 = vpow.pop %v4278
    %v4280 = vmul.f32 %v4269, 1.442695
    %v4281 = vpow.pop %v4280
    %v4282 = vmul.f32 %v4270, 1.442695
    %v4283 = vpow.pop %v4282
    %v4284 = vmul.f32 %v4271, 1.442695
    %v4285 = vpow.pop %v4284
    %v4286 = vmul.f32 %v4272, 1.442695
    %v4287 = vpow.pop %v4286
    %v4288 = vmul.f32 %v4273, 1.442695
    %v4289 = vpow.pop %v4288
    %v4290 = vadd.f32 %v4275, 1.0
    %v4291 = vadd.f32 %v4277, 1.0
    %v4292 = vadd.f32 %v4279, 1.0
    %v4293 = vadd.f32 %v4281, 1.0
    %v4294 = vadd.f32 %v4283, 1.0
    %v4295 = vadd.f32 %v4285, 1.0
    %v4296 = vadd.f32 %v4287, 1.0
    %v4297 = vadd.f32 %v4289, 1.0
    %v4298 = vrcp.pop %v4290
    %v4299 = vmul.f32 1.0, %v4298
    %v4300 = vrcp.pop %v4291
    %v4301 = vmul.f32 1.0, %v4300
    %v4302 = vrcp.pop %v4292
    %v4303 = vmul.f32 1.0, %v4302
    %v4304 = vrcp.pop %v4293
    %v4305 = vmul.f32 1.0, %v4304
    %v4306 = vrcp.pop %v4294
    %v4307 = vmul.f32 1.0, %v4306
    %v4308 = vrcp.pop %v4295
    %v4309 = vmul.f32 1.0, %v4308
    %v4310 = vrcp.pop %v4296
    %v4311 = vmul.f32 1.0, %v4310
    %v4312 = vrcp.pop %v4297
    %v4313 = vmul.f32 1.0, %v4312
    %v4314 = vrot.slane %v4186, 2
    %v4315 = vrot.slane %v4187, 2
    %v4316 = vrot.slane %v4188, 2
    %v4317 = vrot.slane %v4189, 2
    %v4318 = vrot.slane %v4190, 2
    %v4319 = vrot.slane %v4191, 2
    %v4320 = vrot.slane %v4192, 2
    %v4321 = vrot.slane %v4193, 2
    %v4330 = vtanh.pop %v4314
    %v4331 = vtanh.pop %v4315
    %v4332 = vtanh.pop %v4316
    %v4333 = vtanh.pop %v4317
    %v4334 = vtanh.pop %v4318
    %v4335 = vtanh.pop %v4319
    %v4336 = vtanh.pop %v4320
    %v4337 = vtanh.pop %v4321
    %v4338 = vrot.slane %v4186, 3
    %v4339 = vrot.slane %v4187, 3
    %v4340 = vrot.slane %v4188, 3
    %v4341 = vrot.slane %v4189, 3
    %v4342 = vrot.slane %v4190, 3
    %v4343 = vrot.slane %v4191, 3
    %v4344 = vrot.slane %v4192, 3
    %v4345 = vrot.slane %v4193, 3
    %v4354 = vxor.u32 %v4338, 2147483648
    %v4355 = vxor.u32 %v4339, 2147483648
    %v4356 = vxor.u32 %v4340, 2147483648
    %v4357 = vxor.u32 %v4341, 2147483648
    %v4358 = vxor.u32 %v4342, 2147483648
    %v4359 = vxor.u32 %v4343, 2147483648
    %v4360 = vxor.u32 %v4344, 2147483648
    %v4361 = vxor.u32 %v4345, 2147483648
    %v4362 = vmul.f32 %v4354, 1.442695
    %v4363 = vpow.pop %v4362
    %v4364 = vmul.f32 %v4355, 1.442695
    %v4365 = vpow.pop %v4364
    %v4366 = vmul.f32 %v4356, 1.442695
    %v4367 = vpow.pop %v4366
    %v4368 = vmul.f32 %v4357, 1.442695
    %v4369 = vpow.pop %v4368
    %v4370 = vmul.f32 %v4358, 1.442695
    %v4371 = vpow.pop %v4370
    %v4372 = vmul.f32 %v4359, 1.442695
    %v4373 = vpow.pop %v4372
    %v4374 = vmul.f32 %v4360, 1.442695
    %v4375 = vpow.pop %v4374
    %v4376 = vmul.f32 %v4361, 1.442695
    %v4377 = vpow.pop %v4376
    %v4378 = vadd.f32 %v4363, 1.0
    %v4379 = vadd.f32 %v4365, 1.0
    %v4380 = vadd.f32 %v4367, 1.0
    %v4381 = vadd.f32 %v4369, 1.0
    %v4382 = vadd.f32 %v4371, 1.0
    %v4383 = vadd.f32 %v4373, 1.0
    %v4384 = vadd.f32 %v4375, 1.0
    %v4385 = vadd.f32 %v4377, 1.0
    %v4386 = vrcp.pop %v4378
    %v4387 = vmul.f32 1.0, %v4386
    %v4388 = vrcp.pop %v4379
    %v4389 = vmul.f32 1.0, %v4388
    %v4390 = vrcp.pop %v4380
    %v4391 = vmul.f32 1.0, %v4390
    %v4392 = vrcp.pop %v4381
    %v4393 = vmul.f32 1.0, %v4392
    %v4394 = vrcp.pop %v4382
    %v4395 = vmul.f32 1.0, %v4394
    %v4396 = vrcp.pop %v4383
    %v4397 = vmul.f32 1.0, %v4396
    %v4398 = vrcp.pop %v4384
    %v4399 = vmul.f32 1.0, %v4398
    %v4400 = vrcp.pop %v4385
    %v4401 = vmul.f32 1.0, %v4400
    %v4402 = vmul.f32 %v4299, %v3866
    %v4403 = vmul.f32 %v4301, %v3867
    %v4404 = vmul.f32 %v4303, %v3868
    %v4405 = vmul.f32 %v4305, %v3869
    %v4406 = vmul.f32 %v4307, %v3870
    %v4407 = vmul.f32 %v4309, %v3871
    %v4408 = vmul.f32 %v4311, %v3872
    %v4409 = vmul.f32 %v4313, %v3873
    %v4410 = vmul.f32 %v4227, %v4330
    %v4411 = vmul.f32 %v4229, %v4331
    %v4412 = vmul.f32 %v4231, %v4332
    %v4413 = vmul.f32 %v4233, %v4333
    %v4414 = vmul.f32 %v4235, %v4334
    %v4415 = vmul.f32 %v4237, %v4335
    %v4416 = vmul.f32 %v4239, %v4336
    %v4417 = vmul.f32 %v4241, %v4337
    %v4418 = vadd.f32 %v4402, %v4410
    %v4419 = vadd.f32 %v4403, %v4411
    %v4420 = vadd.f32 %v4404, %v4412
    %v4421 = vadd.f32 %v4405, %v4413
    %v4422 = vadd.f32 %v4406, %v4414
    %v4423 = vadd.f32 %v4407, %v4415
    %v4424 = vadd.f32 %v4408, %v4416
    %v4425 = vadd.f32 %v4409, %v4417
    %v4426 = vtanh.pop %v4418
    %v4427 = vtanh.pop %v4419
    %v4428 = vtanh.pop %v4420
    %v4429 = vtanh.pop %v4421
    %v4430 = vtanh.pop %v4422
    %v4431 = vtanh.pop %v4423
    %v4432 = vtanh.pop %v4424
    %v4433 = vtanh.pop %v4425
    %v4434 = vmul.f32 %v4387, %v4426
    %v4435 = vmul.f32 %v4389, %v4427
    %v4436 = vmul.f32 %v4391, %v4428
    %v4437 = vmul.f32 %v4393, %v4429
    %v4438 = vmul.f32 %v4395, %v4430
    %v4439 = vmul.f32 %v4397, %v4431
    %v4440 = vmul.f32 %v4399, %v4432
    %v4441 = vmul.f32 %v4401, %v4433
    %v4442 = vld [vmem:[%s2] sm:$0xff]
    %v4443 = vld [vmem:[%s2 + $0x8] sm:$0xff]
    %v4444 = vld [vmem:[%s2 + $0x10] sm:$0xff]
    %v4445 = vld [vmem:[%s2 + $0x18] sm:$0xff]
    %v4446 = vld [vmem:[%s2 + $0x20] sm:$0xff]
    %v4447 = vld [vmem:[%s2 + $0x28] sm:$0xff]
    %v4448 = vld [vmem:[%s2 + $0x30] sm:$0xff]
    %v4449 = vld [vmem:[%s2 + $0x38] sm:$0xff]
    %v4450 = vld [vmem:[%s2 + $0x40] sm:$0xff]
    %v4451 = vld [vmem:[%s2 + $0x48] sm:$0xff]
    %v4452 = vld [vmem:[%s2 + $0x50] sm:$0xff]
    %v4453 = vld [vmem:[%s2 + $0x58] sm:$0xff]
    %v4454 = vld [vmem:[%s2 + $0x60] sm:$0xff]
    %v4455 = vld [vmem:[%s2 + $0x68] sm:$0xff]
    %v4456 = vld [vmem:[%s2 + $0x70] sm:$0xff]
    %v4457 = vld [vmem:[%s2 + $0x78] sm:$0xff]
    %v4458 = vld [vmem:[%s3] sm:$0x1]
    %v4460 = vlaneseq
    %v4461 = vshrl.u32 %v4460, 7
    %v4462 = vsub.s32 0, %v4461
    %v4463 = vrot.slane %v4458, %v4462
    %v4473 = vcombine.low %v4434, %v4435
    %v4474 = vcombine.low %v4436, %v4437
    %v4475 = vcombine.low %v4438, %v4439
    %v4476 = vcombine.low %v4440, %v4441
    %v4478 = vunpack.c.l.s4 1966171168
    %v4479 = vunpack.c.0.s8 %v4478
    %v4480 = vlaneseq
    %v4481 = vshrl.u32 %v4480, 7
    %v4482 = vsub.s32 %v4479, %v4481
    %v4483 = vrot.slane %v4473, %v4482
    %v4485 = vunpack.c.l.s4 1966171168
    %v4486 = vunpack.c.0.s8 %v4485
    %v4487 = vlaneseq
    %v4488 = vshrl.u32 %v4487, 7
    %v4489 = vsub.s32 %v4486, %v4488
    %v4490 = vrot.slane %v4474, %v4489
    %v4492 = vunpack.c.l.s4 1966171168
    %v4493 = vunpack.c.0.s8 %v4492
    %v4494 = vlaneseq
    %v4495 = vshrl.u32 %v4494, 7
    %v4496 = vsub.s32 %v4493, %v4495
    %v4497 = vrot.slane %v4475, %v4496
    %v4499 = vunpack.c.l.s4 1966171168
    %v4500 = vunpack.c.0.s8 %v4499
    %v4501 = vlaneseq
    %v4502 = vshrl.u32 %v4501, 7
    %v4503 = vsub.s32 %v4500, %v4502
    %v4504 = vrot.slane %v4476, %v4503
    %v4505 = vcombine.low %v4483, %v4490
    %v4506 = vcombine.low %v4497, %v4504
    %v4508 = vunpack.c.l.s4 1966171168
    %v4509 = vunpack.c.0.s8 %v4508
    %v4510 = vlaneseq
    %v4511 = vshrl.u32 %v4510, 7
    %v4512 = vsub.s32 %v4509, %v4511
    %v4513 = vrot.slane %v4505, %v4512
    %v4515 = vunpack.c.l.s4 1966171168
    %v4516 = vunpack.c.0.s8 %v4515
    %v4517 = vlaneseq
    %v4518 = vshrl.u32 %v4517, 7
    %v4519 = vsub.s32 %v4516, %v4518
    %v4520 = vrot.slane %v4506, %v4519
    %v4521 = vcombine.low %v4513, %v4520
    %4523 = vmatprep.subr.mxu0 0.0
    %4524 = vmatpush1.msra.mxu0 %v4442
    %4525 = vmatprep.subr.mxu0 0.0
    %4526 = vmatpush1.msra.mxu0 %v4443
    %4527 = vmatprep.subr.mxu0 0.0
    %4528 = vmatpush1.msra.mxu0 %v4444
    %4529 = vmatprep.subr.mxu0 0.0
    %4530 = vmatpush1.msra.mxu0 %v4445
    %4531 = vmatprep.subr.mxu0 0.0
    %4532 = vmatpush1.msra.mxu0 %v4446
    %4533 = vmatprep.subr.mxu0 0.0
    %4534 = vmatpush1.msra.mxu0 %v4447
    %4535 = vmatprep.subr.mxu0 0.0
    %4536 = vmatpush1.msra.mxu0 %v4448
    %4537 = vmatprep.subr.mxu0 0.0
    %4538 = vmatpush1.msra.mxu0 %v4449
    %4539 = vmatprep.subr.mxu0 0.0
    %4540 = vmatpush1.msra.mxu0 %v4450
    %4541 = vmatprep.subr.mxu0 0.0
    %4542 = vmatpush1.msra.mxu0 %v4451
    %4543 = vmatprep.subr.mxu0 0.0
    %4544 = vmatpush1.msra.mxu0 %v4452
    %4545 = vmatprep.subr.mxu0 0.0
    %4546 = vmatpush1.msra.mxu0 %v4453
    %4547 = vmatprep.subr.mxu0 0.0
    %4548 = vmatpush1.msra.mxu0 %v4454
    %4549 = vmatprep.subr.mxu0 0.0
    %4550 = vmatpush1.msra.mxu0 %v4455
    %4551 = vmatprep.subr.mxu0 0.0
    %4552 = vmatpush1.msra.mxu0 %v4456
    %4553 = vmatprep.subr.mxu0 0.0
    %4554 = vmatpush1.msra.mxu0 %v4457
    %4555 = vmatprep.subr.mxu0 0.0
    %4556 = vmatpush1.msra.mxu0 0.0
    %4557 = vmatprep.subr.mxu0 0.0
    %4558 = vmatpush1.msra.mxu0 0.0
    %4559 = vmatprep.subr.mxu0 0.0
    %4560 = vmatpush1.msra.mxu0 0.0
    %4561 = vmatprep.subr.mxu0 0.0
    %4562 = vmatpush1.msra.mxu0 0.0
    %4563 = vmatprep.subr.mxu0 0.0
    %4564 = vmatpush1.msra.mxu0 0.0
    %4565 = vmatprep.subr.mxu0 0.0
    %4566 = vmatpush1.msra.mxu0 0.0
    %4567 = vmatprep.subr.mxu0 0.0
    %4568 = vmatpush1.msra.mxu0 0.0
    %4569 = vmatprep.subr.mxu0 0.0
    %4570 = vmatpush1.msra.mxu0 0.0
    %4571 = vmatprep.subr.mxu0 0.0
    %4572 = vmatpush1.msra.mxu0 0.0
    %4573 = vmatprep.subr.mxu0 0.0
    %4574 = vmatpush1.msra.mxu0 0.0
    %4575 = vmatprep.subr.mxu0 0.0
    %4576 = vmatpush1.msra.mxu0 0.0
    %4577 = vmatprep.subr.mxu0 0.0
    %4578 = vmatpush1.msra.mxu0 0.0
    %4579 = vmatprep.subr.mxu0 0.0
    %4580 = vmatpush1.msra.mxu0 0.0
    %4581 = vmatprep.subr.mxu0 0.0
    %4582 = vmatpush1.msra.mxu0 0.0
    %4583 = vmatprep.subr.mxu0 0.0
    %4584 = vmatpush1.msra.mxu0 0.0
    %4585 = vmatprep.subr.mxu0 0.0
    %4586 = vmatpush1.msra.mxu0 0.0
    %4587 = vmatprep.mubr.f32.mxu0 0.0
    %4588 = vmatmul.mubr.f32.gmra.mrb[0].mxu0 %v4521
    %v4589 = vpop.f32.mrb[0].mxu0
    %v4590 = vadd.f32 %v4463, %v4589
    %v4591 = vpop.f32.mrb[0].mxu0
    %4592 = vdwg.mxu0
    %v4593 = vtanh.pop %v4590
    %4594 = vst [vmem:[#allocation2] sm:$0xff] %v4593
    %v4603 = vcombine.low %v4418, %v4419
    %v4604 = vcombine.low %v4420, %v4421
    %v4605 = vcombine.low %v4422, %v4423
    %v4606 = vcombine.low %v4424, %v4425
    %v4608 = vunpack.c.l.s4 1966171168
    %v4609 = vunpack.c.0.s8 %v4608
    %v4610 = vlaneseq
    %v4611 = vshrl.u32 %v4610, 7
    %v4612 = vsub.s32 %v4609, %v4611
    %v4613 = vrot.slane %v4603, %v4612
    %v4615 = vunpack.c.l.s4 1966171168
    %v4616 = vunpack.c.0.s8 %v4615
    %v4617 = vlaneseq
    %v4618 = vshrl.u32 %v4617, 7
    %v4619 = vsub.s32 %v4616, %v4618
    %v4620 = vrot.slane %v4604, %v4619
    %v4622 = vunpack.c.l.s4 1966171168
    %v4623 = vunpack.c.0.s8 %v4622
    %v4624 = vlaneseq
    %v4625 = vshrl.u32 %v4624, 7
    %v4626 = vsub.s32 %v4623, %v4625
    %v4627 = vrot.slane %v4605, %v4626
    %v4629 = vunpack.c.l.s4 1966171168
    %v4630 = vunpack.c.0.s8 %v4629
    %v4631 = vlaneseq
    %v4632 = vshrl.u32 %v4631, 7
    %v4633 = vsub.s32 %v4630, %v4632
    %v4634 = vrot.slane %v4606, %v4633
    %v4635 = vcombine.low %v4613, %v4620
    %v4636 = vcombine.low %v4627, %v4634
    %v4638 = vunpack.c.l.s4 1966171168
    %v4639 = vunpack.c.0.s8 %v4638
    %v4640 = vlaneseq
    %v4641 = vshrl.u32 %v4640, 7
    %v4642 = vsub.s32 %v4639, %v4641
    %v4643 = vrot.slane %v4635, %v4642
    %v4645 = vunpack.c.l.s4 1966171168
    %v4646 = vunpack.c.0.s8 %v4645
    %v4647 = vlaneseq
    %v4648 = vshrl.u32 %v4647, 7
    %v4649 = vsub.s32 %v4646, %v4648
    %v4650 = vrot.slane %v4636, %v4649
    %v4651 = vcombine.low %v4643, %v4650
    %4653 = vst [vmem:[#allocation4] sm:$0xff] %v4651
    // Predicated region
    $region18: #{seq2seq_forward.6} parent=1 // pred_check
      _
    $region19: #{seq2seq_forward.6} parent=1 // pred_check_branch
      %4655 = sbr.rel (0) target = $region21
    $region20: #{seq2seq_forward.6} parent=1 // pred_region
      %s4657 = ssub.s32 128, 128
      %4658 = vsyncadd [#allocation3], %s4657
      %s4660 = sshll.u32 [#allocation2], 4
      %s4661 = int_to_ptr.vmem [resolvable:$true] %s4660
      %4663 = dma.vmem_to_hbm [thread:$0]  %s4661, 128, %s4, [#allocation3]
    $region21: #{seq2seq_forward.6} parent=1 // pred_fallthru
      _
    // Predicated region
    $region22: #{seq2seq_forward.6} parent=1 // pred_check
      _
    $region23: #{seq2seq_forward.6} parent=1 // pred_check_branch
      %4665 = sbr.rel (0) target = $region25
    $region24: #{seq2seq_forward.6} parent=1 // pred_region
      %s4667 = ssub.s32 128, 128
      %4668 = vsyncadd [#allocation5], %s4667
      %s4670 = sshll.u32 [#allocation4], 4
      %s4671 = int_to_ptr.vmem [resolvable:$true] %s4670
      %4673 = dma.vmem_to_hbm [thread:$0]  %s4671, 128, %s5, [#allocation5]
    $region25: #{seq2seq_forward.6} parent=1 // pred_fallthru
      _
    // Predicated region
    $region26: #{seq2seq_forward.6} parent=1 // pred_check
      _
    $region27: #{seq2seq_forward.6} parent=1 // pred_check_branch
      %4675 = sbr.rel (0) target = $region29
    $region28: #{seq2seq_forward.6} parent=1 // pred_region
      %4676 = dma.done [#allocation3], 128
    $region29: #{seq2seq_forward.6} parent=1 // pred_fallthru
      _
    // Predicated region
    $region30: #{seq2seq_forward.6} parent=1 // pred_check
      _
    $region31: #{seq2seq_forward.6} parent=1 // pred_check_branch
      %4678 = sbr.rel (0) target = $region33
    $region32: #{seq2seq_forward.6} parent=1 // pred_region
      %4679 = dma.done [#allocation5], 128
    $region33: #{seq2seq_forward.6} parent=1 // pred_fallthru
      _
    %4680 = vsyncpa [#allocation3], 1
    %4681 = vsyncpa [#allocation5], 1

// kernel: seq2seq_forward.8
$region0: #{seq2seq_forward.8}
  #allocation0 [shape = 'u32[]', space=smem, size = 0x4, offset = 0x4, fixed_abs, tag = 'smem constant byte address 0x4 - core index']
  #allocation1 [shape = 'u32[144,128]{1,0:T(1,128)}', space=vmem, size = 0x12000, scoped, tag = 'internal scratch']
  %s0 = inlined_call_operand.vmem [shape: f32[8,8,512], index: 0, kind: input, shape index: {}]
  %s1 = inlined_call_operand.vmem [shape: f32[8,128], index: 1, kind: input, shape index: {}]
  %s2 = inlined_call_operand.vmem [shape: f32[8,128], index: 2, kind: input, shape index: {}]
  %s3 = inlined_call_operand.vmem [shape: f32[128,512], index: 3, kind: input, shape index: {}]
  %s4 = inlined_call_operand.hbm [shape: f32[8,8,128], index: 4, kind: output, shape index: {}]
  %s5 = sld [smem:[#allocation0]]
  $region26: #{seq2seq_forward.8} parent=0
    _
  %s7 = ssub.s32 1, %s5
  %s8 = scalar_select 0, %s7, %s5
  $region1: #{seq2seq_forward.8} parent=0
    #allocation2 [shape = 'u8[32768]{0}', space=vmem, size = 0x8000, scoped, tag = 'output window, operand 0, single buffered']
    #allocation3 [shape = 's32[1]{0}', space=sflag, size = 0x4, scoped, tag = 'scoped memory for seq2seq_forward.8']
    %9 = vsyncpa [#allocation3], 0
    // Predicated region
    $region2: #{seq2seq_forward.8} parent=1 // pred_check
      _
    $region3: #{seq2seq_forward.8} parent=1 // pred_check_branch
      %11 = sbr.rel (0) target = $region5
    $region4: #{seq2seq_forward.8} parent=1 // pred_region
      _
    $region5: #{seq2seq_forward.8} parent=1 // pred_fallthru
      _
    // Predicated region
    $region6: #{seq2seq_forward.8} parent=1 // pred_check
      _
    $region7: #{seq2seq_forward.8} parent=1 // pred_check_branch
      %13 = sbr.rel (0) target = $region9
    $region8: #{seq2seq_forward.8} parent=1 // pred_region
      _
    $region9: #{seq2seq_forward.8} parent=1 // pred_fallthru
      _
    // Predicated region
    $region10: #{seq2seq_forward.8} parent=1 // pred_check
      _
    $region11: #{seq2seq_forward.8} parent=1 // pred_check_branch
      %15 = sbr.rel (0) target = $region13
    $region12: #{seq2seq_forward.8} parent=1 // pred_region
      _
    $region13: #{seq2seq_forward.8} parent=1 // pred_fallthru
      _
    // Predicated region
    $region14: #{seq2seq_forward.8} parent=1 // pred_check
      _
    $region15: #{seq2seq_forward.8} parent=1 // pred_check_branch
      %17 = sbr.rel (0) target = $region17
    $region16: #{seq2seq_forward.8} parent=1 // pred_region
      _
    $region17: #{seq2seq_forward.8} parent=1 // pred_fallthru
      _
    %v18 = vld [vmem:[%s1] sm:$0xff]
    %v19 = vld [vmem:[%s2] sm:$0xff]
    %v20 = vld [vmem:[%s0] ss:$8 sm:$0xf]
    %s21 = scalar_lea.vmem %s0, 32
    %v22 = vld [vmem:[%s21] ss:$8 sm:$0xf]
    %s23 = scalar_lea.vmem %s0, 64
    %v24 = vld [vmem:[%s23] ss:$8 sm:$0xf]
    %s25 = scalar_lea.vmem %s0, 96
    %v26 = vld [vmem:[%s25] ss:$8 sm:$0xf]
    %s27 = scalar_lea.vmem %s0, 128
    %v28 = vld [vmem:[%s27] ss:$8 sm:$0xf]
    %s29 = scalar_lea.vmem %s0, 160
    %v30 = vld [vmem:[%s29] ss:$8 sm:$0xf]
    %s31 = scalar_lea.vmem %s0, 192
    %v32 = vld [vmem:[%s31] ss:$8 sm:$0xf]
    %s33 = scalar_lea.vmem %s0, 224
    %v34 = vld [vmem:[%s33] ss:$8 sm:$0xf]
    %v35 = vld [vmem:[%s3] sm:$0xff]
    %v36 = vld [vmem:[%s3 + $0x8] sm:$0xff]
    %v37 = vld [vmem:[%s3 + $0x10] sm:$0xff]
    %v38 = vld [vmem:[%s3 + $0x18] sm:$0xff]
    %v39 = vld [vmem:[%s3 + $0x20] sm:$0xff]
    %v40 = vld [vmem:[%s3 + $0x28] sm:$0xff]
    %v41 = vld [vmem:[%s3 + $0x30] sm:$0xff]
    %v42 = vld [vmem:[%s3 + $0x38] sm:$0xff]
    %v43 = vld [vmem:[%s3 + $0x40] sm:$0xff]
    %v44 = vld [vmem:[%s3 + $0x48] sm:$0xff]
    %v45 = vld [vmem:[%s3 + $0x50] sm:$0xff]
    %v46 = vld [vmem:[%s3 + $0x58] sm:$0xff]
    %v47 = vld [vmem:[%s3 + $0x60] sm:$0xff]
    %v48 = vld [vmem:[%s3 + $0x68] sm:$0xff]
    %v49 = vld [vmem:[%s3 + $0x70] sm:$0xff]
    %v50 = vld [vmem:[%s3 + $0x78] sm:$0xff]
    %v51 = vld [vmem:[%s3 + $0x80] sm:$0xff]
    %v52 = vld [vmem:[%s3 + $0x88] sm:$0xff]
    %v53 = vld [vmem:[%s3 + $0x90] sm:$0xff]
    %v54 = vld [vmem:[%s3 + $0x98] sm:$0xff]
    %v55 = vld [vmem:[%s3 + $0xa0] sm:$0xff]
    %v56 = vld [vmem:[%s3 + $0xa8] sm:$0xff]
    %v57 = vld [vmem:[%s3 + $0xb0] sm:$0xff]
    %v58 = vld [vmem:[%s3 + $0xb8] sm:$0xff]
    %v59 = vld [vmem:[%s3 + $0xc0] sm:$0xff]
    %v60 = vld [vmem:[%s3 + $0xc8] sm:$0xff]
    %v61 = vld [vmem:[%s3 + $0xd0] sm:$0xff]
    %v62 = vld [vmem:[%s3 + $0xd8] sm:$0xff]
    %v63 = vld [vmem:[%s3 + $0xe0] sm:$0xff]
    %v64 = vld [vmem:[%s3 + $0xe8] sm:$0xff]
    %v65 = vld [vmem:[%s3 + $0xf0] sm:$0xff]
    %v66 = vld [vmem:[%s3 + $0xf8] sm:$0xff]
    %v67 = vld [vmem:[%s3 + $0x100] sm:$0xff]
    %v68 = vld [vmem:[%s3 + $0x108] sm:$0xff]
    %v69 = vld [vmem:[%s3 + $0x110] sm:$0xff]
    %v70 = vld [vmem:[%s3 + $0x118] sm:$0xff]
    %v71 = vld [vmem:[%s3 + $0x120] sm:$0xff]
    %v72 = vld [vmem:[%s3 + $0x128] sm:$0xff]
    %v73 = vld [vmem:[%s3 + $0x130] sm:$0xff]
    %v74 = vld [vmem:[%s3 + $0x138] sm:$0xff]
    %v75 = vld [vmem:[%s3 + $0x140] sm:$0xff]
    %v76 = vld [vmem:[%s3 + $0x148] sm:$0xff]
    %v77 = vld [vmem:[%s3 + $0x150] sm:$0xff]
    %v78 = vld [vmem:[%s3 + $0x158] sm:$0xff]
    %v79 = vld [vmem:[%s3 + $0x160] sm:$0xff]
    %v80 = vld [vmem:[%s3 + $0x168] sm:$0xff]
    %v81 = vld [vmem:[%s3 + $0x170] sm:$0xff]
    %v82 = vld [vmem:[%s3 + $0x178] sm:$0xff]
    %v83 = vld [vmem:[%s3 + $0x180] sm:$0xff]
    %v84 = vld [vmem:[%s3 + $0x188] sm:$0xff]
    %v85 = vld [vmem:[%s3 + $0x190] sm:$0xff]
    %v86 = vld [vmem:[%s3 + $0x198] sm:$0xff]
    %v87 = vld [vmem:[%s3 + $0x1a0] sm:$0xff]
    %v88 = vld [vmem:[%s3 + $0x1a8] sm:$0xff]
    %v89 = vld [vmem:[%s3 + $0x1b0] sm:$0xff]
    %v90 = vld [vmem:[%s3 + $0x1b8] sm:$0xff]
    %v91 = vld [vmem:[%s3 + $0x1c0] sm:$0xff]
    %v92 = vld [vmem:[%s3 + $0x1c8] sm:$0xff]
    %v93 = vld [vmem:[%s3 + $0x1d0] sm:$0xff]
    %v94 = vld [vmem:[%s3 + $0x1d8] sm:$0xff]
    %v95 = vld [vmem:[%s3 + $0x1e0] sm:$0xff]
    %v96 = vld [vmem:[%s3 + $0x1e8] sm:$0xff]
    %v97 = vld [vmem:[%s3 + $0x1f0] sm:$0xff]
    %v98 = vld [vmem:[%s3 + $0x1f8] sm:$0xff]
    %99 = vmatprep.subr.mxu0 %v36
    %100 = vmatpush1.msra.mxu0 %v35
    %101 = vmatprep.subr.mxu0 %v40
    %102 = vmatpush1.msra.mxu0 %v39
    %103 = vmatprep.subr.mxu0 %v44
    %104 = vmatpush1.msra.mxu0 %v43
    %105 = vmatprep.subr.mxu0 %v48
    %106 = vmatpush1.msra.mxu0 %v47
    %107 = vmatprep.subr.mxu0 %v52
    %108 = vmatpush1.msra.mxu0 %v51
    %109 = vmatprep.subr.mxu0 %v56
    %110 = vmatpush1.msra.mxu0 %v55
    %111 = vmatprep.subr.mxu0 %v60
    %112 = vmatpush1.msra.mxu0 %v59
    %113 = vmatprep.subr.mxu0 %v64
    %114 = vmatpush1.msra.mxu0 %v63
    %115 = vmatprep.subr.mxu0 %v68
    %116 = vmatpush1.msra.mxu0 %v67
    %117 = vmatprep.subr.mxu0 %v72
    %118 = vmatpush1.msra.mxu0 %v71
    %119 = vmatprep.subr.mxu0 %v76
    %120 = vmatpush1.msra.mxu0 %v75
    %121 = vmatprep.subr.mxu0 %v80
    %122 = vmatpush1.msra.mxu0 %v79
    %123 = vmatprep.subr.mxu0 %v84
    %124 = vmatpush1.msra.mxu0 %v83
    %125 = vmatprep.subr.mxu0 %v88
    %126 = vmatpush1.msra.mxu0 %v87
    %127 = vmatprep.subr.mxu0 %v92
    %128 = vmatpush1.msra.mxu0 %v91
    %129 = vmatprep.subr.mxu0 %v96
    %130 = vmatpush1.msra.mxu0 %v95
    %131 = vmatprep.subr.mxu0 0.0
    %132 = vmatpush1.msra.mxu0 0.0
    %133 = vmatprep.subr.mxu0 0.0
    %134 = vmatpush1.msra.mxu0 0.0
    %135 = vmatprep.subr.mxu0 0.0
    %136 = vmatpush1.msra.mxu0 0.0
    %137 = vmatprep.subr.mxu0 0.0
    %138 = vmatpush1.msra.mxu0 0.0
    %139 = vmatprep.subr.mxu0 0.0
    %140 = vmatpush1.msra.mxu0 0.0
    %141 = vmatprep.subr.mxu0 0.0
    %142 = vmatpush1.msra.mxu0 0.0
    %143 = vmatprep.subr.mxu0 0.0
    %144 = vmatpush1.msra.mxu0 0.0
    %145 = vmatprep.subr.mxu0 0.0
    %146 = vmatpush1.msra.mxu0 0.0
    %147 = vmatprep.subr.mxu0 0.0
    %148 = vmatpush1.msra.mxu0 0.0
    %149 = vmatprep.subr.mxu0 0.0
    %150 = vmatpush1.msra.mxu0 0.0
    %151 = vmatprep.subr.mxu0 0.0
    %152 = vmatpush1.msra.mxu0 0.0
    %153 = vmatprep.subr.mxu0 0.0
    %154 = vmatpush1.msra.mxu0 0.0
    %155 = vmatprep.subr.mxu0 0.0
    %156 = vmatpush1.msra.mxu0 0.0
    %157 = vmatprep.subr.mxu0 0.0
    %158 = vmatpush1.msra.mxu0 0.0
    %159 = vmatprep.subr.mxu0 0.0
    %160 = vmatpush1.msra.mxu0 0.0
    %161 = vmatprep.subr.mxu0 0.0
    %162 = vmatpush1.msra.mxu0 0.0
    %163 = vmatprep.mubr.f32.mxu0 0.0
    %164 = vmatmul.mubr.f32.gmra.mrb[0].mxu0 %v18
    %v165 = vpop.f32.mrb[0].mxu0
    %v166 = vadd.f32 0.0, %v165
    %v167 = vpop.f32.mrb[0].mxu0
    %v168 = vadd.f32 0.0, %v167
    %169 = vdwg.mxu0
    %170 = vmatprep.subr.mxu0 %v38
    %171 = vmatpush1.msra.mxu0 %v37
    %172 = vmatprep.subr.mxu0 %v42
    %173 = vmatpush1.msra.mxu0 %v41
    %174 = vmatprep.subr.mxu0 %v46
    %175 = vmatpush1.msra.mxu0 %v45
    %176 = vmatprep.subr.mxu0 %v50
    %177 = vmatpush1.msra.mxu0 %v49
    %178 = vmatprep.subr.mxu0 %v54
    %179 = vmatpush1.msra.mxu0 %v53
    %180 = vmatprep.subr.mxu0 %v58
    %181 = vmatpush1.msra.mxu0 %v57
    %182 = vmatprep.subr.mxu0 %v62
    %183 = vmatpush1.msra.mxu0 %v61
    %184 = vmatprep.subr.mxu0 %v66
    %185 = vmatpush1.msra.mxu0 %v65
    %186 = vmatprep.subr.mxu0 %v70
    %187 = vmatpush1.msra.mxu0 %v69
    %188 = vmatprep.subr.mxu0 %v74
    %189 = vmatpush1.msra.mxu0 %v73
    %190 = vmatprep.subr.mxu0 %v78
    %191 = vmatpush1.msra.mxu0 %v77
    %192 = vmatprep.subr.mxu0 %v82
    %193 = vmatpush1.msra.mxu0 %v81
    %194 = vmatprep.subr.mxu0 %v86
    %195 = vmatpush1.msra.mxu0 %v85
    %196 = vmatprep.subr.mxu0 %v90
    %197 = vmatpush1.msra.mxu0 %v89
    %198 = vmatprep.subr.mxu0 %v94
    %199 = vmatpush1.msra.mxu0 %v93
    %200 = vmatprep.subr.mxu0 %v98
    %201 = vmatpush1.msra.mxu0 %v97
    %202 = vmatprep.subr.mxu0 0.0
    %203 = vmatpush1.msra.mxu0 0.0
    %204 = vmatprep.subr.mxu0 0.0
    %205 = vmatpush1.msra.mxu0 0.0
    %206 = vmatprep.subr.mxu0 0.0
    %207 = vmatpush1.msra.mxu0 0.0
    %208 = vmatprep.subr.mxu0 0.0
    %209 = vmatpush1.msra.mxu0 0.0
    %210 = vmatprep.subr.mxu0 0.0
    %211 = vmatpush1.msra.mxu0 0.0
    %212 = vmatprep.subr.mxu0 0.0
    %213 = vmatpush1.msra.mxu0 0.0
    %214 = vmatprep.subr.mxu0 0.0
    %215 = vmatpush1.msra.mxu0 0.0
    %216 = vmatprep.subr.mxu0 0.0
    %217 = vmatpush1.msra.mxu0 0.0
    %218 = vmatprep.subr.mxu0 0.0
    %219 = vmatpush1.msra.mxu0 0.0
    %220 = vmatprep.subr.mxu0 0.0
    %221 = vmatpush1.msra.mxu0 0.0
    %222 = vmatprep.subr.mxu0 0.0
    %223 = vmatpush1.msra.mxu0 0.0
    %224 = vmatprep.subr.mxu0 0.0
    %225 = vmatpush1.msra.mxu0 0.0
    %226 = vmatprep.subr.mxu0 0.0
    %227 = vmatpush1.msra.mxu0 0.0
    %228 = vmatprep.subr.mxu0 0.0
    %229 = vmatpush1.msra.mxu0 0.0
    %230 = vmatprep.subr.mxu0 0.0
    %231 = vmatpush1.msra.mxu0 0.0
    %232 = vmatprep.subr.mxu0 0.0
    %233 = vmatpush1.msra.mxu0 0.0
    %234 = vmatprep.mubr.f32.mxu0 0.0
    %235 = vmatmul.mubr.f32.gmra.mrb[0].mxu0 %v18
    %v236 = vpop.f32.mrb[0].mxu0
    %v237 = vadd.f32 0.0, %v236
    %v238 = vpop.f32.mrb[0].mxu0
    %v239 = vadd.f32 0.0, %v238
    %240 = vdwg.mxu0
    %v245 = vcombine.low %v166, %v168
    %v246 = vcombine.high %v166, %v168
    %v247 = vcombine.low %v237, %v239
    %v248 = vcombine.high %v237, %v239
    %v250 = vunpack.c.l.s4 1966171168
    %v251 = vunpack.c.0.s8 %v250
    %v252 = vlaneseq
    %v253 = vshrl.u32 %v252, 7
    %v254 = vsub.s32 %v251, %v253
    %v255 = vrot.slane %v245, %v254
    %v257 = vunpack.c.l.s4 1966171168
    %v258 = vunpack.c.0.s8 %v257
    %v259 = vlaneseq
    %v260 = vshrl.u32 %v259, 7
    %v261 = vsub.s32 %v258, %v260
    %v262 = vrot.slane %v246, %v261
    %v264 = vunpack.c.l.s4 1966171168
    %v265 = vunpack.c.0.s8 %v264
    %v266 = vlaneseq
    %v267 = vshrl.u32 %v266, 7
    %v268 = vsub.s32 %v265, %v267
    %v269 = vrot.slane %v247, %v268
    %v271 = vunpack.c.l.s4 1966171168
    %v272 = vunpack.c.0.s8 %v271
    %v273 = vlaneseq
    %v274 = vshrl.u32 %v273, 7
    %v275 = vsub.s32 %v272, %v274
    %v276 = vrot.slane %v248, %v275
    %v277 = vcombine.low %v255, %v269
    %v278 = vcombine.high %v255, %v269
    %v279 = vcombine.low %v262, %v276
    %v280 = vcombine.high %v262, %v276
    %v282 = vunpack.c.l.s4 1966171168
    %v283 = vunpack.c.0.s8 %v282
    %v284 = vlaneseq
    %v285 = vshrl.u32 %v284, 7
    %v286 = vsub.s32 %v283, %v285
    %v287 = vrot.slane %v277, %v286
    %v289 = vunpack.c.l.s4 1966171168
    %v290 = vunpack.c.0.s8 %v289
    %v291 = vlaneseq
    %v292 = vshrl.u32 %v291, 7
    %v293 = vsub.s32 %v290, %v292
    %v294 = vrot.slane %v279, %v293
    %v296 = vunpack.c.l.s4 1966171168
    %v297 = vunpack.c.0.s8 %v296
    %v298 = vlaneseq
    %v299 = vshrl.u32 %v298, 7
    %v300 = vsub.s32 %v297, %v299
    %v301 = vrot.slane %v278, %v300
    %v303 = vunpack.c.l.s4 1966171168
    %v304 = vunpack.c.0.s8 %v303
    %v305 = vlaneseq
    %v306 = vshrl.u32 %v305, 7
    %v307 = vsub.s32 %v304, %v306
    %v308 = vrot.slane %v280, %v307
    %v309 = vcombine.high %v287, %v287
    %v310 = vcombine.high %v294, %v294
    %v311 = vcombine.high %v301, %v301
    %v312 = vcombine.high %v308, %v308
    %v321 = vadd.f32 %v20, %v287
    %v322 = vadd.f32 %v22, %v301
    %v323 = vadd.f32 %v24, %v309
    %v324 = vadd.f32 %v26, %v311
    %v325 = vadd.f32 %v28, %v294
    %v326 = vadd.f32 %v30, %v308
    %v327 = vadd.f32 %v32, %v310
    %v328 = vadd.f32 %v34, %v312
    %v329 = vxor.u32 %v321, 2147483648
    %v330 = vxor.u32 %v322, 2147483648
    %v331 = vxor.u32 %v323, 2147483648
    %v332 = vxor.u32 %v324, 2147483648
    %v333 = vxor.u32 %v325, 2147483648
    %v334 = vxor.u32 %v326, 2147483648
    %v335 = vxor.u32 %v327, 2147483648
    %v336 = vxor.u32 %v328, 2147483648
    %v337 = vmul.f32 %v329, 1.442695
    %v338 = vpow.pop %v337
    %v339 = vmul.f32 %v330, 1.442695
    %v340 = vpow.pop %v339
    %v341 = vmul.f32 %v331, 1.442695
    %v342 = vpow.pop %v341
    %v343 = vmul.f32 %v332, 1.442695
    %v344 = vpow.pop %v343
    %v345 = vmul.f32 %v333, 1.442695
    %v346 = vpow.pop %v345
    %v347 = vmul.f32 %v334, 1.442695
    %v348 = vpow.pop %v347
    %v349 = vmul.f32 %v335, 1.442695
    %v350 = vpow.pop %v349
    %v351 = vmul.f32 %v336, 1.442695
    %v352 = vpow.pop %v351
    %v353 = vadd.f32 %v338, 1.0
    %v354 = vadd.f32 %v340, 1.0
    %v355 = vadd.f32 %v342, 1.0
    %v356 = vadd.f32 %v344, 1.0
    %v357 = vadd.f32 %v346, 1.0
    %v358 = vadd.f32 %v348, 1.0
    %v359 = vadd.f32 %v350, 1.0
    %v360 = vadd.f32 %v352, 1.0
    %v361 = vrcp.pop %v353
    %v362 = vmul.f32 1.0, %v361
    %v363 = vrcp.pop %v354
    %v364 = vmul.f32 1.0, %v363
    %v365 = vrcp.pop %v355
    %v366 = vmul.f32 1.0, %v365
    %v367 = vrcp.pop %v356
    %v368 = vmul.f32 1.0, %v367
    %v369 = vrcp.pop %v357
    %v370 = vmul.f32 1.0, %v369
    %v371 = vrcp.pop %v358
    %v372 = vmul.f32 1.0, %v371
    %v373 = vrcp.pop %v359
    %v374 = vmul.f32 1.0, %v373
    %v375 = vrcp.pop %v360
    %v376 = vmul.f32 1.0, %v375
    %v385 = vrot.slane %v321, 1
    %v386 = vrot.slane %v322, 1
    %v387 = vrot.slane %v323, 1
    %v388 = vrot.slane %v324, 1
    %v389 = vrot.slane %v325, 1
    %v390 = vrot.slane %v326, 1
    %v391 = vrot.slane %v327, 1
    %v392 = vrot.slane %v328, 1
    %v401 = vxor.u32 %v385, 2147483648
    %v402 = vxor.u32 %v386, 2147483648
    %v403 = vxor.u32 %v387, 2147483648
    %v404 = vxor.u32 %v388, 2147483648
    %v405 = vxor.u32 %v389, 2147483648
    %v406 = vxor.u32 %v390, 2147483648
    %v407 = vxor.u32 %v391, 2147483648
    %v408 = vxor.u32 %v392, 2147483648
    %v409 = vmul.f32 %v401, 1.442695
    %v410 = vpow.pop %v409
    %v411 = vmul.f32 %v402, 1.442695
    %v412 = vpow.pop %v411
    %v413 = vmul.f32 %v403, 1.442695
    %v414 = vpow.pop %v413
    %v415 = vmul.f32 %v404, 1.442695
    %v416 = vpow.pop %v415
    %v417 = vmul.f32 %v405, 1.442695
    %v418 = vpow.pop %v417
    %v419 = vmul.f32 %v406, 1.442695
    %v420 = vpow.pop %v419
    %v421 = vmul.f32 %v407, 1.442695
    %v422 = vpow.pop %v421
    %v423 = vmul.f32 %v408, 1.442695
    %v424 = vpow.pop %v423
    %v425 = vadd.f32 %v410, 1.0
    %v426 = vadd.f32 %v412, 1.0
    %v427 = vadd.f32 %v414, 1.0
    %v428 = vadd.f32 %v416, 1.0
    %v429 = vadd.f32 %v418, 1.0
    %v430 = vadd.f32 %v420, 1.0
    %v431 = vadd.f32 %v422, 1.0
    %v432 = vadd.f32 %v424, 1.0
    %v433 = vrcp.pop %v425
    %v434 = vmul.f32 1.0, %v433
    %v435 = vrcp.pop %v426
    %v436 = vmul.f32 1.0, %v435
    %v437 = vrcp.pop %v427
    %v438 = vmul.f32 1.0, %v437
    %v439 = vrcp.pop %v428
    %v440 = vmul.f32 1.0, %v439
    %v441 = vrcp.pop %v429
    %v442 = vmul.f32 1.0, %v441
    %v443 = vrcp.pop %v430
    %v444 = vmul.f32 1.0, %v443
    %v445 = vrcp.pop %v431
    %v446 = vmul.f32 1.0, %v445
    %v447 = vrcp.pop %v432
    %v448 = vmul.f32 1.0, %v447
    %v449 = vrot.slane %v321, 2
    %v450 = vrot.slane %v322, 2
    %v451 = vrot.slane %v323, 2
    %v452 = vrot.slane %v324, 2
    %v453 = vrot.slane %v325, 2
    %v454 = vrot.slane %v326, 2
    %v455 = vrot.slane %v327, 2
    %v456 = vrot.slane %v328, 2
    %v465 = vtanh.pop %v449
    %v466 = vtanh.pop %v450
    %v467 = vtanh.pop %v451
    %v468 = vtanh.pop %v452
    %v469 = vtanh.pop %v453
    %v470 = vtanh.pop %v454
    %v471 = vtanh.pop %v455
    %v472 = vtanh.pop %v456
    %v473 = vrot.slane %v321, 3
    %v474 = vrot.slane %v322, 3
    %v475 = vrot.slane %v323, 3
    %v476 = vrot.slane %v324, 3
    %v477 = vrot.slane %v325, 3
    %v478 = vrot.slane %v326, 3
    %v479 = vrot.slane %v327, 3
    %v480 = vrot.slane %v328, 3
    %v489 = vxor.u32 %v473, 2147483648
    %v490 = vxor.u32 %v474, 2147483648
    %v491 = vxor.u32 %v475, 2147483648
    %v492 = vxor.u32 %v476, 2147483648
    %v493 = vxor.u32 %v477, 2147483648
    %v494 = vxor.u32 %v478, 2147483648
    %v495 = vxor.u32 %v479, 2147483648
    %v496 = vxor.u32 %v480, 2147483648
    %v497 = vmul.f32 %v489, 1.442695
    %v498 = vpow.pop %v497
    %v499 = vmul.f32 %v490, 1.442695
    %v500 = vpow.pop %v499
    %v501 = vmul.f32 %v491, 1.442695
    %v502 = vpow.pop %v501
    %v503 = vmul.f32 %v492, 1.442695
    %v504 = vpow.pop %v503
    %v505 = vmul.f32 %v493, 1.442695
    %v506 = vpow.pop %v505
    %v507 = vmul.f32 %v494, 1.442695
    %v508 = vpow.pop %v507
    %v509 = vmul.f32 %v495, 1.442695
    %v510 = vpow.pop %v509
    %v511 = vmul.f32 %v496, 1.442695
    %v512 = vpow.pop %v511
    %v513 = vadd.f32 %v498, 1.0
    %v514 = vadd.f32 %v500, 1.0
    %v515 = vadd.f32 %v502, 1.0
    %v516 = vadd.f32 %v504, 1.0
    %v517 = vadd.f32 %v506, 1.0
    %v518 = vadd.f32 %v508, 1.0
    %v519 = vadd.f32 %v510, 1.0
    %v520 = vadd.f32 %v512, 1.0
    %v521 = vrcp.pop %v513
    %v522 = vmul.f32 1.0, %v521
    %v523 = vrcp.pop %v514
    %v524 = vmul.f32 1.0, %v523
    %v525 = vrcp.pop %v515
    %v526 = vmul.f32 1.0, %v525
    %v527 = vrcp.pop %v516
    %v528 = vmul.f32 1.0, %v527
    %v529 = vrcp.pop %v517
    %v530 = vmul.f32 1.0, %v529
    %v531 = vrcp.pop %v518
    %v532 = vmul.f32 1.0, %v531
    %v533 = vrcp.pop %v519
    %v534 = vmul.f32 1.0, %v533
    %v535 = vrcp.pop %v520
    %v536 = vmul.f32 1.0, %v535
    %v538 = vcombine.high %v19, %v19
    %v540 = vunpack.c.l.s4 1966171168
    %v541 = vunpack.c.0.s8 %v540
    %v542 = vlaneseq
    %v543 = vshrl.u32 %v542, 7
    %v544 = vsub.s32 %v541, %v543
    %v545 = vrot.slane %v19, %v544
    %v547 = vunpack.c.l.s4 1966171168
    %v548 = vunpack.c.0.s8 %v547
    %v549 = vlaneseq
    %v550 = vshrl.u32 %v549, 7
    %v551 = vsub.s32 %v548, %v550
    %v552 = vrot.slane %v538, %v551
    %v553 = vcombine.high %v545, %v545
    %v554 = vcombine.high %v552, %v552
    %v556 = vunpack.c.l.s4 1966171168
    %v557 = vunpack.c.0.s8 %v556
    %v558 = vlaneseq
    %v559 = vshrl.u32 %v558, 7
    %v560 = vsub.s32 %v557, %v559
    %v561 = vrot.slane %v545, %v560
    %v563 = vunpack.c.l.s4 1966171168
    %v564 = vunpack.c.0.s8 %v563
    %v565 = vlaneseq
    %v566 = vshrl.u32 %v565, 7
    %v567 = vsub.s32 %v564, %v566
    %v568 = vrot.slane %v552, %v567
    %v570 = vunpack.c.l.s4 1966171168
    %v571 = vunpack.c.0.s8 %v570
    %v572 = vlaneseq
    %v573 = vshrl.u32 %v572, 7
    %v574 = vsub.s32 %v571, %v573
    %v575 = vrot.slane %v553, %v574
    %v577 = vunpack.c.l.s4 1966171168
    %v578 = vunpack.c.0.s8 %v577
    %v579 = vlaneseq
    %v580 = vshrl.u32 %v579, 7
    %v581 = vsub.s32 %v578, %v580
    %v582 = vrot.slane %v554, %v581
    %v583 = vcombine.high %v561, %v561
    %v584 = vcombine.high %v568, %v568
    %v585 = vcombine.high %v575, %v575
    %v586 = vcombine.high %v582, %v582
    %v595 = vmul.f32 %v434, %v561
    %v596 = vmul.f32 %v436, %v575
    %v597 = vmul.f32 %v438, %v583
    %v598 = vmul.f32 %v440, %v585
    %v599 = vmul.f32 %v442, %v568
    %v600 = vmul.f32 %v444, %v582
    %v601 = vmul.f32 %v446, %v584
    %v602 = vmul.f32 %v448, %v586
    %v603 = vmul.f32 %v362, %v465
    %v604 = vmul.f32 %v364, %v466
    %v605 = vmul.f32 %v366, %v467
    %v606 = vmul.f32 %v368, %v468
    %v607 = vmul.f32 %v370, %v469
    %v608 = vmul.f32 %v372, %v470
    %v609 = vmul.f32 %v374, %v471
    %v610 = vmul.f32 %v376, %v472
    %v611 = vadd.f32 %v595, %v603
    %v612 = vadd.f32 %v596, %v604
    %v613 = vadd.f32 %v597, %v605
    %v614 = vadd.f32 %v598, %v606
    %v615 = vadd.f32 %v599, %v607
    %v616 = vadd.f32 %v600, %v608
    %v617 = vadd.f32 %v601, %v609
    %v618 = vadd.f32 %v602, %v610
    %v619 = vtanh.pop %v611
    %v620 = vtanh.pop %v612
    %v621 = vtanh.pop %v613
    %v622 = vtanh.pop %v614
    %v623 = vtanh.pop %v615
    %v624 = vtanh.pop %v616
    %v625 = vtanh.pop %v617
    %v626 = vtanh.pop %v618
    %v627 = vmul.f32 %v522, %v619
    %v628 = vmul.f32 %v524, %v620
    %v629 = vmul.f32 %v526, %v621
    %v630 = vmul.f32 %v528, %v622
    %v631 = vmul.f32 %v530, %v623
    %v632 = vmul.f32 %v532, %v624
    %v633 = vmul.f32 %v534, %v625
    %v634 = vmul.f32 %v536, %v626
    %635 = vst [vmem:[#allocation2] sm:$0x1] %v627
    %636 = vst [vmem:[#allocation2 + $0x8] sm:$0x1] %v628
    %637 = vst [vmem:[#allocation2 + $0x10] sm:$0x1] %v629
    %638 = vst [vmem:[#allocation2 + $0x18] sm:$0x1] %v630
    %639 = vst [vmem:[#allocation2 + $0x20] sm:$0x1] %v631
    %640 = vst [vmem:[#allocation2 + $0x28] sm:$0x1] %v632
    %641 = vst [vmem:[#allocation2 + $0x30] sm:$0x1] %v633
    %642 = vst [vmem:[#allocation2 + $0x38] sm:$0x1] %v634
    %s643 = scalar_lea.vmem %s0, 1
    %v644 = vld [vmem:[%s643] ss:$8 sm:$0xf]
    %s645 = scalar_lea.vmem %s0, 33
    %v646 = vld [vmem:[%s645] ss:$8 sm:$0xf]
    %s647 = scalar_lea.vmem %s0, 65
    %v648 = vld [vmem:[%s647] ss:$8 sm:$0xf]
    %s649 = scalar_lea.vmem %s0, 97
    %v650 = vld [vmem:[%s649] ss:$8 sm:$0xf]
    %s651 = scalar_lea.vmem %s0, 129
    %v652 = vld [vmem:[%s651] ss:$8 sm:$0xf]
    %s653 = scalar_lea.vmem %s0, 161
    %v654 = vld [vmem:[%s653] ss:$8 sm:$0xf]
    %s655 = scalar_lea.vmem %s0, 193
    %v656 = vld [vmem:[%s655] ss:$8 sm:$0xf]
    %s657 = scalar_lea.vmem %s0, 225
    %v658 = vld [vmem:[%s657] ss:$8 sm:$0xf]
    %v659 = vld [vmem:[%s3] sm:$0xff]
    %v660 = vld [vmem:[%s3 + $0x8] sm:$0xff]
    %v661 = vld [vmem:[%s3 + $0x10] sm:$0xff]
    %v662 = vld [vmem:[%s3 + $0x18] sm:$0xff]
    %v663 = vld [vmem:[%s3 + $0x20] sm:$0xff]
    %v664 = vld [vmem:[%s3 + $0x28] sm:$0xff]
    %v665 = vld [vmem:[%s3 + $0x30] sm:$0xff]
    %v666 = vld [vmem:[%s3 + $0x38] sm:$0xff]
    %v667 = vld [vmem:[%s3 + $0x40] sm:$0xff]
    %v668 = vld [vmem:[%s3 + $0x48] sm:$0xff]
    %v669 = vld [vmem:[%s3 + $0x50] sm:$0xff]
    %v670 = vld [vmem:[%s3 + $0x58] sm:$0xff]
    %v671 = vld [vmem:[%s3 + $0x60] sm:$0xff]
    %v672 = vld [vmem:[%s3 + $0x68] sm:$0xff]
    %v673 = vld [vmem:[%s3 + $0x70] sm:$0xff]
    %v674 = vld [vmem:[%s3 + $0x78] sm:$0xff]
    %v675 = vld [vmem:[%s3 + $0x80] sm:$0xff]
    %v676 = vld [vmem:[%s3 + $0x88] sm:$0xff]
    %v677 = vld [vmem:[%s3 + $0x90] sm:$0xff]
    %v678 = vld [vmem:[%s3 + $0x98] sm:$0xff]
    %v679 = vld [vmem:[%s3 + $0xa0] sm:$0xff]
    %v680 = vld [vmem:[%s3 + $0xa8] sm:$0xff]
    %v681 = vld [vmem:[%s3 + $0xb0] sm:$0xff]
    %v682 = vld [vmem:[%s3 + $0xb8] sm:$0xff]
    %v683 = vld [vmem:[%s3 + $0xc0] sm:$0xff]
    %v684 = vld [vmem:[%s3 + $0xc8] sm:$0xff]
    %v685 = vld [vmem:[%s3 + $0xd0] sm:$0xff]
    %v686 = vld [vmem:[%s3 + $0xd8] sm:$0xff]
    %v687 = vld [vmem:[%s3 + $0xe0] sm:$0xff]
    %v688 = vld [vmem:[%s3 + $0xe8] sm:$0xff]
    %v689 = vld [vmem:[%s3 + $0xf0] sm:$0xff]
    %v690 = vld [vmem:[%s3 + $0xf8] sm:$0xff]
    %v691 = vld [vmem:[%s3 + $0x100] sm:$0xff]
    %v692 = vld [vmem:[%s3 + $0x108] sm:$0xff]
    %v693 = vld [vmem:[%s3 + $0x110] sm:$0xff]
    %v694 = vld [vmem:[%s3 + $0x118] sm:$0xff]
    %v695 = vld [vmem:[%s3 + $0x120] sm:$0xff]
    %v696 = vld [vmem:[%s3 + $0x128] sm:$0xff]
    %v697 = vld [vmem:[%s3 + $0x130] sm:$0xff]
    %v698 = vld [vmem:[%s3 + $0x138] sm:$0xff]
    %v699 = vld [vmem:[%s3 + $0x140] sm:$0xff]
    %v700 = vld [vmem:[%s3 + $0x148] sm:$0xff]
    %v701 = vld [vmem:[%s3 + $0x150] sm:$0xff]
    %v702 = vld [vmem:[%s3 + $0x158] sm:$0xff]
    %v703 = vld [vmem:[%s3 + $0x160] sm:$0xff]
    %v704 = vld [vmem:[%s3 + $0x168] sm:$0xff]
    %v705 = vld [vmem:[%s3 + $0x170] sm:$0xff]
    %v706 = vld [vmem:[%s3 + $0x178] sm:$0xff]
    %v707 = vld [vmem:[%s3 + $0x180] sm:$0xff]
    %v708 = vld [vmem:[%s3 + $0x188] sm:$0xff]
    %v709 = vld [vmem:[%s3 + $0x190] sm:$0xff]
    %v710 = vld [vmem:[%s3 + $0x198] sm:$0xff]
    %v711 = vld [vmem:[%s3 + $0x1a0] sm:$0xff]
    %v712 = vld [vmem:[%s3 + $0x1a8] sm:$0xff]
    %v713 = vld [vmem:[%s3 + $0x1b0] sm:$0xff]
    %v714 = vld [vmem:[%s3 + $0x1b8] sm:$0xff]
    %v715 = vld [vmem:[%s3 + $0x1c0] sm:$0xff]
    %v716 = vld [vmem:[%s3 + $0x1c8] sm:$0xff]
    %v717 = vld [vmem:[%s3 + $0x1d0] sm:$0xff]
    %v718 = vld [vmem:[%s3 + $0x1d8] sm:$0xff]
    %v719 = vld [vmem:[%s3 + $0x1e0] sm:$0xff]
    %v720 = vld [vmem:[%s3 + $0x1e8] sm:$0xff]
    %v721 = vld [vmem:[%s3 + $0x1f0] sm:$0xff]
    %v722 = vld [vmem:[%s3 + $0x1f8] sm:$0xff]
    %v731 = vcombine.low %v627, %v628
    %v732 = vcombine.low %v629, %v630
    %v733 = vcombine.low %v631, %v632
    %v734 = vcombine.low %v633, %v634
    %v736 = vunpack.c.l.s4 1966171168
    %v737 = vunpack.c.0.s8 %v736
    %v738 = vlaneseq
    %v739 = vshrl.u32 %v738, 7
    %v740 = vsub.s32 %v737, %v739
    %v741 = vrot.slane %v731, %v740
    %v743 = vunpack.c.l.s4 1966171168
    %v744 = vunpack.c.0.s8 %v743
    %v745 = vlaneseq
    %v746 = vshrl.u32 %v745, 7
    %v747 = vsub.s32 %v744, %v746
    %v748 = vrot.slane %v732, %v747
    %v750 = vunpack.c.l.s4 1966171168
    %v751 = vunpack.c.0.s8 %v750
    %v752 = vlaneseq
    %v753 = vshrl.u32 %v752, 7
    %v754 = vsub.s32 %v751, %v753
    %v755 = vrot.slane %v733, %v754
    %v757 = vunpack.c.l.s4 1966171168
    %v758 = vunpack.c.0.s8 %v757
    %v759 = vlaneseq
    %v760 = vshrl.u32 %v759, 7
    %v761 = vsub.s32 %v758, %v760
    %v762 = vrot.slane %v734, %v761
    %v763 = vcombine.low %v741, %v748
    %v764 = vcombine.low %v755, %v762
    %v766 = vunpack.c.l.s4 1966171168
    %v767 = vunpack.c.0.s8 %v766
    %v768 = vlaneseq
    %v769 = vshrl.u32 %v768, 7
    %v770 = vsub.s32 %v767, %v769
    %v771 = vrot.slane %v763, %v770
    %v773 = vunpack.c.l.s4 1966171168
    %v774 = vunpack.c.0.s8 %v773
    %v775 = vlaneseq
    %v776 = vshrl.u32 %v775, 7
    %v777 = vsub.s32 %v774, %v776
    %v778 = vrot.slane %v764, %v777
    %v779 = vcombine.low %v771, %v778
    %781 = vmatprep.subr.mxu0 %v660
    %782 = vmatpush1.msra.mxu0 %v659
    %783 = vmatprep.subr.mxu0 %v664
    %784 = vmatpush1.msra.mxu0 %v663
    %785 = vmatprep.subr.mxu0 %v668
    %786 = vmatpush1.msra.mxu0 %v667
    %787 = vmatprep.subr.mxu0 %v672
    %788 = vmatpush1.msra.mxu0 %v671
    %789 = vmatprep.subr.mxu0 %v676
    %790 = vmatpush1.msra.mxu0 %v675
    %791 = vmatprep.subr.mxu0 %v680
    %792 = vmatpush1.msra.mxu0 %v679
    %793 = vmatprep.subr.mxu0 %v684
    %794 = vmatpush1.msra.mxu0 %v683
    %795 = vmatprep.subr.mxu0 %v688
    %796 = vmatpush1.msra.mxu0 %v687
    %797 = vmatprep.subr.mxu0 %v692
    %798 = vmatpush1.msra.mxu0 %v691
    %799 = vmatprep.subr.mxu0 %v696
    %800 = vmatpush1.msra.mxu0 %v695
    %801 = vmatprep.subr.mxu0 %v700
    %802 = vmatpush1.msra.mxu0 %v699
    %803 = vmatprep.subr.mxu0 %v704
    %804 = vmatpush1.msra.mxu0 %v703
    %805 = vmatprep.subr.mxu0 %v708
    %806 = vmatpush1.msra.mxu0 %v707
    %807 = vmatprep.subr.mxu0 %v712
    %808 = vmatpush1.msra.mxu0 %v711
    %809 = vmatprep.subr.mxu0 %v716
    %810 = vmatpush1.msra.mxu0 %v715
    %811 = vmatprep.subr.mxu0 %v720
    %812 = vmatpush1.msra.mxu0 %v719
    %813 = vmatprep.subr.mxu0 0.0
    %814 = vmatpush1.msra.mxu0 0.0
    %815 = vmatprep.subr.mxu0 0.0
    %816 = vmatpush1.msra.mxu0 0.0
    %817 = vmatprep.subr.mxu0 0.0
    %818 = vmatpush1.msra.mxu0 0.0
    %819 = vmatprep.subr.mxu0 0.0
    %820 = vmatpush1.msra.mxu0 0.0
    %821 = vmatprep.subr.mxu0 0.0
    %822 = vmatpush1.msra.mxu0 0.0
    %823 = vmatprep.subr.mxu0 0.0
    %824 = vmatpush1.msra.mxu0 0.0
    %825 = vmatprep.subr.mxu0 0.0
    %826 = vmatpush1.msra.mxu0 0.0
    %827 = vmatprep.subr.mxu0 0.0
    %828 = vmatpush1.msra.mxu0 0.0
    %829 = vmatprep.subr.mxu0 0.0
    %830 = vmatpush1.msra.mxu0 0.0
    %831 = vmatprep.subr.mxu0 0.0
    %832 = vmatpush1.msra.mxu0 0.0
    %833 = vmatprep.subr.mxu0 0.0
    %834 = vmatpush1.msra.mxu0 0.0
    %835 = vmatprep.subr.mxu0 0.0
    %836 = vmatpush1.msra.mxu0 0.0
    %837 = vmatprep.subr.mxu0 0.0
    %838 = vmatpush1.msra.mxu0 0.0
    %839 = vmatprep.subr.mxu0 0.0
    %840 = vmatpush1.msra.mxu0 0.0
    %841 = vmatprep.subr.mxu0 0.0
    %842 = vmatpush1.msra.mxu0 0.0
    %843 = vmatprep.subr.mxu0 0.0
    %844 = vmatpush1.msra.mxu0 0.0
    %845 = vmatprep.mubr.f32.mxu0 0.0
    %846 = vmatmul.mubr.f32.gmra.mrb[0].mxu0 %v779
    %v847 = vpop.f32.mrb[0].mxu0
    %v848 = vadd.f32 0.0, %v847
    %v849 = vpop.f32.mrb[0].mxu0
    %v850 = vadd.f32 0.0, %v849
    %851 = vdwg.mxu0
    %852 = vmatprep.subr.mxu0 %v662
    %853 = vmatpush1.msra.mxu0 %v661
    %854 = vmatprep.subr.mxu0 %v666
    %855 = vmatpush1.msra.mxu0 %v665
    %856 = vmatprep.subr.mxu0 %v670
    %857 = vmatpush1.msra.mxu0 %v669
    %858 = vmatprep.subr.mxu0 %v674
    %859 = vmatpush1.msra.mxu0 %v673
    %860 = vmatprep.subr.mxu0 %v678
    %861 = vmatpush1.msra.mxu0 %v677
    %862 = vmatprep.subr.mxu0 %v682
    %863 = vmatpush1.msra.mxu0 %v681
    %864 = vmatprep.subr.mxu0 %v686
    %865 = vmatpush1.msra.mxu0 %v685
    %866 = vmatprep.subr.mxu0 %v690
    %867 = vmatpush1.msra.mxu0 %v689
    %868 = vmatprep.subr.mxu0 %v694
    %869 = vmatpush1.msra.mxu0 %v693
    %870 = vmatprep.subr.mxu0 %v698
    %871 = vmatpush1.msra.mxu0 %v697
    %872 = vmatprep.subr.mxu0 %v702
    %873 = vmatpush1.msra.mxu0 %v701
    %874 = vmatprep.subr.mxu0 %v706
    %875 = vmatpush1.msra.mxu0 %v705
    %876 = vmatprep.subr.mxu0 %v710
    %877 = vmatpush1.msra.mxu0 %v709
    %878 = vmatprep.subr.mxu0 %v714
    %879 = vmatpush1.msra.mxu0 %v713
    %880 = vmatprep.subr.mxu0 %v718
    %881 = vmatpush1.msra.mxu0 %v717
    %882 = vmatprep.subr.mxu0 %v722
    %883 = vmatpush1.msra.mxu0 %v721
    %884 = vmatprep.subr.mxu0 0.0
    %885 = vmatpush1.msra.mxu0 0.0
    %886 = vmatprep.subr.mxu0 0.0
    %887 = vmatpush1.msra.mxu0 0.0
    %888 = vmatprep.subr.mxu0 0.0
    %889 = vmatpush1.msra.mxu0 0.0
    %890 = vmatprep.subr.mxu0 0.0
    %891 = vmatpush1.msra.mxu0 0.0
    %892 = vmatprep.subr.mxu0 0.0
    %893 = vmatpush1.msra.mxu0 0.0
    %894 = vmatprep.subr.mxu0 0.0
    %895 = vmatpush1.msra.mxu0 0.0
    %896 = vmatprep.subr.mxu0 0.0
    %897 = vmatpush1.msra.mxu0 0.0
    %898 = vmatprep.subr.mxu0 0.0
    %899 = vmatpush1.msra.mxu0 0.0
    %900 = vmatprep.subr.mxu0 0.0
    %901 = vmatpush1.msra.mxu0 0.0
    %902 = vmatprep.subr.mxu0 0.0
    %903 = vmatpush1.msra.mxu0 0.0
    %904 = vmatprep.subr.mxu0 0.0
    %905 = vmatpush1.msra.mxu0 0.0
    %906 = vmatprep.subr.mxu0 0.0
    %907 = vmatpush1.msra.mxu0 0.0
    %908 = vmatprep.subr.mxu0 0.0
    %909 = vmatpush1.msra.mxu0 0.0
    %910 = vmatprep.subr.mxu0 0.0
    %911 = vmatpush1.msra.mxu0 0.0
    %912 = vmatprep.subr.mxu0 0.0
    %913 = vmatpush1.msra.mxu0 0.0
    %914 = vmatprep.subr.mxu0 0.0
    %915 = vmatpush1.msra.mxu0 0.0
    %916 = vmatprep.mubr.f32.mxu0 0.0
    %917 = vmatmul.mubr.f32.gmra.mrb[0].mxu0 %v779
    %v918 = vpop.f32.mrb[0].mxu0
    %v919 = vadd.f32 0.0, %v918
    %v920 = vpop.f32.mrb[0].mxu0
    %v921 = vadd.f32 0.0, %v920
    %922 = vdwg.mxu0
    %v927 = vcombine.low %v848, %v850
    %v928 = vcombine.high %v848, %v850
    %v929 = vcombine.low %v919, %v921
    %v930 = vcombine.high %v919, %v921
    %v932 = vunpack.c.l.s4 1966171168
    %v933 = vunpack.c.0.s8 %v932
    %v934 = vlaneseq
    %v935 = vshrl.u32 %v934, 7
    %v936 = vsub.s32 %v933, %v935
    %v937 = vrot.slane %v927, %v936
    %v939 = vunpack.c.l.s4 1966171168
    %v940 = vunpack.c.0.s8 %v939
    %v941 = vlaneseq
    %v942 = vshrl.u32 %v941, 7
    %v943 = vsub.s32 %v940, %v942
    %v944 = vrot.slane %v928, %v943
    %v946 = vunpack.c.l.s4 1966171168
    %v947 = vunpack.c.0.s8 %v946
    %v948 = vlaneseq
    %v949 = vshrl.u32 %v948, 7
    %v950 = vsub.s32 %v947, %v949
    %v951 = vrot.slane %v929, %v950
    %v953 = vunpack.c.l.s4 1966171168
    %v954 = vunpack.c.0.s8 %v953
    %v955 = vlaneseq
    %v956 = vshrl.u32 %v955, 7
    %v957 = vsub.s32 %v954, %v956
    %v958 = vrot.slane %v930, %v957
    %v959 = vcombine.low %v937, %v951
    %v960 = vcombine.high %v937, %v951
    %v961 = vcombine.low %v944, %v958
    %v962 = vcombine.high %v944, %v958
    %v964 = vunpack.c.l.s4 1966171168
    %v965 = vunpack.c.0.s8 %v964
    %v966 = vlaneseq
    %v967 = vshrl.u32 %v966, 7
    %v968 = vsub.s32 %v965, %v967
    %v969 = vrot.slane %v959, %v968
    %v971 = vunpack.c.l.s4 1966171168
    %v972 = vunpack.c.0.s8 %v971
    %v973 = vlaneseq
    %v974 = vshrl.u32 %v973, 7
    %v975 = vsub.s32 %v972, %v974
    %v976 = vrot.slane %v961, %v975
    %v978 = vunpack.c.l.s4 1966171168
    %v979 = vunpack.c.0.s8 %v978
    %v980 = vlaneseq
    %v981 = vshrl.u32 %v980, 7
    %v982 = vsub.s32 %v979, %v981
    %v983 = vrot.slane %v960, %v982
    %v985 = vunpack.c.l.s4 1966171168
    %v986 = vunpack.c.0.s8 %v985
    %v987 = vlaneseq
    %v988 = vshrl.u32 %v987, 7
    %v989 = vsub.s32 %v986, %v988
    %v990 = vrot.slane %v962, %v989
    %v991 = vcombine.high %v969, %v969
    %v992 = vcombine.high %v976, %v976
    %v993 = vcombine.high %v983, %v983
    %v994 = vcombine.high %v990, %v990
    %v1003 = vadd.f32 %v644, %v969
    %v1004 = vadd.f32 %v646, %v983
    %v1005 = vadd.f32 %v648, %v991
    %v1006 = vadd.f32 %v650, %v993
    %v1007 = vadd.f32 %v652, %v976
    %v1008 = vadd.f32 %v654, %v990
    %v1009 = vadd.f32 %v656, %v992
    %v1010 = vadd.f32 %v658, %v994
    %v1011 = vxor.u32 %v1003, 2147483648
    %v1012 = vxor.u32 %v1004, 2147483648
    %v1013 = vxor.u32 %v1005, 2147483648
    %v1014 = vxor.u32 %v1006, 2147483648
    %v1015 = vxor.u32 %v1007, 2147483648
    %v1016 = vxor.u32 %v1008, 2147483648
    %v1017 = vxor.u32 %v1009, 2147483648
    %v1018 = vxor.u32 %v1010, 2147483648
    %v1019 = vmul.f32 %v1011, 1.442695
    %v1020 = vpow.pop %v1019
    %v1021 = vmul.f32 %v1012, 1.442695
    %v1022 = vpow.pop %v1021
    %v1023 = vmul.f32 %v1013, 1.442695
    %v1024 = vpow.pop %v1023
    %v1025 = vmul.f32 %v1014, 1.442695
    %v1026 = vpow.pop %v1025
    %v1027 = vmul.f32 %v1015, 1.442695
    %v1028 = vpow.pop %v1027
    %v1029 = vmul.f32 %v1016, 1.442695
    %v1030 = vpow.pop %v1029
    %v1031 = vmul.f32 %v1017, 1.442695
    %v1032 = vpow.pop %v1031
    %v1033 = vmul.f32 %v1018, 1.442695
    %v1034 = vpow.pop %v1033
    %v1035 = vadd.f32 %v1020, 1.0
    %v1036 = vadd.f32 %v1022, 1.0
    %v1037 = vadd.f32 %v1024, 1.0
    %v1038 = vadd.f32 %v1026, 1.0
    %v1039 = vadd.f32 %v1028, 1.0
    %v1040 = vadd.f32 %v1030, 1.0
    %v1041 = vadd.f32 %v1032, 1.0
    %v1042 = vadd.f32 %v1034, 1.0
    %v1043 = vrcp.pop %v1035
    %v1044 = vmul.f32 1.0, %v1043
    %v1045 = vrcp.pop %v1036
    %v1046 = vmul.f32 1.0, %v1045
    %v1047 = vrcp.pop %v1037
    %v1048 = vmul.f32 1.0, %v1047
    %v1049 = vrcp.pop %v1038
    %v1050 = vmul.f32 1.0, %v1049
    %v1051 = vrcp.pop %v1039
    %v1052 = vmul.f32 1.0, %v1051
    %v1053 = vrcp.pop %v1040
    %v1054 = vmul.f32 1.0, %v1053
    %v1055 = vrcp.pop %v1041
    %v1056 = vmul.f32 1.0, %v1055
    %v1057 = vrcp.pop %v1042
    %v1058 = vmul.f32 1.0, %v1057
    %v1067 = vrot.slane %v1003, 1
    %v1068 = vrot.slane %v1004, 1
    %v1069 = vrot.slane %v1005, 1
    %v1070 = vrot.slane %v1006, 1
    %v1071 = vrot.slane %v1007, 1
    %v1072 = vrot.slane %v1008, 1
    %v1073 = vrot.slane %v1009, 1
    %v1074 = vrot.slane %v1010, 1
    %v1083 = vxor.u32 %v1067, 2147483648
    %v1084 = vxor.u32 %v1068, 2147483648
    %v1085 = vxor.u32 %v1069, 2147483648
    %v1086 = vxor.u32 %v1070, 2147483648
    %v1087 = vxor.u32 %v1071, 2147483648
    %v1088 = vxor.u32 %v1072, 2147483648
    %v1089 = vxor.u32 %v1073, 2147483648
    %v1090 = vxor.u32 %v1074, 2147483648
    %v1091 = vmul.f32 %v1083, 1.442695
    %v1092 = vpow.pop %v1091
    %v1093 = vmul.f32 %v1084, 1.442695
    %v1094 = vpow.pop %v1093
    %v1095 = vmul.f32 %v1085, 1.442695
    %v1096 = vpow.pop %v1095
    %v1097 = vmul.f32 %v1086, 1.442695
    %v1098 = vpow.pop %v1097
    %v1099 = vmul.f32 %v1087, 1.442695
    %v1100 = vpow.pop %v1099
    %v1101 = vmul.f32 %v1088, 1.442695
    %v1102 = vpow.pop %v1101
    %v1103 = vmul.f32 %v1089, 1.442695
    %v1104 = vpow.pop %v1103
    %v1105 = vmul.f32 %v1090, 1.442695
    %v1106 = vpow.pop %v1105
    %v1107 = vadd.f32 %v1092, 1.0
    %v1108 = vadd.f32 %v1094, 1.0
    %v1109 = vadd.f32 %v1096, 1.0
    %v1110 = vadd.f32 %v1098, 1.0
    %v1111 = vadd.f32 %v1100, 1.0
    %v1112 = vadd.f32 %v1102, 1.0
    %v1113 = vadd.f32 %v1104, 1.0
    %v1114 = vadd.f32 %v1106, 1.0
    %v1115 = vrcp.pop %v1107
    %v1116 = vmul.f32 1.0, %v1115
    %v1117 = vrcp.pop %v1108
    %v1118 = vmul.f32 1.0, %v1117
    %v1119 = vrcp.pop %v1109
    %v1120 = vmul.f32 1.0, %v1119
    %v1121 = vrcp.pop %v1110
    %v1122 = vmul.f32 1.0, %v1121
    %v1123 = vrcp.pop %v1111
    %v1124 = vmul.f32 1.0, %v1123
    %v1125 = vrcp.pop %v1112
    %v1126 = vmul.f32 1.0, %v1125
    %v1127 = vrcp.pop %v1113
    %v1128 = vmul.f32 1.0, %v1127
    %v1129 = vrcp.pop %v1114
    %v1130 = vmul.f32 1.0, %v1129
    %v1131 = vrot.slane %v1003, 2
    %v1132 = vrot.slane %v1004, 2
    %v1133 = vrot.slane %v1005, 2
    %v1134 = vrot.slane %v1006, 2
    %v1135 = vrot.slane %v1007, 2
    %v1136 = vrot.slane %v1008, 2
    %v1137 = vrot.slane %v1009, 2
    %v1138 = vrot.slane %v1010, 2
    %v1147 = vtanh.pop %v1131
    %v1148 = vtanh.pop %v1132
    %v1149 = vtanh.pop %v1133
    %v1150 = vtanh.pop %v1134
    %v1151 = vtanh.pop %v1135
    %v1152 = vtanh.pop %v1136
    %v1153 = vtanh.pop %v1137
    %v1154 = vtanh.pop %v1138
    %v1155 = vrot.slane %v1003, 3
    %v1156 = vrot.slane %v1004, 3
    %v1157 = vrot.slane %v1005, 3
    %v1158 = vrot.slane %v1006, 3
    %v1159 = vrot.slane %v1007, 3
    %v1160 = vrot.slane %v1008, 3
    %v1161 = vrot.slane %v1009, 3
    %v1162 = vrot.slane %v1010, 3
    %v1171 = vxor.u32 %v1155, 2147483648
    %v1172 = vxor.u32 %v1156, 2147483648
    %v1173 = vxor.u32 %v1157, 2147483648
    %v1174 = vxor.u32 %v1158, 2147483648
    %v1175 = vxor.u32 %v1159, 2147483648
    %v1176 = vxor.u32 %v1160, 2147483648
    %v1177 = vxor.u32 %v1161, 2147483648
    %v1178 = vxor.u32 %v1162, 2147483648
    %v1179 = vmul.f32 %v1171, 1.442695
    %v1180 = vpow.pop %v1179
    %v1181 = vmul.f32 %v1172, 1.442695
    %v1182 = vpow.pop %v1181
    %v1183 = vmul.f32 %v1173, 1.442695
    %v1184 = vpow.pop %v1183
    %v1185 = vmul.f32 %v1174, 1.442695
    %v1186 = vpow.pop %v1185
    %v1187 = vmul.f32 %v1175, 1.442695
    %v1188 = vpow.pop %v1187
    %v1189 = vmul.f32 %v1176, 1.442695
    %v1190 = vpow.pop %v1189
    %v1191 = vmul.f32 %v1177, 1.442695
    %v1192 = vpow.pop %v1191
    %v1193 = vmul.f32 %v1178, 1.442695
    %v1194 = vpow.pop %v1193
    %v1195 = vadd.f32 %v1180, 1.0
    %v1196 = vadd.f32 %v1182, 1.0
    %v1197 = vadd.f32 %v1184, 1.0
    %v1198 = vadd.f32 %v1186, 1.0
    %v1199 = vadd.f32 %v1188, 1.0
    %v1200 = vadd.f32 %v1190, 1.0
    %v1201 = vadd.f32 %v1192, 1.0
    %v1202 = vadd.f32 %v1194, 1.0
    %v1203 = vrcp.pop %v1195
    %v1204 = vmul.f32 1.0, %v1203
    %v1205 = vrcp.pop %v1196
    %v1206 = vmul.f32 1.0, %v1205
    %v1207 = vrcp.pop %v1197
    %v1208 = vmul.f32 1.0, %v1207
    %v1209 = vrcp.pop %v1198
    %v1210 = vmul.f32 1.0, %v1209
    %v1211 = vrcp.pop %v1199
    %v1212 = vmul.f32 1.0, %v1211
    %v1213 = vrcp.pop %v1200
    %v1214 = vmul.f32 1.0, %v1213
    %v1215 = vrcp.pop %v1201
    %v1216 = vmul.f32 1.0, %v1215
    %v1217 = vrcp.pop %v1202
    %v1218 = vmul.f32 1.0, %v1217
    %v1219 = vmul.f32 %v1116, %v611
    %v1220 = vmul.f32 %v1118, %v612
    %v1221 = vmul.f32 %v1120, %v613
    %v1222 = vmul.f32 %v1122, %v614
    %v1223 = vmul.f32 %v1124, %v615
    %v1224 = vmul.f32 %v1126, %v616
    %v1225 = vmul.f32 %v1128, %v617
    %v1226 = vmul.f32 %v1130, %v618
    %v1227 = vmul.f32 %v1044, %v1147
    %v1228 = vmul.f32 %v1046, %v1148
    %v1229 = vmul.f32 %v1048, %v1149
    %v1230 = vmul.f32 %v1050, %v1150
    %v1231 = vmul.f32 %v1052, %v1151
    %v1232 = vmul.f32 %v1054, %v1152
    %v1233 = vmul.f32 %v1056, %v1153
    %v1234 = vmul.f32 %v1058, %v1154
    %v1235 = vadd.f32 %v1219, %v1227
    %v1236 = vadd.f32 %v1220, %v1228
    %v1237 = vadd.f32 %v1221, %v1229
    %v1238 = vadd.f32 %v1222, %v1230
    %v1239 = vadd.f32 %v1223, %v1231
    %v1240 = vadd.f32 %v1224, %v1232
    %v1241 = vadd.f32 %v1225, %v1233
    %v1242 = vadd.f32 %v1226, %v1234
    %v1243 = vtanh.pop %v1235
    %v1244 = vtanh.pop %v1236
    %v1245 = vtanh.pop %v1237
    %v1246 = vtanh.pop %v1238
    %v1247 = vtanh.pop %v1239
    %v1248 = vtanh.pop %v1240
    %v1249 = vtanh.pop %v1241
    %v1250 = vtanh.pop %v1242
    %v1251 = vmul.f32 %v1204, %v1243
    %v1252 = vmul.f32 %v1206, %v1244
    %v1253 = vmul.f32 %v1208, %v1245
    %v1254 = vmul.f32 %v1210, %v1246
    %v1255 = vmul.f32 %v1212, %v1247
    %v1256 = vmul.f32 %v1214, %v1248
    %v1257 = vmul.f32 %v1216, %v1249
    %v1258 = vmul.f32 %v1218, %v1250
    %1259 = vst [vmem:[#allocation2 + $0x1] sm:$0x1] %v1251
    %1260 = vst [vmem:[#allocation2 + $0x9] sm:$0x1] %v1252
    %1261 = vst [vmem:[#allocation2 + $0x11] sm:$0x1] %v1253
    %1262 = vst [vmem:[#allocation2 + $0x19] sm:$0x1] %v1254
    %1263 = vst [vmem:[#allocation2 + $0x21] sm:$0x1] %v1255
    %1264 = vst [vmem:[#allocation2 + $0x29] sm:$0x1] %v1256
    %1265 = vst [vmem:[#allocation2 + $0x31] sm:$0x1] %v1257
    %1266 = vst [vmem:[#allocation2 + $0x39] sm:$0x1] %v1258
    %s1267 = scalar_lea.vmem %s0, 2
    %v1268 = vld [vmem:[%s1267] ss:$8 sm:$0xf]
    %s1269 = scalar_lea.vmem %s0, 34
    %v1270 = vld [vmem:[%s1269] ss:$8 sm:$0xf]
    %s1271 = scalar_lea.vmem %s0, 66
    %v1272 = vld [vmem:[%s1271] ss:$8 sm:$0xf]
    %s1273 = scalar_lea.vmem %s0, 98
    %v1274 = vld [vmem:[%s1273] ss:$8 sm:$0xf]
    %s1275 = scalar_lea.vmem %s0, 130
    %v1276 = vld [vmem:[%s1275] ss:$8 sm:$0xf]
    %s1277 = scalar_lea.vmem %s0, 162
    %v1278 = vld [vmem:[%s1277] ss:$8 sm:$0xf]
    %s1279 = scalar_lea.vmem %s0, 194
    %v1280 = vld [vmem:[%s1279] ss:$8 sm:$0xf]
    %s1281 = scalar_lea.vmem %s0, 226
    %v1282 = vld [vmem:[%s1281] ss:$8 sm:$0xf]
    %v1283 = vld [vmem:[%s3] sm:$0xff]
    %v1284 = vld [vmem:[%s3 + $0x8] sm:$0xff]
    %v1285 = vld [vmem:[%s3 + $0x10] sm:$0xff]
    %v1286 = vld [vmem:[%s3 + $0x18] sm:$0xff]
    %v1287 = vld [vmem:[%s3 + $0x20] sm:$0xff]
    %v1288 = vld [vmem:[%s3 + $0x28] sm:$0xff]
    %v1289 = vld [vmem:[%s3 + $0x30] sm:$0xff]
    %v1290 = vld [vmem:[%s3 + $0x38] sm:$0xff]
    %v1291 = vld [vmem:[%s3 + $0x40] sm:$0xff]
    %v1292 = vld [vmem:[%s3 + $0x48] sm:$0xff]
    %v1293 = vld [vmem:[%s3 + $0x50] sm:$0xff]
    %v1294 = vld [vmem:[%s3 + $0x58] sm:$0xff]
    %v1295 = vld [vmem:[%s3 + $0x60] sm:$0xff]
    %v1296 = vld [vmem:[%s3 + $0x68] sm:$0xff]
    %v1297 = vld [vmem:[%s3 + $0x70] sm:$0xff]
    %v1298 = vld [vmem:[%s3 + $0x78] sm:$0xff]
    %v1299 = vld [vmem:[%s3 + $0x80] sm:$0xff]
    %v1300 = vld [vmem:[%s3 + $0x88] sm:$0xff]
    %v1301 = vld [vmem:[%s3 + $0x90] sm:$0xff]
    %v1302 = vld [vmem:[%s3 + $0x98] sm:$0xff]
    %v1303 = vld [vmem:[%s3 + $0xa0] sm:$0xff]
    %v1304 = vld [vmem:[%s3 + $0xa8] sm:$0xff]
    %v1305 = vld [vmem:[%s3 + $0xb0] sm:$0xff]
    %v1306 = vld [vmem:[%s3 + $0xb8] sm:$0xff]
    %v1307 = vld [vmem:[%s3 + $0xc0] sm:$0xff]
    %v1308 = vld [vmem:[%s3 + $0xc8] sm:$0xff]
    %v1309 = vld [vmem:[%s3 + $0xd0] sm:$0xff]
    %v1310 = vld [vmem:[%s3 + $0xd8] sm:$0xff]
    %v1311 = vld [vmem:[%s3 + $0xe0] sm:$0xff]
    %v1312 = vld [vmem:[%s3 + $0xe8] sm:$0xff]
    %v1313 = vld [vmem:[%s3 + $0xf0] sm:$0xff]
    %v1314 = vld [vmem:[%s3 + $0xf8] sm:$0xff]
    %v1315 = vld [vmem:[%s3 + $0x100] sm:$0xff]
    %v1316 = vld [vmem:[%s3 + $0x108] sm:$0xff]
    %v1317 = vld [vmem:[%s3 + $0x110] sm:$0xff]
    %v1318 = vld [vmem:[%s3 + $0x118] sm:$0xff]
    %v1319 = vld [vmem:[%s3 + $0x120] sm:$0xff]
    %v1320 = vld [vmem:[%s3 + $0x128] sm:$0xff]
    %v1321 = vld [vmem:[%s3 + $0x130] sm:$0xff]
    %v1322 = vld [vmem:[%s3 + $0x138] sm:$0xff]
    %v1323 = vld [vmem:[%s3 + $0x140] sm:$0xff]
    %v1324 = vld [vmem:[%s3 + $0x148] sm:$0xff]
    %v1325 = vld [vmem:[%s3 + $0x150] sm:$0xff]
    %v1326 = vld [vmem:[%s3 + $0x158] sm:$0xff]
    %v1327 = vld [vmem:[%s3 + $0x160] sm:$0xff]
    %v1328 = vld [vmem:[%s3 + $0x168] sm:$0xff]
    %v1329 = vld [vmem:[%s3 + $0x170] sm:$0xff]
    %v1330 = vld [vmem:[%s3 + $0x178] sm:$0xff]
    %v1331 = vld [vmem:[%s3 + $0x180] sm:$0xff]
    %v1332 = vld [vmem:[%s3 + $0x188] sm:$0xff]
    %v1333 = vld [vmem:[%s3 + $0x190] sm:$0xff]
    %v1334 = vld [vmem:[%s3 + $0x198] sm:$0xff]
    %v1335 = vld [vmem:[%s3 + $0x1a0] sm:$0xff]
    %v1336 = vld [vmem:[%s3 + $0x1a8] sm:$0xff]
    %v1337 = vld [vmem:[%s3 + $0x1b0] sm:$0xff]
    %v1338 = vld [vmem:[%s3 + $0x1b8] sm:$0xff]
    %v1339 = vld [vmem:[%s3 + $0x1c0] sm:$0xff]
    %v1340 = vld [vmem:[%s3 + $0x1c8] sm:$0xff]
    %v1341 = vld [vmem:[%s3 + $0x1d0] sm:$0xff]
    %v1342 = vld [vmem:[%s3 + $0x1d8] sm:$0xff]
    %v1343 = vld [vmem:[%s3 + $0x1e0] sm:$0xff]
    %v1344 = vld [vmem:[%s3 + $0x1e8] sm:$0xff]
    %v1345 = vld [vmem:[%s3 + $0x1f0] sm:$0xff]
    %v1346 = vld [vmem:[%s3 + $0x1f8] sm:$0xff]
    %v1355 = vcombine.low %v1251, %v1252
    %v1356 = vcombine.low %v1253, %v1254
    %v1357 = vcombine.low %v1255, %v1256
    %v1358 = vcombine.low %v1257, %v1258
    %v1360 = vunpack.c.l.s4 1966171168
    %v1361 = vunpack.c.0.s8 %v1360
    %v1362 = vlaneseq
    %v1363 = vshrl.u32 %v1362, 7
    %v1364 = vsub.s32 %v1361, %v1363
    %v1365 = vrot.slane %v1355, %v1364
    %v1367 = vunpack.c.l.s4 1966171168
    %v1368 = vunpack.c.0.s8 %v1367
    %v1369 = vlaneseq
    %v1370 = vshrl.u32 %v1369, 7
    %v1371 = vsub.s32 %v1368, %v1370
    %v1372 = vrot.slane %v1356, %v1371
    %v1374 = vunpack.c.l.s4 1966171168
    %v1375 = vunpack.c.0.s8 %v1374
    %v1376 = vlaneseq
    %v1377 = vshrl.u32 %v1376, 7
    %v1378 = vsub.s32 %v1375, %v1377
    %v1379 = vrot.slane %v1357, %v1378
    %v1381 = vunpack.c.l.s4 1966171168
    %v1382 = vunpack.c.0.s8 %v1381
    %v1383 = vlaneseq
    %v1384 = vshrl.u32 %v1383, 7
    %v1385 = vsub.s32 %v1382, %v1384
    %v1386 = vrot.slane %v1358, %v1385
    %v1387 = vcombine.low %v1365, %v1372
    %v1388 = vcombine.low %v1379, %v1386
    %v1390 = vunpack.c.l.s4 1966171168
    %v1391 = vunpack.c.0.s8 %v1390
    %v1392 = vlaneseq
    %v1393 = vshrl.u32 %v1392, 7
    %v1394 = vsub.s32 %v1391, %v1393
    %v1395 = vrot.slane %v1387, %v1394
    %v1397 = vunpack.c.l.s4 1966171168
    %v1398 = vunpack.c.0.s8 %v1397
    %v1399 = vlaneseq
    %v1400 = vshrl.u32 %v1399, 7
    %v1401 = vsub.s32 %v1398, %v1400
    %v1402 = vrot.slane %v1388, %v1401
    %v1403 = vcombine.low %v1395, %v1402
    %1405 = vmatprep.subr.mxu0 %v1284
    %1406 = vmatpush1.msra.mxu0 %v1283
    %1407 = vmatprep.subr.mxu0 %v1288
    %1408 = vmatpush1.msra.mxu0 %v1287
    %1409 = vmatprep.subr.mxu0 %v1292
    %1410 = vmatpush1.msra.mxu0 %v1291
    %1411 = vmatprep.subr.mxu0 %v1296
    %1412 = vmatpush1.msra.mxu0 %v1295
    %1413 = vmatprep.subr.mxu0 %v1300
    %1414 = vmatpush1.msra.mxu0 %v1299
    %1415 = vmatprep.subr.mxu0 %v1304
    %1416 = vmatpush1.msra.mxu0 %v1303
    %1417 = vmatprep.subr.mxu0 %v1308
    %1418 = vmatpush1.msra.mxu0 %v1307
    %1419 = vmatprep.subr.mxu0 %v1312
    %1420 = vmatpush1.msra.mxu0 %v1311
    %1421 = vmatprep.subr.mxu0 %v1316
    %1422 = vmatpush1.msra.mxu0 %v1315
    %1423 = vmatprep.subr.mxu0 %v1320
    %1424 = vmatpush1.msra.mxu0 %v1319
    %1425 = vmatprep.subr.mxu0 %v1324
    %1426 = vmatpush1.msra.mxu0 %v1323
    %1427 = vmatprep.subr.mxu0 %v1328
    %1428 = vmatpush1.msra.mxu0 %v1327
    %1429 = vmatprep.subr.mxu0 %v1332
    %1430 = vmatpush1.msra.mxu0 %v1331
    %1431 = vmatprep.subr.mxu0 %v1336
    %1432 = vmatpush1.msra.mxu0 %v1335
    %1433 = vmatprep.subr.mxu0 %v1340
    %1434 = vmatpush1.msra.mxu0 %v1339
    %1435 = vmatprep.subr.mxu0 %v1344
    %1436 = vmatpush1.msra.mxu0 %v1343
    %1437 = vmatprep.subr.mxu0 0.0
    %1438 = vmatpush1.msra.mxu0 0.0
    %1439 = vmatprep.subr.mxu0 0.0
    %1440 = vmatpush1.msra.mxu0 0.0
    %1441 = vmatprep.subr.mxu0 0.0
    %1442 = vmatpush1.msra.mxu0 0.0
    %1443 = vmatprep.subr.mxu0 0.0
    %1444 = vmatpush1.msra.mxu0 0.0
    %1445 = vmatprep.subr.mxu0 0.0
    %1446 = vmatpush1.msra.mxu0 0.0
    %1447 = vmatprep.subr.mxu0 0.0
    %1448 = vmatpush1.msra.mxu0 0.0
    %1449 = vmatprep.subr.mxu0 0.0
    %1450 = vmatpush1.msra.mxu0 0.0
    %1451 = vmatprep.subr.mxu0 0.0
    %1452 = vmatpush1.msra.mxu0 0.0
    %1453 = vmatprep.subr.mxu0 0.0
    %1454 = vmatpush1.msra.mxu0 0.0
    %1455 = vmatprep.subr.mxu0 0.0
    %1456 = vmatpush1.msra.mxu0 0.0
    %1457 = vmatprep.subr.mxu0 0.0
    %1458 = vmatpush1.msra.mxu0 0.0
    %1459 = vmatprep.subr.mxu0 0.0
    %1460 = vmatpush1.msra.mxu0 0.0
    %1461 = vmatprep.subr.mxu0 0.0
    %1462 = vmatpush1.msra.mxu0 0.0
    %1463 = vmatprep.subr.mxu0 0.0
    %1464 = vmatpush1.msra.mxu0 0.0
    %1465 = vmatprep.subr.mxu0 0.0
    %1466 = vmatpush1.msra.mxu0 0.0
    %1467 = vmatprep.subr.mxu0 0.0
    %1468 = vmatpush1.msra.mxu0 0.0
    %1469 = vmatprep.mubr.f32.mxu0 0.0
    %1470 = vmatmul.mubr.f32.gmra.mrb[0].mxu0 %v1403
    %v1471 = vpop.f32.mrb[0].mxu0
    %v1472 = vadd.f32 0.0, %v1471
    %v1473 = vpop.f32.mrb[0].mxu0
    %v1474 = vadd.f32 0.0, %v1473
    %1475 = vdwg.mxu0
    %1476 = vmatprep.subr.mxu0 %v1286
    %1477 = vmatpush1.msra.mxu0 %v1285
    %1478 = vmatprep.subr.mxu0 %v1290
    %1479 = vmatpush1.msra.mxu0 %v1289
    %1480 = vmatprep.subr.mxu0 %v1294
    %1481 = vmatpush1.msra.mxu0 %v1293
    %1482 = vmatprep.subr.mxu0 %v1298
    %1483 = vmatpush1.msra.mxu0 %v1297
    %1484 = vmatprep.subr.mxu0 %v1302
    %1485 = vmatpush1.msra.mxu0 %v1301
    %1486 = vmatprep.subr.mxu0 %v1306
    %1487 = vmatpush1.msra.mxu0 %v1305
    %1488 = vmatprep.subr.mxu0 %v1310
    %1489 = vmatpush1.msra.mxu0 %v1309
    %1490 = vmatprep.subr.mxu0 %v1314
    %1491 = vmatpush1.msra.mxu0 %v1313
    %1492 = vmatprep.subr.mxu0 %v1318
    %1493 = vmatpush1.msra.mxu0 %v1317
    %1494 = vmatprep.subr.mxu0 %v1322
    %1495 = vmatpush1.msra.mxu0 %v1321
    %1496 = vmatprep.subr.mxu0 %v1326
    %1497 = vmatpush1.msra.mxu0 %v1325
    %1498 = vmatprep.subr.mxu0 %v1330
    %1499 = vmatpush1.msra.mxu0 %v1329
    %1500 = vmatprep.subr.mxu0 %v1334
    %1501 = vmatpush1.msra.mxu0 %v1333
    %1502 = vmatprep.subr.mxu0 %v1338
    %1503 = vmatpush1.msra.mxu0 %v1337
    %1504 = vmatprep.subr.mxu0 %v1342
    %1505 = vmatpush1.msra.mxu0 %v1341
    %1506 = vmatprep.subr.mxu0 %v1346
    %1507 = vmatpush1.msra.mxu0 %v1345
    %1508 = vmatprep.subr.mxu0 0.0
    %1509 = vmatpush1.msra.mxu0 0.0
    %1510 = vmatprep.subr.mxu0 0.0
    %1511 = vmatpush1.msra.mxu0 0.0
    %1512 = vmatprep.subr.mxu0 0.0
    %1513 = vmatpush1.msra.mxu0 0.0
    %1514 = vmatprep.subr.mxu0 0.0
    %1515 = vmatpush1.msra.mxu0 0.0
    %1516 = vmatprep.subr.mxu0 0.0
    %1517 = vmatpush1.msra.mxu0 0.0
    %1518 = vmatprep.subr.mxu0 0.0
    %1519 = vmatpush1.msra.mxu0 0.0
    %1520 = vmatprep.subr.mxu0 0.0
    %1521 = vmatpush1.msra.mxu0 0.0
    %1522 = vmatprep.subr.mxu0 0.0
    %1523 = vmatpush1.msra.mxu0 0.0
    %1524 = vmatprep.subr.mxu0 0.0
    %1525 = vmatpush1.msra.mxu0 0.0
    %1526 = vmatprep.subr.mxu0 0.0
    %1527 = vmatpush1.msra.mxu0 0.0
    %1528 = vmatprep.subr.mxu0 0.0
    %1529 = vmatpush1.msra.mxu0 0.0
    %1530 = vmatprep.subr.mxu0 0.0
    %1531 = vmatpush1.msra.mxu0 0.0
    %1532 = vmatprep.subr.mxu0 0.0
    %1533 = vmatpush1.msra.mxu0 0.0
    %1534 = vmatprep.subr.mxu0 0.0
    %1535 = vmatpush1.msra.mxu0 0.0
    %1536 = vmatprep.subr.mxu0 0.0
    %1537 = vmatpush1.msra.mxu0 0.0
    %1538 = vmatprep.subr.mxu0 0.0
    %1539 = vmatpush1.msra.mxu0 0.0
    %1540 = vmatprep.mubr.f32.mxu0 0.0
    %1541 = vmatmul.mubr.f32.gmra.mrb[0].mxu0 %v1403
    %v1542 = vpop.f32.mrb[0].mxu0
    %v1543 = vadd.f32 0.0, %v1542
    %v1544 = vpop.f32.mrb[0].mxu0
    %v1545 = vadd.f32 0.0, %v1544
    %1546 = vdwg.mxu0
    %v1551 = vcombine.low %v1472, %v1474
    %v1552 = vcombine.high %v1472, %v1474
    %v1553 = vcombine.low %v1543, %v1545
    %v1554 = vcombine.high %v1543, %v1545
    %v1556 = vunpack.c.l.s4 1966171168
    %v1557 = vunpack.c.0.s8 %v1556
    %v1558 = vlaneseq
    %v1559 = vshrl.u32 %v1558, 7
    %v1560 = vsub.s32 %v1557, %v1559
    %v1561 = vrot.slane %v1551, %v1560
    %v1563 = vunpack.c.l.s4 1966171168
    %v1564 = vunpack.c.0.s8 %v1563
    %v1565 = vlaneseq
    %v1566 = vshrl.u32 %v1565, 7
    %v1567 = vsub.s32 %v1564, %v1566
    %v1568 = vrot.slane %v1552, %v1567
    %v1570 = vunpack.c.l.s4 1966171168
    %v1571 = vunpack.c.0.s8 %v1570
    %v1572 = vlaneseq
    %v1573 = vshrl.u32 %v1572, 7
    %v1574 = vsub.s32 %v1571, %v1573
    %v1575 = vrot.slane %v1553, %v1574
    %v1577 = vunpack.c.l.s4 1966171168
    %v1578 = vunpack.c.0.s8 %v1577
    %v1579 = vlaneseq
    %v1580 = vshrl.u32 %v1579, 7
    %v1581 = vsub.s32 %v1578, %v1580
    %v1582 = vrot.slane %v1554, %v1581
    %v1583 = vcombine.low %v1561, %v1575
    %v1584 = vcombine.high %v1561, %v1575
    %v1585 = vcombine.low %v1568, %v1582
    %v1586 = vcombine.high %v1568, %v1582
    %v1588 = vunpack.c.l.s4 1966171168
    %v1589 = vunpack.c.0.s8 %v1588
    %v1590 = vlaneseq
    %v1591 = vshrl.u32 %v1590, 7
    %v1592 = vsub.s32 %v1589, %v1591
    %v1593 = vrot.slane %v1583, %v1592
    %v1595 = vunpack.c.l.s4 1966171168
    %v1596 = vunpack.c.0.s8 %v1595
    %v1597 = vlaneseq
    %v1598 = vshrl.u32 %v1597, 7
    %v1599 = vsub.s32 %v1596, %v1598
    %v1600 = vrot.slane %v1585, %v1599
    %v1602 = vunpack.c.l.s4 1966171168
    %v1603 = vunpack.c.0.s8 %v1602
    %v1604 = vlaneseq
    %v1605 = vshrl.u32 %v1604, 7
    %v1606 = vsub.s32 %v1603, %v1605
    %v1607 = vrot.slane %v1584, %v1606
    %v1609 = vunpack.c.l.s4 1966171168
    %v1610 = vunpack.c.0.s8 %v1609
    %v1611 = vlaneseq
    %v1612 = vshrl.u32 %v1611, 7
    %v1613 = vsub.s32 %v1610, %v1612
    %v1614 = vrot.slane %v1586, %v1613
    %v1615 = vcombine.high %v1593, %v1593
    %v1616 = vcombine.high %v1600, %v1600
    %v1617 = vcombine.high %v1607, %v1607
    %v1618 = vcombine.high %v1614, %v1614
    %v1627 = vadd.f32 %v1268, %v1593
    %v1628 = vadd.f32 %v1270, %v1607
    %v1629 = vadd.f32 %v1272, %v1615
    %v1630 = vadd.f32 %v1274, %v1617
    %v1631 = vadd.f32 %v1276, %v1600
    %v1632 = vadd.f32 %v1278, %v1614
    %v1633 = vadd.f32 %v1280, %v1616
    %v1634 = vadd.f32 %v1282, %v1618
    %v1635 = vxor.u32 %v1627, 2147483648
    %v1636 = vxor.u32 %v1628, 2147483648
    %v1637 = vxor.u32 %v1629, 2147483648
    %v1638 = vxor.u32 %v1630, 2147483648
    %v1639 = vxor.u32 %v1631, 2147483648
    %v1640 = vxor.u32 %v1632, 2147483648
    %v1641 = vxor.u32 %v1633, 2147483648
    %v1642 = vxor.u32 %v1634, 2147483648
    %v1643 = vmul.f32 %v1635, 1.442695
    %v1644 = vpow.pop %v1643
    %v1645 = vmul.f32 %v1636, 1.442695
    %v1646 = vpow.pop %v1645
    %v1647 = vmul.f32 %v1637, 1.442695
    %v1648 = vpow.pop %v1647
    %v1649 = vmul.f32 %v1638, 1.442695
    %v1650 = vpow.pop %v1649
    %v1651 = vmul.f32 %v1639, 1.442695
    %v1652 = vpow.pop %v1651
    %v1653 = vmul.f32 %v1640, 1.442695
    %v1654 = vpow.pop %v1653
    %v1655 = vmul.f32 %v1641, 1.442695
    %v1656 = vpow.pop %v1655
    %v1657 = vmul.f32 %v1642, 1.442695
    %v1658 = vpow.pop %v1657
    %v1659 = vadd.f32 %v1644, 1.0
    %v1660 = vadd.f32 %v1646, 1.0
    %v1661 = vadd.f32 %v1648, 1.0
    %v1662 = vadd.f32 %v1650, 1.0
    %v1663 = vadd.f32 %v1652, 1.0
    %v1664 = vadd.f32 %v1654, 1.0
    %v1665 = vadd.f32 %v1656, 1.0
    %v1666 = vadd.f32 %v1658, 1.0
    %v1667 = vrcp.pop %v1659
    %v1668 = vmul.f32 1.0, %v1667
    %v1669 = vrcp.pop %v1660
    %v1670 = vmul.f32 1.0, %v1669
    %v1671 = vrcp.pop %v1661
    %v1672 = vmul.f32 1.0, %v1671
    %v1673 = vrcp.pop %v1662
    %v1674 = vmul.f32 1.0, %v1673
    %v1675 = vrcp.pop %v1663
    %v1676 = vmul.f32 1.0, %v1675
    %v1677 = vrcp.pop %v1664
    %v1678 = vmul.f32 1.0, %v1677
    %v1679 = vrcp.pop %v1665
    %v1680 = vmul.f32 1.0, %v1679
    %v1681 = vrcp.pop %v1666
    %v1682 = vmul.f32 1.0, %v1681
    %v1691 = vrot.slane %v1627, 1
    %v1692 = vrot.slane %v1628, 1
    %v1693 = vrot.slane %v1629, 1
    %v1694 = vrot.slane %v1630, 1
    %v1695 = vrot.slane %v1631, 1
    %v1696 = vrot.slane %v1632, 1
    %v1697 = vrot.slane %v1633, 1
    %v1698 = vrot.slane %v1634, 1
    %v1707 = vxor.u32 %v1691, 2147483648
    %v1708 = vxor.u32 %v1692, 2147483648
    %v1709 = vxor.u32 %v1693, 2147483648
    %v1710 = vxor.u32 %v1694, 2147483648
    %v1711 = vxor.u32 %v1695, 2147483648
    %v1712 = vxor.u32 %v1696, 2147483648
    %v1713 = vxor.u32 %v1697, 2147483648
    %v1714 = vxor.u32 %v1698, 2147483648
    %v1715 = vmul.f32 %v1707, 1.442695
    %v1716 = vpow.pop %v1715
    %v1717 = vmul.f32 %v1708, 1.442695
    %v1718 = vpow.pop %v1717
    %v1719 = vmul.f32 %v1709, 1.442695
    %v1720 = vpow.pop %v1719
    %v1721 = vmul.f32 %v1710, 1.442695
    %v1722 = vpow.pop %v1721
    %v1723 = vmul.f32 %v1711, 1.442695
    %v1724 = vpow.pop %v1723
    %v1725 = vmul.f32 %v1712, 1.442695
    %v1726 = vpow.pop %v1725
    %v1727 = vmul.f32 %v1713, 1.442695
    %v1728 = vpow.pop %v1727
    %v1729 = vmul.f32 %v1714, 1.442695
    %v1730 = vpow.pop %v1729
    %v1731 = vadd.f32 %v1716, 1.0
    %v1732 = vadd.f32 %v1718, 1.0
    %v1733 = vadd.f32 %v1720, 1.0
    %v1734 = vadd.f32 %v1722, 1.0
    %v1735 = vadd.f32 %v1724, 1.0
    %v1736 = vadd.f32 %v1726, 1.0
    %v1737 = vadd.f32 %v1728, 1.0
    %v1738 = vadd.f32 %v1730, 1.0
    %v1739 = vrcp.pop %v1731
    %v1740 = vmul.f32 1.0, %v1739
    %v1741 = vrcp.pop %v1732
    %v1742 = vmul.f32 1.0, %v1741
    %v1743 = vrcp.pop %v1733
    %v1744 = vmul.f32 1.0, %v1743
    %v1745 = vrcp.pop %v1734
    %v1746 = vmul.f32 1.0, %v1745
    %v1747 = vrcp.pop %v1735
    %v1748 = vmul.f32 1.0, %v1747
    %v1749 = vrcp.pop %v1736
    %v1750 = vmul.f32 1.0, %v1749
    %v1751 = vrcp.pop %v1737
    %v1752 = vmul.f32 1.0, %v1751
    %v1753 = vrcp.pop %v1738
    %v1754 = vmul.f32 1.0, %v1753
    %v1755 = vrot.slane %v1627, 2
    %v1756 = vrot.slane %v1628, 2
    %v1757 = vrot.slane %v1629, 2
    %v1758 = vrot.slane %v1630, 2
    %v1759 = vrot.slane %v1631, 2
    %v1760 = vrot.slane %v1632, 2
    %v1761 = vrot.slane %v1633, 2
    %v1762 = vrot.slane %v1634, 2
    %v1771 = vtanh.pop %v1755
    %v1772 = vtanh.pop %v1756
    %v1773 = vtanh.pop %v1757
    %v1774 = vtanh.pop %v1758
    %v1775 = vtanh.pop %v1759
    %v1776 = vtanh.pop %v1760
    %v1777 = vtanh.pop %v1761
    %v1778 = vtanh.pop %v1762
    %v1779 = vrot.slane %v1627, 3
    %v1780 = vrot.slane %v1628, 3
    %v1781 = vrot.slane %v1629, 3
    %v1782 = vrot.slane %v1630, 3
    %v1783 = vrot.slane %v1631, 3
    %v1784 = vrot.slane %v1632, 3
    %v1785 = vrot.slane %v1633, 3
    %v1786 = vrot.slane %v1634, 3
    %v1795 = vxor.u32 %v1779, 2147483648
    %v1796 = vxor.u32 %v1780, 2147483648
    %v1797 = vxor.u32 %v1781, 2147483648
    %v1798 = vxor.u32 %v1782, 2147483648
    %v1799 = vxor.u32 %v1783, 2147483648
    %v1800 = vxor.u32 %v1784, 2147483648
    %v1801 = vxor.u32 %v1785, 2147483648
    %v1802 = vxor.u32 %v1786, 2147483648
    %v1803 = vmul.f32 %v1795, 1.442695
    %v1804 = vpow.pop %v1803
    %v1805 = vmul.f32 %v1796, 1.442695
    %v1806 = vpow.pop %v1805
    %v1807 = vmul.f32 %v1797, 1.442695
    %v1808 = vpow.pop %v1807
    %v1809 = vmul.f32 %v1798, 1.442695
    %v1810 = vpow.pop %v1809
    %v1811 = vmul.f32 %v1799, 1.442695
    %v1812 = vpow.pop %v1811
    %v1813 = vmul.f32 %v1800, 1.442695
    %v1814 = vpow.pop %v1813
    %v1815 = vmul.f32 %v1801, 1.442695
    %v1816 = vpow.pop %v1815
    %v1817 = vmul.f32 %v1802, 1.442695
    %v1818 = vpow.pop %v1817
    %v1819 = vadd.f32 %v1804, 1.0
    %v1820 = vadd.f32 %v1806, 1.0
    %v1821 = vadd.f32 %v1808, 1.0
    %v1822 = vadd.f32 %v1810, 1.0
    %v1823 = vadd.f32 %v1812, 1.0
    %v1824 = vadd.f32 %v1814, 1.0
    %v1825 = vadd.f32 %v1816, 1.0
    %v1826 = vadd.f32 %v1818, 1.0
    %v1827 = vrcp.pop %v1819
    %v1828 = vmul.f32 1.0, %v1827
    %v1829 = vrcp.pop %v1820
    %v1830 = vmul.f32 1.0, %v1829
    %v1831 = vrcp.pop %v1821
    %v1832 = vmul.f32 1.0, %v1831
    %v1833 = vrcp.pop %v1822
    %v1834 = vmul.f32 1.0, %v1833
    %v1835 = vrcp.pop %v1823
    %v1836 = vmul.f32 1.0, %v1835
    %v1837 = vrcp.pop %v1824
    %v1838 = vmul.f32 1.0, %v1837
    %v1839 = vrcp.pop %v1825
    %v1840 = vmul.f32 1.0, %v1839
    %v1841 = vrcp.pop %v1826
    %v1842 = vmul.f32 1.0, %v1841
    %v1843 = vmul.f32 %v1740, %v1235
    %v1844 = vmul.f32 %v1742, %v1236
    %v1845 = vmul.f32 %v1744, %v1237
    %v1846 = vmul.f32 %v1746, %v1238
    %v1847 = vmul.f32 %v1748, %v1239
    %v1848 = vmul.f32 %v1750, %v1240
    %v1849 = vmul.f32 %v1752, %v1241
    %v1850 = vmul.f32 %v1754, %v1242
    %v1851 = vmul.f32 %v1668, %v1771
    %v1852 = vmul.f32 %v1670, %v1772
    %v1853 = vmul.f32 %v1672, %v1773
    %v1854 = vmul.f32 %v1674, %v1774
    %v1855 = vmul.f32 %v1676, %v1775
    %v1856 = vmul.f32 %v1678, %v1776
    %v1857 = vmul.f32 %v1680, %v1777
    %v1858 = vmul.f32 %v1682, %v1778
    %v1859 = vadd.f32 %v1843, %v1851
    %v1860 = vadd.f32 %v1844, %v1852
    %v1861 = vadd.f32 %v1845, %v1853
    %v1862 = vadd.f32 %v1846, %v1854
    %v1863 = vadd.f32 %v1847, %v1855
    %v1864 = vadd.f32 %v1848, %v1856
    %v1865 = vadd.f32 %v1849, %v1857
    %v1866 = vadd.f32 %v1850, %v1858
    %v1867 = vtanh.pop %v1859
    %v1868 = vtanh.pop %v1860
    %v1869 = vtanh.pop %v1861
    %v1870 = vtanh.pop %v1862
    %v1871 = vtanh.pop %v1863
    %v1872 = vtanh.pop %v1864
    %v1873 = vtanh.pop %v1865
    %v1874 = vtanh.pop %v1866
    %v1875 = vmul.f32 %v1828, %v1867
    %v1876 = vmul.f32 %v1830, %v1868
    %v1877 = vmul.f32 %v1832, %v1869
    %v1878 = vmul.f32 %v1834, %v1870
    %v1879 = vmul.f32 %v1836, %v1871
    %v1880 = vmul.f32 %v1838, %v1872
    %v1881 = vmul.f32 %v1840, %v1873
    %v1882 = vmul.f32 %v1842, %v1874
    %1883 = vst [vmem:[#allocation2 + $0x2] sm:$0x1] %v1875
    %1884 = vst [vmem:[#allocation2 + $0xa] sm:$0x1] %v1876
    %1885 = vst [vmem:[#allocation2 + $0x12] sm:$0x1] %v1877
    %1886 = vst [vmem:[#allocation2 + $0x1a] sm:$0x1] %v1878
    %1887 = vst [vmem:[#allocation2 + $0x22] sm:$0x1] %v1879
    %1888 = vst [vmem:[#allocation2 + $0x2a] sm:$0x1] %v1880
    %1889 = vst [vmem:[#allocation2 + $0x32] sm:$0x1] %v1881
    %1890 = vst [vmem:[#allocation2 + $0x3a] sm:$0x1] %v1882
    %s1891 = scalar_lea.vmem %s0, 3
    %v1892 = vld [vmem:[%s1891] ss:$8 sm:$0xf]
    %s1893 = scalar_lea.vmem %s0, 35
    %v1894 = vld [vmem:[%s1893] ss:$8 sm:$0xf]
    %s1895 = scalar_lea.vmem %s0, 67
    %v1896 = vld [vmem:[%s1895] ss:$8 sm:$0xf]
    %s1897 = scalar_lea.vmem %s0, 99
    %v1898 = vld [vmem:[%s1897] ss:$8 sm:$0xf]
    %s1899 = scalar_lea.vmem %s0, 131
    %v1900 = vld [vmem:[%s1899] ss:$8 sm:$0xf]
    %s1901 = scalar_lea.vmem %s0, 163
    %v1902 = vld [vmem:[%s1901] ss:$8 sm:$0xf]
    %s1903 = scalar_lea.vmem %s0, 195
    %v1904 = vld [vmem:[%s1903] ss:$8 sm:$0xf]
    %s1905 = scalar_lea.vmem %s0, 227
    %v1906 = vld [vmem:[%s1905] ss:$8 sm:$0xf]
    %v1907 = vld [vmem:[%s3] sm:$0xff]
    %v1908 = vld [vmem:[%s3 + $0x8] sm:$0xff]
    %v1909 = vld [vmem:[%s3 + $0x10] sm:$0xff]
    %v1910 = vld [vmem:[%s3 + $0x18] sm:$0xff]
    %v1911 = vld [vmem:[%s3 + $0x20] sm:$0xff]
    %v1912 = vld [vmem:[%s3 + $0x28] sm:$0xff]
    %v1913 = vld [vmem:[%s3 + $0x30] sm:$0xff]
    %v1914 = vld [vmem:[%s3 + $0x38] sm:$0xff]
    %v1915 = vld [vmem:[%s3 + $0x40] sm:$0xff]
    %v1916 = vld [vmem:[%s3 + $0x48] sm:$0xff]
    %v1917 = vld [vmem:[%s3 + $0x50] sm:$0xff]
    %v1918 = vld [vmem:[%s3 + $0x58] sm:$0xff]
    %v1919 = vld [vmem:[%s3 + $0x60] sm:$0xff]
    %v1920 = vld [vmem:[%s3 + $0x68] sm:$0xff]
    %v1921 = vld [vmem:[%s3 + $0x70] sm:$0xff]
    %v1922 = vld [vmem:[%s3 + $0x78] sm:$0xff]
    %v1923 = vld [vmem:[%s3 + $0x80] sm:$0xff]
    %v1924 = vld [vmem:[%s3 + $0x88] sm:$0xff]
    %v1925 = vld [vmem:[%s3 + $0x90] sm:$0xff]
    %v1926 = vld [vmem:[%s3 + $0x98] sm:$0xff]
    %v1927 = vld [vmem:[%s3 + $0xa0] sm:$0xff]
    %v1928 = vld [vmem:[%s3 + $0xa8] sm:$0xff]
    %v1929 = vld [vmem:[%s3 + $0xb0] sm:$0xff]
    %v1930 = vld [vmem:[%s3 + $0xb8] sm:$0xff]
    %v1931 = vld [vmem:[%s3 + $0xc0] sm:$0xff]
    %v1932 = vld [vmem:[%s3 + $0xc8] sm:$0xff]
    %v1933 = vld [vmem:[%s3 + $0xd0] sm:$0xff]
    %v1934 = vld [vmem:[%s3 + $0xd8] sm:$0xff]
    %v1935 = vld [vmem:[%s3 + $0xe0] sm:$0xff]
    %v1936 = vld [vmem:[%s3 + $0xe8] sm:$0xff]
    %v1937 = vld [vmem:[%s3 + $0xf0] sm:$0xff]
    %v1938 = vld [vmem:[%s3 + $0xf8] sm:$0xff]
    %v1939 = vld [vmem:[%s3 + $0x100] sm:$0xff]
    %v1940 = vld [vmem:[%s3 + $0x108] sm:$0xff]
    %v1941 = vld [vmem:[%s3 + $0x110] sm:$0xff]
    %v1942 = vld [vmem:[%s3 + $0x118] sm:$0xff]
    %v1943 = vld [vmem:[%s3 + $0x120] sm:$0xff]
    %v1944 = vld [vmem:[%s3 + $0x128] sm:$0xff]
    %v1945 = vld [vmem:[%s3 + $0x130] sm:$0xff]
    %v1946 = vld [vmem:[%s3 + $0x138] sm:$0xff]
    %v1947 = vld [vmem:[%s3 + $0x140] sm:$0xff]
    %v1948 = vld [vmem:[%s3 + $0x148] sm:$0xff]
    %v1949 = vld [vmem:[%s3 + $0x150] sm:$0xff]
    %v1950 = vld [vmem:[%s3 + $0x158] sm:$0xff]
    %v1951 = vld [vmem:[%s3 + $0x160] sm:$0xff]
    %v1952 = vld [vmem:[%s3 + $0x168] sm:$0xff]
    %v1953 = vld [vmem:[%s3 + $0x170] sm:$0xff]
    %v1954 = vld [vmem:[%s3 + $0x178] sm:$0xff]
    %v1955 = vld [vmem:[%s3 + $0x180] sm:$0xff]
    %v1956 = vld [vmem:[%s3 + $0x188] sm:$0xff]
    %v1957 = vld [vmem:[%s3 + $0x190] sm:$0xff]
    %v1958 = vld [vmem:[%s3 + $0x198] sm:$0xff]
    %v1959 = vld [vmem:[%s3 + $0x1a0] sm:$0xff]
    %v1960 = vld [vmem:[%s3 + $0x1a8] sm:$0xff]
    %v1961 = vld [vmem:[%s3 + $0x1b0] sm:$0xff]
    %v1962 = vld [vmem:[%s3 + $0x1b8] sm:$0xff]
    %v1963 = vld [vmem:[%s3 + $0x1c0] sm:$0xff]
    %v1964 = vld [vmem:[%s3 + $0x1c8] sm:$0xff]
    %v1965 = vld [vmem:[%s3 + $0x1d0] sm:$0xff]
    %v1966 = vld [vmem:[%s3 + $0x1d8] sm:$0xff]
    %v1967 = vld [vmem:[%s3 + $0x1e0] sm:$0xff]
    %v1968 = vld [vmem:[%s3 + $0x1e8] sm:$0xff]
    %v1969 = vld [vmem:[%s3 + $0x1f0] sm:$0xff]
    %v1970 = vld [vmem:[%s3 + $0x1f8] sm:$0xff]
    %v1979 = vcombine.low %v1875, %v1876
    %v1980 = vcombine.low %v1877, %v1878
    %v1981 = vcombine.low %v1879, %v1880
    %v1982 = vcombine.low %v1881, %v1882
    %v1984 = vunpack.c.l.s4 1966171168
    %v1985 = vunpack.c.0.s8 %v1984
    %v1986 = vlaneseq
    %v1987 = vshrl.u32 %v1986, 7
    %v1988 = vsub.s32 %v1985, %v1987
    %v1989 = vrot.slane %v1979, %v1988
    %v1991 = vunpack.c.l.s4 1966171168
    %v1992 = vunpack.c.0.s8 %v1991
    %v1993 = vlaneseq
    %v1994 = vshrl.u32 %v1993, 7
    %v1995 = vsub.s32 %v1992, %v1994
    %v1996 = vrot.slane %v1980, %v1995
    %v1998 = vunpack.c.l.s4 1966171168
    %v1999 = vunpack.c.0.s8 %v1998
    %v2000 = vlaneseq
    %v2001 = vshrl.u32 %v2000, 7
    %v2002 = vsub.s32 %v1999, %v2001
    %v2003 = vrot.slane %v1981, %v2002
    %v2005 = vunpack.c.l.s4 1966171168
    %v2006 = vunpack.c.0.s8 %v2005
    %v2007 = vlaneseq
    %v2008 = vshrl.u32 %v2007, 7
    %v2009 = vsub.s32 %v2006, %v2008
    %v2010 = vrot.slane %v1982, %v2009
    %v2011 = vcombine.low %v1989, %v1996
    %v2012 = vcombine.low %v2003, %v2010
    %v2014 = vunpack.c.l.s4 1966171168
    %v2015 = vunpack.c.0.s8 %v2014
    %v2016 = vlaneseq
    %v2017 = vshrl.u32 %v2016, 7
    %v2018 = vsub.s32 %v2015, %v2017
    %v2019 = vrot.slane %v2011, %v2018
    %v2021 = vunpack.c.l.s4 1966171168
    %v2022 = vunpack.c.0.s8 %v2021
    %v2023 = vlaneseq
    %v2024 = vshrl.u32 %v2023, 7
    %v2025 = vsub.s32 %v2022, %v2024
    %v2026 = vrot.slane %v2012, %v2025
    %v2027 = vcombine.low %v2019, %v2026
    %2029 = vmatprep.subr.mxu0 %v1908
    %2030 = vmatpush1.msra.mxu0 %v1907
    %2031 = vmatprep.subr.mxu0 %v1912
    %2032 = vmatpush1.msra.mxu0 %v1911
    %2033 = vmatprep.subr.mxu0 %v1916
    %2034 = vmatpush1.msra.mxu0 %v1915
    %2035 = vmatprep.subr.mxu0 %v1920
    %2036 = vmatpush1.msra.mxu0 %v1919
    %2037 = vmatprep.subr.mxu0 %v1924
    %2038 = vmatpush1.msra.mxu0 %v1923
    %2039 = vmatprep.subr.mxu0 %v1928
    %2040 = vmatpush1.msra.mxu0 %v1927
    %2041 = vmatprep.subr.mxu0 %v1932
    %2042 = vmatpush1.msra.mxu0 %v1931
    %2043 = vmatprep.subr.mxu0 %v1936
    %2044 = vmatpush1.msra.mxu0 %v1935
    %2045 = vmatprep.subr.mxu0 %v1940
    %2046 = vmatpush1.msra.mxu0 %v1939
    %2047 = vmatprep.subr.mxu0 %v1944
    %2048 = vmatpush1.msra.mxu0 %v1943
    %2049 = vmatprep.subr.mxu0 %v1948
    %2050 = vmatpush1.msra.mxu0 %v1947
    %2051 = vmatprep.subr.mxu0 %v1952
    %2052 = vmatpush1.msra.mxu0 %v1951
    %2053 = vmatprep.subr.mxu0 %v1956
    %2054 = vmatpush1.msra.mxu0 %v1955
    %2055 = vmatprep.subr.mxu0 %v1960
    %2056 = vmatpush1.msra.mxu0 %v1959
    %2057 = vmatprep.subr.mxu0 %v1964
    %2058 = vmatpush1.msra.mxu0 %v1963
    %2059 = vmatprep.subr.mxu0 %v1968
    %2060 = vmatpush1.msra.mxu0 %v1967
    %2061 = vmatprep.subr.mxu0 0.0
    %2062 = vmatpush1.msra.mxu0 0.0
    %2063 = vmatprep.subr.mxu0 0.0
    %2064 = vmatpush1.msra.mxu0 0.0
    %2065 = vmatprep.subr.mxu0 0.0
    %2066 = vmatpush1.msra.mxu0 0.0
    %2067 = vmatprep.subr.mxu0 0.0
    %2068 = vmatpush1.msra.mxu0 0.0
    %2069 = vmatprep.subr.mxu0 0.0
    %2070 = vmatpush1.msra.mxu0 0.0
    %2071 = vmatprep.subr.mxu0 0.0
    %2072 = vmatpush1.msra.mxu0 0.0
    %2073 = vmatprep.subr.mxu0 0.0
    %2074 = vmatpush1.msra.mxu0 0.0
    %2075 = vmatprep.subr.mxu0 0.0
    %2076 = vmatpush1.msra.mxu0 0.0
    %2077 = vmatprep.subr.mxu0 0.0
    %2078 = vmatpush1.msra.mxu0 0.0
    %2079 = vmatprep.subr.mxu0 0.0
    %2080 = vmatpush1.msra.mxu0 0.0
    %2081 = vmatprep.subr.mxu0 0.0
    %2082 = vmatpush1.msra.mxu0 0.0
    %2083 = vmatprep.subr.mxu0 0.0
    %2084 = vmatpush1.msra.mxu0 0.0
    %2085 = vmatprep.subr.mxu0 0.0
    %2086 = vmatpush1.msra.mxu0 0.0
    %2087 = vmatprep.subr.mxu0 0.0
    %2088 = vmatpush1.msra.mxu0 0.0
    %2089 = vmatprep.subr.mxu0 0.0
    %2090 = vmatpush1.msra.mxu0 0.0
    %2091 = vmatprep.subr.mxu0 0.0
    %2092 = vmatpush1.msra.mxu0 0.0
    %2093 = vmatprep.mubr.f32.mxu0 0.0
    %2094 = vmatmul.mubr.f32.gmra.mrb[0].mxu0 %v2027
    %v2095 = vpop.f32.mrb[0].mxu0
    %v2096 = vadd.f32 0.0, %v2095
    %v2097 = vpop.f32.mrb[0].mxu0
    %v2098 = vadd.f32 0.0, %v2097
    %2099 = vdwg.mxu0
    %2100 = vmatprep.subr.mxu0 %v1910
    %2101 = vmatpush1.msra.mxu0 %v1909
    %2102 = vmatprep.subr.mxu0 %v1914
    %2103 = vmatpush1.msra.mxu0 %v1913
    %2104 = vmatprep.subr.mxu0 %v1918
    %2105 = vmatpush1.msra.mxu0 %v1917
    %2106 = vmatprep.subr.mxu0 %v1922
    %2107 = vmatpush1.msra.mxu0 %v1921
    %2108 = vmatprep.subr.mxu0 %v1926
    %2109 = vmatpush1.msra.mxu0 %v1925
    %2110 = vmatprep.subr.mxu0 %v1930
    %2111 = vmatpush1.msra.mxu0 %v1929
    %2112 = vmatprep.subr.mxu0 %v1934
    %2113 = vmatpush1.msra.mxu0 %v1933
    %2114 = vmatprep.subr.mxu0 %v1938
    %2115 = vmatpush1.msra.mxu0 %v1937
    %2116 = vmatprep.subr.mxu0 %v1942
    %2117 = vmatpush1.msra.mxu0 %v1941
    %2118 = vmatprep.subr.mxu0 %v1946
    %2119 = vmatpush1.msra.mxu0 %v1945
    %2120 = vmatprep.subr.mxu0 %v1950
    %2121 = vmatpush1.msra.mxu0 %v1949
    %2122 = vmatprep.subr.mxu0 %v1954
    %2123 = vmatpush1.msra.mxu0 %v1953
    %2124 = vmatprep.subr.mxu0 %v1958
    %2125 = vmatpush1.msra.mxu0 %v1957
    %2126 = vmatprep.subr.mxu0 %v1962
    %2127 = vmatpush1.msra.mxu0 %v1961
    %2128 = vmatprep.subr.mxu0 %v1966
    %2129 = vmatpush1.msra.mxu0 %v1965
    %2130 = vmatprep.subr.mxu0 %v1970
    %2131 = vmatpush1.msra.mxu0 %v1969
    %2132 = vmatprep.subr.mxu0 0.0
    %2133 = vmatpush1.msra.mxu0 0.0
    %2134 = vmatprep.subr.mxu0 0.0
    %2135 = vmatpush1.msra.mxu0 0.0
    %2136 = vmatprep.subr.mxu0 0.0
    %2137 = vmatpush1.msra.mxu0 0.0
    %2138 = vmatprep.subr.mxu0 0.0
    %2139 = vmatpush1.msra.mxu0 0.0
    %2140 = vmatprep.subr.mxu0 0.0
    %2141 = vmatpush1.msra.mxu0 0.0
    %2142 = vmatprep.subr.mxu0 0.0
    %2143 = vmatpush1.msra.mxu0 0.0
    %2144 = vmatprep.subr.mxu0 0.0
    %2145 = vmatpush1.msra.mxu0 0.0
    %2146 = vmatprep.subr.mxu0 0.0
    %2147 = vmatpush1.msra.mxu0 0.0
    %2148 = vmatprep.subr.mxu0 0.0
    %2149 = vmatpush1.msra.mxu0 0.0
    %2150 = vmatprep.subr.mxu0 0.0
    %2151 = vmatpush1.msra.mxu0 0.0
    %2152 = vmatprep.subr.mxu0 0.0
    %2153 = vmatpush1.msra.mxu0 0.0
    %2154 = vmatprep.subr.mxu0 0.0
    %2155 = vmatpush1.msra.mxu0 0.0
    %2156 = vmatprep.subr.mxu0 0.0
    %2157 = vmatpush1.msra.mxu0 0.0
    %2158 = vmatprep.subr.mxu0 0.0
    %2159 = vmatpush1.msra.mxu0 0.0
    %2160 = vmatprep.subr.mxu0 0.0
    %2161 = vmatpush1.msra.mxu0 0.0
    %2162 = vmatprep.subr.mxu0 0.0
    %2163 = vmatpush1.msra.mxu0 0.0
    %2164 = vmatprep.mubr.f32.mxu0 0.0
    %2165 = vmatmul.mubr.f32.gmra.mrb[0].mxu0 %v2027
    %v2166 = vpop.f32.mrb[0].mxu0
    %v2167 = vadd.f32 0.0, %v2166
    %v2168 = vpop.f32.mrb[0].mxu0
    %v2169 = vadd.f32 0.0, %v2168
    %2170 = vdwg.mxu0
    %v2175 = vcombine.low %v2096, %v2098
    %v2176 = vcombine.high %v2096, %v2098
    %v2177 = vcombine.low %v2167, %v2169
    %v2178 = vcombine.high %v2167, %v2169
    %v2180 = vunpack.c.l.s4 1966171168
    %v2181 = vunpack.c.0.s8 %v2180
    %v2182 = vlaneseq
    %v2183 = vshrl.u32 %v2182, 7
    %v2184 = vsub.s32 %v2181, %v2183
    %v2185 = vrot.slane %v2175, %v2184
    %v2187 = vunpack.c.l.s4 1966171168
    %v2188 = vunpack.c.0.s8 %v2187
    %v2189 = vlaneseq
    %v2190 = vshrl.u32 %v2189, 7
    %v2191 = vsub.s32 %v2188, %v2190
    %v2192 = vrot.slane %v2176, %v2191
    %v2194 = vunpack.c.l.s4 1966171168
    %v2195 = vunpack.c.0.s8 %v2194
    %v2196 = vlaneseq
    %v2197 = vshrl.u32 %v2196, 7
    %v2198 = vsub.s32 %v2195, %v2197
    %v2199 = vrot.slane %v2177, %v2198
    %v2201 = vunpack.c.l.s4 1966171168
    %v2202 = vunpack.c.0.s8 %v2201
    %v2203 = vlaneseq
    %v2204 = vshrl.u32 %v2203, 7
    %v2205 = vsub.s32 %v2202, %v2204
    %v2206 = vrot.slane %v2178, %v2205
    %v2207 = vcombine.low %v2185, %v2199
    %v2208 = vcombine.high %v2185, %v2199
    %v2209 = vcombine.low %v2192, %v2206
    %v2210 = vcombine.high %v2192, %v2206
    %v2212 = vunpack.c.l.s4 1966171168
    %v2213 = vunpack.c.0.s8 %v2212
    %v2214 = vlaneseq
    %v2215 = vshrl.u32 %v2214, 7
    %v2216 = vsub.s32 %v2213, %v2215
    %v2217 = vrot.slane %v2207, %v2216
    %v2219 = vunpack.c.l.s4 1966171168
    %v2220 = vunpack.c.0.s8 %v2219
    %v2221 = vlaneseq
    %v2222 = vshrl.u32 %v2221, 7
    %v2223 = vsub.s32 %v2220, %v2222
    %v2224 = vrot.slane %v2209, %v2223
    %v2226 = vunpack.c.l.s4 1966171168
    %v2227 = vunpack.c.0.s8 %v2226
    %v2228 = vlaneseq
    %v2229 = vshrl.u32 %v2228, 7
    %v2230 = vsub.s32 %v2227, %v2229
    %v2231 = vrot.slane %v2208, %v2230
    %v2233 = vunpack.c.l.s4 1966171168
    %v2234 = vunpack.c.0.s8 %v2233
    %v2235 = vlaneseq
    %v2236 = vshrl.u32 %v2235, 7
    %v2237 = vsub.s32 %v2234, %v2236
    %v2238 = vrot.slane %v2210, %v2237
    %v2239 = vcombine.high %v2217, %v2217
    %v2240 = vcombine.high %v2224, %v2224
    %v2241 = vcombine.high %v2231, %v2231
    %v2242 = vcombine.high %v2238, %v2238
    %v2251 = vadd.f32 %v1892, %v2217
    %v2252 = vadd.f32 %v1894, %v2231
    %v2253 = vadd.f32 %v1896, %v2239
    %v2254 = vadd.f32 %v1898, %v2241
    %v2255 = vadd.f32 %v1900, %v2224
    %v2256 = vadd.f32 %v1902, %v2238
    %v2257 = vadd.f32 %v1904, %v2240
    %v2258 = vadd.f32 %v1906, %v2242
    %v2259 = vxor.u32 %v2251, 2147483648
    %v2260 = vxor.u32 %v2252, 2147483648
    %v2261 = vxor.u32 %v2253, 2147483648
    %v2262 = vxor.u32 %v2254, 2147483648
    %v2263 = vxor.u32 %v2255, 2147483648
    %v2264 = vxor.u32 %v2256, 2147483648
    %v2265 = vxor.u32 %v2257, 2147483648
    %v2266 = vxor.u32 %v2258, 2147483648
    %v2267 = vmul.f32 %v2259, 1.442695
    %v2268 = vpow.pop %v2267
    %v2269 = vmul.f32 %v2260, 1.442695
    %v2270 = vpow.pop %v2269
    %v2271 = vmul.f32 %v2261, 1.442695
    %v2272 = vpow.pop %v2271
    %v2273 = vmul.f32 %v2262, 1.442695
    %v2274 = vpow.pop %v2273
    %v2275 = vmul.f32 %v2263, 1.442695
    %v2276 = vpow.pop %v2275
    %v2277 = vmul.f32 %v2264, 1.442695
    %v2278 = vpow.pop %v2277
    %v2279 = vmul.f32 %v2265, 1.442695
    %v2280 = vpow.pop %v2279
    %v2281 = vmul.f32 %v2266, 1.442695
    %v2282 = vpow.pop %v2281
    %v2283 = vadd.f32 %v2268, 1.0
    %v2284 = vadd.f32 %v2270, 1.0
    %v2285 = vadd.f32 %v2272, 1.0
    %v2286 = vadd.f32 %v2274, 1.0
    %v2287 = vadd.f32 %v2276, 1.0
    %v2288 = vadd.f32 %v2278, 1.0
    %v2289 = vadd.f32 %v2280, 1.0
    %v2290 = vadd.f32 %v2282, 1.0
    %v2291 = vrcp.pop %v2283
    %v2292 = vmul.f32 1.0, %v2291
    %v2293 = vrcp.pop %v2284
    %v2294 = vmul.f32 1.0, %v2293
    %v2295 = vrcp.pop %v2285
    %v2296 = vmul.f32 1.0, %v2295
    %v2297 = vrcp.pop %v2286
    %v2298 = vmul.f32 1.0, %v2297
    %v2299 = vrcp.pop %v2287
    %v2300 = vmul.f32 1.0, %v2299
    %v2301 = vrcp.pop %v2288
    %v2302 = vmul.f32 1.0, %v2301
    %v2303 = vrcp.pop %v2289
    %v2304 = vmul.f32 1.0, %v2303
    %v2305 = vrcp.pop %v2290
    %v2306 = vmul.f32 1.0, %v2305
    %v2315 = vrot.slane %v2251, 1
    %v2316 = vrot.slane %v2252, 1
    %v2317 = vrot.slane %v2253, 1
    %v2318 = vrot.slane %v2254, 1
    %v2319 = vrot.slane %v2255, 1
    %v2320 = vrot.slane %v2256, 1
    %v2321 = vrot.slane %v2257, 1
    %v2322 = vrot.slane %v2258, 1
    %v2331 = vxor.u32 %v2315, 2147483648
    %v2332 = vxor.u32 %v2316, 2147483648
    %v2333 = vxor.u32 %v2317, 2147483648
    %v2334 = vxor.u32 %v2318, 2147483648
    %v2335 = vxor.u32 %v2319, 2147483648
    %v2336 = vxor.u32 %v2320, 2147483648
    %v2337 = vxor.u32 %v2321, 2147483648
    %v2338 = vxor.u32 %v2322, 2147483648
    %v2339 = vmul.f32 %v2331, 1.442695
    %v2340 = vpow.pop %v2339
    %v2341 = vmul.f32 %v2332, 1.442695
    %v2342 = vpow.pop %v2341
    %v2343 = vmul.f32 %v2333, 1.442695
    %v2344 = vpow.pop %v2343
    %v2345 = vmul.f32 %v2334, 1.442695
    %v2346 = vpow.pop %v2345
    %v2347 = vmul.f32 %v2335, 1.442695
    %v2348 = vpow.pop %v2347
    %v2349 = vmul.f32 %v2336, 1.442695
    %v2350 = vpow.pop %v2349
    %v2351 = vmul.f32 %v2337, 1.442695
    %v2352 = vpow.pop %v2351
    %v2353 = vmul.f32 %v2338, 1.442695
    %v2354 = vpow.pop %v2353
    %v2355 = vadd.f32 %v2340, 1.0
    %v2356 = vadd.f32 %v2342, 1.0
    %v2357 = vadd.f32 %v2344, 1.0
    %v2358 = vadd.f32 %v2346, 1.0
    %v2359 = vadd.f32 %v2348, 1.0
    %v2360 = vadd.f32 %v2350, 1.0
    %v2361 = vadd.f32 %v2352, 1.0
    %v2362 = vadd.f32 %v2354, 1.0
    %v2363 = vrcp.pop %v2355
    %v2364 = vmul.f32 1.0, %v2363
    %v2365 = vrcp.pop %v2356
    %v2366 = vmul.f32 1.0, %v2365
    %v2367 = vrcp.pop %v2357
    %v2368 = vmul.f32 1.0, %v2367
    %v2369 = vrcp.pop %v2358
    %v2370 = vmul.f32 1.0, %v2369
    %v2371 = vrcp.pop %v2359
    %v2372 = vmul.f32 1.0, %v2371
    %v2373 = vrcp.pop %v2360
    %v2374 = vmul.f32 1.0, %v2373
    %v2375 = vrcp.pop %v2361
    %v2376 = vmul.f32 1.0, %v2375
    %v2377 = vrcp.pop %v2362
    %v2378 = vmul.f32 1.0, %v2377
    %v2379 = vrot.slane %v2251, 2
    %v2380 = vrot.slane %v2252, 2
    %v2381 = vrot.slane %v2253, 2
    %v2382 = vrot.slane %v2254, 2
    %v2383 = vrot.slane %v2255, 2
    %v2384 = vrot.slane %v2256, 2
    %v2385 = vrot.slane %v2257, 2
    %v2386 = vrot.slane %v2258, 2
    %v2395 = vtanh.pop %v2379
    %v2396 = vtanh.pop %v2380
    %v2397 = vtanh.pop %v2381
    %v2398 = vtanh.pop %v2382
    %v2399 = vtanh.pop %v2383
    %v2400 = vtanh.pop %v2384
    %v2401 = vtanh.pop %v2385
    %v2402 = vtanh.pop %v2386
    %v2403 = vrot.slane %v2251, 3
    %v2404 = vrot.slane %v2252, 3
    %v2405 = vrot.slane %v2253, 3
    %v2406 = vrot.slane %v2254, 3
    %v2407 = vrot.slane %v2255, 3
    %v2408 = vrot.slane %v2256, 3
    %v2409 = vrot.slane %v2257, 3
    %v2410 = vrot.slane %v2258, 3
    %v2419 = vxor.u32 %v2403, 2147483648
    %v2420 = vxor.u32 %v2404, 2147483648
    %v2421 = vxor.u32 %v2405, 2147483648
    %v2422 = vxor.u32 %v2406, 2147483648
    %v2423 = vxor.u32 %v2407, 2147483648
    %v2424 = vxor.u32 %v2408, 2147483648
    %v2425 = vxor.u32 %v2409, 2147483648
    %v2426 = vxor.u32 %v2410, 2147483648
    %v2427 = vmul.f32 %v2419, 1.442695
    %v2428 = vpow.pop %v2427
    %v2429 = vmul.f32 %v2420, 1.442695
    %v2430 = vpow.pop %v2429
    %v2431 = vmul.f32 %v2421, 1.442695
    %v2432 = vpow.pop %v2431
    %v2433 = vmul.f32 %v2422, 1.442695
    %v2434 = vpow.pop %v2433
    %v2435 = vmul.f32 %v2423, 1.442695
    %v2436 = vpow.pop %v2435
    %v2437 = vmul.f32 %v2424, 1.442695
    %v2438 = vpow.pop %v2437
    %v2439 = vmul.f32 %v2425, 1.442695
    %v2440 = vpow.pop %v2439
    %v2441 = vmul.f32 %v2426, 1.442695
    %v2442 = vpow.pop %v2441
    %v2443 = vadd.f32 %v2428, 1.0
    %v2444 = vadd.f32 %v2430, 1.0
    %v2445 = vadd.f32 %v2432, 1.0
    %v2446 = vadd.f32 %v2434, 1.0
    %v2447 = vadd.f32 %v2436, 1.0
    %v2448 = vadd.f32 %v2438, 1.0
    %v2449 = vadd.f32 %v2440, 1.0
    %v2450 = vadd.f32 %v2442, 1.0
    %v2451 = vrcp.pop %v2443
    %v2452 = vmul.f32 1.0, %v2451
    %v2453 = vrcp.pop %v2444
    %v2454 = vmul.f32 1.0, %v2453
    %v2455 = vrcp.pop %v2445
    %v2456 = vmul.f32 1.0, %v2455
    %v2457 = vrcp.pop %v2446
    %v2458 = vmul.f32 1.0, %v2457
    %v2459 = vrcp.pop %v2447
    %v2460 = vmul.f32 1.0, %v2459
    %v2461 = vrcp.pop %v2448
    %v2462 = vmul.f32 1.0, %v2461
    %v2463 = vrcp.pop %v2449
    %v2464 = vmul.f32 1.0, %v2463
    %v2465 = vrcp.pop %v2450
    %v2466 = vmul.f32 1.0, %v2465
    %v2467 = vmul.f32 %v2364, %v1859
    %v2468 = vmul.f32 %v2366, %v1860
    %v2469 = vmul.f32 %v2368, %v1861
    %v2470 = vmul.f32 %v2370, %v1862
    %v2471 = vmul.f32 %v2372, %v1863
    %v2472 = vmul.f32 %v2374, %v1864
    %v2473 = vmul.f32 %v2376, %v1865
    %v2474 = vmul.f32 %v2378, %v1866
    %v2475 = vmul.f32 %v2292, %v2395
    %v2476 = vmul.f32 %v2294, %v2396
    %v2477 = vmul.f32 %v2296, %v2397
    %v2478 = vmul.f32 %v2298, %v2398
    %v2479 = vmul.f32 %v2300, %v2399
    %v2480 = vmul.f32 %v2302, %v2400
    %v2481 = vmul.f32 %v2304, %v2401
    %v2482 = vmul.f32 %v2306, %v2402
    %v2483 = vadd.f32 %v2467, %v2475
    %v2484 = vadd.f32 %v2468, %v2476
    %v2485 = vadd.f32 %v2469, %v2477
    %v2486 = vadd.f32 %v2470, %v2478
    %v2487 = vadd.f32 %v2471, %v2479
    %v2488 = vadd.f32 %v2472, %v2480
    %v2489 = vadd.f32 %v2473, %v2481
    %v2490 = vadd.f32 %v2474, %v2482
    %v2491 = vtanh.pop %v2483
    %v2492 = vtanh.pop %v2484
    %v2493 = vtanh.pop %v2485
    %v2494 = vtanh.pop %v2486
    %v2495 = vtanh.pop %v2487
    %v2496 = vtanh.pop %v2488
    %v2497 = vtanh.pop %v2489
    %v2498 = vtanh.pop %v2490
    %v2499 = vmul.f32 %v2452, %v2491
    %v2500 = vmul.f32 %v2454, %v2492
    %v2501 = vmul.f32 %v2456, %v2493
    %v2502 = vmul.f32 %v2458, %v2494
    %v2503 = vmul.f32 %v2460, %v2495
    %v2504 = vmul.f32 %v2462, %v2496
    %v2505 = vmul.f32 %v2464, %v2497
    %v2506 = vmul.f32 %v2466, %v2498
    %2507 = vst [vmem:[#allocation2 + $0x3] sm:$0x1] %v2499
    %2508 = vst [vmem:[#allocation2 + $0xb] sm:$0x1] %v2500
    %2509 = vst [vmem:[#allocation2 + $0x13] sm:$0x1] %v2501
    %2510 = vst [vmem:[#allocation2 + $0x1b] sm:$0x1] %v2502
    %2511 = vst [vmem:[#allocation2 + $0x23] sm:$0x1] %v2503
    %2512 = vst [vmem:[#allocation2 + $0x2b] sm:$0x1] %v2504
    %2513 = vst [vmem:[#allocation2 + $0x33] sm:$0x1] %v2505
    %2514 = vst [vmem:[#allocation2 + $0x3b] sm:$0x1] %v2506
    %s2515 = scalar_lea.vmem %s0, 4
    %v2516 = vld [vmem:[%s2515] ss:$8 sm:$0xf]
    %s2517 = scalar_lea.vmem %s0, 36
    %v2518 = vld [vmem:[%s2517] ss:$8 sm:$0xf]
    %s2519 = scalar_lea.vmem %s0, 68
    %v2520 = vld [vmem:[%s2519] ss:$8 sm:$0xf]
    %s2521 = scalar_lea.vmem %s0, 100
    %v2522 = vld [vmem:[%s2521] ss:$8 sm:$0xf]
    %s2523 = scalar_lea.vmem %s0, 132
    %v2524 = vld [vmem:[%s2523] ss:$8 sm:$0xf]
    %s2525 = scalar_lea.vmem %s0, 164
    %v2526 = vld [vmem:[%s2525] ss:$8 sm:$0xf]
    %s2527 = scalar_lea.vmem %s0, 196
    %v2528 = vld [vmem:[%s2527] ss:$8 sm:$0xf]
    %s2529 = scalar_lea.vmem %s0, 228
    %v2530 = vld [vmem:[%s2529] ss:$8 sm:$0xf]
    %v2531 = vld [vmem:[%s3] sm:$0xff]
    %v2532 = vld [vmem:[%s3 + $0x8] sm:$0xff]
    %v2533 = vld [vmem:[%s3 + $0x10] sm:$0xff]
    %v2534 = vld [vmem:[%s3 + $0x18] sm:$0xff]
    %v2535 = vld [vmem:[%s3 + $0x20] sm:$0xff]
    %v2536 = vld [vmem:[%s3 + $0x28] sm:$0xff]
    %v2537 = vld [vmem:[%s3 + $0x30] sm:$0xff]
    %v2538 = vld [vmem:[%s3 + $0x38] sm:$0xff]
    %v2539 = vld [vmem:[%s3 + $0x40] sm:$0xff]
    %v2540 = vld [vmem:[%s3 + $0x48] sm:$0xff]
    %v2541 = vld [vmem:[%s3 + $0x50] sm:$0xff]
    %v2542 = vld [vmem:[%s3 + $0x58] sm:$0xff]
    %v2543 = vld [vmem:[%s3 + $0x60] sm:$0xff]
    %v2544 = vld [vmem:[%s3 + $0x68] sm:$0xff]
    %v2545 = vld [vmem:[%s3 + $0x70] sm:$0xff]
    %v2546 = vld [vmem:[%s3 + $0x78] sm:$0xff]
    %v2547 = vld [vmem:[%s3 + $0x80] sm:$0xff]
    %v2548 = vld [vmem:[%s3 + $0x88] sm:$0xff]
    %v2549 = vld [vmem:[%s3 + $0x90] sm:$0xff]
    %v2550 = vld [vmem:[%s3 + $0x98] sm:$0xff]
    %v2551 = vld [vmem:[%s3 + $0xa0] sm:$0xff]
    %v2552 = vld [vmem:[%s3 + $0xa8] sm:$0xff]
    %v2553 = vld [vmem:[%s3 + $0xb0] sm:$0xff]
    %v2554 = vld [vmem:[%s3 + $0xb8] sm:$0xff]
    %v2555 = vld [vmem:[%s3 + $0xc0] sm:$0xff]
    %v2556 = vld [vmem:[%s3 + $0xc8] sm:$0xff]
    %v2557 = vld [vmem:[%s3 + $0xd0] sm:$0xff]
    %v2558 = vld [vmem:[%s3 + $0xd8] sm:$0xff]
    %v2559 = vld [vmem:[%s3 + $0xe0] sm:$0xff]
    %v2560 = vld [vmem:[%s3 + $0xe8] sm:$0xff]
    %v2561 = vld [vmem:[%s3 + $0xf0] sm:$0xff]
    %v2562 = vld [vmem:[%s3 + $0xf8] sm:$0xff]
    %v2563 = vld [vmem:[%s3 + $0x100] sm:$0xff]
    %v2564 = vld [vmem:[%s3 + $0x108] sm:$0xff]
    %v2565 = vld [vmem:[%s3 + $0x110] sm:$0xff]
    %v2566 = vld [vmem:[%s3 + $0x118] sm:$0xff]
    %v2567 = vld [vmem:[%s3 + $0x120] sm:$0xff]
    %v2568 = vld [vmem:[%s3 + $0x128] sm:$0xff]
    %v2569 = vld [vmem:[%s3 + $0x130] sm:$0xff]
    %v2570 = vld [vmem:[%s3 + $0x138] sm:$0xff]
    %v2571 = vld [vmem:[%s3 + $0x140] sm:$0xff]
    %v2572 = vld [vmem:[%s3 + $0x148] sm:$0xff]
    %v2573 = vld [vmem:[%s3 + $0x150] sm:$0xff]
    %v2574 = vld [vmem:[%s3 + $0x158] sm:$0xff]
    %v2575 = vld [vmem:[%s3 + $0x160] sm:$0xff]
    %v2576 = vld [vmem:[%s3 + $0x168] sm:$0xff]
    %v2577 = vld [vmem:[%s3 + $0x170] sm:$0xff]
    %v2578 = vld [vmem:[%s3 + $0x178] sm:$0xff]
    %v2579 = vld [vmem:[%s3 + $0x180] sm:$0xff]
    %v2580 = vld [vmem:[%s3 + $0x188] sm:$0xff]
    %v2581 = vld [vmem:[%s3 + $0x190] sm:$0xff]
    %v2582 = vld [vmem:[%s3 + $0x198] sm:$0xff]
    %v2583 = vld [vmem:[%s3 + $0x1a0] sm:$0xff]
    %v2584 = vld [vmem:[%s3 + $0x1a8] sm:$0xff]
    %v2585 = vld [vmem:[%s3 + $0x1b0] sm:$0xff]
    %v2586 = vld [vmem:[%s3 + $0x1b8] sm:$0xff]
    %v2587 = vld [vmem:[%s3 + $0x1c0] sm:$0xff]
    %v2588 = vld [vmem:[%s3 + $0x1c8] sm:$0xff]
    %v2589 = vld [vmem:[%s3 + $0x1d0] sm:$0xff]
    %v2590 = vld [vmem:[%s3 + $0x1d8] sm:$0xff]
    %v2591 = vld [vmem:[%s3 + $0x1e0] sm:$0xff]
    %v2592 = vld [vmem:[%s3 + $0x1e8] sm:$0xff]
    %v2593 = vld [vmem:[%s3 + $0x1f0] sm:$0xff]
    %v2594 = vld [vmem:[%s3 + $0x1f8] sm:$0xff]
    %v2603 = vcombine.low %v2499, %v2500
    %v2604 = vcombine.low %v2501, %v2502
    %v2605 = vcombine.low %v2503, %v2504
    %v2606 = vcombine.low %v2505, %v2506
    %v2608 = vunpack.c.l.s4 1966171168
    %v2609 = vunpack.c.0.s8 %v2608
    %v2610 = vlaneseq
    %v2611 = vshrl.u32 %v2610, 7
    %v2612 = vsub.s32 %v2609, %v2611
    %v2613 = vrot.slane %v2603, %v2612
    %v2615 = vunpack.c.l.s4 1966171168
    %v2616 = vunpack.c.0.s8 %v2615
    %v2617 = vlaneseq
    %v2618 = vshrl.u32 %v2617, 7
    %v2619 = vsub.s32 %v2616, %v2618
    %v2620 = vrot.slane %v2604, %v2619
    %v2622 = vunpack.c.l.s4 1966171168
    %v2623 = vunpack.c.0.s8 %v2622
    %v2624 = vlaneseq
    %v2625 = vshrl.u32 %v2624, 7
    %v2626 = vsub.s32 %v2623, %v2625
    %v2627 = vrot.slane %v2605, %v2626
    %v2629 = vunpack.c.l.s4 1966171168
    %v2630 = vunpack.c.0.s8 %v2629
    %v2631 = vlaneseq
    %v2632 = vshrl.u32 %v2631, 7
    %v2633 = vsub.s32 %v2630, %v2632
    %v2634 = vrot.slane %v2606, %v2633
    %v2635 = vcombine.low %v2613, %v2620
    %v2636 = vcombine.low %v2627, %v2634
    %v2638 = vunpack.c.l.s4 1966171168
    %v2639 = vunpack.c.0.s8 %v2638
    %v2640 = vlaneseq
    %v2641 = vshrl.u32 %v2640, 7
    %v2642 = vsub.s32 %v2639, %v2641
    %v2643 = vrot.slane %v2635, %v2642
    %v2645 = vunpack.c.l.s4 1966171168
    %v2646 = vunpack.c.0.s8 %v2645
    %v2647 = vlaneseq
    %v2648 = vshrl.u32 %v2647, 7
    %v2649 = vsub.s32 %v2646, %v2648
    %v2650 = vrot.slane %v2636, %v2649
    %v2651 = vcombine.low %v2643, %v2650
    %2653 = vmatprep.subr.mxu0 %v2532
    %2654 = vmatpush1.msra.mxu0 %v2531
    %2655 = vmatprep.subr.mxu0 %v2536
    %2656 = vmatpush1.msra.mxu0 %v2535
    %2657 = vmatprep.subr.mxu0 %v2540
    %2658 = vmatpush1.msra.mxu0 %v2539
    %2659 = vmatprep.subr.mxu0 %v2544
    %2660 = vmatpush1.msra.mxu0 %v2543
    %2661 = vmatprep.subr.mxu0 %v2548
    %2662 = vmatpush1.msra.mxu0 %v2547
    %2663 = vmatprep.subr.mxu0 %v2552
    %2664 = vmatpush1.msra.mxu0 %v2551
    %2665 = vmatprep.subr.mxu0 %v2556
    %2666 = vmatpush1.msra.mxu0 %v2555
    %2667 = vmatprep.subr.mxu0 %v2560
    %2668 = vmatpush1.msra.mxu0 %v2559
    %2669 = vmatprep.subr.mxu0 %v2564
    %2670 = vmatpush1.msra.mxu0 %v2563
    %2671 = vmatprep.subr.mxu0 %v2568
    %2672 = vmatpush1.msra.mxu0 %v2567
    %2673 = vmatprep.subr.mxu0 %v2572
    %2674 = vmatpush1.msra.mxu0 %v2571
    %2675 = vmatprep.subr.mxu0 %v2576
    %2676 = vmatpush1.msra.mxu0 %v2575
    %2677 = vmatprep.subr.mxu0 %v2580
    %2678 = vmatpush1.msra.mxu0 %v2579
    %2679 = vmatprep.subr.mxu0 %v2584
    %2680 = vmatpush1.msra.mxu0 %v2583
    %2681 = vmatprep.subr.mxu0 %v2588
    %2682 = vmatpush1.msra.mxu0 %v2587
    %2683 = vmatprep.subr.mxu0 %v2592
    %2684 = vmatpush1.msra.mxu0 %v2591
    %2685 = vmatprep.subr.mxu0 0.0
    %2686 = vmatpush1.msra.mxu0 0.0
    %2687 = vmatprep.subr.mxu0 0.0
    %2688 = vmatpush1.msra.mxu0 0.0
    %2689 = vmatprep.subr.mxu0 0.0
    %2690 = vmatpush1.msra.mxu0 0.0
    %2691 = vmatprep.subr.mxu0 0.0
    %2692 = vmatpush1.msra.mxu0 0.0
    %2693 = vmatprep.subr.mxu0 0.0
    %2694 = vmatpush1.msra.mxu0 0.0
    %2695 = vmatprep.subr.mxu0 0.0
    %2696 = vmatpush1.msra.mxu0 0.0
    %2697 = vmatprep.subr.mxu0 0.0
    %2698 = vmatpush1.msra.mxu0 0.0
    %2699 = vmatprep.subr.mxu0 0.0
    %2700 = vmatpush1.msra.mxu0 0.0
    %2701 = vmatprep.subr.mxu0 0.0
    %2702 = vmatpush1.msra.mxu0 0.0
    %2703 = vmatprep.subr.mxu0 0.0
    %2704 = vmatpush1.msra.mxu0 0.0
    %2705 = vmatprep.subr.mxu0 0.0
    %2706 = vmatpush1.msra.mxu0 0.0
    %2707 = vmatprep.subr.mxu0 0.0
    %2708 = vmatpush1.msra.mxu0 0.0
    %2709 = vmatprep.subr.mxu0 0.0
    %2710 = vmatpush1.msra.mxu0 0.0
    %2711 = vmatprep.subr.mxu0 0.0
    %2712 = vmatpush1.msra.mxu0 0.0
    %2713 = vmatprep.subr.mxu0 0.0
    %2714 = vmatpush1.msra.mxu0 0.0
    %2715 = vmatprep.subr.mxu0 0.0
    %2716 = vmatpush1.msra.mxu0 0.0
    %2717 = vmatprep.mubr.f32.mxu0 0.0
    %2718 = vmatmul.mubr.f32.gmra.mrb[0].mxu0 %v2651
    %v2719 = vpop.f32.mrb[0].mxu0
    %v2720 = vadd.f32 0.0, %v2719
    %v2721 = vpop.f32.mrb[0].mxu0
    %v2722 = vadd.f32 0.0, %v2721
    %2723 = vdwg.mxu0
    %2724 = vmatprep.subr.mxu0 %v2534
    %2725 = vmatpush1.msra.mxu0 %v2533
    %2726 = vmatprep.subr.mxu0 %v2538
    %2727 = vmatpush1.msra.mxu0 %v2537
    %2728 = vmatprep.subr.mxu0 %v2542
    %2729 = vmatpush1.msra.mxu0 %v2541
    %2730 = vmatprep.subr.mxu0 %v2546
    %2731 = vmatpush1.msra.mxu0 %v2545
    %2732 = vmatprep.subr.mxu0 %v2550
    %2733 = vmatpush1.msra.mxu0 %v2549
    %2734 = vmatprep.subr.mxu0 %v2554
    %2735 = vmatpush1.msra.mxu0 %v2553
    %2736 = vmatprep.subr.mxu0 %v2558
    %2737 = vmatpush1.msra.mxu0 %v2557
    %2738 = vmatprep.subr.mxu0 %v2562
    %2739 = vmatpush1.msra.mxu0 %v2561
    %2740 = vmatprep.subr.mxu0 %v2566
    %2741 = vmatpush1.msra.mxu0 %v2565
    %2742 = vmatprep.subr.mxu0 %v2570
    %2743 = vmatpush1.msra.mxu0 %v2569
    %2744 = vmatprep.subr.mxu0 %v2574
    %2745 = vmatpush1.msra.mxu0 %v2573
    %2746 = vmatprep.subr.mxu0 %v2578
    %2747 = vmatpush1.msra.mxu0 %v2577
    %2748 = vmatprep.subr.mxu0 %v2582
    %2749 = vmatpush1.msra.mxu0 %v2581
    %2750 = vmatprep.subr.mxu0 %v2586
    %2751 = vmatpush1.msra.mxu0 %v2585
    %2752 = vmatprep.subr.mxu0 %v2590
    %2753 = vmatpush1.msra.mxu0 %v2589
    %2754 = vmatprep.subr.mxu0 %v2594
    %2755 = vmatpush1.msra.mxu0 %v2593
    %2756 = vmatprep.subr.mxu0 0.0
    %2757 = vmatpush1.msra.mxu0 0.0
    %2758 = vmatprep.subr.mxu0 0.0
    %2759 = vmatpush1.msra.mxu0 0.0
    %2760 = vmatprep.subr.mxu0 0.0
    %2761 = vmatpush1.msra.mxu0 0.0
    %2762 = vmatprep.subr.mxu0 0.0
    %2763 = vmatpush1.msra.mxu0 0.0
    %2764 = vmatprep.subr.mxu0 0.0
    %2765 = vmatpush1.msra.mxu0 0.0
    %2766 = vmatprep.subr.mxu0 0.0
    %2767 = vmatpush1.msra.mxu0 0.0
    %2768 = vmatprep.subr.mxu0 0.0
    %2769 = vmatpush1.msra.mxu0 0.0
    %2770 = vmatprep.subr.mxu0 0.0
    %2771 = vmatpush1.msra.mxu0 0.0
    %2772 = vmatprep.subr.mxu0 0.0
    %2773 = vmatpush1.msra.mxu0 0.0
    %2774 = vmatprep.subr.mxu0 0.0
    %2775 = vmatpush1.msra.mxu0 0.0
    %2776 = vmatprep.subr.mxu0 0.0
    %2777 = vmatpush1.msra.mxu0 0.0
    %2778 = vmatprep.subr.mxu0 0.0
    %2779 = vmatpush1.msra.mxu0 0.0
    %2780 = vmatprep.subr.mxu0 0.0
    %2781 = vmatpush1.msra.mxu0 0.0
    %2782 = vmatprep.subr.mxu0 0.0
    %2783 = vmatpush1.msra.mxu0 0.0
    %2784 = vmatprep.subr.mxu0 0.0
    %2785 = vmatpush1.msra.mxu0 0.0
    %2786 = vmatprep.subr.mxu0 0.0
    %2787 = vmatpush1.msra.mxu0 0.0
    %2788 = vmatprep.mubr.f32.mxu0 0.0
    %2789 = vmatmul.mubr.f32.gmra.mrb[0].mxu0 %v2651
    %v2790 = vpop.f32.mrb[0].mxu0
    %v2791 = vadd.f32 0.0, %v2790
    %v2792 = vpop.f32.mrb[0].mxu0
    %v2793 = vadd.f32 0.0, %v2792
    %2794 = vdwg.mxu0
    %v2799 = vcombine.low %v2720, %v2722
    %v2800 = vcombine.high %v2720, %v2722
    %v2801 = vcombine.low %v2791, %v2793
    %v2802 = vcombine.high %v2791, %v2793
    %v2804 = vunpack.c.l.s4 1966171168
    %v2805 = vunpack.c.0.s8 %v2804
    %v2806 = vlaneseq
    %v2807 = vshrl.u32 %v2806, 7
    %v2808 = vsub.s32 %v2805, %v2807
    %v2809 = vrot.slane %v2799, %v2808
    %v2811 = vunpack.c.l.s4 1966171168
    %v2812 = vunpack.c.0.s8 %v2811
    %v2813 = vlaneseq
    %v2814 = vshrl.u32 %v2813, 7
    %v2815 = vsub.s32 %v2812, %v2814
    %v2816 = vrot.slane %v2800, %v2815
    %v2818 = vunpack.c.l.s4 1966171168
    %v2819 = vunpack.c.0.s8 %v2818
    %v2820 = vlaneseq
    %v2821 = vshrl.u32 %v2820, 7
    %v2822 = vsub.s32 %v2819, %v2821
    %v2823 = vrot.slane %v2801, %v2822
    %v2825 = vunpack.c.l.s4 1966171168
    %v2826 = vunpack.c.0.s8 %v2825
    %v2827 = vlaneseq
    %v2828 = vshrl.u32 %v2827, 7
    %v2829 = vsub.s32 %v2826, %v2828
    %v2830 = vrot.slane %v2802, %v2829
    %v2831 = vcombine.low %v2809, %v2823
    %v2832 = vcombine.high %v2809, %v2823
    %v2833 = vcombine.low %v2816, %v2830
    %v2834 = vcombine.high %v2816, %v2830
    %v2836 = vunpack.c.l.s4 1966171168
    %v2837 = vunpack.c.0.s8 %v2836
    %v2838 = vlaneseq
    %v2839 = vshrl.u32 %v2838, 7
    %v2840 = vsub.s32 %v2837, %v2839
    %v2841 = vrot.slane %v2831, %v2840
    %v2843 = vunpack.c.l.s4 1966171168
    %v2844 = vunpack.c.0.s8 %v2843
    %v2845 = vlaneseq
    %v2846 = vshrl.u32 %v2845, 7
    %v2847 = vsub.s32 %v2844, %v2846
    %v2848 = vrot.slane %v2833, %v2847
    %v2850 = vunpack.c.l.s4 1966171168
    %v2851 = vunpack.c.0.s8 %v2850
    %v2852 = vlaneseq
    %v2853 = vshrl.u32 %v2852, 7
    %v2854 = vsub.s32 %v2851, %v2853
    %v2855 = vrot.slane %v2832, %v2854
    %v2857 = vunpack.c.l.s4 1966171168
    %v2858 = vunpack.c.0.s8 %v2857
    %v2859 = vlaneseq
    %v2860 = vshrl.u32 %v2859, 7
    %v2861 = vsub.s32 %v2858, %v2860
    %v2862 = vrot.slane %v2834, %v2861
    %v2863 = vcombine.high %v2841, %v2841
    %v2864 = vcombine.high %v2848, %v2848
    %v2865 = vcombine.high %v2855, %v2855
    %v2866 = vcombine.high %v2862, %v2862
    %v2875 = vadd.f32 %v2516, %v2841
    %v2876 = vadd.f32 %v2518, %v2855
    %v2877 = vadd.f32 %v2520, %v2863
    %v2878 = vadd.f32 %v2522, %v2865
    %v2879 = vadd.f32 %v2524, %v2848
    %v2880 = vadd.f32 %v2526, %v2862
    %v2881 = vadd.f32 %v2528, %v2864
    %v2882 = vadd.f32 %v2530, %v2866
    %v2883 = vxor.u32 %v2875, 2147483648
    %v2884 = vxor.u32 %v2876, 2147483648
    %v2885 = vxor.u32 %v2877, 2147483648
    %v2886 = vxor.u32 %v2878, 2147483648
    %v2887 = vxor.u32 %v2879, 2147483648
    %v2888 = vxor.u32 %v2880, 2147483648
    %v2889 = vxor.u32 %v2881, 2147483648
    %v2890 = vxor.u32 %v2882, 2147483648
    %v2891 = vmul.f32 %v2883, 1.442695
    %v2892 = vpow.pop %v2891
    %v2893 = vmul.f32 %v2884, 1.442695
    %v2894 = vpow.pop %v2893
    %v2895 = vmul.f32 %v2885, 1.442695
    %v2896 = vpow.pop %v2895
    %v2897 = vmul.f32 %v2886, 1.442695
    %v2898 = vpow.pop %v2897
    %v2899 = vmul.f32 %v2887, 1.442695
    %v2900 = vpow.pop %v2899
    %v2901 = vmul.f32 %v2888, 1.442695
    %v2902 = vpow.pop %v2901
    %v2903 = vmul.f32 %v2889, 1.442695
    %v2904 = vpow.pop %v2903
    %v2905 = vmul.f32 %v2890, 1.442695
    %v2906 = vpow.pop %v2905
    %v2907 = vadd.f32 %v2892, 1.0
    %v2908 = vadd.f32 %v2894, 1.0
    %v2909 = vadd.f32 %v2896, 1.0
    %v2910 = vadd.f32 %v2898, 1.0
    %v2911 = vadd.f32 %v2900, 1.0
    %v2912 = vadd.f32 %v2902, 1.0
    %v2913 = vadd.f32 %v2904, 1.0
    %v2914 = vadd.f32 %v2906, 1.0
    %v2915 = vrcp.pop %v2907
    %v2916 = vmul.f32 1.0, %v2915
    %v2917 = vrcp.pop %v2908
    %v2918 = vmul.f32 1.0, %v2917
    %v2919 = vrcp.pop %v2909
    %v2920 = vmul.f32 1.0, %v2919
    %v2921 = vrcp.pop %v2910
    %v2922 = vmul.f32 1.0, %v2921
    %v2923 = vrcp.pop %v2911
    %v2924 = vmul.f32 1.0, %v2923
    %v2925 = vrcp.pop %v2912
    %v2926 = vmul.f32 1.0, %v2925
    %v2927 = vrcp.pop %v2913
    %v2928 = vmul.f32 1.0, %v2927
    %v2929 = vrcp.pop %v2914
    %v2930 = vmul.f32 1.0, %v2929
    %v2939 = vrot.slane %v2875, 1
    %v2940 = vrot.slane %v2876, 1
    %v2941 = vrot.slane %v2877, 1
    %v2942 = vrot.slane %v2878, 1
    %v2943 = vrot.slane %v2879, 1
    %v2944 = vrot.slane %v2880, 1
    %v2945 = vrot.slane %v2881, 1
    %v2946 = vrot.slane %v2882, 1
    %v2955 = vxor.u32 %v2939, 2147483648
    %v2956 = vxor.u32 %v2940, 2147483648
    %v2957 = vxor.u32 %v2941, 2147483648
    %v2958 = vxor.u32 %v2942, 2147483648
    %v2959 = vxor.u32 %v2943, 2147483648
    %v2960 = vxor.u32 %v2944, 2147483648
    %v2961 = vxor.u32 %v2945, 2147483648
    %v2962 = vxor.u32 %v2946, 2147483648
    %v2963 = vmul.f32 %v2955, 1.442695
    %v2964 = vpow.pop %v2963
    %v2965 = vmul.f32 %v2956, 1.442695
    %v2966 = vpow.pop %v2965
    %v2967 = vmul.f32 %v2957, 1.442695
    %v2968 = vpow.pop %v2967
    %v2969 = vmul.f32 %v2958, 1.442695
    %v2970 = vpow.pop %v2969
    %v2971 = vmul.f32 %v2959, 1.442695
    %v2972 = vpow.pop %v2971
    %v2973 = vmul.f32 %v2960, 1.442695
    %v2974 = vpow.pop %v2973
    %v2975 = vmul.f32 %v2961, 1.442695
    %v2976 = vpow.pop %v2975
    %v2977 = vmul.f32 %v2962, 1.442695
    %v2978 = vpow.pop %v2977
    %v2979 = vadd.f32 %v2964, 1.0
    %v2980 = vadd.f32 %v2966, 1.0
    %v2981 = vadd.f32 %v2968, 1.0
    %v2982 = vadd.f32 %v2970, 1.0
    %v2983 = vadd.f32 %v2972, 1.0
    %v2984 = vadd.f32 %v2974, 1.0
    %v2985 = vadd.f32 %v2976, 1.0
    %v2986 = vadd.f32 %v2978, 1.0
    %v2987 = vrcp.pop %v2979
    %v2988 = vmul.f32 1.0, %v2987
    %v2989 = vrcp.pop %v2980
    %v2990 = vmul.f32 1.0, %v2989
    %v2991 = vrcp.pop %v2981
    %v2992 = vmul.f32 1.0, %v2991
    %v2993 = vrcp.pop %v2982
    %v2994 = vmul.f32 1.0, %v2993
    %v2995 = vrcp.pop %v2983
    %v2996 = vmul.f32 1.0, %v2995
    %v2997 = vrcp.pop %v2984
    %v2998 = vmul.f32 1.0, %v2997
    %v2999 = vrcp.pop %v2985
    %v3000 = vmul.f32 1.0, %v2999
    %v3001 = vrcp.pop %v2986
    %v3002 = vmul.f32 1.0, %v3001
    %v3003 = vrot.slane %v2875, 2
    %v3004 = vrot.slane %v2876, 2
    %v3005 = vrot.slane %v2877, 2
    %v3006 = vrot.slane %v2878, 2
    %v3007 = vrot.slane %v2879, 2
    %v3008 = vrot.slane %v2880, 2
    %v3009 = vrot.slane %v2881, 2
    %v3010 = vrot.slane %v2882, 2
    %v3019 = vtanh.pop %v3003
    %v3020 = vtanh.pop %v3004
    %v3021 = vtanh.pop %v3005
    %v3022 = vtanh.pop %v3006
    %v3023 = vtanh.pop %v3007
    %v3024 = vtanh.pop %v3008
    %v3025 = vtanh.pop %v3009
    %v3026 = vtanh.pop %v3010
    %v3027 = vrot.slane %v2875, 3
    %v3028 = vrot.slane %v2876, 3
    %v3029 = vrot.slane %v2877, 3
    %v3030 = vrot.slane %v2878, 3
    %v3031 = vrot.slane %v2879, 3
    %v3032 = vrot.slane %v2880, 3
    %v3033 = vrot.slane %v2881, 3
    %v3034 = vrot.slane %v2882, 3
    %v3043 = vxor.u32 %v3027, 2147483648
    %v3044 = vxor.u32 %v3028, 2147483648
    %v3045 = vxor.u32 %v3029, 2147483648
    %v3046 = vxor.u32 %v3030, 2147483648
    %v3047 = vxor.u32 %v3031, 2147483648
    %v3048 = vxor.u32 %v3032, 2147483648
    %v3049 = vxor.u32 %v3033, 2147483648
    %v3050 = vxor.u32 %v3034, 2147483648
    %v3051 = vmul.f32 %v3043, 1.442695
    %v3052 = vpow.pop %v3051
    %v3053 = vmul.f32 %v3044, 1.442695
    %v3054 = vpow.pop %v3053
    %v3055 = vmul.f32 %v3045, 1.442695
    %v3056 = vpow.pop %v3055
    %v3057 = vmul.f32 %v3046, 1.442695
    %v3058 = vpow.pop %v3057
    %v3059 = vmul.f32 %v3047, 1.442695
    %v3060 = vpow.pop %v3059
    %v3061 = vmul.f32 %v3048, 1.442695
    %v3062 = vpow.pop %v3061
    %v3063 = vmul.f32 %v3049, 1.442695
    %v3064 = vpow.pop %v3063
    %v3065 = vmul.f32 %v3050, 1.442695
    %v3066 = vpow.pop %v3065
    %v3067 = vadd.f32 %v3052, 1.0
    %v3068 = vadd.f32 %v3054, 1.0
    %v3069 = vadd.f32 %v3056, 1.0
    %v3070 = vadd.f32 %v3058, 1.0
    %v3071 = vadd.f32 %v3060, 1.0
    %v3072 = vadd.f32 %v3062, 1.0
    %v3073 = vadd.f32 %v3064, 1.0
    %v3074 = vadd.f32 %v3066, 1.0
    %v3075 = vrcp.pop %v3067
    %v3076 = vmul.f32 1.0, %v3075
    %v3077 = vrcp.pop %v3068
    %v3078 = vmul.f32 1.0, %v3077
    %v3079 = vrcp.pop %v3069
    %v3080 = vmul.f32 1.0, %v3079
    %v3081 = vrcp.pop %v3070
    %v3082 = vmul.f32 1.0, %v3081
    %v3083 = vrcp.pop %v3071
    %v3084 = vmul.f32 1.0, %v3083
    %v3085 = vrcp.pop %v3072
    %v3086 = vmul.f32 1.0, %v3085
    %v3087 = vrcp.pop %v3073
    %v3088 = vmul.f32 1.0, %v3087
    %v3089 = vrcp.pop %v3074
    %v3090 = vmul.f32 1.0, %v3089
    %v3091 = vmul.f32 %v2988, %v2483
    %v3092 = vmul.f32 %v2990, %v2484
    %v3093 = vmul.f32 %v2992, %v2485
    %v3094 = vmul.f32 %v2994, %v2486
    %v3095 = vmul.f32 %v2996, %v2487
    %v3096 = vmul.f32 %v2998, %v2488
    %v3097 = vmul.f32 %v3000, %v2489
    %v3098 = vmul.f32 %v3002, %v2490
    %v3099 = vmul.f32 %v2916, %v3019
    %v3100 = vmul.f32 %v2918, %v3020
    %v3101 = vmul.f32 %v2920, %v3021
    %v3102 = vmul.f32 %v2922, %v3022
    %v3103 = vmul.f32 %v2924, %v3023
    %v3104 = vmul.f32 %v2926, %v3024
    %v3105 = vmul.f32 %v2928, %v3025
    %v3106 = vmul.f32 %v2930, %v3026
    %v3107 = vadd.f32 %v3091, %v3099
    %v3108 = vadd.f32 %v3092, %v3100
    %v3109 = vadd.f32 %v3093, %v3101
    %v3110 = vadd.f32 %v3094, %v3102
    %v3111 = vadd.f32 %v3095, %v3103
    %v3112 = vadd.f32 %v3096, %v3104
    %v3113 = vadd.f32 %v3097, %v3105
    %v3114 = vadd.f32 %v3098, %v3106
    %v3115 = vtanh.pop %v3107
    %v3116 = vtanh.pop %v3108
    %v3117 = vtanh.pop %v3109
    %v3118 = vtanh.pop %v3110
    %v3119 = vtanh.pop %v3111
    %v3120 = vtanh.pop %v3112
    %v3121 = vtanh.pop %v3113
    %v3122 = vtanh.pop %v3114
    %v3123 = vmul.f32 %v3076, %v3115
    %v3124 = vmul.f32 %v3078, %v3116
    %v3125 = vmul.f32 %v3080, %v3117
    %v3126 = vmul.f32 %v3082, %v3118
    %v3127 = vmul.f32 %v3084, %v3119
    %v3128 = vmul.f32 %v3086, %v3120
    %v3129 = vmul.f32 %v3088, %v3121
    %v3130 = vmul.f32 %v3090, %v3122
    %3131 = vst [vmem:[#allocation2 + $0x4] sm:$0x1] %v3123
    %3132 = vst [vmem:[#allocation2 + $0xc] sm:$0x1] %v3124
    %3133 = vst [vmem:[#allocation2 + $0x14] sm:$0x1] %v3125
    %3134 = vst [vmem:[#allocation2 + $0x1c] sm:$0x1] %v3126
    %3135 = vst [vmem:[#allocation2 + $0x24] sm:$0x1] %v3127
    %3136 = vst [vmem:[#allocation2 + $0x2c] sm:$0x1] %v3128
    %3137 = vst [vmem:[#allocation2 + $0x34] sm:$0x1] %v3129
    %3138 = vst [vmem:[#allocation2 + $0x3c] sm:$0x1] %v3130
    %s3139 = scalar_lea.vmem %s0, 5
    %v3140 = vld [vmem:[%s3139] ss:$8 sm:$0xf]
    %s3141 = scalar_lea.vmem %s0, 37
    %v3142 = vld [vmem:[%s3141] ss:$8 sm:$0xf]
    %s3143 = scalar_lea.vmem %s0, 69
    %v3144 = vld [vmem:[%s3143] ss:$8 sm:$0xf]
    %s3145 = scalar_lea.vmem %s0, 101
    %v3146 = vld [vmem:[%s3145] ss:$8 sm:$0xf]
    %s3147 = scalar_lea.vmem %s0, 133
    %v3148 = vld [vmem:[%s3147] ss:$8 sm:$0xf]
    %s3149 = scalar_lea.vmem %s0, 165
    %v3150 = vld [vmem:[%s3149] ss:$8 sm:$0xf]
    %s3151 = scalar_lea.vmem %s0, 197
    %v3152 = vld [vmem:[%s3151] ss:$8 sm:$0xf]
    %s3153 = scalar_lea.vmem %s0, 229
    %v3154 = vld [vmem:[%s3153] ss:$8 sm:$0xf]
    %v3155 = vld [vmem:[%s3] sm:$0xff]
    %v3156 = vld [vmem:[%s3 + $0x8] sm:$0xff]
    %v3157 = vld [vmem:[%s3 + $0x10] sm:$0xff]
    %v3158 = vld [vmem:[%s3 + $0x18] sm:$0xff]
    %v3159 = vld [vmem:[%s3 + $0x20] sm:$0xff]
    %v3160 = vld [vmem:[%s3 + $0x28] sm:$0xff]
    %v3161 = vld [vmem:[%s3 + $0x30] sm:$0xff]
    %v3162 = vld [vmem:[%s3 + $0x38] sm:$0xff]
    %v3163 = vld [vmem:[%s3 + $0x40] sm:$0xff]
    %v3164 = vld [vmem:[%s3 + $0x48] sm:$0xff]
    %v3165 = vld [vmem:[%s3 + $0x50] sm:$0xff]
    %v3166 = vld [vmem:[%s3 + $0x58] sm:$0xff]
    %v3167 = vld [vmem:[%s3 + $0x60] sm:$0xff]
    %v3168 = vld [vmem:[%s3 + $0x68] sm:$0xff]
    %v3169 = vld [vmem:[%s3 + $0x70] sm:$0xff]
    %v3170 = vld [vmem:[%s3 + $0x78] sm:$0xff]
    %v3171 = vld [vmem:[%s3 + $0x80] sm:$0xff]
    %v3172 = vld [vmem:[%s3 + $0x88] sm:$0xff]
    %v3173 = vld [vmem:[%s3 + $0x90] sm:$0xff]
    %v3174 = vld [vmem:[%s3 + $0x98] sm:$0xff]
    %v3175 = vld [vmem:[%s3 + $0xa0] sm:$0xff]
    %v3176 = vld [vmem:[%s3 + $0xa8] sm:$0xff]
    %v3177 = vld [vmem:[%s3 + $0xb0] sm:$0xff]
    %v3178 = vld [vmem:[%s3 + $0xb8] sm:$0xff]
    %v3179 = vld [vmem:[%s3 + $0xc0] sm:$0xff]
    %v3180 = vld [vmem:[%s3 + $0xc8] sm:$0xff]
    %v3181 = vld [vmem:[%s3 + $0xd0] sm:$0xff]
    %v3182 = vld [vmem:[%s3 + $0xd8] sm:$0xff]
    %v3183 = vld [vmem:[%s3 + $0xe0] sm:$0xff]
    %v3184 = vld [vmem:[%s3 + $0xe8] sm:$0xff]
    %v3185 = vld [vmem:[%s3 + $0xf0] sm:$0xff]
    %v3186 = vld [vmem:[%s3 + $0xf8] sm:$0xff]
    %v3187 = vld [vmem:[%s3 + $0x100] sm:$0xff]
    %v3188 = vld [vmem:[%s3 + $0x108] sm:$0xff]
    %v3189 = vld [vmem:[%s3 + $0x110] sm:$0xff]
    %v3190 = vld [vmem:[%s3 + $0x118] sm:$0xff]
    %v3191 = vld [vmem:[%s3 + $0x120] sm:$0xff]
    %v3192 = vld [vmem:[%s3 + $0x128] sm:$0xff]
    %v3193 = vld [vmem:[%s3 + $0x130] sm:$0xff]
    %v3194 = vld [vmem:[%s3 + $0x138] sm:$0xff]
    %v3195 = vld [vmem:[%s3 + $0x140] sm:$0xff]
    %v3196 = vld [vmem:[%s3 + $0x148] sm:$0xff]
    %v3197 = vld [vmem:[%s3 + $0x150] sm:$0xff]
    %v3198 = vld [vmem:[%s3 + $0x158] sm:$0xff]
    %v3199 = vld [vmem:[%s3 + $0x160] sm:$0xff]
    %v3200 = vld [vmem:[%s3 + $0x168] sm:$0xff]
    %v3201 = vld [vmem:[%s3 + $0x170] sm:$0xff]
    %v3202 = vld [vmem:[%s3 + $0x178] sm:$0xff]
    %v3203 = vld [vmem:[%s3 + $0x180] sm:$0xff]
    %v3204 = vld [vmem:[%s3 + $0x188] sm:$0xff]
    %v3205 = vld [vmem:[%s3 + $0x190] sm:$0xff]
    %v3206 = vld [vmem:[%s3 + $0x198] sm:$0xff]
    %v3207 = vld [vmem:[%s3 + $0x1a0] sm:$0xff]
    %v3208 = vld [vmem:[%s3 + $0x1a8] sm:$0xff]
    %v3209 = vld [vmem:[%s3 + $0x1b0] sm:$0xff]
    %v3210 = vld [vmem:[%s3 + $0x1b8] sm:$0xff]
    %v3211 = vld [vmem:[%s3 + $0x1c0] sm:$0xff]
    %v3212 = vld [vmem:[%s3 + $0x1c8] sm:$0xff]
    %v3213 = vld [vmem:[%s3 + $0x1d0] sm:$0xff]
    %v3214 = vld [vmem:[%s3 + $0x1d8] sm:$0xff]
    %v3215 = vld [vmem:[%s3 + $0x1e0] sm:$0xff]
    %v3216 = vld [vmem:[%s3 + $0x1e8] sm:$0xff]
    %v3217 = vld [vmem:[%s3 + $0x1f0] sm:$0xff]
    %v3218 = vld [vmem:[%s3 + $0x1f8] sm:$0xff]
    %v3227 = vcombine.low %v3123, %v3124
    %v3228 = vcombine.low %v3125, %v3126
    %v3229 = vcombine.low %v3127, %v3128
    %v3230 = vcombine.low %v3129, %v3130
    %v3232 = vunpack.c.l.s4 1966171168
    %v3233 = vunpack.c.0.s8 %v3232
    %v3234 = vlaneseq
    %v3235 = vshrl.u32 %v3234, 7
    %v3236 = vsub.s32 %v3233, %v3235
    %v3237 = vrot.slane %v3227, %v3236
    %v3239 = vunpack.c.l.s4 1966171168
    %v3240 = vunpack.c.0.s8 %v3239
    %v3241 = vlaneseq
    %v3242 = vshrl.u32 %v3241, 7
    %v3243 = vsub.s32 %v3240, %v3242
    %v3244 = vrot.slane %v3228, %v3243
    %v3246 = vunpack.c.l.s4 1966171168
    %v3247 = vunpack.c.0.s8 %v3246
    %v3248 = vlaneseq
    %v3249 = vshrl.u32 %v3248, 7
    %v3250 = vsub.s32 %v3247, %v3249
    %v3251 = vrot.slane %v3229, %v3250
    %v3253 = vunpack.c.l.s4 1966171168
    %v3254 = vunpack.c.0.s8 %v3253
    %v3255 = vlaneseq
    %v3256 = vshrl.u32 %v3255, 7
    %v3257 = vsub.s32 %v3254, %v3256
    %v3258 = vrot.slane %v3230, %v3257
    %v3259 = vcombine.low %v3237, %v3244
    %v3260 = vcombine.low %v3251, %v3258
    %v3262 = vunpack.c.l.s4 1966171168
    %v3263 = vunpack.c.0.s8 %v3262
    %v3264 = vlaneseq
    %v3265 = vshrl.u32 %v3264, 7
    %v3266 = vsub.s32 %v3263, %v3265
    %v3267 = vrot.slane %v3259, %v3266
    %v3269 = vunpack.c.l.s4 1966171168
    %v3270 = vunpack.c.0.s8 %v3269
    %v3271 = vlaneseq
    %v3272 = vshrl.u32 %v3271, 7
    %v3273 = vsub.s32 %v3270, %v3272
    %v3274 = vrot.slane %v3260, %v3273
    %v3275 = vcombine.low %v3267, %v3274
    %3277 = vmatprep.subr.mxu0 %v3156
    %3278 = vmatpush1.msra.mxu0 %v3155
    %3279 = vmatprep.subr.mxu0 %v3160
    %3280 = vmatpush1.msra.mxu0 %v3159
    %3281 = vmatprep.subr.mxu0 %v3164
    %3282 = vmatpush1.msra.mxu0 %v3163
    %3283 = vmatprep.subr.mxu0 %v3168
    %3284 = vmatpush1.msra.mxu0 %v3167
    %3285 = vmatprep.subr.mxu0 %v3172
    %3286 = vmatpush1.msra.mxu0 %v3171
    %3287 = vmatprep.subr.mxu0 %v3176
    %3288 = vmatpush1.msra.mxu0 %v3175
    %3289 = vmatprep.subr.mxu0 %v3180
    %3290 = vmatpush1.msra.mxu0 %v3179
    %3291 = vmatprep.subr.mxu0 %v3184
    %3292 = vmatpush1.msra.mxu0 %v3183
    %3293 = vmatprep.subr.mxu0 %v3188
    %3294 = vmatpush1.msra.mxu0 %v3187
    %3295 = vmatprep.subr.mxu0 %v3192
    %3296 = vmatpush1.msra.mxu0 %v3191
    %3297 = vmatprep.subr.mxu0 %v3196
    %3298 = vmatpush1.msra.mxu0 %v3195
    %3299 = vmatprep.subr.mxu0 %v3200
    %3300 = vmatpush1.msra.mxu0 %v3199
    %3301 = vmatprep.subr.mxu0 %v3204
    %3302 = vmatpush1.msra.mxu0 %v3203
    %3303 = vmatprep.subr.mxu0 %v3208
    %3304 = vmatpush1.msra.mxu0 %v3207
    %3305 = vmatprep.subr.mxu0 %v3212
    %3306 = vmatpush1.msra.mxu0 %v3211
    %3307 = vmatprep.subr.mxu0 %v3216
    %3308 = vmatpush1.msra.mxu0 %v3215
    %3309 = vmatprep.subr.mxu0 0.0
    %3310 = vmatpush1.msra.mxu0 0.0
    %3311 = vmatprep.subr.mxu0 0.0
    %3312 = vmatpush1.msra.mxu0 0.0
    %3313 = vmatprep.subr.mxu0 0.0
    %3314 = vmatpush1.msra.mxu0 0.0
    %3315 = vmatprep.subr.mxu0 0.0
    %3316 = vmatpush1.msra.mxu0 0.0
    %3317 = vmatprep.subr.mxu0 0.0
    %3318 = vmatpush1.msra.mxu0 0.0
    %3319 = vmatprep.subr.mxu0 0.0
    %3320 = vmatpush1.msra.mxu0 0.0
    %3321 = vmatprep.subr.mxu0 0.0
    %3322 = vmatpush1.msra.mxu0 0.0
    %3323 = vmatprep.subr.mxu0 0.0
    %3324 = vmatpush1.msra.mxu0 0.0
    %3325 = vmatprep.subr.mxu0 0.0
    %3326 = vmatpush1.msra.mxu0 0.0
    %3327 = vmatprep.subr.mxu0 0.0
    %3328 = vmatpush1.msra.mxu0 0.0
    %3329 = vmatprep.subr.mxu0 0.0
    %3330 = vmatpush1.msra.mxu0 0.0
    %3331 = vmatprep.subr.mxu0 0.0
    %3332 = vmatpush1.msra.mxu0 0.0
    %3333 = vmatprep.subr.mxu0 0.0
    %3334 = vmatpush1.msra.mxu0 0.0
    %3335 = vmatprep.subr.mxu0 0.0
    %3336 = vmatpush1.msra.mxu0 0.0
    %3337 = vmatprep.subr.mxu0 0.0
    %3338 = vmatpush1.msra.mxu0 0.0
    %3339 = vmatprep.subr.mxu0 0.0
    %3340 = vmatpush1.msra.mxu0 0.0
    %3341 = vmatprep.mubr.f32.mxu0 0.0
    %3342 = vmatmul.mubr.f32.gmra.mrb[0].mxu0 %v3275
    %v3343 = vpop.f32.mrb[0].mxu0
    %v3344 = vadd.f32 0.0, %v3343
    %v3345 = vpop.f32.mrb[0].mxu0
    %v3346 = vadd.f32 0.0, %v3345
    %3347 = vdwg.mxu0
    %3348 = vmatprep.subr.mxu0 %v3158
    %3349 = vmatpush1.msra.mxu0 %v3157
    %3350 = vmatprep.subr.mxu0 %v3162
    %3351 = vmatpush1.msra.mxu0 %v3161
    %3352 = vmatprep.subr.mxu0 %v3166
    %3353 = vmatpush1.msra.mxu0 %v3165
    %3354 = vmatprep.subr.mxu0 %v3170
    %3355 = vmatpush1.msra.mxu0 %v3169
    %3356 = vmatprep.subr.mxu0 %v3174
    %3357 = vmatpush1.msra.mxu0 %v3173
    %3358 = vmatprep.subr.mxu0 %v3178
    %3359 = vmatpush1.msra.mxu0 %v3177
    %3360 = vmatprep.subr.mxu0 %v3182
    %3361 = vmatpush1.msra.mxu0 %v3181
    %3362 = vmatprep.subr.mxu0 %v3186
    %3363 = vmatpush1.msra.mxu0 %v3185
    %3364 = vmatprep.subr.mxu0 %v3190
    %3365 = vmatpush1.msra.mxu0 %v3189
    %3366 = vmatprep.subr.mxu0 %v3194
    %3367 = vmatpush1.msra.mxu0 %v3193
    %3368 = vmatprep.subr.mxu0 %v3198
    %3369 = vmatpush1.msra.mxu0 %v3197
    %3370 = vmatprep.subr.mxu0 %v3202
    %3371 = vmatpush1.msra.mxu0 %v3201
    %3372 = vmatprep.subr.mxu0 %v3206
    %3373 = vmatpush1.msra.mxu0 %v3205
    %3374 = vmatprep.subr.mxu0 %v3210
    %3375 = vmatpush1.msra.mxu0 %v3209
    %3376 = vmatprep.subr.mxu0 %v3214
    %3377 = vmatpush1.msra.mxu0 %v3213
    %3378 = vmatprep.subr.mxu0 %v3218
    %3379 = vmatpush1.msra.mxu0 %v3217
    %3380 = vmatprep.subr.mxu0 0.0
    %3381 = vmatpush1.msra.mxu0 0.0
    %3382 = vmatprep.subr.mxu0 0.0
    %3383 = vmatpush1.msra.mxu0 0.0
    %3384 = vmatprep.subr.mxu0 0.0
    %3385 = vmatpush1.msra.mxu0 0.0
    %3386 = vmatprep.subr.mxu0 0.0
    %3387 = vmatpush1.msra.mxu0 0.0
    %3388 = vmatprep.subr.mxu0 0.0
    %3389 = vmatpush1.msra.mxu0 0.0
    %3390 = vmatprep.subr.mxu0 0.0
    %3391 = vmatpush1.msra.mxu0 0.0
    %3392 = vmatprep.subr.mxu0 0.0
    %3393 = vmatpush1.msra.mxu0 0.0
    %3394 = vmatprep.subr.mxu0 0.0
    %3395 = vmatpush1.msra.mxu0 0.0
    %3396 = vmatprep.subr.mxu0 0.0
    %3397 = vmatpush1.msra.mxu0 0.0
    %3398 = vmatprep.subr.mxu0 0.0
    %3399 = vmatpush1.msra.mxu0 0.0
    %3400 = vmatprep.subr.mxu0 0.0
    %3401 = vmatpush1.msra.mxu0 0.0
    %3402 = vmatprep.subr.mxu0 0.0
    %3403 = vmatpush1.msra.mxu0 0.0
    %3404 = vmatprep.subr.mxu0 0.0
    %3405 = vmatpush1.msra.mxu0 0.0
    %3406 = vmatprep.subr.mxu0 0.0
    %3407 = vmatpush1.msra.mxu0 0.0
    %3408 = vmatprep.subr.mxu0 0.0
    %3409 = vmatpush1.msra.mxu0 0.0
    %3410 = vmatprep.subr.mxu0 0.0
    %3411 = vmatpush1.msra.mxu0 0.0
    %3412 = vmatprep.mubr.f32.mxu0 0.0
    %3413 = vmatmul.mubr.f32.gmra.mrb[0].mxu0 %v3275
    %v3414 = vpop.f32.mrb[0].mxu0
    %v3415 = vadd.f32 0.0, %v3414
    %v3416 = vpop.f32.mrb[0].mxu0
    %v3417 = vadd.f32 0.0, %v3416
    %3418 = vdwg.mxu0
    %v3423 = vcombine.low %v3344, %v3346
    %v3424 = vcombine.high %v3344, %v3346
    %v3425 = vcombine.low %v3415, %v3417
    %v3426 = vcombine.high %v3415, %v3417
    %v3428 = vunpack.c.l.s4 1966171168
    %v3429 = vunpack.c.0.s8 %v3428
    %v3430 = vlaneseq
    %v3431 = vshrl.u32 %v3430, 7
    %v3432 = vsub.s32 %v3429, %v3431
    %v3433 = vrot.slane %v3423, %v3432
    %v3435 = vunpack.c.l.s4 1966171168
    %v3436 = vunpack.c.0.s8 %v3435
    %v3437 = vlaneseq
    %v3438 = vshrl.u32 %v3437, 7
    %v3439 = vsub.s32 %v3436, %v3438
    %v3440 = vrot.slane %v3424, %v3439
    %v3442 = vunpack.c.l.s4 1966171168
    %v3443 = vunpack.c.0.s8 %v3442
    %v3444 = vlaneseq
    %v3445 = vshrl.u32 %v3444, 7
    %v3446 = vsub.s32 %v3443, %v3445
    %v3447 = vrot.slane %v3425, %v3446
    %v3449 = vunpack.c.l.s4 1966171168
    %v3450 = vunpack.c.0.s8 %v3449
    %v3451 = vlaneseq
    %v3452 = vshrl.u32 %v3451, 7
    %v3453 = vsub.s32 %v3450, %v3452
    %v3454 = vrot.slane %v3426, %v3453
    %v3455 = vcombine.low %v3433, %v3447
    %v3456 = vcombine.high %v3433, %v3447
    %v3457 = vcombine.low %v3440, %v3454
    %v3458 = vcombine.high %v3440, %v3454
    %v3460 = vunpack.c.l.s4 1966171168
    %v3461 = vunpack.c.0.s8 %v3460
    %v3462 = vlaneseq
    %v3463 = vshrl.u32 %v3462, 7
    %v3464 = vsub.s32 %v3461, %v3463
    %v3465 = vrot.slane %v3455, %v3464
    %v3467 = vunpack.c.l.s4 1966171168
    %v3468 = vunpack.c.0.s8 %v3467
    %v3469 = vlaneseq
    %v3470 = vshrl.u32 %v3469, 7
    %v3471 = vsub.s32 %v3468, %v3470
    %v3472 = vrot.slane %v3457, %v3471
    %v3474 = vunpack.c.l.s4 1966171168
    %v3475 = vunpack.c.0.s8 %v3474
    %v3476 = vlaneseq
    %v3477 = vshrl.u32 %v3476, 7
    %v3478 = vsub.s32 %v3475, %v3477
    %v3479 = vrot.slane %v3456, %v3478
    %v3481 = vunpack.c.l.s4 1966171168
    %v3482 = vunpack.c.0.s8 %v3481
    %v3483 = vlaneseq
    %v3484 = vshrl.u32 %v3483, 7
    %v3485 = vsub.s32 %v3482, %v3484
    %v3486 = vrot.slane %v3458, %v3485
    %v3487 = vcombine.high %v3465, %v3465
    %v3488 = vcombine.high %v3472, %v3472
    %v3489 = vcombine.high %v3479, %v3479
    %v3490 = vcombine.high %v3486, %v3486
    %v3499 = vadd.f32 %v3140, %v3465
    %v3500 = vadd.f32 %v3142, %v3479
    %v3501 = vadd.f32 %v3144, %v3487
    %v3502 = vadd.f32 %v3146, %v3489
    %v3503 = vadd.f32 %v3148, %v3472
    %v3504 = vadd.f32 %v3150, %v3486
    %v3505 = vadd.f32 %v3152, %v3488
    %v3506 = vadd.f32 %v3154, %v3490
    %v3507 = vxor.u32 %v3499, 2147483648
    %v3508 = vxor.u32 %v3500, 2147483648
    %v3509 = vxor.u32 %v3501, 2147483648
    %v3510 = vxor.u32 %v3502, 2147483648
    %v3511 = vxor.u32 %v3503, 2147483648
    %v3512 = vxor.u32 %v3504, 2147483648
    %v3513 = vxor.u32 %v3505, 2147483648
    %v3514 = vxor.u32 %v3506, 2147483648
    %v3515 = vmul.f32 %v3507, 1.442695
    %v3516 = vpow.pop %v3515
    %v3517 = vmul.f32 %v3508, 1.442695
    %v3518 = vpow.pop %v3517
    %v3519 = vmul.f32 %v3509, 1.442695
    %v3520 = vpow.pop %v3519
    %v3521 = vmul.f32 %v3510, 1.442695
    %v3522 = vpow.pop %v3521
    %v3523 = vmul.f32 %v3511, 1.442695
    %v3524 = vpow.pop %v3523
    %v3525 = vmul.f32 %v3512, 1.442695
    %v3526 = vpow.pop %v3525
    %v3527 = vmul.f32 %v3513, 1.442695
    %v3528 = vpow.pop %v3527
    %v3529 = vmul.f32 %v3514, 1.442695
    %v3530 = vpow.pop %v3529
    %v3531 = vadd.f32 %v3516, 1.0
    %v3532 = vadd.f32 %v3518, 1.0
    %v3533 = vadd.f32 %v3520, 1.0
    %v3534 = vadd.f32 %v3522, 1.0
    %v3535 = vadd.f32 %v3524, 1.0
    %v3536 = vadd.f32 %v3526, 1.0
    %v3537 = vadd.f32 %v3528, 1.0
    %v3538 = vadd.f32 %v3530, 1.0
    %v3539 = vrcp.pop %v3531
    %v3540 = vmul.f32 1.0, %v3539
    %v3541 = vrcp.pop %v3532
    %v3542 = vmul.f32 1.0, %v3541
    %v3543 = vrcp.pop %v3533
    %v3544 = vmul.f32 1.0, %v3543
    %v3545 = vrcp.pop %v3534
    %v3546 = vmul.f32 1.0, %v3545
    %v3547 = vrcp.pop %v3535
    %v3548 = vmul.f32 1.0, %v3547
    %v3549 = vrcp.pop %v3536
    %v3550 = vmul.f32 1.0, %v3549
    %v3551 = vrcp.pop %v3537
    %v3552 = vmul.f32 1.0, %v3551
    %v3553 = vrcp.pop %v3538
    %v3554 = vmul.f32 1.0, %v3553
    %v3563 = vrot.slane %v3499, 1
    %v3564 = vrot.slane %v3500, 1
    %v3565 = vrot.slane %v3501, 1
    %v3566 = vrot.slane %v3502, 1
    %v3567 = vrot.slane %v3503, 1
    %v3568 = vrot.slane %v3504, 1
    %v3569 = vrot.slane %v3505, 1
    %v3570 = vrot.slane %v3506, 1
    %v3579 = vxor.u32 %v3563, 2147483648
    %v3580 = vxor.u32 %v3564, 2147483648
    %v3581 = vxor.u32 %v3565, 2147483648
    %v3582 = vxor.u32 %v3566, 2147483648
    %v3583 = vxor.u32 %v3567, 2147483648
    %v3584 = vxor.u32 %v3568, 2147483648
    %v3585 = vxor.u32 %v3569, 2147483648
    %v3586 = vxor.u32 %v3570, 2147483648
    %v3587 = vmul.f32 %v3579, 1.442695
    %v3588 = vpow.pop %v3587
    %v3589 = vmul.f32 %v3580, 1.442695
    %v3590 = vpow.pop %v3589
    %v3591 = vmul.f32 %v3581, 1.442695
    %v3592 = vpow.pop %v3591
    %v3593 = vmul.f32 %v3582, 1.442695
    %v3594 = vpow.pop %v3593
    %v3595 = vmul.f32 %v3583, 1.442695
    %v3596 = vpow.pop %v3595
    %v3597 = vmul.f32 %v3584, 1.442695
    %v3598 = vpow.pop %v3597
    %v3599 = vmul.f32 %v3585, 1.442695
    %v3600 = vpow.pop %v3599
    %v3601 = vmul.f32 %v3586, 1.442695
    %v3602 = vpow.pop %v3601
    %v3603 = vadd.f32 %v3588, 1.0
    %v3604 = vadd.f32 %v3590, 1.0
    %v3605 = vadd.f32 %v3592, 1.0
    %v3606 = vadd.f32 %v3594, 1.0
    %v3607 = vadd.f32 %v3596, 1.0
    %v3608 = vadd.f32 %v3598, 1.0
    %v3609 = vadd.f32 %v3600, 1.0
    %v3610 = vadd.f32 %v3602, 1.0
    %v3611 = vrcp.pop %v3603
    %v3612 = vmul.f32 1.0, %v3611
    %v3613 = vrcp.pop %v3604
    %v3614 = vmul.f32 1.0, %v3613
    %v3615 = vrcp.pop %v3605
    %v3616 = vmul.f32 1.0, %v3615
    %v3617 = vrcp.pop %v3606
    %v3618 = vmul.f32 1.0, %v3617
    %v3619 = vrcp.pop %v3607
    %v3620 = vmul.f32 1.0, %v3619
    %v3621 = vrcp.pop %v3608
    %v3622 = vmul.f32 1.0, %v3621
    %v3623 = vrcp.pop %v3609
    %v3624 = vmul.f32 1.0, %v3623
    %v3625 = vrcp.pop %v3610
    %v3626 = vmul.f32 1.0, %v3625
    %v3627 = vrot.slane %v3499, 2
    %v3628 = vrot.slane %v3500, 2
    %v3629 = vrot.slane %v3501, 2
    %v3630 = vrot.slane %v3502, 2
    %v3631 = vrot.slane %v3503, 2
    %v3632 = vrot.slane %v3504, 2
    %v3633 = vrot.slane %v3505, 2
    %v3634 = vrot.slane %v3506, 2
    %v3643 = vtanh.pop %v3627
    %v3644 = vtanh.pop %v3628
    %v3645 = vtanh.pop %v3629
    %v3646 = vtanh.pop %v3630
    %v3647 = vtanh.pop %v3631
    %v3648 = vtanh.pop %v3632
    %v3649 = vtanh.pop %v3633
    %v3650 = vtanh.pop %v3634
    %v3651 = vrot.slane %v3499, 3
    %v3652 = vrot.slane %v3500, 3
    %v3653 = vrot.slane %v3501, 3
    %v3654 = vrot.slane %v3502, 3
    %v3655 = vrot.slane %v3503, 3
    %v3656 = vrot.slane %v3504, 3
    %v3657 = vrot.slane %v3505, 3
    %v3658 = vrot.slane %v3506, 3
    %v3667 = vxor.u32 %v3651, 2147483648
    %v3668 = vxor.u32 %v3652, 2147483648
    %v3669 = vxor.u32 %v3653, 2147483648
    %v3670 = vxor.u32 %v3654, 2147483648
    %v3671 = vxor.u32 %v3655, 2147483648
    %v3672 = vxor.u32 %v3656, 2147483648
    %v3673 = vxor.u32 %v3657, 2147483648
    %v3674 = vxor.u32 %v3658, 2147483648
    %v3675 = vmul.f32 %v3667, 1.442695
    %v3676 = vpow.pop %v3675
    %v3677 = vmul.f32 %v3668, 1.442695
    %v3678 = vpow.pop %v3677
    %v3679 = vmul.f32 %v3669, 1.442695
    %v3680 = vpow.pop %v3679
    %v3681 = vmul.f32 %v3670, 1.442695
    %v3682 = vpow.pop %v3681
    %v3683 = vmul.f32 %v3671, 1.442695
    %v3684 = vpow.pop %v3683
    %v3685 = vmul.f32 %v3672, 1.442695
    %v3686 = vpow.pop %v3685
    %v3687 = vmul.f32 %v3673, 1.442695
    %v3688 = vpow.pop %v3687
    %v3689 = vmul.f32 %v3674, 1.442695
    %v3690 = vpow.pop %v3689
    %v3691 = vadd.f32 %v3676, 1.0
    %v3692 = vadd.f32 %v3678, 1.0
    %v3693 = vadd.f32 %v3680, 1.0
    %v3694 = vadd.f32 %v3682, 1.0
    %v3695 = vadd.f32 %v3684, 1.0
    %v3696 = vadd.f32 %v3686, 1.0
    %v3697 = vadd.f32 %v3688, 1.0
    %v3698 = vadd.f32 %v3690, 1.0
    %v3699 = vrcp.pop %v3691
    %v3700 = vmul.f32 1.0, %v3699
    %v3701 = vrcp.pop %v3692
    %v3702 = vmul.f32 1.0, %v3701
    %v3703 = vrcp.pop %v3693
    %v3704 = vmul.f32 1.0, %v3703
    %v3705 = vrcp.pop %v3694
    %v3706 = vmul.f32 1.0, %v3705
    %v3707 = vrcp.pop %v3695
    %v3708 = vmul.f32 1.0, %v3707
    %v3709 = vrcp.pop %v3696
    %v3710 = vmul.f32 1.0, %v3709
    %v3711 = vrcp.pop %v3697
    %v3712 = vmul.f32 1.0, %v3711
    %v3713 = vrcp.pop %v3698
    %v3714 = vmul.f32 1.0, %v3713
    %v3715 = vmul.f32 %v3612, %v3107
    %v3716 = vmul.f32 %v3614, %v3108
    %v3717 = vmul.f32 %v3616, %v3109
    %v3718 = vmul.f32 %v3618, %v3110
    %v3719 = vmul.f32 %v3620, %v3111
    %v3720 = vmul.f32 %v3622, %v3112
    %v3721 = vmul.f32 %v3624, %v3113
    %v3722 = vmul.f32 %v3626, %v3114
    %v3723 = vmul.f32 %v3540, %v3643
    %v3724 = vmul.f32 %v3542, %v3644
    %v3725 = vmul.f32 %v3544, %v3645
    %v3726 = vmul.f32 %v3546, %v3646
    %v3727 = vmul.f32 %v3548, %v3647
    %v3728 = vmul.f32 %v3550, %v3648
    %v3729 = vmul.f32 %v3552, %v3649
    %v3730 = vmul.f32 %v3554, %v3650
    %v3731 = vadd.f32 %v3715, %v3723
    %v3732 = vadd.f32 %v3716, %v3724
    %v3733 = vadd.f32 %v3717, %v3725
    %v3734 = vadd.f32 %v3718, %v3726
    %v3735 = vadd.f32 %v3719, %v3727
    %v3736 = vadd.f32 %v3720, %v3728
    %v3737 = vadd.f32 %v3721, %v3729
    %v3738 = vadd.f32 %v3722, %v3730
    %v3739 = vtanh.pop %v3731
    %v3740 = vtanh.pop %v3732
    %v3741 = vtanh.pop %v3733
    %v3742 = vtanh.pop %v3734
    %v3743 = vtanh.pop %v3735
    %v3744 = vtanh.pop %v3736
    %v3745 = vtanh.pop %v3737
    %v3746 = vtanh.pop %v3738
    %v3747 = vmul.f32 %v3700, %v3739
    %v3748 = vmul.f32 %v3702, %v3740
    %v3749 = vmul.f32 %v3704, %v3741
    %v3750 = vmul.f32 %v3706, %v3742
    %v3751 = vmul.f32 %v3708, %v3743
    %v3752 = vmul.f32 %v3710, %v3744
    %v3753 = vmul.f32 %v3712, %v3745
    %v3754 = vmul.f32 %v3714, %v3746
    %3755 = vst [vmem:[#allocation2 + $0x5] sm:$0x1] %v3747
    %3756 = vst [vmem:[#allocation2 + $0xd] sm:$0x1] %v3748
    %3757 = vst [vmem:[#allocation2 + $0x15] sm:$0x1] %v3749
    %3758 = vst [vmem:[#allocation2 + $0x1d] sm:$0x1] %v3750
    %3759 = vst [vmem:[#allocation2 + $0x25] sm:$0x1] %v3751
    %3760 = vst [vmem:[#allocation2 + $0x2d] sm:$0x1] %v3752
    %3761 = vst [vmem:[#allocation2 + $0x35] sm:$0x1] %v3753
    %3762 = vst [vmem:[#allocation2 + $0x3d] sm:$0x1] %v3754
    %s3763 = scalar_lea.vmem %s0, 6
    %v3764 = vld [vmem:[%s3763] ss:$8 sm:$0xf]
    %s3765 = scalar_lea.vmem %s0, 38
    %v3766 = vld [vmem:[%s3765] ss:$8 sm:$0xf]
    %s3767 = scalar_lea.vmem %s0, 70
    %v3768 = vld [vmem:[%s3767] ss:$8 sm:$0xf]
    %s3769 = scalar_lea.vmem %s0, 102
    %v3770 = vld [vmem:[%s3769] ss:$8 sm:$0xf]
    %s3771 = scalar_lea.vmem %s0, 134
    %v3772 = vld [vmem:[%s3771] ss:$8 sm:$0xf]
    %s3773 = scalar_lea.vmem %s0, 166
    %v3774 = vld [vmem:[%s3773] ss:$8 sm:$0xf]
    %s3775 = scalar_lea.vmem %s0, 198
    %v3776 = vld [vmem:[%s3775] ss:$8 sm:$0xf]
    %s3777 = scalar_lea.vmem %s0, 230
    %v3778 = vld [vmem:[%s3777] ss:$8 sm:$0xf]
    %v3779 = vld [vmem:[%s3] sm:$0xff]
    %v3780 = vld [vmem:[%s3 + $0x8] sm:$0xff]
    %v3781 = vld [vmem:[%s3 + $0x10] sm:$0xff]
    %v3782 = vld [vmem:[%s3 + $0x18] sm:$0xff]
    %v3783 = vld [vmem:[%s3 + $0x20] sm:$0xff]
    %v3784 = vld [vmem:[%s3 + $0x28] sm:$0xff]
    %v3785 = vld [vmem:[%s3 + $0x30] sm:$0xff]
    %v3786 = vld [vmem:[%s3 + $0x38] sm:$0xff]
    %v3787 = vld [vmem:[%s3 + $0x40] sm:$0xff]
    %v3788 = vld [vmem:[%s3 + $0x48] sm:$0xff]
    %v3789 = vld [vmem:[%s3 + $0x50] sm:$0xff]
    %v3790 = vld [vmem:[%s3 + $0x58] sm:$0xff]
    %v3791 = vld [vmem:[%s3 + $0x60] sm:$0xff]
    %v3792 = vld [vmem:[%s3 + $0x68] sm:$0xff]
    %v3793 = vld [vmem:[%s3 + $0x70] sm:$0xff]
    %v3794 = vld [vmem:[%s3 + $0x78] sm:$0xff]
    %v3795 = vld [vmem:[%s3 + $0x80] sm:$0xff]
    %v3796 = vld [vmem:[%s3 + $0x88] sm:$0xff]
    %v3797 = vld [vmem:[%s3 + $0x90] sm:$0xff]
    %v3798 = vld [vmem:[%s3 + $0x98] sm:$0xff]
    %v3799 = vld [vmem:[%s3 + $0xa0] sm:$0xff]
    %v3800 = vld [vmem:[%s3 + $0xa8] sm:$0xff]
    %v3801 = vld [vmem:[%s3 + $0xb0] sm:$0xff]
    %v3802 = vld [vmem:[%s3 + $0xb8] sm:$0xff]
    %v3803 = vld [vmem:[%s3 + $0xc0] sm:$0xff]
    %v3804 = vld [vmem:[%s3 + $0xc8] sm:$0xff]
    %v3805 = vld [vmem:[%s3 + $0xd0] sm:$0xff]
    %v3806 = vld [vmem:[%s3 + $0xd8] sm:$0xff]
    %v3807 = vld [vmem:[%s3 + $0xe0] sm:$0xff]
    %v3808 = vld [vmem:[%s3 + $0xe8] sm:$0xff]
    %v3809 = vld [vmem:[%s3 + $0xf0] sm:$0xff]
    %v3810 = vld [vmem:[%s3 + $0xf8] sm:$0xff]
    %v3811 = vld [vmem:[%s3 + $0x100] sm:$0xff]
    %v3812 = vld [vmem:[%s3 + $0x108] sm:$0xff]
    %v3813 = vld [vmem:[%s3 + $0x110] sm:$0xff]
    %v3814 = vld [vmem:[%s3 + $0x118] sm:$0xff]
    %v3815 = vld [vmem:[%s3 + $0x120] sm:$0xff]
    %v3816 = vld [vmem:[%s3 + $0x128] sm:$0xff]
    %v3817 = vld [vmem:[%s3 + $0x130] sm:$0xff]
    %v3818 = vld [vmem:[%s3 + $0x138] sm:$0xff]
    %v3819 = vld [vmem:[%s3 + $0x140] sm:$0xff]
    %v3820 = vld [vmem:[%s3 + $0x148] sm:$0xff]
    %v3821 = vld [vmem:[%s3 + $0x150] sm:$0xff]
    %v3822 = vld [vmem:[%s3 + $0x158] sm:$0xff]
    %v3823 = vld [vmem:[%s3 + $0x160] sm:$0xff]
    %v3824 = vld [vmem:[%s3 + $0x168] sm:$0xff]
    %v3825 = vld [vmem:[%s3 + $0x170] sm:$0xff]
    %v3826 = vld [vmem:[%s3 + $0x178] sm:$0xff]
    %v3827 = vld [vmem:[%s3 + $0x180] sm:$0xff]
    %v3828 = vld [vmem:[%s3 + $0x188] sm:$0xff]
    %v3829 = vld [vmem:[%s3 + $0x190] sm:$0xff]
    %v3830 = vld [vmem:[%s3 + $0x198] sm:$0xff]
    %v3831 = vld [vmem:[%s3 + $0x1a0] sm:$0xff]
    %v3832 = vld [vmem:[%s3 + $0x1a8] sm:$0xff]
    %v3833 = vld [vmem:[%s3 + $0x1b0] sm:$0xff]
    %v3834 = vld [vmem:[%s3 + $0x1b8] sm:$0xff]
    %v3835 = vld [vmem:[%s3 + $0x1c0] sm:$0xff]
    %v3836 = vld [vmem:[%s3 + $0x1c8] sm:$0xff]
    %v3837 = vld [vmem:[%s3 + $0x1d0] sm:$0xff]
    %v3838 = vld [vmem:[%s3 + $0x1d8] sm:$0xff]
    %v3839 = vld [vmem:[%s3 + $0x1e0] sm:$0xff]
    %v3840 = vld [vmem:[%s3 + $0x1e8] sm:$0xff]
    %v3841 = vld [vmem:[%s3 + $0x1f0] sm:$0xff]
    %v3842 = vld [vmem:[%s3 + $0x1f8] sm:$0xff]
    %v3851 = vcombine.low %v3747, %v3748
    %v3852 = vcombine.low %v3749, %v3750
    %v3853 = vcombine.low %v3751, %v3752
    %v3854 = vcombine.low %v3753, %v3754
    %v3856 = vunpack.c.l.s4 1966171168
    %v3857 = vunpack.c.0.s8 %v3856
    %v3858 = vlaneseq
    %v3859 = vshrl.u32 %v3858, 7
    %v3860 = vsub.s32 %v3857, %v3859
    %v3861 = vrot.slane %v3851, %v3860
    %v3863 = vunpack.c.l.s4 1966171168
    %v3864 = vunpack.c.0.s8 %v3863
    %v3865 = vlaneseq
    %v3866 = vshrl.u32 %v3865, 7
    %v3867 = vsub.s32 %v3864, %v3866
    %v3868 = vrot.slane %v3852, %v3867
    %v3870 = vunpack.c.l.s4 1966171168
    %v3871 = vunpack.c.0.s8 %v3870
    %v3872 = vlaneseq
    %v3873 = vshrl.u32 %v3872, 7
    %v3874 = vsub.s32 %v3871, %v3873
    %v3875 = vrot.slane %v3853, %v3874
    %v3877 = vunpack.c.l.s4 1966171168
    %v3878 = vunpack.c.0.s8 %v3877
    %v3879 = vlaneseq
    %v3880 = vshrl.u32 %v3879, 7
    %v3881 = vsub.s32 %v3878, %v3880
    %v3882 = vrot.slane %v3854, %v3881
    %v3883 = vcombine.low %v3861, %v3868
    %v3884 = vcombine.low %v3875, %v3882
    %v3886 = vunpack.c.l.s4 1966171168
    %v3887 = vunpack.c.0.s8 %v3886
    %v3888 = vlaneseq
    %v3889 = vshrl.u32 %v3888, 7
    %v3890 = vsub.s32 %v3887, %v3889
    %v3891 = vrot.slane %v3883, %v3890
    %v3893 = vunpack.c.l.s4 1966171168
    %v3894 = vunpack.c.0.s8 %v3893
    %v3895 = vlaneseq
    %v3896 = vshrl.u32 %v3895, 7
    %v3897 = vsub.s32 %v3894, %v3896
    %v3898 = vrot.slane %v3884, %v3897
    %v3899 = vcombine.low %v3891, %v3898
    %3901 = vmatprep.subr.mxu0 %v3780
    %3902 = vmatpush1.msra.mxu0 %v3779
    %3903 = vmatprep.subr.mxu0 %v3784
    %3904 = vmatpush1.msra.mxu0 %v3783
    %3905 = vmatprep.subr.mxu0 %v3788
    %3906 = vmatpush1.msra.mxu0 %v3787
    %3907 = vmatprep.subr.mxu0 %v3792
    %3908 = vmatpush1.msra.mxu0 %v3791
    %3909 = vmatprep.subr.mxu0 %v3796
    %3910 = vmatpush1.msra.mxu0 %v3795
    %3911 = vmatprep.subr.mxu0 %v3800
    %3912 = vmatpush1.msra.mxu0 %v3799
    %3913 = vmatprep.subr.mxu0 %v3804
    %3914 = vmatpush1.msra.mxu0 %v3803
    %3915 = vmatprep.subr.mxu0 %v3808
    %3916 = vmatpush1.msra.mxu0 %v3807
    %3917 = vmatprep.subr.mxu0 %v3812
    %3918 = vmatpush1.msra.mxu0 %v3811
    %3919 = vmatprep.subr.mxu0 %v3816
    %3920 = vmatpush1.msra.mxu0 %v3815
    %3921 = vmatprep.subr.mxu0 %v3820
    %3922 = vmatpush1.msra.mxu0 %v3819
    %3923 = vmatprep.subr.mxu0 %v3824
    %3924 = vmatpush1.msra.mxu0 %v3823
    %3925 = vmatprep.subr.mxu0 %v3828
    %3926 = vmatpush1.msra.mxu0 %v3827
    %3927 = vmatprep.subr.mxu0 %v3832
    %3928 = vmatpush1.msra.mxu0 %v3831
    %3929 = vmatprep.subr.mxu0 %v3836
    %3930 = vmatpush1.msra.mxu0 %v3835
    %3931 = vmatprep.subr.mxu0 %v3840
    %3932 = vmatpush1.msra.mxu0 %v3839
    %3933 = vmatprep.subr.mxu0 0.0
    %3934 = vmatpush1.msra.mxu0 0.0
    %3935 = vmatprep.subr.mxu0 0.0
    %3936 = vmatpush1.msra.mxu0 0.0
    %3937 = vmatprep.subr.mxu0 0.0
    %3938 = vmatpush1.msra.mxu0 0.0
    %3939 = vmatprep.subr.mxu0 0.0
    %3940 = vmatpush1.msra.mxu0 0.0
    %3941 = vmatprep.subr.mxu0 0.0
    %3942 = vmatpush1.msra.mxu0 0.0
    %3943 = vmatprep.subr.mxu0 0.0
    %3944 = vmatpush1.msra.mxu0 0.0
    %3945 = vmatprep.subr.mxu0 0.0
    %3946 = vmatpush1.msra.mxu0 0.0
    %3947 = vmatprep.subr.mxu0 0.0
    %3948 = vmatpush1.msra.mxu0 0.0
    %3949 = vmatprep.subr.mxu0 0.0
    %3950 = vmatpush1.msra.mxu0 0.0
    %3951 = vmatprep.subr.mxu0 0.0
    %3952 = vmatpush1.msra.mxu0 0.0
    %3953 = vmatprep.subr.mxu0 0.0
    %3954 = vmatpush1.msra.mxu0 0.0
    %3955 = vmatprep.subr.mxu0 0.0
    %3956 = vmatpush1.msra.mxu0 0.0
    %3957 = vmatprep.subr.mxu0 0.0
    %3958 = vmatpush1.msra.mxu0 0.0
    %3959 = vmatprep.subr.mxu0 0.0
    %3960 = vmatpush1.msra.mxu0 0.0
    %3961 = vmatprep.subr.mxu0 0.0
    %3962 = vmatpush1.msra.mxu0 0.0
    %3963 = vmatprep.subr.mxu0 0.0
    %3964 = vmatpush1.msra.mxu0 0.0
    %3965 = vmatprep.mubr.f32.mxu0 0.0
    %3966 = vmatmul.mubr.f32.gmra.mrb[0].mxu0 %v3899
    %v3967 = vpop.f32.mrb[0].mxu0
    %v3968 = vadd.f32 0.0, %v3967
    %v3969 = vpop.f32.mrb[0].mxu0
    %v3970 = vadd.f32 0.0, %v3969
    %3971 = vdwg.mxu0
    %3972 = vmatprep.subr.mxu0 %v3782
    %3973 = vmatpush1.msra.mxu0 %v3781
    %3974 = vmatprep.subr.mxu0 %v3786
    %3975 = vmatpush1.msra.mxu0 %v3785
    %3976 = vmatprep.subr.mxu0 %v3790
    %3977 = vmatpush1.msra.mxu0 %v3789
    %3978 = vmatprep.subr.mxu0 %v3794
    %3979 = vmatpush1.msra.mxu0 %v3793
    %3980 = vmatprep.subr.mxu0 %v3798
    %3981 = vmatpush1.msra.mxu0 %v3797
    %3982 = vmatprep.subr.mxu0 %v3802
    %3983 = vmatpush1.msra.mxu0 %v3801
    %3984 = vmatprep.subr.mxu0 %v3806
    %3985 = vmatpush1.msra.mxu0 %v3805
    %3986 = vmatprep.subr.mxu0 %v3810
    %3987 = vmatpush1.msra.mxu0 %v3809
    %3988 = vmatprep.subr.mxu0 %v3814
    %3989 = vmatpush1.msra.mxu0 %v3813
    %3990 = vmatprep.subr.mxu0 %v3818
    %3991 = vmatpush1.msra.mxu0 %v3817
    %3992 = vmatprep.subr.mxu0 %v3822
    %3993 = vmatpush1.msra.mxu0 %v3821
    %3994 = vmatprep.subr.mxu0 %v3826
    %3995 = vmatpush1.msra.mxu0 %v3825
    %3996 = vmatprep.subr.mxu0 %v3830
    %3997 = vmatpush1.msra.mxu0 %v3829
    %3998 = vmatprep.subr.mxu0 %v3834
    %3999 = vmatpush1.msra.mxu0 %v3833
    %4000 = vmatprep.subr.mxu0 %v3838
    %4001 = vmatpush1.msra.mxu0 %v3837
    %4002 = vmatprep.subr.mxu0 %v3842
    %4003 = vmatpush1.msra.mxu0 %v3841
    %4004 = vmatprep.subr.mxu0 0.0
    %4005 = vmatpush1.msra.mxu0 0.0
    %4006 = vmatprep.subr.mxu0 0.0
    %4007 = vmatpush1.msra.mxu0 0.0
    %4008 = vmatprep.subr.mxu0 0.0
    %4009 = vmatpush1.msra.mxu0 0.0
    %4010 = vmatprep.subr.mxu0 0.0
    %4011 = vmatpush1.msra.mxu0 0.0
    %4012 = vmatprep.subr.mxu0 0.0
    %4013 = vmatpush1.msra.mxu0 0.0
    %4014 = vmatprep.subr.mxu0 0.0
    %4015 = vmatpush1.msra.mxu0 0.0
    %4016 = vmatprep.subr.mxu0 0.0
    %4017 = vmatpush1.msra.mxu0 0.0
    %4018 = vmatprep.subr.mxu0 0.0
    %4019 = vmatpush1.msra.mxu0 0.0
    %4020 = vmatprep.subr.mxu0 0.0
    %4021 = vmatpush1.msra.mxu0 0.0
    %4022 = vmatprep.subr.mxu0 0.0
    %4023 = vmatpush1.msra.mxu0 0.0
    %4024 = vmatprep.subr.mxu0 0.0
    %4025 = vmatpush1.msra.mxu0 0.0
    %4026 = vmatprep.subr.mxu0 0.0
    %4027 = vmatpush1.msra.mxu0 0.0
    %4028 = vmatprep.subr.mxu0 0.0
    %4029 = vmatpush1.msra.mxu0 0.0
    %4030 = vmatprep.subr.mxu0 0.0
    %4031 = vmatpush1.msra.mxu0 0.0
    %4032 = vmatprep.subr.mxu0 0.0
    %4033 = vmatpush1.msra.mxu0 0.0
    %4034 = vmatprep.subr.mxu0 0.0
    %4035 = vmatpush1.msra.mxu0 0.0
    %4036 = vmatprep.mubr.f32.mxu0 0.0
    %4037 = vmatmul.mubr.f32.gmra.mrb[0].mxu0 %v3899
    %v4038 = vpop.f32.mrb[0].mxu0
    %v4039 = vadd.f32 0.0, %v4038
    %v4040 = vpop.f32.mrb[0].mxu0
    %v4041 = vadd.f32 0.0, %v4040
    %4042 = vdwg.mxu0
    %v4047 = vcombine.low %v3968, %v3970
    %v4048 = vcombine.high %v3968, %v3970
    %v4049 = vcombine.low %v4039, %v4041
    %v4050 = vcombine.high %v4039, %v4041
    %v4052 = vunpack.c.l.s4 1966171168
    %v4053 = vunpack.c.0.s8 %v4052
    %v4054 = vlaneseq
    %v4055 = vshrl.u32 %v4054, 7
    %v4056 = vsub.s32 %v4053, %v4055
    %v4057 = vrot.slane %v4047, %v4056
    %v4059 = vunpack.c.l.s4 1966171168
    %v4060 = vunpack.c.0.s8 %v4059
    %v4061 = vlaneseq
    %v4062 = vshrl.u32 %v4061, 7
    %v4063 = vsub.s32 %v4060, %v4062
    %v4064 = vrot.slane %v4048, %v4063
    %v4066 = vunpack.c.l.s4 1966171168
    %v4067 = vunpack.c.0.s8 %v4066
    %v4068 = vlaneseq
    %v4069 = vshrl.u32 %v4068, 7
    %v4070 = vsub.s32 %v4067, %v4069
    %v4071 = vrot.slane %v4049, %v4070
    %v4073 = vunpack.c.l.s4 1966171168
    %v4074 = vunpack.c.0.s8 %v4073
    %v4075 = vlaneseq
    %v4076 = vshrl.u32 %v4075, 7
    %v4077 = vsub.s32 %v4074, %v4076
    %v4078 = vrot.slane %v4050, %v4077
    %v4079 = vcombine.low %v4057, %v4071
    %v4080 = vcombine.high %v4057, %v4071
    %v4081 = vcombine.low %v4064, %v4078
    %v4082 = vcombine.high %v4064, %v4078
    %v4084 = vunpack.c.l.s4 1966171168
    %v4085 = vunpack.c.0.s8 %v4084
    %v4086 = vlaneseq
    %v4087 = vshrl.u32 %v4086, 7
    %v4088 = vsub.s32 %v4085, %v4087
    %v4089 = vrot.slane %v4079, %v4088
    %v4091 = vunpack.c.l.s4 1966171168
    %v4092 = vunpack.c.0.s8 %v4091
    %v4093 = vlaneseq
    %v4094 = vshrl.u32 %v4093, 7
    %v4095 = vsub.s32 %v4092, %v4094
    %v4096 = vrot.slane %v4081, %v4095
    %v4098 = vunpack.c.l.s4 1966171168
    %v4099 = vunpack.c.0.s8 %v4098
    %v4100 = vlaneseq
    %v4101 = vshrl.u32 %v4100, 7
    %v4102 = vsub.s32 %v4099, %v4101
    %v4103 = vrot.slane %v4080, %v4102
    %v4105 = vunpack.c.l.s4 1966171168
    %v4106 = vunpack.c.0.s8 %v4105
    %v4107 = vlaneseq
    %v4108 = vshrl.u32 %v4107, 7
    %v4109 = vsub.s32 %v4106, %v4108
    %v4110 = vrot.slane %v4082, %v4109
    %v4111 = vcombine.high %v4089, %v4089
    %v4112 = vcombine.high %v4096, %v4096
    %v4113 = vcombine.high %v4103, %v4103
    %v4114 = vcombine.high %v4110, %v4110
    %v4123 = vadd.f32 %v3764, %v4089
    %v4124 = vadd.f32 %v3766, %v4103
    %v4125 = vadd.f32 %v3768, %v4111
    %v4126 = vadd.f32 %v3770, %v4113
    %v4127 = vadd.f32 %v3772, %v4096
    %v4128 = vadd.f32 %v3774, %v4110
    %v4129 = vadd.f32 %v3776, %v4112
    %v4130 = vadd.f32 %v3778, %v4114
    %v4131 = vxor.u32 %v4123, 2147483648
    %v4132 = vxor.u32 %v4124, 2147483648
    %v4133 = vxor.u32 %v4125, 2147483648
    %v4134 = vxor.u32 %v4126, 2147483648
    %v4135 = vxor.u32 %v4127, 2147483648
    %v4136 = vxor.u32 %v4128, 2147483648
    %v4137 = vxor.u32 %v4129, 2147483648
    %v4138 = vxor.u32 %v4130, 2147483648
    %v4139 = vmul.f32 %v4131, 1.442695
    %v4140 = vpow.pop %v4139
    %v4141 = vmul.f32 %v4132, 1.442695
    %v4142 = vpow.pop %v4141
    %v4143 = vmul.f32 %v4133, 1.442695
    %v4144 = vpow.pop %v4143
    %v4145 = vmul.f32 %v4134, 1.442695
    %v4146 = vpow.pop %v4145
    %v4147 = vmul.f32 %v4135, 1.442695
    %v4148 = vpow.pop %v4147
    %v4149 = vmul.f32 %v4136, 1.442695
    %v4150 = vpow.pop %v4149
    %v4151 = vmul.f32 %v4137, 1.442695
    %v4152 = vpow.pop %v4151
    %v4153 = vmul.f32 %v4138, 1.442695
    %v4154 = vpow.pop %v4153
    %v4155 = vadd.f32 %v4140, 1.0
    %v4156 = vadd.f32 %v4142, 1.0
    %v4157 = vadd.f32 %v4144, 1.0
    %v4158 = vadd.f32 %v4146, 1.0
    %v4159 = vadd.f32 %v4148, 1.0
    %v4160 = vadd.f32 %v4150, 1.0
    %v4161 = vadd.f32 %v4152, 1.0
    %v4162 = vadd.f32 %v4154, 1.0
    %v4163 = vrcp.pop %v4155
    %v4164 = vmul.f32 1.0, %v4163
    %v4165 = vrcp.pop %v4156
    %v4166 = vmul.f32 1.0, %v4165
    %v4167 = vrcp.pop %v4157
    %v4168 = vmul.f32 1.0, %v4167
    %v4169 = vrcp.pop %v4158
    %v4170 = vmul.f32 1.0, %v4169
    %v4171 = vrcp.pop %v4159
    %v4172 = vmul.f32 1.0, %v4171
    %v4173 = vrcp.pop %v4160
    %v4174 = vmul.f32 1.0, %v4173
    %v4175 = vrcp.pop %v4161
    %v4176 = vmul.f32 1.0, %v4175
    %v4177 = vrcp.pop %v4162
    %v4178 = vmul.f32 1.0, %v4177
    %v4187 = vrot.slane %v4123, 1
    %v4188 = vrot.slane %v4124, 1
    %v4189 = vrot.slane %v4125, 1
    %v4190 = vrot.slane %v4126, 1
    %v4191 = vrot.slane %v4127, 1
    %v4192 = vrot.slane %v4128, 1
    %v4193 = vrot.slane %v4129, 1
    %v4194 = vrot.slane %v4130, 1
    %v4203 = vxor.u32 %v4187, 2147483648
    %v4204 = vxor.u32 %v4188, 2147483648
    %v4205 = vxor.u32 %v4189, 2147483648
    %v4206 = vxor.u32 %v4190, 2147483648
    %v4207 = vxor.u32 %v4191, 2147483648
    %v4208 = vxor.u32 %v4192, 2147483648
    %v4209 = vxor.u32 %v4193, 2147483648
    %v4210 = vxor.u32 %v4194, 2147483648
    %v4211 = vmul.f32 %v4203, 1.442695
    %v4212 = vpow.pop %v4211
    %v4213 = vmul.f32 %v4204, 1.442695
    %v4214 = vpow.pop %v4213
    %v4215 = vmul.f32 %v4205, 1.442695
    %v4216 = vpow.pop %v4215
    %v4217 = vmul.f32 %v4206, 1.442695
    %v4218 = vpow.pop %v4217
    %v4219 = vmul.f32 %v4207, 1.442695
    %v4220 = vpow.pop %v4219
    %v4221 = vmul.f32 %v4208, 1.442695
    %v4222 = vpow.pop %v4221
    %v4223 = vmul.f32 %v4209, 1.442695
    %v4224 = vpow.pop %v4223
    %v4225 = vmul.f32 %v4210, 1.442695
    %v4226 = vpow.pop %v4225
    %v4227 = vadd.f32 %v4212, 1.0
    %v4228 = vadd.f32 %v4214, 1.0
    %v4229 = vadd.f32 %v4216, 1.0
    %v4230 = vadd.f32 %v4218, 1.0
    %v4231 = vadd.f32 %v4220, 1.0
    %v4232 = vadd.f32 %v4222, 1.0
    %v4233 = vadd.f32 %v4224, 1.0
    %v4234 = vadd.f32 %v4226, 1.0
    %v4235 = vrcp.pop %v4227
    %v4236 = vmul.f32 1.0, %v4235
    %v4237 = vrcp.pop %v4228
    %v4238 = vmul.f32 1.0, %v4237
    %v4239 = vrcp.pop %v4229
    %v4240 = vmul.f32 1.0, %v4239
    %v4241 = vrcp.pop %v4230
    %v4242 = vmul.f32 1.0, %v4241
    %v4243 = vrcp.pop %v4231
    %v4244 = vmul.f32 1.0, %v4243
    %v4245 = vrcp.pop %v4232
    %v4246 = vmul.f32 1.0, %v4245
    %v4247 = vrcp.pop %v4233
    %v4248 = vmul.f32 1.0, %v4247
    %v4249 = vrcp.pop %v4234
    %v4250 = vmul.f32 1.0, %v4249
    %v4251 = vrot.slane %v4123, 2
    %v4252 = vrot.slane %v4124, 2
    %v4253 = vrot.slane %v4125, 2
    %v4254 = vrot.slane %v4126, 2
    %v4255 = vrot.slane %v4127, 2
    %v4256 = vrot.slane %v4128, 2
    %v4257 = vrot.slane %v4129, 2
    %v4258 = vrot.slane %v4130, 2
    %v4267 = vtanh.pop %v4251
    %v4268 = vtanh.pop %v4252
    %v4269 = vtanh.pop %v4253
    %v4270 = vtanh.pop %v4254
    %v4271 = vtanh.pop %v4255
    %v4272 = vtanh.pop %v4256
    %v4273 = vtanh.pop %v4257
    %v4274 = vtanh.pop %v4258
    %v4275 = vrot.slane %v4123, 3
    %v4276 = vrot.slane %v4124, 3
    %v4277 = vrot.slane %v4125, 3
    %v4278 = vrot.slane %v4126, 3
    %v4279 = vrot.slane %v4127, 3
    %v4280 = vrot.slane %v4128, 3
    %v4281 = vrot.slane %v4129, 3
    %v4282 = vrot.slane %v4130, 3
    %v4291 = vxor.u32 %v4275, 2147483648
    %v4292 = vxor.u32 %v4276, 2147483648
    %v4293 = vxor.u32 %v4277, 2147483648
    %v4294 = vxor.u32 %v4278, 2147483648
    %v4295 = vxor.u32 %v4279, 2147483648
    %v4296 = vxor.u32 %v4280, 2147483648
    %v4297 = vxor.u32 %v4281, 2147483648
    %v4298 = vxor.u32 %v4282, 2147483648
    %v4299 = vmul.f32 %v4291, 1.442695
    %v4300 = vpow.pop %v4299
    %v4301 = vmul.f32 %v4292, 1.442695
    %v4302 = vpow.pop %v4301
    %v4303 = vmul.f32 %v4293, 1.442695
    %v4304 = vpow.pop %v4303
    %v4305 = vmul.f32 %v4294, 1.442695
    %v4306 = vpow.pop %v4305
    %v4307 = vmul.f32 %v4295, 1.442695
    %v4308 = vpow.pop %v4307
    %v4309 = vmul.f32 %v4296, 1.442695
    %v4310 = vpow.pop %v4309
    %v4311 = vmul.f32 %v4297, 1.442695
    %v4312 = vpow.pop %v4311
    %v4313 = vmul.f32 %v4298, 1.442695
    %v4314 = vpow.pop %v4313
    %v4315 = vadd.f32 %v4300, 1.0
    %v4316 = vadd.f32 %v4302, 1.0
    %v4317 = vadd.f32 %v4304, 1.0
    %v4318 = vadd.f32 %v4306, 1.0
    %v4319 = vadd.f32 %v4308, 1.0
    %v4320 = vadd.f32 %v4310, 1.0
    %v4321 = vadd.f32 %v4312, 1.0
    %v4322 = vadd.f32 %v4314, 1.0
    %v4323 = vrcp.pop %v4315
    %v4324 = vmul.f32 1.0, %v4323
    %v4325 = vrcp.pop %v4316
    %v4326 = vmul.f32 1.0, %v4325
    %v4327 = vrcp.pop %v4317
    %v4328 = vmul.f32 1.0, %v4327
    %v4329 = vrcp.pop %v4318
    %v4330 = vmul.f32 1.0, %v4329
    %v4331 = vrcp.pop %v4319
    %v4332 = vmul.f32 1.0, %v4331
    %v4333 = vrcp.pop %v4320
    %v4334 = vmul.f32 1.0, %v4333
    %v4335 = vrcp.pop %v4321
    %v4336 = vmul.f32 1.0, %v4335
    %v4337 = vrcp.pop %v4322
    %v4338 = vmul.f32 1.0, %v4337
    %v4339 = vmul.f32 %v4236, %v3731
    %v4340 = vmul.f32 %v4238, %v3732
    %v4341 = vmul.f32 %v4240, %v3733
    %v4342 = vmul.f32 %v4242, %v3734
    %v4343 = vmul.f32 %v4244, %v3735
    %v4344 = vmul.f32 %v4246, %v3736
    %v4345 = vmul.f32 %v4248, %v3737
    %v4346 = vmul.f32 %v4250, %v3738
    %v4347 = vmul.f32 %v4164, %v4267
    %v4348 = vmul.f32 %v4166, %v4268
    %v4349 = vmul.f32 %v4168, %v4269
    %v4350 = vmul.f32 %v4170, %v4270
    %v4351 = vmul.f32 %v4172, %v4271
    %v4352 = vmul.f32 %v4174, %v4272
    %v4353 = vmul.f32 %v4176, %v4273
    %v4354 = vmul.f32 %v4178, %v4274
    %v4355 = vadd.f32 %v4339, %v4347
    %v4356 = vadd.f32 %v4340, %v4348
    %v4357 = vadd.f32 %v4341, %v4349
    %v4358 = vadd.f32 %v4342, %v4350
    %v4359 = vadd.f32 %v4343, %v4351
    %v4360 = vadd.f32 %v4344, %v4352
    %v4361 = vadd.f32 %v4345, %v4353
    %v4362 = vadd.f32 %v4346, %v4354
    %v4363 = vtanh.pop %v4355
    %v4364 = vtanh.pop %v4356
    %v4365 = vtanh.pop %v4357
    %v4366 = vtanh.pop %v4358
    %v4367 = vtanh.pop %v4359
    %v4368 = vtanh.pop %v4360
    %v4369 = vtanh.pop %v4361
    %v4370 = vtanh.pop %v4362
    %v4371 = vmul.f32 %v4324, %v4363
    %v4372 = vmul.f32 %v4326, %v4364
    %v4373 = vmul.f32 %v4328, %v4365
    %v4374 = vmul.f32 %v4330, %v4366
    %v4375 = vmul.f32 %v4332, %v4367
    %v4376 = vmul.f32 %v4334, %v4368
    %v4377 = vmul.f32 %v4336, %v4369
    %v4378 = vmul.f32 %v4338, %v4370
    %4379 = vst [vmem:[#allocation2 + $0x6] sm:$0x1] %v4371
    %4380 = vst [vmem:[#allocation2 + $0xe] sm:$0x1] %v4372
    %4381 = vst [vmem:[#allocation2 + $0x16] sm:$0x1] %v4373
    %4382 = vst [vmem:[#allocation2 + $0x1e] sm:$0x1] %v4374
    %4383 = vst [vmem:[#allocation2 + $0x26] sm:$0x1] %v4375
    %4384 = vst [vmem:[#allocation2 + $0x2e] sm:$0x1] %v4376
    %4385 = vst [vmem:[#allocation2 + $0x36] sm:$0x1] %v4377
    %4386 = vst [vmem:[#allocation2 + $0x3e] sm:$0x1] %v4378
    %s4387 = scalar_lea.vmem %s0, 7
    %v4388 = vld [vmem:[%s4387] ss:$8 sm:$0xf]
    %s4389 = scalar_lea.vmem %s0, 39
    %v4390 = vld [vmem:[%s4389] ss:$8 sm:$0xf]
    %s4391 = scalar_lea.vmem %s0, 71
    %v4392 = vld [vmem:[%s4391] ss:$8 sm:$0xf]
    %s4393 = scalar_lea.vmem %s0, 103
    %v4394 = vld [vmem:[%s4393] ss:$8 sm:$0xf]
    %s4395 = scalar_lea.vmem %s0, 135
    %v4396 = vld [vmem:[%s4395] ss:$8 sm:$0xf]
    %s4397 = scalar_lea.vmem %s0, 167
    %v4398 = vld [vmem:[%s4397] ss:$8 sm:$0xf]
    %s4399 = scalar_lea.vmem %s0, 199
    %v4400 = vld [vmem:[%s4399] ss:$8 sm:$0xf]
    %s4401 = scalar_lea.vmem %s0, 231
    %v4402 = vld [vmem:[%s4401] ss:$8 sm:$0xf]
    %v4403 = vld [vmem:[%s3] sm:$0xff]
    %v4404 = vld [vmem:[%s3 + $0x8] sm:$0xff]
    %v4405 = vld [vmem:[%s3 + $0x10] sm:$0xff]
    %v4406 = vld [vmem:[%s3 + $0x18] sm:$0xff]
    %v4407 = vld [vmem:[%s3 + $0x20] sm:$0xff]
    %v4408 = vld [vmem:[%s3 + $0x28] sm:$0xff]
    %v4409 = vld [vmem:[%s3 + $0x30] sm:$0xff]
    %v4410 = vld [vmem:[%s3 + $0x38] sm:$0xff]
    %v4411 = vld [vmem:[%s3 + $0x40] sm:$0xff]
    %v4412 = vld [vmem:[%s3 + $0x48] sm:$0xff]
    %v4413 = vld [vmem:[%s3 + $0x50] sm:$0xff]
    %v4414 = vld [vmem:[%s3 + $0x58] sm:$0xff]
    %v4415 = vld [vmem:[%s3 + $0x60] sm:$0xff]
    %v4416 = vld [vmem:[%s3 + $0x68] sm:$0xff]
    %v4417 = vld [vmem:[%s3 + $0x70] sm:$0xff]
    %v4418 = vld [vmem:[%s3 + $0x78] sm:$0xff]
    %v4419 = vld [vmem:[%s3 + $0x80] sm:$0xff]
    %v4420 = vld [vmem:[%s3 + $0x88] sm:$0xff]
    %v4421 = vld [vmem:[%s3 + $0x90] sm:$0xff]
    %v4422 = vld [vmem:[%s3 + $0x98] sm:$0xff]
    %v4423 = vld [vmem:[%s3 + $0xa0] sm:$0xff]
    %v4424 = vld [vmem:[%s3 + $0xa8] sm:$0xff]
    %v4425 = vld [vmem:[%s3 + $0xb0] sm:$0xff]
    %v4426 = vld [vmem:[%s3 + $0xb8] sm:$0xff]
    %v4427 = vld [vmem:[%s3 + $0xc0] sm:$0xff]
    %v4428 = vld [vmem:[%s3 + $0xc8] sm:$0xff]
    %v4429 = vld [vmem:[%s3 + $0xd0] sm:$0xff]
    %v4430 = vld [vmem:[%s3 + $0xd8] sm:$0xff]
    %v4431 = vld [vmem:[%s3 + $0xe0] sm:$0xff]
    %v4432 = vld [vmem:[%s3 + $0xe8] sm:$0xff]
    %v4433 = vld [vmem:[%s3 + $0xf0] sm:$0xff]
    %v4434 = vld [vmem:[%s3 + $0xf8] sm:$0xff]
    %v4435 = vld [vmem:[%s3 + $0x100] sm:$0xff]
    %v4436 = vld [vmem:[%s3 + $0x108] sm:$0xff]
    %v4437 = vld [vmem:[%s3 + $0x110] sm:$0xff]
    %v4438 = vld [vmem:[%s3 + $0x118] sm:$0xff]
    %v4439 = vld [vmem:[%s3 + $0x120] sm:$0xff]
    %v4440 = vld [vmem:[%s3 + $0x128] sm:$0xff]
    %v4441 = vld [vmem:[%s3 + $0x130] sm:$0xff]
    %v4442 = vld [vmem:[%s3 + $0x138] sm:$0xff]
    %v4443 = vld [vmem:[%s3 + $0x140] sm:$0xff]
    %v4444 = vld [vmem:[%s3 + $0x148] sm:$0xff]
    %v4445 = vld [vmem:[%s3 + $0x150] sm:$0xff]
    %v4446 = vld [vmem:[%s3 + $0x158] sm:$0xff]
    %v4447 = vld [vmem:[%s3 + $0x160] sm:$0xff]
    %v4448 = vld [vmem:[%s3 + $0x168] sm:$0xff]
    %v4449 = vld [vmem:[%s3 + $0x170] sm:$0xff]
    %v4450 = vld [vmem:[%s3 + $0x178] sm:$0xff]
    %v4451 = vld [vmem:[%s3 + $0x180] sm:$0xff]
    %v4452 = vld [vmem:[%s3 + $0x188] sm:$0xff]
    %v4453 = vld [vmem:[%s3 + $0x190] sm:$0xff]
    %v4454 = vld [vmem:[%s3 + $0x198] sm:$0xff]
    %v4455 = vld [vmem:[%s3 + $0x1a0] sm:$0xff]
    %v4456 = vld [vmem:[%s3 + $0x1a8] sm:$0xff]
    %v4457 = vld [vmem:[%s3 + $0x1b0] sm:$0xff]
    %v4458 = vld [vmem:[%s3 + $0x1b8] sm:$0xff]
    %v4459 = vld [vmem:[%s3 + $0x1c0] sm:$0xff]
    %v4460 = vld [vmem:[%s3 + $0x1c8] sm:$0xff]
    %v4461 = vld [vmem:[%s3 + $0x1d0] sm:$0xff]
    %v4462 = vld [vmem:[%s3 + $0x1d8] sm:$0xff]
    %v4463 = vld [vmem:[%s3 + $0x1e0] sm:$0xff]
    %v4464 = vld [vmem:[%s3 + $0x1e8] sm:$0xff]
    %v4465 = vld [vmem:[%s3 + $0x1f0] sm:$0xff]
    %v4466 = vld [vmem:[%s3 + $0x1f8] sm:$0xff]
    %v4475 = vcombine.low %v4371, %v4372
    %v4476 = vcombine.low %v4373, %v4374
    %v4477 = vcombine.low %v4375, %v4376
    %v4478 = vcombine.low %v4377, %v4378
    %v4480 = vunpack.c.l.s4 1966171168
    %v4481 = vunpack.c.0.s8 %v4480
    %v4482 = vlaneseq
    %v4483 = vshrl.u32 %v4482, 7
    %v4484 = vsub.s32 %v4481, %v4483
    %v4485 = vrot.slane %v4475, %v4484
    %v4487 = vunpack.c.l.s4 1966171168
    %v4488 = vunpack.c.0.s8 %v4487
    %v4489 = vlaneseq
    %v4490 = vshrl.u32 %v4489, 7
    %v4491 = vsub.s32 %v4488, %v4490
    %v4492 = vrot.slane %v4476, %v4491
    %v4494 = vunpack.c.l.s4 1966171168
    %v4495 = vunpack.c.0.s8 %v4494
    %v4496 = vlaneseq
    %v4497 = vshrl.u32 %v4496, 7
    %v4498 = vsub.s32 %v4495, %v4497
    %v4499 = vrot.slane %v4477, %v4498
    %v4501 = vunpack.c.l.s4 1966171168
    %v4502 = vunpack.c.0.s8 %v4501
    %v4503 = vlaneseq
    %v4504 = vshrl.u32 %v4503, 7
    %v4505 = vsub.s32 %v4502, %v4504
    %v4506 = vrot.slane %v4478, %v4505
    %v4507 = vcombine.low %v4485, %v4492
    %v4508 = vcombine.low %v4499, %v4506
    %v4510 = vunpack.c.l.s4 1966171168
    %v4511 = vunpack.c.0.s8 %v4510
    %v4512 = vlaneseq
    %v4513 = vshrl.u32 %v4512, 7
    %v4514 = vsub.s32 %v4511, %v4513
    %v4515 = vrot.slane %v4507, %v4514
    %v4517 = vunpack.c.l.s4 1966171168
    %v4518 = vunpack.c.0.s8 %v4517
    %v4519 = vlaneseq
    %v4520 = vshrl.u32 %v4519, 7
    %v4521 = vsub.s32 %v4518, %v4520
    %v4522 = vrot.slane %v4508, %v4521
    %v4523 = vcombine.low %v4515, %v4522
    %4525 = vmatprep.subr.mxu0 %v4404
    %4526 = vmatpush1.msra.mxu0 %v4403
    %4527 = vmatprep.subr.mxu0 %v4408
    %4528 = vmatpush1.msra.mxu0 %v4407
    %4529 = vmatprep.subr.mxu0 %v4412
    %4530 = vmatpush1.msra.mxu0 %v4411
    %4531 = vmatprep.subr.mxu0 %v4416
    %4532 = vmatpush1.msra.mxu0 %v4415
    %4533 = vmatprep.subr.mxu0 %v4420
    %4534 = vmatpush1.msra.mxu0 %v4419
    %4535 = vmatprep.subr.mxu0 %v4424
    %4536 = vmatpush1.msra.mxu0 %v4423
    %4537 = vmatprep.subr.mxu0 %v4428
    %4538 = vmatpush1.msra.mxu0 %v4427
    %4539 = vmatprep.subr.mxu0 %v4432
    %4540 = vmatpush1.msra.mxu0 %v4431
    %4541 = vmatprep.subr.mxu0 %v4436
    %4542 = vmatpush1.msra.mxu0 %v4435
    %4543 = vmatprep.subr.mxu0 %v4440
    %4544 = vmatpush1.msra.mxu0 %v4439
    %4545 = vmatprep.subr.mxu0 %v4444
    %4546 = vmatpush1.msra.mxu0 %v4443
    %4547 = vmatprep.subr.mxu0 %v4448
    %4548 = vmatpush1.msra.mxu0 %v4447
    %4549 = vmatprep.subr.mxu0 %v4452
    %4550 = vmatpush1.msra.mxu0 %v4451
    %4551 = vmatprep.subr.mxu0 %v4456
    %4552 = vmatpush1.msra.mxu0 %v4455
    %4553 = vmatprep.subr.mxu0 %v4460
    %4554 = vmatpush1.msra.mxu0 %v4459
    %4555 = vmatprep.subr.mxu0 %v4464
    %4556 = vmatpush1.msra.mxu0 %v4463
    %4557 = vmatprep.subr.mxu0 0.0
    %4558 = vmatpush1.msra.mxu0 0.0
    %4559 = vmatprep.subr.mxu0 0.0
    %4560 = vmatpush1.msra.mxu0 0.0
    %4561 = vmatprep.subr.mxu0 0.0
    %4562 = vmatpush1.msra.mxu0 0.0
    %4563 = vmatprep.subr.mxu0 0.0
    %4564 = vmatpush1.msra.mxu0 0.0
    %4565 = vmatprep.subr.mxu0 0.0
    %4566 = vmatpush1.msra.mxu0 0.0
    %4567 = vmatprep.subr.mxu0 0.0
    %4568 = vmatpush1.msra.mxu0 0.0
    %4569 = vmatprep.subr.mxu0 0.0
    %4570 = vmatpush1.msra.mxu0 0.0
    %4571 = vmatprep.subr.mxu0 0.0
    %4572 = vmatpush1.msra.mxu0 0.0
    %4573 = vmatprep.subr.mxu0 0.0
    %4574 = vmatpush1.msra.mxu0 0.0
    %4575 = vmatprep.subr.mxu0 0.0
    %4576 = vmatpush1.msra.mxu0 0.0
    %4577 = vmatprep.subr.mxu0 0.0
    %4578 = vmatpush1.msra.mxu0 0.0
    %4579 = vmatprep.subr.mxu0 0.0
    %4580 = vmatpush1.msra.mxu0 0.0
    %4581 = vmatprep.subr.mxu0 0.0
    %4582 = vmatpush1.msra.mxu0 0.0
    %4583 = vmatprep.subr.mxu0 0.0
    %4584 = vmatpush1.msra.mxu0 0.0
    %4585 = vmatprep.subr.mxu0 0.0
    %4586 = vmatpush1.msra.mxu0 0.0
    %4587 = vmatprep.subr.mxu0 0.0
    %4588 = vmatpush1.msra.mxu0 0.0
    %4589 = vmatprep.mubr.f32.mxu0 0.0
    %4590 = vmatmul.mubr.f32.gmra.mrb[0].mxu0 %v4523
    %v4591 = vpop.f32.mrb[0].mxu0
    %v4592 = vadd.f32 0.0, %v4591
    %v4593 = vpop.f32.mrb[0].mxu0
    %v4594 = vadd.f32 0.0, %v4593
    %4595 = vdwg.mxu0
    %4596 = vmatprep.subr.mxu0 %v4406
    %4597 = vmatpush1.msra.mxu0 %v4405
    %4598 = vmatprep.subr.mxu0 %v4410
    %4599 = vmatpush1.msra.mxu0 %v4409
    %4600 = vmatprep.subr.mxu0 %v4414
    %4601 = vmatpush1.msra.mxu0 %v4413
    %4602 = vmatprep.subr.mxu0 %v4418
    %4603 = vmatpush1.msra.mxu0 %v4417
    %4604 = vmatprep.subr.mxu0 %v4422
    %4605 = vmatpush1.msra.mxu0 %v4421
    %4606 = vmatprep.subr.mxu0 %v4426
    %4607 = vmatpush1.msra.mxu0 %v4425
    %4608 = vmatprep.subr.mxu0 %v4430
    %4609 = vmatpush1.msra.mxu0 %v4429
    %4610 = vmatprep.subr.mxu0 %v4434
    %4611 = vmatpush1.msra.mxu0 %v4433
    %4612 = vmatprep.subr.mxu0 %v4438
    %4613 = vmatpush1.msra.mxu0 %v4437
    %4614 = vmatprep.subr.mxu0 %v4442
    %4615 = vmatpush1.msra.mxu0 %v4441
    %4616 = vmatprep.subr.mxu0 %v4446
    %4617 = vmatpush1.msra.mxu0 %v4445
    %4618 = vmatprep.subr.mxu0 %v4450
    %4619 = vmatpush1.msra.mxu0 %v4449
    %4620 = vmatprep.subr.mxu0 %v4454
    %4621 = vmatpush1.msra.mxu0 %v4453
    %4622 = vmatprep.subr.mxu0 %v4458
    %4623 = vmatpush1.msra.mxu0 %v4457
    %4624 = vmatprep.subr.mxu0 %v4462
    %4625 = vmatpush1.msra.mxu0 %v4461
    %4626 = vmatprep.subr.mxu0 %v4466
    %4627 = vmatpush1.msra.mxu0 %v4465
    %4628 = vmatprep.subr.mxu0 0.0
    %4629 = vmatpush1.msra.mxu0 0.0
    %4630 = vmatprep.subr.mxu0 0.0
    %4631 = vmatpush1.msra.mxu0 0.0
    %4632 = vmatprep.subr.mxu0 0.0
    %4633 = vmatpush1.msra.mxu0 0.0
    %4634 = vmatprep.subr.mxu0 0.0
    %4635 = vmatpush1.msra.mxu0 0.0
    %4636 = vmatprep.subr.mxu0 0.0
    %4637 = vmatpush1.msra.mxu0 0.0
    %4638 = vmatprep.subr.mxu0 0.0
    %4639 = vmatpush1.msra.mxu0 0.0
    %4640 = vmatprep.subr.mxu0 0.0
    %4641 = vmatpush1.msra.mxu0 0.0
    %4642 = vmatprep.subr.mxu0 0.0
    %4643 = vmatpush1.msra.mxu0 0.0
    %4644 = vmatprep.subr.mxu0 0.0
    %4645 = vmatpush1.msra.mxu0 0.0
    %4646 = vmatprep.subr.mxu0 0.0
    %4647 = vmatpush1.msra.mxu0 0.0
    %4648 = vmatprep.subr.mxu0 0.0
    %4649 = vmatpush1.msra.mxu0 0.0
    %4650 = vmatprep.subr.mxu0 0.0
    %4651 = vmatpush1.msra.mxu0 0.0
    %4652 = vmatprep.subr.mxu0 0.0
    %4653 = vmatpush1.msra.mxu0 0.0
    %4654 = vmatprep.subr.mxu0 0.0
    %4655 = vmatpush1.msra.mxu0 0.0
    %4656 = vmatprep.subr.mxu0 0.0
    %4657 = vmatpush1.msra.mxu0 0.0
    %4658 = vmatprep.subr.mxu0 0.0
    %4659 = vmatpush1.msra.mxu0 0.0
    %4660 = vmatprep.mubr.f32.mxu0 0.0
    %4661 = vmatmul.mubr.f32.gmra.mrb[0].mxu0 %v4523
    %v4662 = vpop.f32.mrb[0].mxu0
    %v4663 = vadd.f32 0.0, %v4662
    %v4664 = vpop.f32.mrb[0].mxu0
    %v4665 = vadd.f32 0.0, %v4664
    %4666 = vdwg.mxu0
    %v4671 = vcombine.low %v4592, %v4594
    %v4672 = vcombine.high %v4592, %v4594
    %v4673 = vcombine.low %v4663, %v4665
    %v4674 = vcombine.high %v4663, %v4665
    %v4676 = vunpack.c.l.s4 1966171168
    %v4677 = vunpack.c.0.s8 %v4676
    %v4678 = vlaneseq
    %v4679 = vshrl.u32 %v4678, 7
    %v4680 = vsub.s32 %v4677, %v4679
    %v4681 = vrot.slane %v4671, %v4680
    %v4683 = vunpack.c.l.s4 1966171168
    %v4684 = vunpack.c.0.s8 %v4683
    %v4685 = vlaneseq
    %v4686 = vshrl.u32 %v4685, 7
    %v4687 = vsub.s32 %v4684, %v4686
    %v4688 = vrot.slane %v4672, %v4687
    %v4690 = vunpack.c.l.s4 1966171168
    %v4691 = vunpack.c.0.s8 %v4690
    %v4692 = vlaneseq
    %v4693 = vshrl.u32 %v4692, 7
    %v4694 = vsub.s32 %v4691, %v4693
    %v4695 = vrot.slane %v4673, %v4694
    %v4697 = vunpack.c.l.s4 1966171168
    %v4698 = vunpack.c.0.s8 %v4697
    %v4699 = vlaneseq
    %v4700 = vshrl.u32 %v4699, 7
    %v4701 = vsub.s32 %v4698, %v4700
    %v4702 = vrot.slane %v4674, %v4701
    %v4703 = vcombine.low %v4681, %v4695
    %v4704 = vcombine.high %v4681, %v4695
    %v4705 = vcombine.low %v4688, %v4702
    %v4706 = vcombine.high %v4688, %v4702
    %v4708 = vunpack.c.l.s4 1966171168
    %v4709 = vunpack.c.0.s8 %v4708
    %v4710 = vlaneseq
    %v4711 = vshrl.u32 %v4710, 7
    %v4712 = vsub.s32 %v4709, %v4711
    %v4713 = vrot.slane %v4703, %v4712
    %v4715 = vunpack.c.l.s4 1966171168
    %v4716 = vunpack.c.0.s8 %v4715
    %v4717 = vlaneseq
    %v4718 = vshrl.u32 %v4717, 7
    %v4719 = vsub.s32 %v4716, %v4718
    %v4720 = vrot.slane %v4705, %v4719
    %v4722 = vunpack.c.l.s4 1966171168
    %v4723 = vunpack.c.0.s8 %v4722
    %v4724 = vlaneseq
    %v4725 = vshrl.u32 %v4724, 7
    %v4726 = vsub.s32 %v4723, %v4725
    %v4727 = vrot.slane %v4704, %v4726
    %v4729 = vunpack.c.l.s4 1966171168
    %v4730 = vunpack.c.0.s8 %v4729
    %v4731 = vlaneseq
    %v4732 = vshrl.u32 %v4731, 7
    %v4733 = vsub.s32 %v4730, %v4732
    %v4734 = vrot.slane %v4706, %v4733
    %v4735 = vcombine.high %v4713, %v4713
    %v4736 = vcombine.high %v4720, %v4720
    %v4737 = vcombine.high %v4727, %v4727
    %v4738 = vcombine.high %v4734, %v4734
    %v4747 = vadd.f32 %v4388, %v4713
    %v4748 = vadd.f32 %v4390, %v4727
    %v4749 = vadd.f32 %v4392, %v4735
    %v4750 = vadd.f32 %v4394, %v4737
    %v4751 = vadd.f32 %v4396, %v4720
    %v4752 = vadd.f32 %v4398, %v4734
    %v4753 = vadd.f32 %v4400, %v4736
    %v4754 = vadd.f32 %v4402, %v4738
    %v4755 = vxor.u32 %v4747, 2147483648
    %v4756 = vxor.u32 %v4748, 2147483648
    %v4757 = vxor.u32 %v4749, 2147483648
    %v4758 = vxor.u32 %v4750, 2147483648
    %v4759 = vxor.u32 %v4751, 2147483648
    %v4760 = vxor.u32 %v4752, 2147483648
    %v4761 = vxor.u32 %v4753, 2147483648
    %v4762 = vxor.u32 %v4754, 2147483648
    %v4763 = vmul.f32 %v4755, 1.442695
    %v4764 = vpow.pop %v4763
    %v4765 = vmul.f32 %v4756, 1.442695
    %v4766 = vpow.pop %v4765
    %v4767 = vmul.f32 %v4757, 1.442695
    %v4768 = vpow.pop %v4767
    %v4769 = vmul.f32 %v4758, 1.442695
    %v4770 = vpow.pop %v4769
    %v4771 = vmul.f32 %v4759, 1.442695
    %v4772 = vpow.pop %v4771
    %v4773 = vmul.f32 %v4760, 1.442695
    %v4774 = vpow.pop %v4773
    %v4775 = vmul.f32 %v4761, 1.442695
    %v4776 = vpow.pop %v4775
    %v4777 = vmul.f32 %v4762, 1.442695
    %v4778 = vpow.pop %v4777
    %v4779 = vadd.f32 %v4764, 1.0
    %v4780 = vadd.f32 %v4766, 1.0
    %v4781 = vadd.f32 %v4768, 1.0
    %v4782 = vadd.f32 %v4770, 1.0
    %v4783 = vadd.f32 %v4772, 1.0
    %v4784 = vadd.f32 %v4774, 1.0
    %v4785 = vadd.f32 %v4776, 1.0
    %v4786 = vadd.f32 %v4778, 1.0
    %v4787 = vrcp.pop %v4779
    %v4788 = vmul.f32 1.0, %v4787
    %v4789 = vrcp.pop %v4780
    %v4790 = vmul.f32 1.0, %v4789
    %v4791 = vrcp.pop %v4781
    %v4792 = vmul.f32 1.0, %v4791
    %v4793 = vrcp.pop %v4782
    %v4794 = vmul.f32 1.0, %v4793
    %v4795 = vrcp.pop %v4783
    %v4796 = vmul.f32 1.0, %v4795
    %v4797 = vrcp.pop %v4784
    %v4798 = vmul.f32 1.0, %v4797
    %v4799 = vrcp.pop %v4785
    %v4800 = vmul.f32 1.0, %v4799
    %v4801 = vrcp.pop %v4786
    %v4802 = vmul.f32 1.0, %v4801
    %v4811 = vrot.slane %v4747, 1
    %v4812 = vrot.slane %v4748, 1
    %v4813 = vrot.slane %v4749, 1
    %v4814 = vrot.slane %v4750, 1
    %v4815 = vrot.slane %v4751, 1
    %v4816 = vrot.slane %v4752, 1
    %v4817 = vrot.slane %v4753, 1
    %v4818 = vrot.slane %v4754, 1
    %v4827 = vxor.u32 %v4811, 2147483648
    %v4828 = vxor.u32 %v4812, 2147483648
    %v4829 = vxor.u32 %v4813, 2147483648
    %v4830 = vxor.u32 %v4814, 2147483648
    %v4831 = vxor.u32 %v4815, 2147483648
    %v4832 = vxor.u32 %v4816, 2147483648
    %v4833 = vxor.u32 %v4817, 2147483648
    %v4834 = vxor.u32 %v4818, 2147483648
    %v4835 = vmul.f32 %v4827, 1.442695
    %v4836 = vpow.pop %v4835
    %v4837 = vmul.f32 %v4828, 1.442695
    %v4838 = vpow.pop %v4837
    %v4839 = vmul.f32 %v4829, 1.442695
    %v4840 = vpow.pop %v4839
    %v4841 = vmul.f32 %v4830, 1.442695
    %v4842 = vpow.pop %v4841
    %v4843 = vmul.f32 %v4831, 1.442695
    %v4844 = vpow.pop %v4843
    %v4845 = vmul.f32 %v4832, 1.442695
    %v4846 = vpow.pop %v4845
    %v4847 = vmul.f32 %v4833, 1.442695
    %v4848 = vpow.pop %v4847
    %v4849 = vmul.f32 %v4834, 1.442695
    %v4850 = vpow.pop %v4849
    %v4851 = vadd.f32 %v4836, 1.0
    %v4852 = vadd.f32 %v4838, 1.0
    %v4853 = vadd.f32 %v4840, 1.0
    %v4854 = vadd.f32 %v4842, 1.0
    %v4855 = vadd.f32 %v4844, 1.0
    %v4856 = vadd.f32 %v4846, 1.0
    %v4857 = vadd.f32 %v4848, 1.0
    %v4858 = vadd.f32 %v4850, 1.0
    %v4859 = vrcp.pop %v4851
    %v4860 = vmul.f32 1.0, %v4859
    %v4861 = vrcp.pop %v4852
    %v4862 = vmul.f32 1.0, %v4861
    %v4863 = vrcp.pop %v4853
    %v4864 = vmul.f32 1.0, %v4863
    %v4865 = vrcp.pop %v4854
    %v4866 = vmul.f32 1.0, %v4865
    %v4867 = vrcp.pop %v4855
    %v4868 = vmul.f32 1.0, %v4867
    %v4869 = vrcp.pop %v4856
    %v4870 = vmul.f32 1.0, %v4869
    %v4871 = vrcp.pop %v4857
    %v4872 = vmul.f32 1.0, %v4871
    %v4873 = vrcp.pop %v4858
    %v4874 = vmul.f32 1.0, %v4873
    %v4875 = vrot.slane %v4747, 2
    %v4876 = vrot.slane %v4748, 2
    %v4877 = vrot.slane %v4749, 2
    %v4878 = vrot.slane %v4750, 2
    %v4879 = vrot.slane %v4751, 2
    %v4880 = vrot.slane %v4752, 2
    %v4881 = vrot.slane %v4753, 2
    %v4882 = vrot.slane %v4754, 2
    %v4891 = vtanh.pop %v4875
    %v4892 = vtanh.pop %v4876
    %v4893 = vtanh.pop %v4877
    %v4894 = vtanh.pop %v4878
    %v4895 = vtanh.pop %v4879
    %v4896 = vtanh.pop %v4880
    %v4897 = vtanh.pop %v4881
    %v4898 = vtanh.pop %v4882
    %v4899 = vrot.slane %v4747, 3
    %v4900 = vrot.slane %v4748, 3
    %v4901 = vrot.slane %v4749, 3
    %v4902 = vrot.slane %v4750, 3
    %v4903 = vrot.slane %v4751, 3
    %v4904 = vrot.slane %v4752, 3
    %v4905 = vrot.slane %v4753, 3
    %v4906 = vrot.slane %v4754, 3
    %v4915 = vxor.u32 %v4899, 2147483648
    %v4916 = vxor.u32 %v4900, 2147483648
    %v4917 = vxor.u32 %v4901, 2147483648
    %v4918 = vxor.u32 %v4902, 2147483648
    %v4919 = vxor.u32 %v4903, 2147483648
    %v4920 = vxor.u32 %v4904, 2147483648
    %v4921 = vxor.u32 %v4905, 2147483648
    %v4922 = vxor.u32 %v4906, 2147483648
    %v4923 = vmul.f32 %v4915, 1.442695
    %v4924 = vpow.pop %v4923
    %v4925 = vmul.f32 %v4916, 1.442695
    %v4926 = vpow.pop %v4925
    %v4927 = vmul.f32 %v4917, 1.442695
    %v4928 = vpow.pop %v4927
    %v4929 = vmul.f32 %v4918, 1.442695
    %v4930 = vpow.pop %v4929
    %v4931 = vmul.f32 %v4919, 1.442695
    %v4932 = vpow.pop %v4931
    %v4933 = vmul.f32 %v4920, 1.442695
    %v4934 = vpow.pop %v4933
    %v4935 = vmul.f32 %v4921, 1.442695
    %v4936 = vpow.pop %v4935
    %v4937 = vmul.f32 %v4922, 1.442695
    %v4938 = vpow.pop %v4937
    %v4939 = vadd.f32 %v4924, 1.0
    %v4940 = vadd.f32 %v4926, 1.0
    %v4941 = vadd.f32 %v4928, 1.0
    %v4942 = vadd.f32 %v4930, 1.0
    %v4943 = vadd.f32 %v4932, 1.0
    %v4944 = vadd.f32 %v4934, 1.0
    %v4945 = vadd.f32 %v4936, 1.0
    %v4946 = vadd.f32 %v4938, 1.0
    %v4947 = vrcp.pop %v4939
    %v4948 = vmul.f32 1.0, %v4947
    %v4949 = vrcp.pop %v4940
    %v4950 = vmul.f32 1.0, %v4949
    %v4951 = vrcp.pop %v4941
    %v4952 = vmul.f32 1.0, %v4951
    %v4953 = vrcp.pop %v4942
    %v4954 = vmul.f32 1.0, %v4953
    %v4955 = vrcp.pop %v4943
    %v4956 = vmul.f32 1.0, %v4955
    %v4957 = vrcp.pop %v4944
    %v4958 = vmul.f32 1.0, %v4957
    %v4959 = vrcp.pop %v4945
    %v4960 = vmul.f32 1.0, %v4959
    %v4961 = vrcp.pop %v4946
    %v4962 = vmul.f32 1.0, %v4961
    %v4963 = vmul.f32 %v4860, %v4355
    %v4964 = vmul.f32 %v4862, %v4356
    %v4965 = vmul.f32 %v4864, %v4357
    %v4966 = vmul.f32 %v4866, %v4358
    %v4967 = vmul.f32 %v4868, %v4359
    %v4968 = vmul.f32 %v4870, %v4360
    %v4969 = vmul.f32 %v4872, %v4361
    %v4970 = vmul.f32 %v4874, %v4362
    %v4971 = vmul.f32 %v4788, %v4891
    %v4972 = vmul.f32 %v4790, %v4892
    %v4973 = vmul.f32 %v4792, %v4893
    %v4974 = vmul.f32 %v4794, %v4894
    %v4975 = vmul.f32 %v4796, %v4895
    %v4976 = vmul.f32 %v4798, %v4896
    %v4977 = vmul.f32 %v4800, %v4897
    %v4978 = vmul.f32 %v4802, %v4898
    %v4979 = vadd.f32 %v4963, %v4971
    %v4980 = vadd.f32 %v4964, %v4972
    %v4981 = vadd.f32 %v4965, %v4973
    %v4982 = vadd.f32 %v4966, %v4974
    %v4983 = vadd.f32 %v4967, %v4975
    %v4984 = vadd.f32 %v4968, %v4976
    %v4985 = vadd.f32 %v4969, %v4977
    %v4986 = vadd.f32 %v4970, %v4978
    %v4987 = vtanh.pop %v4979
    %v4988 = vtanh.pop %v4980
    %v4989 = vtanh.pop %v4981
    %v4990 = vtanh.pop %v4982
    %v4991 = vtanh.pop %v4983
    %v4992 = vtanh.pop %v4984
    %v4993 = vtanh.pop %v4985
    %v4994 = vtanh.pop %v4986
    %v4995 = vmul.f32 %v4948, %v4987
    %v4996 = vmul.f32 %v4950, %v4988
    %v4997 = vmul.f32 %v4952, %v4989
    %v4998 = vmul.f32 %v4954, %v4990
    %v4999 = vmul.f32 %v4956, %v4991
    %v5000 = vmul.f32 %v4958, %v4992
    %v5001 = vmul.f32 %v4960, %v4993
    %v5002 = vmul.f32 %v4962, %v4994
    %5003 = vst [vmem:[#allocation2 + $0x7] sm:$0x1] %v4995
    %5004 = vst [vmem:[#allocation2 + $0xf] sm:$0x1] %v4996
    %5005 = vst [vmem:[#allocation2 + $0x17] sm:$0x1] %v4997
    %5006 = vst [vmem:[#allocation2 + $0x1f] sm:$0x1] %v4998
    %5007 = vst [vmem:[#allocation2 + $0x27] sm:$0x1] %v4999
    %5008 = vst [vmem:[#allocation2 + $0x2f] sm:$0x1] %v5000
    %5009 = vst [vmem:[#allocation2 + $0x37] sm:$0x1] %v5001
    %5010 = vst [vmem:[#allocation2 + $0x3f] sm:$0x1] %v5002
    // Predicated region
    $region18: #{seq2seq_forward.8} parent=1 // pred_check
      _
    $region19: #{seq2seq_forward.8} parent=1 // pred_check_branch
      %5012 = sbr.rel (0) target = $region21
    $region20: #{seq2seq_forward.8} parent=1 // pred_region
      %s5014 = ssub.s32 1024, 1024
      %5015 = vsyncadd [#allocation3], %s5014
      %s5016 = sshll.u32 [#allocation2], 4
      %s5017 = int_to_ptr.vmem [resolvable:$true] %s5016
      %5022 = dma.vmem_to_hbm [thread:$0]  %s5017, 1024, %s4, [#allocation3], 128, 128, 8
    $region21: #{seq2seq_forward.8} parent=1 // pred_fallthru
      _
    // Predicated region
    $region22: #{seq2seq_forward.8} parent=1 // pred_check
      _
    $region23: #{seq2seq_forward.8} parent=1 // pred_check_branch
      %5024 = sbr.rel (0) target = $region25
    $region24: #{seq2seq_forward.8} parent=1 // pred_region
      %5025 = dma.done [#allocation3], 1024
    $region25: #{seq2seq_forward.8} parent=1 // pred_fallthru
      _
    %5026 = vsyncpa [#allocation3], 1

</llo_original>
